<compile_context>
chip_gen: v6e
topology: v6e:2x2x1
jax: 0.10.0
libtpu: 0.0.40
codegen_flags: <defaults>
</compile_context>

<pallas_src>
import jax
import jax.numpy as jnp
from jax import lax
from jax.experimental import pallas as pl
from jax.experimental.pallas import tpu as pltpu

HIDDEN = 1024
LN_EPS = 1e-5
NEG_SLOPE = 0.01


def _round_up(x, m):
    return ((x + m - 1) // m) * m


def _leaky_relu(x):
    # max(x, 0.01*x) == LeakyReLU(0.01) for slope < 1; mul+max (2 VALU ops)
    # instead of cmp+mul+select (3).
    return jnp.maximum(x, NEG_SLOPE * x)


def _normalize(x):
    # LayerNorm without affine (affine folded into the next Linear).
    # Single-pass variance: E[x^2] - mean^2 halves the cross-lane reductions.
    # (Clamped to >=0; activations here are well-conditioned post-Linear+LReLU.)
    mean = jnp.mean(x, axis=-1, keepdims=True)
    mean_sq = jnp.mean(jnp.square(x), axis=-1, keepdims=True)
    var = jnp.maximum(mean_sq - jnp.square(mean), 0.0)
    return (x - mean) * lax.rsqrt(var + LN_EPS)


def classifier3_kernel(
    x_ref,
    w1_ref, b1_ref,
    w2_ref, b2_ref,
    w3_ref, b3_ref,
    w4_ref, b4_ref,
    o_ref,
):
    # Linear(D,1024) -> LeakyReLU -> LayerNorm (affine folded into w2/b2)
    h = jnp.dot(x_ref[...].astype(jnp.bfloat16), w1_ref[...],
                preferred_element_type=jnp.float32)
    h = h + b1_ref[...]
    h = _leaky_relu(h)
    h = _normalize(h)
    # Dropout(p=0.4): identity at inference.

    # Linear(1024,1024) -> LeakyReLU
    h = jnp.dot(h.astype(jnp.bfloat16), w2_ref[...],
                preferred_element_type=jnp.float32)
    h = h + b2_ref[...]
    h = _leaky_relu(h)
    # Dropout(p=0.4): identity at inference.

    # Linear(1024,1024) -> LeakyReLU -> LayerNorm (affine folded into w4/b4)
    h = jnp.dot(h.astype(jnp.bfloat16), w3_ref[...],
                preferred_element_type=jnp.float32)
    h = h + b3_ref[...]
    h = _leaky_relu(h)
    h = _normalize(h)

    # Linear(1024, n_classes_padded)  (padded columns are zero; sliced off later)
    out = jnp.dot(h.astype(jnp.bfloat16), w4_ref[...],
                  preferred_element_type=jnp.float32)
    out = out + b4_ref[...]
    o_ref[...] = out.astype(o_ref.dtype)


def prepare_params(params):
    """Fold LayerNorm affine into the following Linear, cast matmul weights to
    bf16, and pad the final layer to a lane-dense (multiple-of-128) width.

    LN(h)*g + be followed by Linear(W, b) equals
      normalize(h) @ (diag(g) @ W) + (be @ W + b).
    """
    g1 = params["g1"].reshape(-1).astype(jnp.float32)
    be1 = params["be1"].reshape(1, -1).astype(jnp.float32)
    g2 = params["g2"].reshape(-1).astype(jnp.float32)
    be2 = params["be2"].reshape(1, -1).astype(jnp.float32)

    w2f = params["w2"] * g1[:, None]
    b2f = params["b2"] + be1 @ params["w2"]
    w4f = params["w4"] * g2[:, None]
    b4f = params["b4"] + be2 @ params["w4"]

    # Pad the output layer once (lane-dense -> unmasked vst in the kernel).
    n_classes = w4f.shape[1]
    nc_pad = _round_up(n_classes, 128)
    if nc_pad != n_classes:
        w4f = jnp.pad(w4f, ((0, 0), (0, nc_pad - n_classes)))
        b4f = jnp.pad(b4f, ((0, 0), (0, nc_pad - n_classes)))

    return {
        "w1": params["w1"].astype(jnp.bfloat16), "b1": params["b1"],
        "w2": w2f.astype(jnp.bfloat16), "b2": b2f,
        "w3": params["w3"].astype(jnp.bfloat16), "b3": params["b3"],
        "w4": w4f.astype(jnp.bfloat16), "b4": b4f,
    }


def _vmem_limit_bytes():
    # 75% of physical VMEM, capped at 96 MiB: ~96 MiB on v5e/v6e (128 MiB),
    # ~48 MiB on v7x (64 MiB).
    try:
        phys = pltpu.get_tpu_info().vmem_capacity_bytes
    except Exception:
        phys = 64 << 20
    return int(min(96 << 20, (phys * 3) // 4))


def classifier3_forward(x, fp, n_classes, *, tb=512):
    """x: (B, latent_dim) float32. fp: prepare_params() output. Returns (B, n_classes) f32."""
    B, D = x.shape
    H = HIDDEN
    NCp = fp["w4"].shape[1]                 # already lane-dense padded

    # Batch tiling: multiple of 16 rows (bf16 sublane packing); cap TB so the
    # grid has >= 2 steps whenever the batch allows (v7x megacore sharding).
    B16 = _round_up(B, 16)
    TB = min(tb, B16, _round_up(pl.cdiv(B16, 2), 16))
    TB = max(TB, 16)
    Bp = _round_up(B, TB)
    x_p = x if Bp == B else jnp.pad(x, ((0, Bp - B), (0, 0)))
    grid = (Bp // TB,)

    def resident(shape):
        # Weights/biases: constant index_map -> VMEM-resident; single-buffered
        # (double-buffering an unchanging block only wastes VMEM).
        return pl.BlockSpec(shape, lambda i: (0, 0), pipeline_mode=pl.Buffered(1))

    in_specs = [
        pl.BlockSpec((TB, D), lambda i: (i, 0)),
        resident((D, H)), resident((1, H)),
        resident((H, H)), resident((1, H)),
        resident((H, H)), resident((1, H)),
        resident((H, NCp)), resident((1, NCp)),
    ]
    out_spec = pl.BlockSpec((TB, NCp), lambda i: (i, 0))

    weight_bytes = (D * H + 2 * H * H + H * NCp) * 2        # bf16 weights
    bias_bytes = (3 * H + NCp) * 4                           # f32 biases
    cost = pl.CostEstimate(
        flops=2 * Bp * (D * H + 2 * H * H + H * NCp),
        transcendentals=2 * Bp,                              # one rsqrt per row per LN
        bytes_accessed=Bp * D * 4 + weight_bytes + bias_bytes + Bp * NCp * 4,
    )

    fn = pl.pallas_call(
        classifier3_kernel,
        out_shape=jax.ShapeDtypeStruct((Bp, NCp), jnp.float32),
        grid=grid,
        in_specs=in_specs,
        out_specs=out_spec,
        compiler_params=pltpu.CompilerParams(
            dimension_semantics=("parallel",),
            vmem_limit_bytes=_vmem_limit_bytes(),
        ),
        cost_estimate=cost,
    )
    out = fn(
        x_p,
        fp["w1"], fp["b1"],
        fp["w2"], fp["b2"],
        fp["w3"], fp["b3"],
        fp["w4"], fp["b4"],
    )
    return out[:B, :n_classes]


def init_params(key, latent_dim, n_classes):
    """Deterministic synthetic initialization (PyTorch-style uniform fan-in).

    Linear weights are stored as (in_features, out_features) so y = x @ W + b
    matches PyTorch's x @ W.T. LayerNorm affine params are randomly perturbed
    from the (1, 0) defaults purely to exercise the affine-folding path.
    """
    keys = jax.random.split(key, 12)

    def lin(kw, kb, fan_in, fan_out):
        bound = 1.0 / jnp.sqrt(fan_in)
        w = jax.random.uniform(kw, (fan_in, fan_out), jnp.float32, -bound, bound)
        b = jax.random.uniform(kb, (1, fan_out), jnp.float32, -bound, bound)
        return w, b

    w1, b1 = lin(keys[0], keys[1], latent_dim, HIDDEN)
    w2, b2 = lin(keys[2], keys[3], HIDDEN, HIDDEN)
    w3, b3 = lin(keys[4], keys[5], HIDDEN, HIDDEN)
    w4, b4 = lin(keys[6], keys[7], HIDDEN, n_classes)

    g1 = 1.0 + 0.1 * jax.random.normal(keys[8], (1, HIDDEN), jnp.float32)
    be1 = 0.1 * jax.random.normal(keys[9], (1, HIDDEN), jnp.float32)
    g2 = 1.0 + 0.1 * jax.random.normal(keys[10], (1, HIDDEN), jnp.float32)
    be2 = 0.1 * jax.random.normal(keys[11], (1, HIDDEN), jnp.float32)

    return {
        "w1": w1, "b1": b1, "g1": g1, "be1": be1,
        "w2": w2, "b2": b2,
        "w3": w3, "b3": b3, "g2": g2, "be2": be2,
        "w4": w4, "b4": b4,
    }


def reference_forward_f32(x, params):
    """Pure-JAX f32 reference with the *original* module math (no folding, no bf16)."""
    def ln(h, g, b):
        mean = jnp.mean(h, -1, keepdims=True)
        var = jnp.mean(jnp.square(h - mean), -1, keepdims=True)
        return (h - mean) * lax.rsqrt(var + LN_EPS) * g + b

    h = x @ params["w1"] + params["b1"]
    h = _leaky_relu(h)
    h = ln(h, params["g1"], params["be1"])
    h = h @ params["w2"] + params["b2"]
    h = _leaky_relu(h)
    h = h @ params["w3"] + params["b3"]
    h = _leaky_relu(h)
    h = ln(h, params["g2"], params["be2"])
    return h @ params["w4"] + params["b4"]


def reference_forward_mirrored(x, fp, n_classes):
    """Pure-JAX reference mirroring the kernel's folded-params / bf16 math."""
    h = jnp.dot(x.astype(jnp.bfloat16), fp["w1"],
                preferred_element_type=jnp.float32) + fp["b1"]
    h = _leaky_relu(h)
    h = _normalize(h)
    h = jnp.dot(h.astype(jnp.bfloat16), fp["w2"],
                preferred_element_type=jnp.float32) + fp["b2"]
    h = _leaky_relu(h)
    h = jnp.dot(h.astype(jnp.bfloat16), fp["w3"],
                preferred_element_type=jnp.float32) + fp["b3"]
    h = _leaky_relu(h)
    h = _normalize(h)
    out = jnp.dot(h.astype(jnp.bfloat16), fp["w4"],
                  preferred_element_type=jnp.float32) + fp["b4"]
    return out[:, :n_classes]


if __name__ == "__main__":
    latent_dim = 32
    n_classes = 10
    batch = 4

    key = jax.random.PRNGKey(0)
    k_x, k_p = jax.random.split(key)
    x = jax.random.normal(k_x, (batch, latent_dim), jnp.float32)
    params = init_params(k_p, latent_dim, n_classes)
    fused = prepare_params(params)

    out = classifier3_forward(x, fused, n_classes)
    out = jax.block_until_ready(out)
    assert out.shape == (batch, n_classes), out.shape

    # Exactness check against a pure-JAX mirror of the kernel math.
    ref_mirror = reference_forward_mirrored(x, fused, n_classes)
    assert jnp.allclose(out, ref_mirror, atol=2e-3, rtol=2e-3), \
        "mismatch vs bf16-mirrored reference"

    # Semantics check against the original f32 module math (bf16 quantization tolerance).
    ref_f32 = reference_forward_f32(x, params)
    assert jnp.allclose(out, ref_f32, atol=6e-2, rtol=6e-2), \
        "mismatch vs f32 module reference"

    print("KERNEL_OK")
</pallas_src>

<mosaic_0001>
module attributes {stable_mosaic.version = 11 : i64} {
  func.func @classifier3_kernel(%arg0: i32, %arg1: memref<16x32xf32, #tpu.memory_space<vmem>>, %arg2: memref<32x1024xbf16, #tpu.memory_space<vmem>>, %arg3: memref<1x1024xf32, #tpu.memory_space<vmem>>, %arg4: memref<1024x1024xbf16, #tpu.memory_space<vmem>>, %arg5: memref<1x1024xf32, #tpu.memory_space<vmem>>, %arg6: memref<1024x1024xbf16, #tpu.memory_space<vmem>>, %arg7: memref<1x1024xf32, #tpu.memory_space<vmem>>, %arg8: memref<1024x128xbf16, #tpu.memory_space<vmem>>, %arg9: memref<1x128xf32, #tpu.memory_space<vmem>>, %arg10: memref<16x128xf32, #tpu.memory_space<vmem>>) attributes {dimension_semantics = [#tpu.dimension_semantics<parallel>], iteration_bounds = array<i64: 1>, scalar_prefetch = 0 : i64, scratch_operands = 0 : i64, tpu.core_type = #tpu.core_type<tc>, window_params = [{transform_indices = @transform_0, window_bounds = array<i64: 16, 32>}, {pipeline_mode = #tpu.pipeline_mode<synchronous>, transform_indices = @transform_1, window_bounds = array<i64: 32, 1024>}, {pipeline_mode = #tpu.pipeline_mode<synchronous>, transform_indices = @transform_2, window_bounds = array<i64: 1, 1024>}, {pipeline_mode = #tpu.pipeline_mode<synchronous>, transform_indices = @transform_3, window_bounds = array<i64: 1024, 1024>}, {pipeline_mode = #tpu.pipeline_mode<synchronous>, transform_indices = @transform_4, window_bounds = array<i64: 1, 1024>}, {pipeline_mode = #tpu.pipeline_mode<synchronous>, transform_indices = @transform_5, window_bounds = array<i64: 1024, 1024>}, {pipeline_mode = #tpu.pipeline_mode<synchronous>, transform_indices = @transform_6, window_bounds = array<i64: 1, 1024>}, {pipeline_mode = #tpu.pipeline_mode<synchronous>, transform_indices = @transform_7, window_bounds = array<i64: 1024, 128>}, {pipeline_mode = #tpu.pipeline_mode<synchronous>, transform_indices = @transform_8, window_bounds = array<i64: 1, 128>}, {transform_indices = @transform_9, window_bounds = array<i64: 16, 128>}]} {
    %c0 = arith.constant 0 : index
    %c0_0 = arith.constant 0 : index
    %0 = vector.load %arg1[%c0, %c0_0] : memref<16x32xf32, #tpu.memory_space<vmem>>, vector<16x32xf32>
    %1 = arith.truncf %0 : vector<16x32xf32> to vector<16x32xbf16>
    %c0_1 = arith.constant 0 : index
    %c0_2 = arith.constant 0 : index
    %2 = vector.load %arg2[%c0_1, %c0_2] : memref<32x1024xbf16, #tpu.memory_space<vmem>>, vector<32x1024xbf16>
    %cst = arith.constant dense<0.000000e+00> : vector<16x1024xf32>
    %3 = tpu.matmul %1, %2, %cst {dimension_numbers = #tpu.dot_dimension_numbers<[1], [0], [0], [1], [0, 0, 1, 1], [], []>} : vector<16x32xbf16>, vector<32x1024xbf16>, vector<16x1024xf32> -> vector<16x1024xf32>
    %c0_3 = arith.constant 0 : index
    %c0_4 = arith.constant 0 : index
    %4 = vector.load %arg3[%c0_3, %c0_4] : memref<1x1024xf32, #tpu.memory_space<vmem>>, vector<1x1024xf32>
    %5 = vector.broadcast %4 : vector<1x1024xf32> to vector<16x1024xf32>
    %6 = arith.addf %3, %5 : vector<16x1024xf32>
    %cst_5 = arith.constant 0.00999999977 : f32
    %7 = vector.broadcast %cst_5 : f32 to vector<16x1024xf32>
    %8 = arith.mulf %7, %6 : vector<16x1024xf32>
    %9 = arith.maximumf %6, %8 : vector<16x1024xf32>
    %cst_6 = arith.constant dense<0.000000e+00> : vector<16xf32>
    %10 = vector.multi_reduction <add>, %9, %cst_6 [1] : vector<16x1024xf32> to vector<16xf32>
    %11 = vector.shape_cast %10 : vector<16xf32> to vector<16x1xf32>
    %cst_7 = arith.constant 1.024000e+03 : f32
    %12 = vector.broadcast %cst_7 : f32 to vector<16x1xf32>
    %13 = arith.divf %11, %12 : vector<16x1xf32>
    %14 = arith.mulf %9, %9 : vector<16x1024xf32>
    %cst_8 = arith.constant dense<0.000000e+00> : vector<16xf32>
    %15 = vector.multi_reduction <add>, %14, %cst_8 [1] : vector<16x1024xf32> to vector<16xf32>
    %16 = vector.shape_cast %15 : vector<16xf32> to vector<16x1xf32>
    %cst_9 = arith.constant 1.024000e+03 : f32
    %17 = vector.broadcast %cst_9 : f32 to vector<16x1xf32>
    %18 = arith.divf %16, %17 : vector<16x1xf32>
    %19 = arith.mulf %13, %13 : vector<16x1xf32>
    %20 = arith.subf %18, %19 : vector<16x1xf32>
    %cst_10 = arith.constant 0.000000e+00 : f32
    %21 = vector.broadcast %cst_10 : f32 to vector<16x1xf32>
    %22 = arith.maximumf %20, %21 : vector<16x1xf32>
    %23 = vector.broadcast %13 : vector<16x1xf32> to vector<16x1024xf32>
    %24 = arith.subf %9, %23 : vector<16x1024xf32>
    %cst_11 = arith.constant 9.99999974E-6 : f32
    %25 = vector.broadcast %cst_11 : f32 to vector<16x1xf32>
    %26 = arith.addf %22, %25 : vector<16x1xf32>
    %27 = math.rsqrt %26 : vector<16x1xf32>
    %28 = vector.broadcast %27 : vector<16x1xf32> to vector<16x1024xf32>
    %29 = arith.mulf %24, %28 : vector<16x1024xf32>
    %30 = arith.truncf %29 : vector<16x1024xf32> to vector<16x1024xbf16>
    %c0_12 = arith.constant 0 : index
    %c0_13 = arith.constant 0 : index
    %31 = vector.load %arg4[%c0_12, %c0_13] : memref<1024x1024xbf16, #tpu.memory_space<vmem>>, vector<1024x1024xbf16>
    %cst_14 = arith.constant dense<0.000000e+00> : vector<16x1024xf32>
    %32 = tpu.matmul %30, %31, %cst_14 {dimension_numbers = #tpu.dot_dimension_numbers<[1], [0], [0], [1], [0, 0, 1, 1], [], []>} : vector<16x1024xbf16>, vector<1024x1024xbf16>, vector<16x1024xf32> -> vector<16x1024xf32>
    %c0_15 = arith.constant 0 : index
    %c0_16 = arith.constant 0 : index
    %33 = vector.load %arg5[%c0_15, %c0_16] : memref<1x1024xf32, #tpu.memory_space<vmem>>, vector<1x1024xf32>
    %34 = vector.broadcast %33 : vector<1x1024xf32> to vector<16x1024xf32>
    %35 = arith.addf %32, %34 : vector<16x1024xf32>
    %cst_17 = arith.constant 0.00999999977 : f32
    %36 = vector.broadcast %cst_17 : f32 to vector<16x1024xf32>
    %37 = arith.mulf %36, %35 : vector<16x1024xf32>
    %38 = arith.maximumf %35, %37 : vector<16x1024xf32>
    %39 = arith.truncf %38 : vector<16x1024xf32> to vector<16x1024xbf16>
    %c0_18 = arith.constant 0 : index
    %c0_19 = arith.constant 0 : index
    %40 = vector.load %arg6[%c0_18, %c0_19] : memref<1024x1024xbf16, #tpu.memory_space<vmem>>, vector<1024x1024xbf16>
    %cst_20 = arith.constant dense<0.000000e+00> : vector<16x1024xf32>
    %41 = tpu.matmul %39, %40, %cst_20 {dimension_numbers = #tpu.dot_dimension_numbers<[1], [0], [0], [1], [0, 0, 1, 1], [], []>} : vector<16x1024xbf16>, vector<1024x1024xbf16>, vector<16x1024xf32> -> vector<16x1024xf32>
    %c0_21 = arith.constant 0 : index
    %c0_22 = arith.constant 0 : index
    %42 = vector.load %arg7[%c0_21, %c0_22] : memref<1x1024xf32, #tpu.memory_space<vmem>>, vector<1x1024xf32>
    %43 = vector.broadcast %42 : vector<1x1024xf32> to vector<16x1024xf32>
    %44 = arith.addf %41, %43 : vector<16x1024xf32>
    %cst_23 = arith.constant 0.00999999977 : f32
    %45 = vector.broadcast %cst_23 : f32 to vector<16x1024xf32>
    %46 = arith.mulf %45, %44 : vector<16x1024xf32>
    %47 = arith.maximumf %44, %46 : vector<16x1024xf32>
    %cst_24 = arith.constant dense<0.000000e+00> : vector<16xf32>
    %48 = vector.multi_reduction <add>, %47, %cst_24 [1] : vector<16x1024xf32> to vector<16xf32>
    %49 = vector.shape_cast %48 : vector<16xf32> to vector<16x1xf32>
    %cst_25 = arith.constant 1.024000e+03 : f32
    %50 = vector.broadcast %cst_25 : f32 to vector<16x1xf32>
    %51 = arith.divf %49, %50 : vector<16x1xf32>
    %52 = arith.mulf %47, %47 : vector<16x1024xf32>
    %cst_26 = arith.constant dense<0.000000e+00> : vector<16xf32>
    %53 = vector.multi_reduction <add>, %52, %cst_26 [1] : vector<16x1024xf32> to vector<16xf32>
    %54 = vector.shape_cast %53 : vector<16xf32> to vector<16x1xf32>
    %cst_27 = arith.constant 1.024000e+03 : f32
    %55 = vector.broadcast %cst_27 : f32 to vector<16x1xf32>
    %56 = arith.divf %54, %55 : vector<16x1xf32>
    %57 = arith.mulf %51, %51 : vector<16x1xf32>
    %58 = arith.subf %56, %57 : vector<16x1xf32>
    %cst_28 = arith.constant 0.000000e+00 : f32
    %59 = vector.broadcast %cst_28 : f32 to vector<16x1xf32>
    %60 = arith.maximumf %58, %59 : vector<16x1xf32>
    %61 = vector.broadcast %51 : vector<16x1xf32> to vector<16x1024xf32>
    %62 = arith.subf %47, %61 : vector<16x1024xf32>
    %cst_29 = arith.constant 9.99999974E-6 : f32
    %63 = vector.broadcast %cst_29 : f32 to vector<16x1xf32>
    %64 = arith.addf %60, %63 : vector<16x1xf32>
    %65 = math.rsqrt %64 : vector<16x1xf32>
    %66 = vector.broadcast %65 : vector<16x1xf32> to vector<16x1024xf32>
    %67 = arith.mulf %62, %66 : vector<16x1024xf32>
    %68 = arith.truncf %67 : vector<16x1024xf32> to vector<16x1024xbf16>
    %c0_30 = arith.constant 0 : index
    %c0_31 = arith.constant 0 : index
    %69 = vector.load %arg8[%c0_30, %c0_31] : memref<1024x128xbf16, #tpu.memory_space<vmem>>, vector<1024x128xbf16>
    %cst_32 = arith.constant dense<0.000000e+00> : vector<16x128xf32>
    %70 = tpu.matmul %68, %69, %cst_32 {dimension_numbers = #tpu.dot_dimension_numbers<[1], [0], [0], [1], [0, 0, 1, 1], [], []>} : vector<16x1024xbf16>, vector<1024x128xbf16>, vector<16x128xf32> -> vector<16x128xf32>
    %c0_33 = arith.constant 0 : index
    %c0_34 = arith.constant 0 : index
    %71 = vector.load %arg9[%c0_33, %c0_34] : memref<1x128xf32, #tpu.memory_space<vmem>>, vector<1x128xf32>
    %72 = vector.broadcast %71 : vector<1x128xf32> to vector<16x128xf32>
    %73 = arith.addf %70, %72 : vector<16x128xf32>
    %c0_35 = arith.constant 0 : index
    %c0_36 = arith.constant 0 : index
    %74 = vector.load %arg10[%c0_35, %c0_36] : memref<16x128xf32, #tpu.memory_space<vmem>>, vector<16x128xf32>
    tpu.vector_store %arg10[%c0_35, %c0_36], %73 {strides = array<i32>} : memref<16x128xf32, #tpu.memory_space<vmem>>, vector<16x128xf32>,
    return
  }
  func.func @transform_0(%arg0: i32) -> (i32, i32) {
    %c0_i32 = arith.constant 0 : i32
    %c0_i32_0 = arith.constant 0 : i32
    return %arg0, %c0_i32 : i32, i32
  }
  func.func @transform_1(%arg0: i32) -> (i32, i32) {
    %c0_i32 = arith.constant 0 : i32
    %c0_i32_0 = arith.constant 0 : i32
    %c0_i32_1 = arith.constant 0 : i32
    return %c0_i32, %c0_i32_0 : i32, i32
  }
  func.func @transform_2(%arg0: i32) -> (i32, i32) {
    %c0_i32 = arith.constant 0 : i32
    %c0_i32_0 = arith.constant 0 : i32
    %c0_i32_1 = arith.constant 0 : i32
    return %c0_i32, %c0_i32_0 : i32, i32
  }
  func.func @transform_3(%arg0: i32) -> (i32, i32) {
    %c0_i32 = arith.constant 0 : i32
    %c0_i32_0 = arith.constant 0 : i32
    %c0_i32_1 = arith.constant 0 : i32
    return %c0_i32, %c0_i32_0 : i32, i32
  }
  func.func @transform_4(%arg0: i32) -> (i32, i32) {
    %c0_i32 = arith.constant 0 : i32
    %c0_i32_0 = arith.constant 0 : i32
    %c0_i32_1 = arith.constant 0 : i32
    return %c0_i32, %c0_i32_0 : i32, i32
  }
  func.func @transform_5(%arg0: i32) -> (i32, i32) {
    %c0_i32 = arith.constant 0 : i32
    %c0_i32_0 = arith.constant 0 : i32
    %c0_i32_1 = arith.constant 0 : i32
    return %c0_i32, %c0_i32_0 : i32, i32
  }
  func.func @transform_6(%arg0: i32) -> (i32, i32) {
    %c0_i32 = arith.constant 0 : i32
    %c0_i32_0 = arith.constant 0 : i32
    %c0_i32_1 = arith.constant 0 : i32
    return %c0_i32, %c0_i32_0 : i32, i32
  }
  func.func @transform_7(%arg0: i32) -> (i32, i32) {
    %c0_i32 = arith.constant 0 : i32
    %c0_i32_0 = arith.constant 0 : i32
    %c0_i32_1 = arith.constant 0 : i32
    return %c0_i32, %c0_i32_0 : i32, i32
  }
  func.func @transform_8(%arg0: i32) -> (i32, i32) {
    %c0_i32 = arith.constant 0 : i32
    %c0_i32_0 = arith.constant 0 : i32
    %c0_i32_1 = arith.constant 0 : i32
    return %c0_i32, %c0_i32_0 : i32, i32
  }
  func.func @transform_9(%arg0: i32) -> (i32, i32) {
    %c0_i32 = arith.constant 0 : i32
    %c0_i32_0 = arith.constant 0 : i32
    return %arg0, %c0_i32 : i32, i32
  }
}

</mosaic_0001>

<llo_original>
// kernel: tpu_custom_call.1
$region0: #{tpu_custom_call.1}
  #allocation0 [shape = 'u32[]', space=smem, size = 0x4, offset = 0x4, fixed_abs, tag = 'smem constant byte address 0x4 - core index']
  #allocation1 [shape = 'u32[144,128]{1,0:T(1,128)}', space=vmem, size = 0x12000, scoped, tag = 'internal scratch']
  %s0 = inlined_call_operand.hbm [shape: f32[16,32], index: 0, kind: input, shape index: {}]
  %s1 = inlined_call_operand.hbm [shape: bf16[32,1024], index: 1, kind: input, shape index: {}]
  %s2 = inlined_call_operand.hbm [shape: f32[1,1024], index: 2, kind: input, shape index: {}]
  %s3 = inlined_call_operand.hbm [shape: bf16[1024,1024], index: 3, kind: input, shape index: {}]
  %s4 = inlined_call_operand.hbm [shape: f32[1,1024], index: 4, kind: input, shape index: {}]
  %s5 = inlined_call_operand.hbm [shape: bf16[1024,1024], index: 5, kind: input, shape index: {}]
  %s6 = inlined_call_operand.hbm [shape: f32[1,1024], index: 6, kind: input, shape index: {}]
  %s7 = inlined_call_operand.hbm [shape: bf16[1024,128], index: 7, kind: input, shape index: {}]
  %s8 = inlined_call_operand.hbm [shape: f32[1,128], index: 8, kind: input, shape index: {}]
  %s9 = inlined_call_operand.hbm [shape: f32[16,128], index: 9, kind: output, shape index: {}]
  %s10 = sld [smem:[#allocation0]]
  $region82: #{tpu_custom_call.1} parent=0
    _
  %s12 = ssub.s32 1, %s10
  %s13 = scalar_select 0, %s12, %s10
  $region1: #{tpu_custom_call.1} parent=0
    #allocation2 [shape = 'u8[8192]{0}', space=vmem, size = 0x2000, scoped, tag = 'input window, operand 0, single buffered']
    #allocation3 [shape = 's32[1]{0}', space=sflag, size = 0x4, scoped, tag = 'scoped memory for tpu_custom_call.1']
    #allocation4 [shape = 's32[1]{0}', space=sflag, size = 0x4, scoped, tag = 'scoped memory for tpu_custom_call.1']
    #allocation5 [shape = 'u8[65536]{0}', space=vmem, size = 0x10000, scoped, tag = 'input window, operand 1, single buffered']
    #allocation6 [shape = 's32[1]{0}', space=sflag, size = 0x4, scoped, tag = 'scoped memory for tpu_custom_call.1']
    #allocation7 [shape = 'u8[4096]{0}', space=vmem, size = 0x1000, scoped, tag = 'input window, operand 2, single buffered']
    #allocation8 [shape = 'u8[2097152]{0}', space=vmem, size = 0x200000, scoped, tag = 'input window, operand 3, single buffered']
    #allocation9 [shape = 's32[1]{0}', space=sflag, size = 0x4, scoped, tag = 'scoped memory for tpu_custom_call.1']
    #allocation10 [shape = 'u8[4096]{0}', space=vmem, size = 0x1000, scoped, tag = 'input window, operand 4, single buffered']
    #allocation11 [shape = 'u8[2097152]{0}', space=vmem, size = 0x200000, scoped, tag = 'input window, operand 5, single buffered']
    #allocation12 [shape = 's32[1]{0}', space=sflag, size = 0x4, scoped, tag = 'scoped memory for tpu_custom_call.1']
    #allocation13 [shape = 'u8[4096]{0}', space=vmem, size = 0x1000, scoped, tag = 'input window, operand 6, single buffered']
    #allocation14 [shape = 'u8[262144]{0}', space=vmem, size = 0x40000, scoped, tag = 'input window, operand 7, single buffered']
    #allocation15 [shape = 's32[1]{0}', space=sflag, size = 0x4, scoped, tag = 'scoped memory for tpu_custom_call.1']
    #allocation16 [shape = 'u8[512]{0}', space=vmem, size = 0x400, scoped, tag = 'input window, operand 8, single buffered']
    #allocation17 [shape = 'u8[8192]{0}', space=vmem, size = 0x2000, scoped, tag = 'output window, operand 0, single buffered']
    %14 = vsyncpa [#allocation3], 0
    %15 = vsyncpa [#allocation6], 0
    %16 = vsyncpa [#allocation9], 0
    %17 = vsyncpa [#allocation12], 0
    %18 = vsyncpa [#allocation15], 0
    %19 = vsyncpa [#allocation4], 0
    // Predicated region
    $region2: #{tpu_custom_call.1} parent=1 // pred_check
      _
    $region3: #{tpu_custom_call.1} parent=1 // pred_check_branch
      %21 = sbr.rel (0) target = $region5
    $region4: #{tpu_custom_call.1} parent=1 // pred_region
      %s23 = ssub.s32 256, 256
      %24 = vsyncadd [#allocation3], %s23
      %s25 = sshll.u32 [#allocation2], 4
      %s26 = int_to_ptr.vmem [resolvable:$true] %s25
      %31 = dma.hbm_to_vmem [thread:$0]  %s0, 256, %s26, [#allocation3], 128, 128, 8
    $region5: #{tpu_custom_call.1} parent=1 // pred_fallthru
      _
    // Predicated region
    $region6: #{tpu_custom_call.1} parent=1 // pred_check
      _
    $region7: #{tpu_custom_call.1} parent=1 // pred_check_branch
      %33 = sbr.rel (0) target = $region9
    $region8: #{tpu_custom_call.1} parent=1 // pred_region
      %s35 = ssub.s32 2048, 2048
      %36 = vsyncadd [#allocation6], %s35
      %s37 = sshll.u32 [#allocation5], 4
      %s38 = int_to_ptr.vmem [resolvable:$true] %s37
      %43 = dma.hbm_to_vmem [thread:$0]  %s1, 2048, %s38, [#allocation6], 512, 512, 32
    $region9: #{tpu_custom_call.1} parent=1 // pred_fallthru
      _
    // Predicated region
    $region10: #{tpu_custom_call.1} parent=1 // pred_check
      _
    $region11: #{tpu_custom_call.1} parent=1 // pred_check_branch
      %45 = sbr.rel (0) target = $region13
    $region12: #{tpu_custom_call.1} parent=1 // pred_region
      %s47 = ssub.s32 128, 128
      %48 = vsyncadd [#allocation6], %s47
      %s50 = sshll.u32 [#allocation7], 4
      %s51 = int_to_ptr.vmem [resolvable:$true] %s50
      %53 = dma.hbm_to_vmem [thread:$0]  %s2, 128, %s51, [#allocation6]
    $region13: #{tpu_custom_call.1} parent=1 // pred_fallthru
      _
    // Predicated region
    $region14: #{tpu_custom_call.1} parent=1 // pred_check
      _
    $region15: #{tpu_custom_call.1} parent=1 // pred_check_branch
      %55 = sbr.rel (0) target = $region17
    $region16: #{tpu_custom_call.1} parent=1 // pred_region
      %s57 = ssub.s32 65536, 65536
      %58 = vsyncadd [#allocation9], %s57
      %s59 = sshll.u32 [#allocation8], 4
      %s60 = int_to_ptr.vmem [resolvable:$true] %s59
      %65 = dma.hbm_to_vmem [thread:$0]  %s3, 65536, %s60, [#allocation9], 512, 512, 32
    $region17: #{tpu_custom_call.1} parent=1 // pred_fallthru
      _
    // Predicated region
    $region18: #{tpu_custom_call.1} parent=1 // pred_check
      _
    $region19: #{tpu_custom_call.1} parent=1 // pred_check_branch
      %67 = sbr.rel (0) target = $region21
    $region20: #{tpu_custom_call.1} parent=1 // pred_region
      %s69 = ssub.s32 128, 128
      %70 = vsyncadd [#allocation9], %s69
      %s72 = sshll.u32 [#allocation10], 4
      %s73 = int_to_ptr.vmem [resolvable:$true] %s72
      %75 = dma.hbm_to_vmem [thread:$0]  %s4, 128, %s73, [#allocation9]
    $region21: #{tpu_custom_call.1} parent=1 // pred_fallthru
      _
    // Predicated region
    $region22: #{tpu_custom_call.1} parent=1 // pred_check
      _
    $region23: #{tpu_custom_call.1} parent=1 // pred_check_branch
      %77 = sbr.rel (0) target = $region25
    $region24: #{tpu_custom_call.1} parent=1 // pred_region
      %s79 = ssub.s32 65536, 65536
      %80 = vsyncadd [#allocation12], %s79
      %s81 = sshll.u32 [#allocation11], 4
      %s82 = int_to_ptr.vmem [resolvable:$true] %s81
      %87 = dma.hbm_to_vmem [thread:$0]  %s5, 65536, %s82, [#allocation12], 512, 512, 32
    $region25: #{tpu_custom_call.1} parent=1 // pred_fallthru
      _
    // Predicated region
    $region26: #{tpu_custom_call.1} parent=1 // pred_check
      _
    $region27: #{tpu_custom_call.1} parent=1 // pred_check_branch
      %89 = sbr.rel (0) target = $region29
    $region28: #{tpu_custom_call.1} parent=1 // pred_region
      %s91 = ssub.s32 128, 128
      %92 = vsyncadd [#allocation12], %s91
      %s94 = sshll.u32 [#allocation13], 4
      %s95 = int_to_ptr.vmem [resolvable:$true] %s94
      %97 = dma.hbm_to_vmem [thread:$0]  %s6, 128, %s95, [#allocation12]
    $region29: #{tpu_custom_call.1} parent=1 // pred_fallthru
      _
    // Predicated region
    $region30: #{tpu_custom_call.1} parent=1 // pred_check
      _
    $region31: #{tpu_custom_call.1} parent=1 // pred_check_branch
      %99 = sbr.rel (0) target = $region33
    $region32: #{tpu_custom_call.1} parent=1 // pred_region
      %s101 = ssub.s32 8192, 8192
      %102 = vsyncadd [#allocation15], %s101
      %s103 = sshll.u32 [#allocation14], 4
      %s104 = int_to_ptr.vmem [resolvable:$true] %s103
      %109 = dma.hbm_to_vmem [thread:$0]  %s7, 8192, %s104, [#allocation15], 64, 64, 4
    $region33: #{tpu_custom_call.1} parent=1 // pred_fallthru
      _
    // Predicated region
    $region34: #{tpu_custom_call.1} parent=1 // pred_check
      _
    $region35: #{tpu_custom_call.1} parent=1 // pred_check_branch
      %111 = sbr.rel (0) target = $region37
    $region36: #{tpu_custom_call.1} parent=1 // pred_region
      %s113 = ssub.s32 16, 16
      %114 = vsyncadd [#allocation15], %s113
      %s116 = sshll.u32 [#allocation16], 4
      %s117 = int_to_ptr.vmem [resolvable:$true] %s116
      %119 = dma.hbm_to_vmem [thread:$0]  %s8, 16, %s117, [#allocation15]
    $region37: #{tpu_custom_call.1} parent=1 // pred_fallthru
      _
    // Predicated region
    $region38: #{tpu_custom_call.1} parent=1 // pred_check
      _
    $region39: #{tpu_custom_call.1} parent=1 // pred_check_branch
      %121 = sbr.rel (0) target = $region41
    $region40: #{tpu_custom_call.1} parent=1 // pred_region
      %122 = dma.done [#allocation3], 256
    $region41: #{tpu_custom_call.1} parent=1 // pred_fallthru
      _
    // Predicated region
    $region42: #{tpu_custom_call.1} parent=1 // pred_check
      _
    $region43: #{tpu_custom_call.1} parent=1 // pred_check_branch
      %124 = sbr.rel (0) target = $region45
    $region44: #{tpu_custom_call.1} parent=1 // pred_region
      %125 = dma.done [#allocation6], 2048
    $region45: #{tpu_custom_call.1} parent=1 // pred_fallthru
      _
    // Predicated region
    $region46: #{tpu_custom_call.1} parent=1 // pred_check
      _
    $region47: #{tpu_custom_call.1} parent=1 // pred_check_branch
      %127 = sbr.rel (0) target = $region49
    $region48: #{tpu_custom_call.1} parent=1 // pred_region
      %128 = dma.done [#allocation6], 128
    $region49: #{tpu_custom_call.1} parent=1 // pred_fallthru
      _
    // Predicated region
    $region50: #{tpu_custom_call.1} parent=1 // pred_check
      _
    $region51: #{tpu_custom_call.1} parent=1 // pred_check_branch
      %130 = sbr.rel (0) target = $region53
    $region52: #{tpu_custom_call.1} parent=1 // pred_region
      %131 = dma.done [#allocation9], 65536
    $region53: #{tpu_custom_call.1} parent=1 // pred_fallthru
      _
    // Predicated region
    $region54: #{tpu_custom_call.1} parent=1 // pred_check
      _
    $region55: #{tpu_custom_call.1} parent=1 // pred_check_branch
      %133 = sbr.rel (0) target = $region57
    $region56: #{tpu_custom_call.1} parent=1 // pred_region
      %134 = dma.done [#allocation9], 128
    $region57: #{tpu_custom_call.1} parent=1 // pred_fallthru
      _
    // Predicated region
    $region58: #{tpu_custom_call.1} parent=1 // pred_check
      _
    $region59: #{tpu_custom_call.1} parent=1 // pred_check_branch
      %136 = sbr.rel (0) target = $region61
    $region60: #{tpu_custom_call.1} parent=1 // pred_region
      %137 = dma.done [#allocation12], 65536
    $region61: #{tpu_custom_call.1} parent=1 // pred_fallthru
      _
    // Predicated region
    $region62: #{tpu_custom_call.1} parent=1 // pred_check
      _
    $region63: #{tpu_custom_call.1} parent=1 // pred_check_branch
      %139 = sbr.rel (0) target = $region65
    $region64: #{tpu_custom_call.1} parent=1 // pred_region
      %140 = dma.done [#allocation12], 128
    $region65: #{tpu_custom_call.1} parent=1 // pred_fallthru
      _
    // Predicated region
    $region66: #{tpu_custom_call.1} parent=1 // pred_check
      _
    $region67: #{tpu_custom_call.1} parent=1 // pred_check_branch
      %142 = sbr.rel (0) target = $region69
    $region68: #{tpu_custom_call.1} parent=1 // pred_region
      %143 = dma.done [#allocation15], 8192
    $region69: #{tpu_custom_call.1} parent=1 // pred_fallthru
      _
    // Predicated region
    $region70: #{tpu_custom_call.1} parent=1 // pred_check
      _
    $region71: #{tpu_custom_call.1} parent=1 // pred_check_branch
      %145 = sbr.rel (0) target = $region73
    $region72: #{tpu_custom_call.1} parent=1 // pred_region
      %146 = dma.done [#allocation15], 16
    $region73: #{tpu_custom_call.1} parent=1 // pred_fallthru
      _
    %v148 = vld [vmem:[#allocation2] sm:$0xff]
    %v149 = vld [vmem:[#allocation2 + $0x8] sm:$0xff]
    %v150 = vpack.c.bf16 %v149, %v148
    %v151 = vld [vmem:[#allocation5] sm:$0xff]
    %v152 = vld [vmem:[#allocation5 + $0x8] sm:$0xff]
    %v153 = vld [vmem:[#allocation5 + $0x10] sm:$0xff]
    %v154 = vld [vmem:[#allocation5 + $0x18] sm:$0xff]
    %v155 = vld [vmem:[#allocation5 + $0x20] sm:$0xff]
    %v156 = vld [vmem:[#allocation5 + $0x28] sm:$0xff]
    %v157 = vld [vmem:[#allocation5 + $0x30] sm:$0xff]
    %v158 = vld [vmem:[#allocation5 + $0x38] sm:$0xff]
    %v159 = vld [vmem:[#allocation5 + $0x40] sm:$0xff]
    %v160 = vld [vmem:[#allocation5 + $0x48] sm:$0xff]
    %v161 = vld [vmem:[#allocation5 + $0x50] sm:$0xff]
    %v162 = vld [vmem:[#allocation5 + $0x58] sm:$0xff]
    %v163 = vld [vmem:[#allocation5 + $0x60] sm:$0xff]
    %v164 = vld [vmem:[#allocation5 + $0x68] sm:$0xff]
    %v165 = vld [vmem:[#allocation5 + $0x70] sm:$0xff]
    %v166 = vld [vmem:[#allocation5 + $0x78] sm:$0xff]
    %v167 = vld [vmem:[#allocation7] sm:$0xff]
    %v169 = vlaneseq
    %v170 = vshrl.u32 %v169, 7
    %v171 = vsub.s32 0, %v170
    %v172 = vrot.slane %v167, %v171
    %v173 = vlaneseq
    %v174 = vshrl.u32 %v173, 7
    %v175 = vsub.s32 1, %v174
    %v176 = vrot.slane %v167, %v175
    %v177 = vlaneseq
    %v178 = vshrl.u32 %v177, 7
    %v179 = vsub.s32 2, %v178
    %v180 = vrot.slane %v167, %v179
    %v181 = vlaneseq
    %v182 = vshrl.u32 %v181, 7
    %v183 = vsub.s32 3, %v182
    %v184 = vrot.slane %v167, %v183
    %v185 = vlaneseq
    %v186 = vshrl.u32 %v185, 7
    %v187 = vsub.s32 4, %v186
    %v188 = vrot.slane %v167, %v187
    %v189 = vlaneseq
    %v190 = vshrl.u32 %v189, 7
    %v191 = vsub.s32 5, %v190
    %v192 = vrot.slane %v167, %v191
    %v193 = vlaneseq
    %v194 = vshrl.u32 %v193, 7
    %v195 = vsub.s32 6, %v194
    %v196 = vrot.slane %v167, %v195
    %v197 = vlaneseq
    %v198 = vshrl.u32 %v197, 7
    %v199 = vsub.s32 7, %v198
    %v200 = vrot.slane %v167, %v199
    %v225 = vunpack.c.l.b16 %v151
    %v226 = vunpack.c.h.b16 %v151
    %v227 = vunpack.c.l.b16 %v152
    %v228 = vunpack.c.h.b16 %v152
    %v229 = vunpack.c.l.b16 %v153
    %v230 = vunpack.c.h.b16 %v153
    %v231 = vunpack.c.l.b16 %v154
    %v232 = vunpack.c.h.b16 %v154
    %v233 = vunpack.c.l.b16 %v155
    %v234 = vunpack.c.h.b16 %v155
    %v235 = vunpack.c.l.b16 %v156
    %v236 = vunpack.c.h.b16 %v156
    %v237 = vunpack.c.l.b16 %v157
    %v238 = vunpack.c.h.b16 %v157
    %v239 = vunpack.c.l.b16 %v158
    %v240 = vunpack.c.h.b16 %v158
    %v241 = vunpack.c.l.b16 %v159
    %v242 = vunpack.c.h.b16 %v159
    %v243 = vunpack.c.l.b16 %v160
    %v244 = vunpack.c.h.b16 %v160
    %v245 = vunpack.c.l.b16 %v161
    %v246 = vunpack.c.h.b16 %v161
    %v247 = vunpack.c.l.b16 %v162
    %v248 = vunpack.c.h.b16 %v162
    %v249 = vunpack.c.l.b16 %v163
    %v250 = vunpack.c.h.b16 %v163
    %v251 = vunpack.c.l.b16 %v164
    %v252 = vunpack.c.h.b16 %v164
    %v253 = vunpack.c.l.b16 %v165
    %v254 = vunpack.c.h.b16 %v165
    %v255 = vunpack.c.l.b16 %v166
    %v256 = vunpack.c.h.b16 %v166
    %v257 = vpack.c.b16 %v233, %v225
    %v258 = vpack.c.b16 %v234, %v226
    %v259 = vpack.c.b16 %v235, %v227
    %v260 = vpack.c.b16 %v236, %v228
    %v261 = vpack.c.b16 %v237, %v229
    %v262 = vpack.c.b16 %v238, %v230
    %v263 = vpack.c.b16 %v239, %v231
    %v264 = vpack.c.b16 %v240, %v232
    %v265 = vpack.c.b16 %v249, %v241
    %v266 = vpack.c.b16 %v250, %v242
    %v267 = vpack.c.b16 %v251, %v243
    %v268 = vpack.c.b16 %v252, %v244
    %v269 = vpack.c.b16 %v253, %v245
    %v270 = vpack.c.b16 %v254, %v246
    %v271 = vpack.c.b16 %v255, %v247
    %v272 = vpack.c.b16 %v256, %v248
    %vm289 = vcmask 261120
    %v291 = vsel %vm289, %v150, 0
    %293 = vmatprep.subr.bf16.mxu0 0
    %294 = vmatpush1.bf16.msra.mxu0 0
    %295 = vmatprep.subr.bf16.mxu0 0
    %296 = vmatpush1.bf16.msra.mxu0 0
    %297 = vmatprep.subr.bf16.mxu0 0
    %298 = vmatpush1.bf16.msra.mxu0 0
    %299 = vmatprep.subr.bf16.mxu0 0
    %300 = vmatpush1.bf16.msra.mxu0 0
    %301 = vmatprep.subr.bf16.mxu0 0
    %302 = vmatpush1.bf16.msra.mxu0 0
    %303 = vmatprep.subr.bf16.mxu0 0
    %304 = vmatpush1.bf16.msra.mxu0 0
    %305 = vmatprep.subr.bf16.mxu0 %v266
    %306 = vmatpush1.bf16.msra.mxu0 %v265
    %307 = vmatprep.subr.bf16.mxu0 %v258
    %308 = vmatpush1.bf16.msra.mxu0 %v257
    %309 = vmatprep.subr.bf16.mxu0 0
    %310 = vmatpush2.bf16.msra.mxu0 0
    %311 = vmatprep.subr.bf16.mxu0 0
    %312 = vmatpush2.bf16.msra.mxu0 0
    %313 = vmatprep.subr.bf16.mxu0 0
    %314 = vmatpush2.bf16.msra.mxu0 0
    %315 = vmatprep.subr.bf16.mxu0 0
    %316 = vmatpush2.bf16.msra.mxu0 0
    %317 = vmatprep.subr.bf16.mxu0 0
    %318 = vmatpush2.bf16.msra.mxu0 0
    %319 = vmatprep.subr.bf16.mxu0 0
    %320 = vmatpush2.bf16.msra.mxu0 0
    %321 = vmatprep.subr.bf16.mxu0 0
    %322 = vmatpush2.bf16.msra.mxu0 0
    %323 = vmatprep.subr.bf16.mxu0 0
    %324 = vmatpush2.bf16.msra.mxu0 0
    %325 = vmatprep.mubr.bf16.mxu0 0
    %326 = vmatmul.mubr.bf16.gmra.mxu0 %v291
    %v327 = vpop.f32.mrf.mxu0
    %v328 = vadd.f32 %v172, %v327
    %v329 = vpop.f32.mrf.mxu0
    %v330 = vadd.f32 %v176, %v329
    %v331 = vpop.f32.mrf.mxu0
    %v332 = vadd.f32 %v172, %v331
    %v333 = vpop.f32.mrf.mxu0
    %v334 = vadd.f32 %v176, %v333
    %335 = vdwg.mxu0
    %336 = vmatprep.subr.bf16.mxu0 0
    %337 = vmatpush1.bf16.msra.mxu0 0
    %338 = vmatprep.subr.bf16.mxu0 0
    %339 = vmatpush1.bf16.msra.mxu0 0
    %340 = vmatprep.subr.bf16.mxu0 0
    %341 = vmatpush1.bf16.msra.mxu0 0
    %342 = vmatprep.subr.bf16.mxu0 0
    %343 = vmatpush1.bf16.msra.mxu0 0
    %344 = vmatprep.subr.bf16.mxu0 0
    %345 = vmatpush1.bf16.msra.mxu0 0
    %346 = vmatprep.subr.bf16.mxu0 0
    %347 = vmatpush1.bf16.msra.mxu0 0
    %348 = vmatprep.subr.bf16.mxu0 %v268
    %349 = vmatpush1.bf16.msra.mxu0 %v267
    %350 = vmatprep.subr.bf16.mxu0 %v260
    %351 = vmatpush1.bf16.msra.mxu0 %v259
    %352 = vmatprep.subr.bf16.mxu0 0
    %353 = vmatpush2.bf16.msra.mxu0 0
    %354 = vmatprep.subr.bf16.mxu0 0
    %355 = vmatpush2.bf16.msra.mxu0 0
    %356 = vmatprep.subr.bf16.mxu0 0
    %357 = vmatpush2.bf16.msra.mxu0 0
    %358 = vmatprep.subr.bf16.mxu0 0
    %359 = vmatpush2.bf16.msra.mxu0 0
    %360 = vmatprep.subr.bf16.mxu0 0
    %361 = vmatpush2.bf16.msra.mxu0 0
    %362 = vmatprep.subr.bf16.mxu0 0
    %363 = vmatpush2.bf16.msra.mxu0 0
    %364 = vmatprep.subr.bf16.mxu0 0
    %365 = vmatpush2.bf16.msra.mxu0 0
    %366 = vmatprep.subr.bf16.mxu0 0
    %367 = vmatpush2.bf16.msra.mxu0 0
    %368 = vmatprep.mubr.bf16.mxu0 0
    %369 = vmatmul.mubr.bf16.gmra.mxu0 %v291
    %v370 = vpop.f32.mrf.mxu0
    %v371 = vadd.f32 %v180, %v370
    %v372 = vpop.f32.mrf.mxu0
    %v373 = vadd.f32 %v184, %v372
    %v374 = vpop.f32.mrf.mxu0
    %v375 = vadd.f32 %v180, %v374
    %v376 = vpop.f32.mrf.mxu0
    %v377 = vadd.f32 %v184, %v376
    %378 = vdwg.mxu0
    %379 = vmatprep.subr.bf16.mxu0 0
    %380 = vmatpush1.bf16.msra.mxu0 0
    %381 = vmatprep.subr.bf16.mxu0 0
    %382 = vmatpush1.bf16.msra.mxu0 0
    %383 = vmatprep.subr.bf16.mxu0 0
    %384 = vmatpush1.bf16.msra.mxu0 0
    %385 = vmatprep.subr.bf16.mxu0 0
    %386 = vmatpush1.bf16.msra.mxu0 0
    %387 = vmatprep.subr.bf16.mxu0 0
    %388 = vmatpush1.bf16.msra.mxu0 0
    %389 = vmatprep.subr.bf16.mxu0 0
    %390 = vmatpush1.bf16.msra.mxu0 0
    %391 = vmatprep.subr.bf16.mxu0 %v270
    %392 = vmatpush1.bf16.msra.mxu0 %v269
    %393 = vmatprep.subr.bf16.mxu0 %v262
    %394 = vmatpush1.bf16.msra.mxu0 %v261
    %395 = vmatprep.subr.bf16.mxu0 0
    %396 = vmatpush2.bf16.msra.mxu0 0
    %397 = vmatprep.subr.bf16.mxu0 0
    %398 = vmatpush2.bf16.msra.mxu0 0
    %399 = vmatprep.subr.bf16.mxu0 0
    %400 = vmatpush2.bf16.msra.mxu0 0
    %401 = vmatprep.subr.bf16.mxu0 0
    %402 = vmatpush2.bf16.msra.mxu0 0
    %403 = vmatprep.subr.bf16.mxu0 0
    %404 = vmatpush2.bf16.msra.mxu0 0
    %405 = vmatprep.subr.bf16.mxu0 0
    %406 = vmatpush2.bf16.msra.mxu0 0
    %407 = vmatprep.subr.bf16.mxu0 0
    %408 = vmatpush2.bf16.msra.mxu0 0
    %409 = vmatprep.subr.bf16.mxu0 0
    %410 = vmatpush2.bf16.msra.mxu0 0
    %411 = vmatprep.mubr.bf16.mxu0 0
    %412 = vmatmul.mubr.bf16.gmra.mxu0 %v291
    %v413 = vpop.f32.mrf.mxu0
    %v414 = vadd.f32 %v188, %v413
    %v415 = vpop.f32.mrf.mxu0
    %v416 = vadd.f32 %v192, %v415
    %v417 = vpop.f32.mrf.mxu0
    %v418 = vadd.f32 %v188, %v417
    %v419 = vpop.f32.mrf.mxu0
    %v420 = vadd.f32 %v192, %v419
    %421 = vdwg.mxu0
    %422 = vmatprep.subr.bf16.mxu0 0
    %423 = vmatpush1.bf16.msra.mxu0 0
    %424 = vmatprep.subr.bf16.mxu0 0
    %425 = vmatpush1.bf16.msra.mxu0 0
    %426 = vmatprep.subr.bf16.mxu0 0
    %427 = vmatpush1.bf16.msra.mxu0 0
    %428 = vmatprep.subr.bf16.mxu0 0
    %429 = vmatpush1.bf16.msra.mxu0 0
    %430 = vmatprep.subr.bf16.mxu0 0
    %431 = vmatpush1.bf16.msra.mxu0 0
    %432 = vmatprep.subr.bf16.mxu0 0
    %433 = vmatpush1.bf16.msra.mxu0 0
    %434 = vmatprep.subr.bf16.mxu0 %v272
    %435 = vmatpush1.bf16.msra.mxu0 %v271
    %436 = vmatprep.subr.bf16.mxu0 %v264
    %437 = vmatpush1.bf16.msra.mxu0 %v263
    %438 = vmatprep.subr.bf16.mxu0 0
    %439 = vmatpush2.bf16.msra.mxu0 0
    %440 = vmatprep.subr.bf16.mxu0 0
    %441 = vmatpush2.bf16.msra.mxu0 0
    %442 = vmatprep.subr.bf16.mxu0 0
    %443 = vmatpush2.bf16.msra.mxu0 0
    %444 = vmatprep.subr.bf16.mxu0 0
    %445 = vmatpush2.bf16.msra.mxu0 0
    %446 = vmatprep.subr.bf16.mxu0 0
    %447 = vmatpush2.bf16.msra.mxu0 0
    %448 = vmatprep.subr.bf16.mxu0 0
    %449 = vmatpush2.bf16.msra.mxu0 0
    %450 = vmatprep.subr.bf16.mxu0 0
    %451 = vmatpush2.bf16.msra.mxu0 0
    %452 = vmatprep.subr.bf16.mxu0 0
    %453 = vmatpush2.bf16.msra.mxu0 0
    %454 = vmatprep.mubr.bf16.mxu0 0
    %455 = vmatmul.mubr.bf16.gmra.mxu0 %v291
    %v456 = vpop.f32.mrf.mxu0
    %v457 = vadd.f32 %v196, %v456
    %v458 = vpop.f32.mrf.mxu0
    %v459 = vadd.f32 %v200, %v458
    %v460 = vpop.f32.mrf.mxu0
    %v461 = vadd.f32 %v196, %v460
    %v462 = vpop.f32.mrf.mxu0
    %v463 = vadd.f32 %v200, %v462
    %464 = vdwg.mxu0
    %v465 = vmul.f32 %v328, 0.01
    %v466 = vmul.f32 %v330, 0.01
    %v467 = vmul.f32 %v371, 0.01
    %v468 = vmul.f32 %v373, 0.01
    %v469 = vmul.f32 %v414, 0.01
    %v470 = vmul.f32 %v416, 0.01
    %v471 = vmul.f32 %v457, 0.01
    %v472 = vmul.f32 %v459, 0.01
    %v473 = vmul.f32 %v332, 0.01
    %v474 = vmul.f32 %v334, 0.01
    %v475 = vmul.f32 %v375, 0.01
    %v476 = vmul.f32 %v377, 0.01
    %v477 = vmul.f32 %v418, 0.01
    %v478 = vmul.f32 %v420, 0.01
    %v479 = vmul.f32 %v461, 0.01
    %v480 = vmul.f32 %v463, 0.01
    %v481 = vmax.f32 %v328, %v465
    %v482 = vmax.f32 %v330, %v466
    %v483 = vmax.f32 %v371, %v467
    %v484 = vmax.f32 %v373, %v468
    %v485 = vmax.f32 %v414, %v469
    %v486 = vmax.f32 %v416, %v470
    %v487 = vmax.f32 %v457, %v471
    %v488 = vmax.f32 %v459, %v472
    %v489 = vmax.f32 %v332, %v473
    %v490 = vmax.f32 %v334, %v474
    %v491 = vmax.f32 %v375, %v475
    %v492 = vmax.f32 %v377, %v476
    %v493 = vmax.f32 %v418, %v477
    %v494 = vmax.f32 %v420, %v478
    %v495 = vmax.f32 %v461, %v479
    %v496 = vmax.f32 %v463, %v480
    %v497 = vadd.f32 %v481, %v482
    %v498 = vadd.f32 %v497, %v483
    %v499 = vadd.f32 %v498, %v484
    %v500 = vadd.f32 %v499, %v485
    %v501 = vadd.f32 %v500, %v486
    %v502 = vadd.f32 %v501, %v487
    %v503 = vadd.f32 %v502, %v488
    %504 = vadd.xlane.f32.xlu0 %v503
    %v505 = vpop.xlane.xlu0 %504
    %v506 = vadd.f32 %v489, %v490
    %v507 = vadd.f32 %v506, %v491
    %v508 = vadd.f32 %v507, %v492
    %v509 = vadd.f32 %v508, %v493
    %v510 = vadd.f32 %v509, %v494
    %v511 = vadd.f32 %v510, %v495
    %v512 = vadd.f32 %v511, %v496
    %513 = vadd.xlane.f32.xlu0 %v512
    %v514 = vpop.xlane.xlu0 %513
    %v515 = vrcp.pop 1024.0
    %v516 = vmul.f32 %v505, %v515
    %v517 = vmul.f32 %v514, %v515
    %v518 = vmul.f32 %v481, %v481
    %v519 = vmul.f32 %v482, %v482
    %v520 = vmul.f32 %v483, %v483
    %v521 = vmul.f32 %v484, %v484
    %v522 = vmul.f32 %v485, %v485
    %v523 = vmul.f32 %v486, %v486
    %v524 = vmul.f32 %v487, %v487
    %v525 = vmul.f32 %v488, %v488
    %v526 = vmul.f32 %v489, %v489
    %v527 = vmul.f32 %v490, %v490
    %v528 = vmul.f32 %v491, %v491
    %v529 = vmul.f32 %v492, %v492
    %v530 = vmul.f32 %v493, %v493
    %v531 = vmul.f32 %v494, %v494
    %v532 = vmul.f32 %v495, %v495
    %v533 = vmul.f32 %v496, %v496
    %v534 = vadd.f32 %v518, %v519
    %v535 = vadd.f32 %v534, %v520
    %v536 = vadd.f32 %v535, %v521
    %v537 = vadd.f32 %v536, %v522
    %v538 = vadd.f32 %v537, %v523
    %v539 = vadd.f32 %v538, %v524
    %v540 = vadd.f32 %v539, %v525
    %541 = vadd.xlane.f32.xlu0 %v540
    %v542 = vpop.xlane.xlu0 %541
    %v543 = vadd.f32 %v526, %v527
    %v544 = vadd.f32 %v543, %v528
    %v545 = vadd.f32 %v544, %v529
    %v546 = vadd.f32 %v545, %v530
    %v547 = vadd.f32 %v546, %v531
    %v548 = vadd.f32 %v547, %v532
    %v549 = vadd.f32 %v548, %v533
    %550 = vadd.xlane.f32.xlu0 %v549
    %v551 = vpop.xlane.xlu0 %550
    %v552 = vmul.f32 %v542, %v515
    %v553 = vmul.f32 %v551, %v515
    %v554 = vmul.f32 %v516, %v516
    %v555 = vmul.f32 %v517, %v517
    %v556 = vsub.f32 %v552, %v554
    %v557 = vsub.f32 %v553, %v555
    %v558 = vmax.f32 %v556, 0.0
    %v559 = vmax.f32 %v557, 0.0
    %v560 = vsub.f32 %v481, %v516
    %v561 = vsub.f32 %v482, %v516
    %v562 = vsub.f32 %v483, %v516
    %v563 = vsub.f32 %v484, %v516
    %v564 = vsub.f32 %v485, %v516
    %v565 = vsub.f32 %v486, %v516
    %v566 = vsub.f32 %v487, %v516
    %v567 = vsub.f32 %v488, %v516
    %v568 = vsub.f32 %v489, %v517
    %v569 = vsub.f32 %v490, %v517
    %v570 = vsub.f32 %v491, %v517
    %v571 = vsub.f32 %v492, %v517
    %v572 = vsub.f32 %v493, %v517
    %v573 = vsub.f32 %v494, %v517
    %v574 = vsub.f32 %v495, %v517
    %v575 = vsub.f32 %v496, %v517
    %v576 = vadd.f32 %v558, 1e-05
    %v577 = vadd.f32 %v559, 1e-05
    %v578 = vrsqrt.pop %v576
    %v579 = vrsqrt.pop %v577
    %v580 = vmul.f32 %v560, %v578
    %v581 = vmul.f32 %v561, %v578
    %v582 = vmul.f32 %v562, %v578
    %v583 = vmul.f32 %v563, %v578
    %v584 = vmul.f32 %v564, %v578
    %v585 = vmul.f32 %v565, %v578
    %v586 = vmul.f32 %v566, %v578
    %v587 = vmul.f32 %v567, %v578
    %v588 = vmul.f32 %v568, %v579
    %v589 = vmul.f32 %v569, %v579
    %v590 = vmul.f32 %v570, %v579
    %v591 = vmul.f32 %v571, %v579
    %v592 = vmul.f32 %v572, %v579
    %v593 = vmul.f32 %v573, %v579
    %v594 = vmul.f32 %v574, %v579
    %v595 = vmul.f32 %v575, %v579
    %v596 = vpack.c.bf16 %v588, %v580
    %v597 = vpack.c.bf16 %v589, %v581
    %v598 = vpack.c.bf16 %v590, %v582
    %v599 = vpack.c.bf16 %v591, %v583
    %v600 = vpack.c.bf16 %v592, %v584
    %v601 = vpack.c.bf16 %v593, %v585
    %v602 = vpack.c.bf16 %v594, %v586
    %v603 = vpack.c.bf16 %v595, %v587
    %v604 = vld [vmem:[#allocation8] sm:$0xff]
    %v605 = vld [vmem:[#allocation8 + $0x8] sm:$0xff]
    %v606 = vld [vmem:[#allocation8 + $0x10] sm:$0xff]
    %v607 = vld [vmem:[#allocation8 + $0x18] sm:$0xff]
    %v608 = vld [vmem:[#allocation8 + $0x20] sm:$0xff]
    %v609 = vld [vmem:[#allocation8 + $0x28] sm:$0xff]
    %v610 = vld [vmem:[#allocation8 + $0x30] sm:$0xff]
    %v611 = vld [vmem:[#allocation8 + $0x38] sm:$0xff]
    %v612 = vld [vmem:[#allocation8 + $0x40] sm:$0xff]
    %v613 = vld [vmem:[#allocation8 + $0x48] sm:$0xff]
    %v614 = vld [vmem:[#allocation8 + $0x50] sm:$0xff]
    %v615 = vld [vmem:[#allocation8 + $0x58] sm:$0xff]
    %v616 = vld [vmem:[#allocation8 + $0x60] sm:$0xff]
    %v617 = vld [vmem:[#allocation8 + $0x68] sm:$0xff]
    %v618 = vld [vmem:[#allocation8 + $0x70] sm:$0xff]
    %v619 = vld [vmem:[#allocation8 + $0x78] sm:$0xff]
    %v620 = vld [vmem:[#allocation8 + $0x80] sm:$0xff]
    %v621 = vld [vmem:[#allocation8 + $0x88] sm:$0xff]
    %v622 = vld [vmem:[#allocation8 + $0x90] sm:$0xff]
    %v623 = vld [vmem:[#allocation8 + $0x98] sm:$0xff]
    %v624 = vld [vmem:[#allocation8 + $0xa0] sm:$0xff]
    %v625 = vld [vmem:[#allocation8 + $0xa8] sm:$0xff]
    %v626 = vld [vmem:[#allocation8 + $0xb0] sm:$0xff]
    %v627 = vld [vmem:[#allocation8 + $0xb8] sm:$0xff]
    %v628 = vld [vmem:[#allocation8 + $0xc0] sm:$0xff]
    %v629 = vld [vmem:[#allocation8 + $0xc8] sm:$0xff]
    %v630 = vld [vmem:[#allocation8 + $0xd0] sm:$0xff]
    %v631 = vld [vmem:[#allocation8 + $0xd8] sm:$0xff]
    %v632 = vld [vmem:[#allocation8 + $0xe0] sm:$0xff]
    %v633 = vld [vmem:[#allocation8 + $0xe8] sm:$0xff]
    %v634 = vld [vmem:[#allocation8 + $0xf0] sm:$0xff]
    %v635 = vld [vmem:[#allocation8 + $0xf8] sm:$0xff]
    %v636 = vld [vmem:[#allocation8 + $0x100] sm:$0xff]
    %v637 = vld [vmem:[#allocation8 + $0x108] sm:$0xff]
    %v638 = vld [vmem:[#allocation8 + $0x110] sm:$0xff]
    %v639 = vld [vmem:[#allocation8 + $0x118] sm:$0xff]
    %v640 = vld [vmem:[#allocation8 + $0x120] sm:$0xff]
    %v641 = vld [vmem:[#allocation8 + $0x128] sm:$0xff]
    %v642 = vld [vmem:[#allocation8 + $0x130] sm:$0xff]
    %v643 = vld [vmem:[#allocation8 + $0x138] sm:$0xff]
    %v644 = vld [vmem:[#allocation8 + $0x140] sm:$0xff]
    %v645 = vld [vmem:[#allocation8 + $0x148] sm:$0xff]
    %v646 = vld [vmem:[#allocation8 + $0x150] sm:$0xff]
    %v647 = vld [vmem:[#allocation8 + $0x158] sm:$0xff]
    %v648 = vld [vmem:[#allocation8 + $0x160] sm:$0xff]
    %v649 = vld [vmem:[#allocation8 + $0x168] sm:$0xff]
    %v650 = vld [vmem:[#allocation8 + $0x170] sm:$0xff]
    %v651 = vld [vmem:[#allocation8 + $0x178] sm:$0xff]
    %v652 = vld [vmem:[#allocation8 + $0x180] sm:$0xff]
    %v653 = vld [vmem:[#allocation8 + $0x188] sm:$0xff]
    %v654 = vld [vmem:[#allocation8 + $0x190] sm:$0xff]
    %v655 = vld [vmem:[#allocation8 + $0x198] sm:$0xff]
    %v656 = vld [vmem:[#allocation8 + $0x1a0] sm:$0xff]
    %v657 = vld [vmem:[#allocation8 + $0x1a8] sm:$0xff]
    %v658 = vld [vmem:[#allocation8 + $0x1b0] sm:$0xff]
    %v659 = vld [vmem:[#allocation8 + $0x1b8] sm:$0xff]
    %v660 = vld [vmem:[#allocation8 + $0x1c0] sm:$0xff]
    %v661 = vld [vmem:[#allocation8 + $0x1c8] sm:$0xff]
    %v662 = vld [vmem:[#allocation8 + $0x1d0] sm:$0xff]
    %v663 = vld [vmem:[#allocation8 + $0x1d8] sm:$0xff]
    %v664 = vld [vmem:[#allocation8 + $0x1e0] sm:$0xff]
    %v665 = vld [vmem:[#allocation8 + $0x1e8] sm:$0xff]
    %v666 = vld [vmem:[#allocation8 + $0x1f0] sm:$0xff]
    %v667 = vld [vmem:[#allocation8 + $0x1f8] sm:$0xff]
    %v668 = vld [vmem:[#allocation8 + $0x200] sm:$0xff]
    %v669 = vld [vmem:[#allocation8 + $0x208] sm:$0xff]
    %v670 = vld [vmem:[#allocation8 + $0x210] sm:$0xff]
    %v671 = vld [vmem:[#allocation8 + $0x218] sm:$0xff]
    %v672 = vld [vmem:[#allocation8 + $0x220] sm:$0xff]
    %v673 = vld [vmem:[#allocation8 + $0x228] sm:$0xff]
    %v674 = vld [vmem:[#allocation8 + $0x230] sm:$0xff]
    %v675 = vld [vmem:[#allocation8 + $0x238] sm:$0xff]
    %v676 = vld [vmem:[#allocation8 + $0x240] sm:$0xff]
    %v677 = vld [vmem:[#allocation8 + $0x248] sm:$0xff]
    %v678 = vld [vmem:[#allocation8 + $0x250] sm:$0xff]
    %v679 = vld [vmem:[#allocation8 + $0x258] sm:$0xff]
    %v680 = vld [vmem:[#allocation8 + $0x260] sm:$0xff]
    %v681 = vld [vmem:[#allocation8 + $0x268] sm:$0xff]
    %v682 = vld [vmem:[#allocation8 + $0x270] sm:$0xff]
    %v683 = vld [vmem:[#allocation8 + $0x278] sm:$0xff]
    %v684 = vld [vmem:[#allocation8 + $0x280] sm:$0xff]
    %v685 = vld [vmem:[#allocation8 + $0x288] sm:$0xff]
    %v686 = vld [vmem:[#allocation8 + $0x290] sm:$0xff]
    %v687 = vld [vmem:[#allocation8 + $0x298] sm:$0xff]
    %v688 = vld [vmem:[#allocation8 + $0x2a0] sm:$0xff]
    %v689 = vld [vmem:[#allocation8 + $0x2a8] sm:$0xff]
    %v690 = vld [vmem:[#allocation8 + $0x2b0] sm:$0xff]
    %v691 = vld [vmem:[#allocation8 + $0x2b8] sm:$0xff]
    %v692 = vld [vmem:[#allocation8 + $0x2c0] sm:$0xff]
    %v693 = vld [vmem:[#allocation8 + $0x2c8] sm:$0xff]
    %v694 = vld [vmem:[#allocation8 + $0x2d0] sm:$0xff]
    %v695 = vld [vmem:[#allocation8 + $0x2d8] sm:$0xff]
    %v696 = vld [vmem:[#allocation8 + $0x2e0] sm:$0xff]
    %v697 = vld [vmem:[#allocation8 + $0x2e8] sm:$0xff]
    %v698 = vld [vmem:[#allocation8 + $0x2f0] sm:$0xff]
    %v699 = vld [vmem:[#allocation8 + $0x2f8] sm:$0xff]
    %v700 = vld [vmem:[#allocation8 + $0x300] sm:$0xff]
    %v701 = vld [vmem:[#allocation8 + $0x308] sm:$0xff]
    %v702 = vld [vmem:[#allocation8 + $0x310] sm:$0xff]
    %v703 = vld [vmem:[#allocation8 + $0x318] sm:$0xff]
    %v704 = vld [vmem:[#allocation8 + $0x320] sm:$0xff]
    %v705 = vld [vmem:[#allocation8 + $0x328] sm:$0xff]
    %v706 = vld [vmem:[#allocation8 + $0x330] sm:$0xff]
    %v707 = vld [vmem:[#allocation8 + $0x338] sm:$0xff]
    %v708 = vld [vmem:[#allocation8 + $0x340] sm:$0xff]
    %v709 = vld [vmem:[#allocation8 + $0x348] sm:$0xff]
    %v710 = vld [vmem:[#allocation8 + $0x350] sm:$0xff]
    %v711 = vld [vmem:[#allocation8 + $0x358] sm:$0xff]
    %v712 = vld [vmem:[#allocation8 + $0x360] sm:$0xff]
    %v713 = vld [vmem:[#allocation8 + $0x368] sm:$0xff]
    %v714 = vld [vmem:[#allocation8 + $0x370] sm:$0xff]
    %v715 = vld [vmem:[#allocation8 + $0x378] sm:$0xff]
    %v716 = vld [vmem:[#allocation8 + $0x380] sm:$0xff]
    %v717 = vld [vmem:[#allocation8 + $0x388] sm:$0xff]
    %v718 = vld [vmem:[#allocation8 + $0x390] sm:$0xff]
    %v719 = vld [vmem:[#allocation8 + $0x398] sm:$0xff]
    %v720 = vld [vmem:[#allocation8 + $0x3a0] sm:$0xff]
    %v721 = vld [vmem:[#allocation8 + $0x3a8] sm:$0xff]
    %v722 = vld [vmem:[#allocation8 + $0x3b0] sm:$0xff]
    %v723 = vld [vmem:[#allocation8 + $0x3b8] sm:$0xff]
    %v724 = vld [vmem:[#allocation8 + $0x3c0] sm:$0xff]
    %v725 = vld [vmem:[#allocation8 + $0x3c8] sm:$0xff]
    %v726 = vld [vmem:[#allocation8 + $0x3d0] sm:$0xff]
    %v727 = vld [vmem:[#allocation8 + $0x3d8] sm:$0xff]
    %v728 = vld [vmem:[#allocation8 + $0x3e0] sm:$0xff]
    %v729 = vld [vmem:[#allocation8 + $0x3e8] sm:$0xff]
    %v730 = vld [vmem:[#allocation8 + $0x3f0] sm:$0xff]
    %v731 = vld [vmem:[#allocation8 + $0x3f8] sm:$0xff]
    %v732 = vld [vmem:[#allocation8 + $0x400] sm:$0xff]
    %v733 = vld [vmem:[#allocation8 + $0x408] sm:$0xff]
    %v734 = vld [vmem:[#allocation8 + $0x410] sm:$0xff]
    %v735 = vld [vmem:[#allocation8 + $0x418] sm:$0xff]
    %v736 = vld [vmem:[#allocation8 + $0x420] sm:$0xff]
    %v737 = vld [vmem:[#allocation8 + $0x428] sm:$0xff]
    %v738 = vld [vmem:[#allocation8 + $0x430] sm:$0xff]
    %v739 = vld [vmem:[#allocation8 + $0x438] sm:$0xff]
    %v740 = vld [vmem:[#allocation8 + $0x440] sm:$0xff]
    %v741 = vld [vmem:[#allocation8 + $0x448] sm:$0xff]
    %v742 = vld [vmem:[#allocation8 + $0x450] sm:$0xff]
    %v743 = vld [vmem:[#allocation8 + $0x458] sm:$0xff]
    %v744 = vld [vmem:[#allocation8 + $0x460] sm:$0xff]
    %v745 = vld [vmem:[#allocation8 + $0x468] sm:$0xff]
    %v746 = vld [vmem:[#allocation8 + $0x470] sm:$0xff]
    %v747 = vld [vmem:[#allocation8 + $0x478] sm:$0xff]
    %v748 = vld [vmem:[#allocation8 + $0x480] sm:$0xff]
    %v749 = vld [vmem:[#allocation8 + $0x488] sm:$0xff]
    %v750 = vld [vmem:[#allocation8 + $0x490] sm:$0xff]
    %v751 = vld [vmem:[#allocation8 + $0x498] sm:$0xff]
    %v752 = vld [vmem:[#allocation8 + $0x4a0] sm:$0xff]
    %v753 = vld [vmem:[#allocation8 + $0x4a8] sm:$0xff]
    %v754 = vld [vmem:[#allocation8 + $0x4b0] sm:$0xff]
    %v755 = vld [vmem:[#allocation8 + $0x4b8] sm:$0xff]
    %v756 = vld [vmem:[#allocation8 + $0x4c0] sm:$0xff]
    %v757 = vld [vmem:[#allocation8 + $0x4c8] sm:$0xff]
    %v758 = vld [vmem:[#allocation8 + $0x4d0] sm:$0xff]
    %v759 = vld [vmem:[#allocation8 + $0x4d8] sm:$0xff]
    %v760 = vld [vmem:[#allocation8 + $0x4e0] sm:$0xff]
    %v761 = vld [vmem:[#allocation8 + $0x4e8] sm:$0xff]
    %v762 = vld [vmem:[#allocation8 + $0x4f0] sm:$0xff]
    %v763 = vld [vmem:[#allocation8 + $0x4f8] sm:$0xff]
    %v764 = vld [vmem:[#allocation8 + $0x500] sm:$0xff]
    %v765 = vld [vmem:[#allocation8 + $0x508] sm:$0xff]
    %v766 = vld [vmem:[#allocation8 + $0x510] sm:$0xff]
    %v767 = vld [vmem:[#allocation8 + $0x518] sm:$0xff]
    %v768 = vld [vmem:[#allocation8 + $0x520] sm:$0xff]
    %v769 = vld [vmem:[#allocation8 + $0x528] sm:$0xff]
    %v770 = vld [vmem:[#allocation8 + $0x530] sm:$0xff]
    %v771 = vld [vmem:[#allocation8 + $0x538] sm:$0xff]
    %v772 = vld [vmem:[#allocation8 + $0x540] sm:$0xff]
    %v773 = vld [vmem:[#allocation8 + $0x548] sm:$0xff]
    %v774 = vld [vmem:[#allocation8 + $0x550] sm:$0xff]
    %v775 = vld [vmem:[#allocation8 + $0x558] sm:$0xff]
    %v776 = vld [vmem:[#allocation8 + $0x560] sm:$0xff]
    %v777 = vld [vmem:[#allocation8 + $0x568] sm:$0xff]
    %v778 = vld [vmem:[#allocation8 + $0x570] sm:$0xff]
    %v779 = vld [vmem:[#allocation8 + $0x578] sm:$0xff]
    %v780 = vld [vmem:[#allocation8 + $0x580] sm:$0xff]
    %v781 = vld [vmem:[#allocation8 + $0x588] sm:$0xff]
    %v782 = vld [vmem:[#allocation8 + $0x590] sm:$0xff]
    %v783 = vld [vmem:[#allocation8 + $0x598] sm:$0xff]
    %v784 = vld [vmem:[#allocation8 + $0x5a0] sm:$0xff]
    %v785 = vld [vmem:[#allocation8 + $0x5a8] sm:$0xff]
    %v786 = vld [vmem:[#allocation8 + $0x5b0] sm:$0xff]
    %v787 = vld [vmem:[#allocation8 + $0x5b8] sm:$0xff]
    %v788 = vld [vmem:[#allocation8 + $0x5c0] sm:$0xff]
    %v789 = vld [vmem:[#allocation8 + $0x5c8] sm:$0xff]
    %v790 = vld [vmem:[#allocation8 + $0x5d0] sm:$0xff]
    %v791 = vld [vmem:[#allocation8 + $0x5d8] sm:$0xff]
    %v792 = vld [vmem:[#allocation8 + $0x5e0] sm:$0xff]
    %v793 = vld [vmem:[#allocation8 + $0x5e8] sm:$0xff]
    %v794 = vld [vmem:[#allocation8 + $0x5f0] sm:$0xff]
    %v795 = vld [vmem:[#allocation8 + $0x5f8] sm:$0xff]
    %v796 = vld [vmem:[#allocation8 + $0x600] sm:$0xff]
    %v797 = vld [vmem:[#allocation8 + $0x608] sm:$0xff]
    %v798 = vld [vmem:[#allocation8 + $0x610] sm:$0xff]
    %v799 = vld [vmem:[#allocation8 + $0x618] sm:$0xff]
    %v800 = vld [vmem:[#allocation8 + $0x620] sm:$0xff]
    %v801 = vld [vmem:[#allocation8 + $0x628] sm:$0xff]
    %v802 = vld [vmem:[#allocation8 + $0x630] sm:$0xff]
    %v803 = vld [vmem:[#allocation8 + $0x638] sm:$0xff]
    %v804 = vld [vmem:[#allocation8 + $0x640] sm:$0xff]
    %v805 = vld [vmem:[#allocation8 + $0x648] sm:$0xff]
    %v806 = vld [vmem:[#allocation8 + $0x650] sm:$0xff]
    %v807 = vld [vmem:[#allocation8 + $0x658] sm:$0xff]
    %v808 = vld [vmem:[#allocation8 + $0x660] sm:$0xff]
    %v809 = vld [vmem:[#allocation8 + $0x668] sm:$0xff]
    %v810 = vld [vmem:[#allocation8 + $0x670] sm:$0xff]
    %v811 = vld [vmem:[#allocation8 + $0x678] sm:$0xff]
    %v812 = vld [vmem:[#allocation8 + $0x680] sm:$0xff]
    %v813 = vld [vmem:[#allocation8 + $0x688] sm:$0xff]
    %v814 = vld [vmem:[#allocation8 + $0x690] sm:$0xff]
    %v815 = vld [vmem:[#allocation8 + $0x698] sm:$0xff]
    %v816 = vld [vmem:[#allocation8 + $0x6a0] sm:$0xff]
    %v817 = vld [vmem:[#allocation8 + $0x6a8] sm:$0xff]
    %v818 = vld [vmem:[#allocation8 + $0x6b0] sm:$0xff]
    %v819 = vld [vmem:[#allocation8 + $0x6b8] sm:$0xff]
    %v820 = vld [vmem:[#allocation8 + $0x6c0] sm:$0xff]
    %v821 = vld [vmem:[#allocation8 + $0x6c8] sm:$0xff]
    %v822 = vld [vmem:[#allocation8 + $0x6d0] sm:$0xff]
    %v823 = vld [vmem:[#allocation8 + $0x6d8] sm:$0xff]
    %v824 = vld [vmem:[#allocation8 + $0x6e0] sm:$0xff]
    %v825 = vld [vmem:[#allocation8 + $0x6e8] sm:$0xff]
    %v826 = vld [vmem:[#allocation8 + $0x6f0] sm:$0xff]
    %v827 = vld [vmem:[#allocation8 + $0x6f8] sm:$0xff]
    %v828 = vld [vmem:[#allocation8 + $0x700] sm:$0xff]
    %v829 = vld [vmem:[#allocation8 + $0x708] sm:$0xff]
    %v830 = vld [vmem:[#allocation8 + $0x710] sm:$0xff]
    %v831 = vld [vmem:[#allocation8 + $0x718] sm:$0xff]
    %v832 = vld [vmem:[#allocation8 + $0x720] sm:$0xff]
    %v833 = vld [vmem:[#allocation8 + $0x728] sm:$0xff]
    %v834 = vld [vmem:[#allocation8 + $0x730] sm:$0xff]
    %v835 = vld [vmem:[#allocation8 + $0x738] sm:$0xff]
    %v836 = vld [vmem:[#allocation8 + $0x740] sm:$0xff]
    %v837 = vld [vmem:[#allocation8 + $0x748] sm:$0xff]
    %v838 = vld [vmem:[#allocation8 + $0x750] sm:$0xff]
    %v839 = vld [vmem:[#allocation8 + $0x758] sm:$0xff]
    %v840 = vld [vmem:[#allocation8 + $0x760] sm:$0xff]
    %v841 = vld [vmem:[#allocation8 + $0x768] sm:$0xff]
    %v842 = vld [vmem:[#allocation8 + $0x770] sm:$0xff]
    %v843 = vld [vmem:[#allocation8 + $0x778] sm:$0xff]
    %v844 = vld [vmem:[#allocation8 + $0x780] sm:$0xff]
    %v845 = vld [vmem:[#allocation8 + $0x788] sm:$0xff]
    %v846 = vld [vmem:[#allocation8 + $0x790] sm:$0xff]
    %v847 = vld [vmem:[#allocation8 + $0x798] sm:$0xff]
    %v848 = vld [vmem:[#allocation8 + $0x7a0] sm:$0xff]
    %v849 = vld [vmem:[#allocation8 + $0x7a8] sm:$0xff]
    %v850 = vld [vmem:[#allocation8 + $0x7b0] sm:$0xff]
    %v851 = vld [vmem:[#allocation8 + $0x7b8] sm:$0xff]
    %v852 = vld [vmem:[#allocation8 + $0x7c0] sm:$0xff]
    %v853 = vld [vmem:[#allocation8 + $0x7c8] sm:$0xff]
    %v854 = vld [vmem:[#allocation8 + $0x7d0] sm:$0xff]
    %v855 = vld [vmem:[#allocation8 + $0x7d8] sm:$0xff]
    %v856 = vld [vmem:[#allocation8 + $0x7e0] sm:$0xff]
    %v857 = vld [vmem:[#allocation8 + $0x7e8] sm:$0xff]
    %v858 = vld [vmem:[#allocation8 + $0x7f0] sm:$0xff]
    %v859 = vld [vmem:[#allocation8 + $0x7f8] sm:$0xff]
    %v860 = vld [vmem:[#allocation8 + $0x800] sm:$0xff]
    %v861 = vld [vmem:[#allocation8 + $0x808] sm:$0xff]
    %v862 = vld [vmem:[#allocation8 + $0x810] sm:$0xff]
    %v863 = vld [vmem:[#allocation8 + $0x818] sm:$0xff]
    %v864 = vld [vmem:[#allocation8 + $0x820] sm:$0xff]
    %v865 = vld [vmem:[#allocation8 + $0x828] sm:$0xff]
    %v866 = vld [vmem:[#allocation8 + $0x830] sm:$0xff]
    %v867 = vld [vmem:[#allocation8 + $0x838] sm:$0xff]
    %v868 = vld [vmem:[#allocation8 + $0x840] sm:$0xff]
    %v869 = vld [vmem:[#allocation8 + $0x848] sm:$0xff]
    %v870 = vld [vmem:[#allocation8 + $0x850] sm:$0xff]
    %v871 = vld [vmem:[#allocation8 + $0x858] sm:$0xff]
    %v872 = vld [vmem:[#allocation8 + $0x860] sm:$0xff]
    %v873 = vld [vmem:[#allocation8 + $0x868] sm:$0xff]
    %v874 = vld [vmem:[#allocation8 + $0x870] sm:$0xff]
    %v875 = vld [vmem:[#allocation8 + $0x878] sm:$0xff]
    %v876 = vld [vmem:[#allocation8 + $0x880] sm:$0xff]
    %v877 = vld [vmem:[#allocation8 + $0x888] sm:$0xff]
    %v878 = vld [vmem:[#allocation8 + $0x890] sm:$0xff]
    %v879 = vld [vmem:[#allocation8 + $0x898] sm:$0xff]
    %v880 = vld [vmem:[#allocation8 + $0x8a0] sm:$0xff]
    %v881 = vld [vmem:[#allocation8 + $0x8a8] sm:$0xff]
    %v882 = vld [vmem:[#allocation8 + $0x8b0] sm:$0xff]
    %v883 = vld [vmem:[#allocation8 + $0x8b8] sm:$0xff]
    %v884 = vld [vmem:[#allocation8 + $0x8c0] sm:$0xff]
    %v885 = vld [vmem:[#allocation8 + $0x8c8] sm:$0xff]
    %v886 = vld [vmem:[#allocation8 + $0x8d0] sm:$0xff]
    %v887 = vld [vmem:[#allocation8 + $0x8d8] sm:$0xff]
    %v888 = vld [vmem:[#allocation8 + $0x8e0] sm:$0xff]
    %v889 = vld [vmem:[#allocation8 + $0x8e8] sm:$0xff]
    %v890 = vld [vmem:[#allocation8 + $0x8f0] sm:$0xff]
    %v891 = vld [vmem:[#allocation8 + $0x8f8] sm:$0xff]
    %v892 = vld [vmem:[#allocation8 + $0x900] sm:$0xff]
    %v893 = vld [vmem:[#allocation8 + $0x908] sm:$0xff]
    %v894 = vld [vmem:[#allocation8 + $0x910] sm:$0xff]
    %v895 = vld [vmem:[#allocation8 + $0x918] sm:$0xff]
    %v896 = vld [vmem:[#allocation8 + $0x920] sm:$0xff]
    %v897 = vld [vmem:[#allocation8 + $0x928] sm:$0xff]
    %v898 = vld [vmem:[#allocation8 + $0x930] sm:$0xff]
    %v899 = vld [vmem:[#allocation8 + $0x938] sm:$0xff]
    %v900 = vld [vmem:[#allocation8 + $0x940] sm:$0xff]
    %v901 = vld [vmem:[#allocation8 + $0x948] sm:$0xff]
    %v902 = vld [vmem:[#allocation8 + $0x950] sm:$0xff]
    %v903 = vld [vmem:[#allocation8 + $0x958] sm:$0xff]
    %v904 = vld [vmem:[#allocation8 + $0x960] sm:$0xff]
    %v905 = vld [vmem:[#allocation8 + $0x968] sm:$0xff]
    %v906 = vld [vmem:[#allocation8 + $0x970] sm:$0xff]
    %v907 = vld [vmem:[#allocation8 + $0x978] sm:$0xff]
    %v908 = vld [vmem:[#allocation8 + $0x980] sm:$0xff]
    %v909 = vld [vmem:[#allocation8 + $0x988] sm:$0xff]
    %v910 = vld [vmem:[#allocation8 + $0x990] sm:$0xff]
    %v911 = vld [vmem:[#allocation8 + $0x998] sm:$0xff]
    %v912 = vld [vmem:[#allocation8 + $0x9a0] sm:$0xff]
    %v913 = vld [vmem:[#allocation8 + $0x9a8] sm:$0xff]
    %v914 = vld [vmem:[#allocation8 + $0x9b0] sm:$0xff]
    %v915 = vld [vmem:[#allocation8 + $0x9b8] sm:$0xff]
    %v916 = vld [vmem:[#allocation8 + $0x9c0] sm:$0xff]
    %v917 = vld [vmem:[#allocation8 + $0x9c8] sm:$0xff]
    %v918 = vld [vmem:[#allocation8 + $0x9d0] sm:$0xff]
    %v919 = vld [vmem:[#allocation8 + $0x9d8] sm:$0xff]
    %v920 = vld [vmem:[#allocation8 + $0x9e0] sm:$0xff]
    %v921 = vld [vmem:[#allocation8 + $0x9e8] sm:$0xff]
    %v922 = vld [vmem:[#allocation8 + $0x9f0] sm:$0xff]
    %v923 = vld [vmem:[#allocation8 + $0x9f8] sm:$0xff]
    %v924 = vld [vmem:[#allocation8 + $0xa00] sm:$0xff]
    %v925 = vld [vmem:[#allocation8 + $0xa08] sm:$0xff]
    %v926 = vld [vmem:[#allocation8 + $0xa10] sm:$0xff]
    %v927 = vld [vmem:[#allocation8 + $0xa18] sm:$0xff]
    %v928 = vld [vmem:[#allocation8 + $0xa20] sm:$0xff]
    %v929 = vld [vmem:[#allocation8 + $0xa28] sm:$0xff]
    %v930 = vld [vmem:[#allocation8 + $0xa30] sm:$0xff]
    %v931 = vld [vmem:[#allocation8 + $0xa38] sm:$0xff]
    %v932 = vld [vmem:[#allocation8 + $0xa40] sm:$0xff]
    %v933 = vld [vmem:[#allocation8 + $0xa48] sm:$0xff]
    %v934 = vld [vmem:[#allocation8 + $0xa50] sm:$0xff]
    %v935 = vld [vmem:[#allocation8 + $0xa58] sm:$0xff]
    %v936 = vld [vmem:[#allocation8 + $0xa60] sm:$0xff]
    %v937 = vld [vmem:[#allocation8 + $0xa68] sm:$0xff]
    %v938 = vld [vmem:[#allocation8 + $0xa70] sm:$0xff]
    %v939 = vld [vmem:[#allocation8 + $0xa78] sm:$0xff]
    %v940 = vld [vmem:[#allocation8 + $0xa80] sm:$0xff]
    %v941 = vld [vmem:[#allocation8 + $0xa88] sm:$0xff]
    %v942 = vld [vmem:[#allocation8 + $0xa90] sm:$0xff]
    %v943 = vld [vmem:[#allocation8 + $0xa98] sm:$0xff]
    %v944 = vld [vmem:[#allocation8 + $0xaa0] sm:$0xff]
    %v945 = vld [vmem:[#allocation8 + $0xaa8] sm:$0xff]
    %v946 = vld [vmem:[#allocation8 + $0xab0] sm:$0xff]
    %v947 = vld [vmem:[#allocation8 + $0xab8] sm:$0xff]
    %v948 = vld [vmem:[#allocation8 + $0xac0] sm:$0xff]
    %v949 = vld [vmem:[#allocation8 + $0xac8] sm:$0xff]
    %v950 = vld [vmem:[#allocation8 + $0xad0] sm:$0xff]
    %v951 = vld [vmem:[#allocation8 + $0xad8] sm:$0xff]
    %v952 = vld [vmem:[#allocation8 + $0xae0] sm:$0xff]
    %v953 = vld [vmem:[#allocation8 + $0xae8] sm:$0xff]
    %v954 = vld [vmem:[#allocation8 + $0xaf0] sm:$0xff]
    %v955 = vld [vmem:[#allocation8 + $0xaf8] sm:$0xff]
    %v956 = vld [vmem:[#allocation8 + $0xb00] sm:$0xff]
    %v957 = vld [vmem:[#allocation8 + $0xb08] sm:$0xff]
    %v958 = vld [vmem:[#allocation8 + $0xb10] sm:$0xff]
    %v959 = vld [vmem:[#allocation8 + $0xb18] sm:$0xff]
    %v960 = vld [vmem:[#allocation8 + $0xb20] sm:$0xff]
    %v961 = vld [vmem:[#allocation8 + $0xb28] sm:$0xff]
    %v962 = vld [vmem:[#allocation8 + $0xb30] sm:$0xff]
    %v963 = vld [vmem:[#allocation8 + $0xb38] sm:$0xff]
    %v964 = vld [vmem:[#allocation8 + $0xb40] sm:$0xff]
    %v965 = vld [vmem:[#allocation8 + $0xb48] sm:$0xff]
    %v966 = vld [vmem:[#allocation8 + $0xb50] sm:$0xff]
    %v967 = vld [vmem:[#allocation8 + $0xb58] sm:$0xff]
    %v968 = vld [vmem:[#allocation8 + $0xb60] sm:$0xff]
    %v969 = vld [vmem:[#allocation8 + $0xb68] sm:$0xff]
    %v970 = vld [vmem:[#allocation8 + $0xb70] sm:$0xff]
    %v971 = vld [vmem:[#allocation8 + $0xb78] sm:$0xff]
    %v972 = vld [vmem:[#allocation8 + $0xb80] sm:$0xff]
    %v973 = vld [vmem:[#allocation8 + $0xb88] sm:$0xff]
    %v974 = vld [vmem:[#allocation8 + $0xb90] sm:$0xff]
    %v975 = vld [vmem:[#allocation8 + $0xb98] sm:$0xff]
    %v976 = vld [vmem:[#allocation8 + $0xba0] sm:$0xff]
    %v977 = vld [vmem:[#allocation8 + $0xba8] sm:$0xff]
    %v978 = vld [vmem:[#allocation8 + $0xbb0] sm:$0xff]
    %v979 = vld [vmem:[#allocation8 + $0xbb8] sm:$0xff]
    %v980 = vld [vmem:[#allocation8 + $0xbc0] sm:$0xff]
    %v981 = vld [vmem:[#allocation8 + $0xbc8] sm:$0xff]
    %v982 = vld [vmem:[#allocation8 + $0xbd0] sm:$0xff]
    %v983 = vld [vmem:[#allocation8 + $0xbd8] sm:$0xff]
    %v984 = vld [vmem:[#allocation8 + $0xbe0] sm:$0xff]
    %v985 = vld [vmem:[#allocation8 + $0xbe8] sm:$0xff]
    %v986 = vld [vmem:[#allocation8 + $0xbf0] sm:$0xff]
    %v987 = vld [vmem:[#allocation8 + $0xbf8] sm:$0xff]
    %v988 = vld [vmem:[#allocation8 + $0xc00] sm:$0xff]
    %v989 = vld [vmem:[#allocation8 + $0xc08] sm:$0xff]
    %v990 = vld [vmem:[#allocation8 + $0xc10] sm:$0xff]
    %v991 = vld [vmem:[#allocation8 + $0xc18] sm:$0xff]
    %v992 = vld [vmem:[#allocation8 + $0xc20] sm:$0xff]
    %v993 = vld [vmem:[#allocation8 + $0xc28] sm:$0xff]
    %v994 = vld [vmem:[#allocation8 + $0xc30] sm:$0xff]
    %v995 = vld [vmem:[#allocation8 + $0xc38] sm:$0xff]
    %v996 = vld [vmem:[#allocation8 + $0xc40] sm:$0xff]
    %v997 = vld [vmem:[#allocation8 + $0xc48] sm:$0xff]
    %v998 = vld [vmem:[#allocation8 + $0xc50] sm:$0xff]
    %v999 = vld [vmem:[#allocation8 + $0xc58] sm:$0xff]
    %v1000 = vld [vmem:[#allocation8 + $0xc60] sm:$0xff]
    %v1001 = vld [vmem:[#allocation8 + $0xc68] sm:$0xff]
    %v1002 = vld [vmem:[#allocation8 + $0xc70] sm:$0xff]
    %v1003 = vld [vmem:[#allocation8 + $0xc78] sm:$0xff]
    %v1004 = vld [vmem:[#allocation8 + $0xc80] sm:$0xff]
    %v1005 = vld [vmem:[#allocation8 + $0xc88] sm:$0xff]
    %v1006 = vld [vmem:[#allocation8 + $0xc90] sm:$0xff]
    %v1007 = vld [vmem:[#allocation8 + $0xc98] sm:$0xff]
    %v1008 = vld [vmem:[#allocation8 + $0xca0] sm:$0xff]
    %v1009 = vld [vmem:[#allocation8 + $0xca8] sm:$0xff]
    %v1010 = vld [vmem:[#allocation8 + $0xcb0] sm:$0xff]
    %v1011 = vld [vmem:[#allocation8 + $0xcb8] sm:$0xff]
    %v1012 = vld [vmem:[#allocation8 + $0xcc0] sm:$0xff]
    %v1013 = vld [vmem:[#allocation8 + $0xcc8] sm:$0xff]
    %v1014 = vld [vmem:[#allocation8 + $0xcd0] sm:$0xff]
    %v1015 = vld [vmem:[#allocation8 + $0xcd8] sm:$0xff]
    %v1016 = vld [vmem:[#allocation8 + $0xce0] sm:$0xff]
    %v1017 = vld [vmem:[#allocation8 + $0xce8] sm:$0xff]
    %v1018 = vld [vmem:[#allocation8 + $0xcf0] sm:$0xff]
    %v1019 = vld [vmem:[#allocation8 + $0xcf8] sm:$0xff]
    %v1020 = vld [vmem:[#allocation8 + $0xd00] sm:$0xff]
    %v1021 = vld [vmem:[#allocation8 + $0xd08] sm:$0xff]
    %v1022 = vld [vmem:[#allocation8 + $0xd10] sm:$0xff]
    %v1023 = vld [vmem:[#allocation8 + $0xd18] sm:$0xff]
    %v1024 = vld [vmem:[#allocation8 + $0xd20] sm:$0xff]
    %v1025 = vld [vmem:[#allocation8 + $0xd28] sm:$0xff]
    %v1026 = vld [vmem:[#allocation8 + $0xd30] sm:$0xff]
    %v1027 = vld [vmem:[#allocation8 + $0xd38] sm:$0xff]
    %v1028 = vld [vmem:[#allocation8 + $0xd40] sm:$0xff]
    %v1029 = vld [vmem:[#allocation8 + $0xd48] sm:$0xff]
    %v1030 = vld [vmem:[#allocation8 + $0xd50] sm:$0xff]
    %v1031 = vld [vmem:[#allocation8 + $0xd58] sm:$0xff]
    %v1032 = vld [vmem:[#allocation8 + $0xd60] sm:$0xff]
    %v1033 = vld [vmem:[#allocation8 + $0xd68] sm:$0xff]
    %v1034 = vld [vmem:[#allocation8 + $0xd70] sm:$0xff]
    %v1035 = vld [vmem:[#allocation8 + $0xd78] sm:$0xff]
    %v1036 = vld [vmem:[#allocation8 + $0xd80] sm:$0xff]
    %v1037 = vld [vmem:[#allocation8 + $0xd88] sm:$0xff]
    %v1038 = vld [vmem:[#allocation8 + $0xd90] sm:$0xff]
    %v1039 = vld [vmem:[#allocation8 + $0xd98] sm:$0xff]
    %v1040 = vld [vmem:[#allocation8 + $0xda0] sm:$0xff]
    %v1041 = vld [vmem:[#allocation8 + $0xda8] sm:$0xff]
    %v1042 = vld [vmem:[#allocation8 + $0xdb0] sm:$0xff]
    %v1043 = vld [vmem:[#allocation8 + $0xdb8] sm:$0xff]
    %v1044 = vld [vmem:[#allocation8 + $0xdc0] sm:$0xff]
    %v1045 = vld [vmem:[#allocation8 + $0xdc8] sm:$0xff]
    %v1046 = vld [vmem:[#allocation8 + $0xdd0] sm:$0xff]
    %v1047 = vld [vmem:[#allocation8 + $0xdd8] sm:$0xff]
    %v1048 = vld [vmem:[#allocation8 + $0xde0] sm:$0xff]
    %v1049 = vld [vmem:[#allocation8 + $0xde8] sm:$0xff]
    %v1050 = vld [vmem:[#allocation8 + $0xdf0] sm:$0xff]
    %v1051 = vld [vmem:[#allocation8 + $0xdf8] sm:$0xff]
    %v1052 = vld [vmem:[#allocation8 + $0xe00] sm:$0xff]
    %v1053 = vld [vmem:[#allocation8 + $0xe08] sm:$0xff]
    %v1054 = vld [vmem:[#allocation8 + $0xe10] sm:$0xff]
    %v1055 = vld [vmem:[#allocation8 + $0xe18] sm:$0xff]
    %v1056 = vld [vmem:[#allocation8 + $0xe20] sm:$0xff]
    %v1057 = vld [vmem:[#allocation8 + $0xe28] sm:$0xff]
    %v1058 = vld [vmem:[#allocation8 + $0xe30] sm:$0xff]
    %v1059 = vld [vmem:[#allocation8 + $0xe38] sm:$0xff]
    %v1060 = vld [vmem:[#allocation8 + $0xe40] sm:$0xff]
    %v1061 = vld [vmem:[#allocation8 + $0xe48] sm:$0xff]
    %v1062 = vld [vmem:[#allocation8 + $0xe50] sm:$0xff]
    %v1063 = vld [vmem:[#allocation8 + $0xe58] sm:$0xff]
    %v1064 = vld [vmem:[#allocation8 + $0xe60] sm:$0xff]
    %v1065 = vld [vmem:[#allocation8 + $0xe68] sm:$0xff]
    %v1066 = vld [vmem:[#allocation8 + $0xe70] sm:$0xff]
    %v1067 = vld [vmem:[#allocation8 + $0xe78] sm:$0xff]
    %v1068 = vld [vmem:[#allocation8 + $0xe80] sm:$0xff]
    %v1069 = vld [vmem:[#allocation8 + $0xe88] sm:$0xff]
    %v1070 = vld [vmem:[#allocation8 + $0xe90] sm:$0xff]
    %v1071 = vld [vmem:[#allocation8 + $0xe98] sm:$0xff]
    %v1072 = vld [vmem:[#allocation8 + $0xea0] sm:$0xff]
    %v1073 = vld [vmem:[#allocation8 + $0xea8] sm:$0xff]
    %v1074 = vld [vmem:[#allocation8 + $0xeb0] sm:$0xff]
    %v1075 = vld [vmem:[#allocation8 + $0xeb8] sm:$0xff]
    %v1076 = vld [vmem:[#allocation8 + $0xec0] sm:$0xff]
    %v1077 = vld [vmem:[#allocation8 + $0xec8] sm:$0xff]
    %v1078 = vld [vmem:[#allocation8 + $0xed0] sm:$0xff]
    %v1079 = vld [vmem:[#allocation8 + $0xed8] sm:$0xff]
    %v1080 = vld [vmem:[#allocation8 + $0xee0] sm:$0xff]
    %v1081 = vld [vmem:[#allocation8 + $0xee8] sm:$0xff]
    %v1082 = vld [vmem:[#allocation8 + $0xef0] sm:$0xff]
    %v1083 = vld [vmem:[#allocation8 + $0xef8] sm:$0xff]
    %v1084 = vld [vmem:[#allocation8 + $0xf00] sm:$0xff]
    %v1085 = vld [vmem:[#allocation8 + $0xf08] sm:$0xff]
    %v1086 = vld [vmem:[#allocation8 + $0xf10] sm:$0xff]
    %v1087 = vld [vmem:[#allocation8 + $0xf18] sm:$0xff]
    %v1088 = vld [vmem:[#allocation8 + $0xf20] sm:$0xff]
    %v1089 = vld [vmem:[#allocation8 + $0xf28] sm:$0xff]
    %v1090 = vld [vmem:[#allocation8 + $0xf30] sm:$0xff]
    %v1091 = vld [vmem:[#allocation8 + $0xf38] sm:$0xff]
    %v1092 = vld [vmem:[#allocation8 + $0xf40] sm:$0xff]
    %v1093 = vld [vmem:[#allocation8 + $0xf48] sm:$0xff]
    %v1094 = vld [vmem:[#allocation8 + $0xf50] sm:$0xff]
    %v1095 = vld [vmem:[#allocation8 + $0xf58] sm:$0xff]
    %v1096 = vld [vmem:[#allocation8 + $0xf60] sm:$0xff]
    %v1097 = vld [vmem:[#allocation8 + $0xf68] sm:$0xff]
    %v1098 = vld [vmem:[#allocation8 + $0xf70] sm:$0xff]
    %v1099 = vld [vmem:[#allocation8 + $0xf78] sm:$0xff]
    %v1100 = vld [vmem:[#allocation8 + $0xf80] sm:$0xff]
    %v1101 = vld [vmem:[#allocation8 + $0xf88] sm:$0xff]
    %v1102 = vld [vmem:[#allocation8 + $0xf90] sm:$0xff]
    %v1103 = vld [vmem:[#allocation8 + $0xf98] sm:$0xff]
    %v1104 = vld [vmem:[#allocation8 + $0xfa0] sm:$0xff]
    %v1105 = vld [vmem:[#allocation8 + $0xfa8] sm:$0xff]
    %v1106 = vld [vmem:[#allocation8 + $0xfb0] sm:$0xff]
    %v1107 = vld [vmem:[#allocation8 + $0xfb8] sm:$0xff]
    %v1108 = vld [vmem:[#allocation8 + $0xfc0] sm:$0xff]
    %v1109 = vld [vmem:[#allocation8 + $0xfc8] sm:$0xff]
    %v1110 = vld [vmem:[#allocation8 + $0xfd0] sm:$0xff]
    %v1111 = vld [vmem:[#allocation8 + $0xfd8] sm:$0xff]
    %v1112 = vld [vmem:[#allocation8 + $0xfe0] sm:$0xff]
    %v1113 = vld [vmem:[#allocation8 + $0xfe8] sm:$0xff]
    %v1114 = vld [vmem:[#allocation8 + $0xff0] sm:$0xff]
    %v1115 = vld [vmem:[#allocation8 + $0xff8] sm:$0xff]
    %v1116 = vld [vmem:[#allocation10] sm:$0xff]
    %v1118 = vlaneseq
    %v1119 = vshrl.u32 %v1118, 7
    %v1120 = vsub.s32 0, %v1119
    %v1121 = vrot.slane %v1116, %v1120
    %v1122 = vlaneseq
    %v1123 = vshrl.u32 %v1122, 7
    %v1124 = vsub.s32 1, %v1123
    %v1125 = vrot.slane %v1116, %v1124
    %v1126 = vlaneseq
    %v1127 = vshrl.u32 %v1126, 7
    %v1128 = vsub.s32 2, %v1127
    %v1129 = vrot.slane %v1116, %v1128
    %v1130 = vlaneseq
    %v1131 = vshrl.u32 %v1130, 7
    %v1132 = vsub.s32 3, %v1131
    %v1133 = vrot.slane %v1116, %v1132
    %v1134 = vlaneseq
    %v1135 = vshrl.u32 %v1134, 7
    %v1136 = vsub.s32 4, %v1135
    %v1137 = vrot.slane %v1116, %v1136
    %v1138 = vlaneseq
    %v1139 = vshrl.u32 %v1138, 7
    %v1140 = vsub.s32 5, %v1139
    %v1141 = vrot.slane %v1116, %v1140
    %v1142 = vlaneseq
    %v1143 = vshrl.u32 %v1142, 7
    %v1144 = vsub.s32 6, %v1143
    %v1145 = vrot.slane %v1116, %v1144
    %v1146 = vlaneseq
    %v1147 = vshrl.u32 %v1146, 7
    %v1148 = vsub.s32 7, %v1147
    %v1149 = vrot.slane %v1116, %v1148
    %v1670 = vunpack.c.l.b16 %v604
    %v1671 = vunpack.c.h.b16 %v604
    %v1672 = vunpack.c.l.b16 %v605
    %v1673 = vunpack.c.h.b16 %v605
    %v1674 = vunpack.c.l.b16 %v606
    %v1675 = vunpack.c.h.b16 %v606
    %v1676 = vunpack.c.l.b16 %v607
    %v1677 = vunpack.c.h.b16 %v607
    %v1678 = vunpack.c.l.b16 %v608
    %v1679 = vunpack.c.h.b16 %v608
    %v1680 = vunpack.c.l.b16 %v609
    %v1681 = vunpack.c.h.b16 %v609
    %v1682 = vunpack.c.l.b16 %v610
    %v1683 = vunpack.c.h.b16 %v610
    %v1684 = vunpack.c.l.b16 %v611
    %v1685 = vunpack.c.h.b16 %v611
    %v1686 = vunpack.c.l.b16 %v612
    %v1687 = vunpack.c.h.b16 %v612
    %v1688 = vunpack.c.l.b16 %v613
    %v1689 = vunpack.c.h.b16 %v613
    %v1690 = vunpack.c.l.b16 %v614
    %v1691 = vunpack.c.h.b16 %v614
    %v1692 = vunpack.c.l.b16 %v615
    %v1693 = vunpack.c.h.b16 %v615
    %v1694 = vunpack.c.l.b16 %v616
    %v1695 = vunpack.c.h.b16 %v616
    %v1696 = vunpack.c.l.b16 %v617
    %v1697 = vunpack.c.h.b16 %v617
    %v1698 = vunpack.c.l.b16 %v618
    %v1699 = vunpack.c.h.b16 %v618
    %v1700 = vunpack.c.l.b16 %v619
    %v1701 = vunpack.c.h.b16 %v619
    %v1702 = vunpack.c.l.b16 %v620
    %v1703 = vunpack.c.h.b16 %v620
    %v1704 = vunpack.c.l.b16 %v621
    %v1705 = vunpack.c.h.b16 %v621
    %v1706 = vunpack.c.l.b16 %v622
    %v1707 = vunpack.c.h.b16 %v622
    %v1708 = vunpack.c.l.b16 %v623
    %v1709 = vunpack.c.h.b16 %v623
    %v1710 = vunpack.c.l.b16 %v624
    %v1711 = vunpack.c.h.b16 %v624
    %v1712 = vunpack.c.l.b16 %v625
    %v1713 = vunpack.c.h.b16 %v625
    %v1714 = vunpack.c.l.b16 %v626
    %v1715 = vunpack.c.h.b16 %v626
    %v1716 = vunpack.c.l.b16 %v627
    %v1717 = vunpack.c.h.b16 %v627
    %v1718 = vunpack.c.l.b16 %v628
    %v1719 = vunpack.c.h.b16 %v628
    %v1720 = vunpack.c.l.b16 %v629
    %v1721 = vunpack.c.h.b16 %v629
    %v1722 = vunpack.c.l.b16 %v630
    %v1723 = vunpack.c.h.b16 %v630
    %v1724 = vunpack.c.l.b16 %v631
    %v1725 = vunpack.c.h.b16 %v631
    %v1726 = vunpack.c.l.b16 %v632
    %v1727 = vunpack.c.h.b16 %v632
    %v1728 = vunpack.c.l.b16 %v633
    %v1729 = vunpack.c.h.b16 %v633
    %v1730 = vunpack.c.l.b16 %v634
    %v1731 = vunpack.c.h.b16 %v634
    %v1732 = vunpack.c.l.b16 %v635
    %v1733 = vunpack.c.h.b16 %v635
    %v1734 = vunpack.c.l.b16 %v636
    %v1735 = vunpack.c.h.b16 %v636
    %v1736 = vunpack.c.l.b16 %v637
    %v1737 = vunpack.c.h.b16 %v637
    %v1738 = vunpack.c.l.b16 %v638
    %v1739 = vunpack.c.h.b16 %v638
    %v1740 = vunpack.c.l.b16 %v639
    %v1741 = vunpack.c.h.b16 %v639
    %v1742 = vunpack.c.l.b16 %v640
    %v1743 = vunpack.c.h.b16 %v640
    %v1744 = vunpack.c.l.b16 %v641
    %v1745 = vunpack.c.h.b16 %v641
    %v1746 = vunpack.c.l.b16 %v642
    %v1747 = vunpack.c.h.b16 %v642
    %v1748 = vunpack.c.l.b16 %v643
    %v1749 = vunpack.c.h.b16 %v643
    %v1750 = vunpack.c.l.b16 %v644
    %v1751 = vunpack.c.h.b16 %v644
    %v1752 = vunpack.c.l.b16 %v645
    %v1753 = vunpack.c.h.b16 %v645
    %v1754 = vunpack.c.l.b16 %v646
    %v1755 = vunpack.c.h.b16 %v646
    %v1756 = vunpack.c.l.b16 %v647
    %v1757 = vunpack.c.h.b16 %v647
    %v1758 = vunpack.c.l.b16 %v648
    %v1759 = vunpack.c.h.b16 %v648
    %v1760 = vunpack.c.l.b16 %v649
    %v1761 = vunpack.c.h.b16 %v649
    %v1762 = vunpack.c.l.b16 %v650
    %v1763 = vunpack.c.h.b16 %v650
    %v1764 = vunpack.c.l.b16 %v651
    %v1765 = vunpack.c.h.b16 %v651
    %v1766 = vunpack.c.l.b16 %v652
    %v1767 = vunpack.c.h.b16 %v652
    %v1768 = vunpack.c.l.b16 %v653
    %v1769 = vunpack.c.h.b16 %v653
    %v1770 = vunpack.c.l.b16 %v654
    %v1771 = vunpack.c.h.b16 %v654
    %v1772 = vunpack.c.l.b16 %v655
    %v1773 = vunpack.c.h.b16 %v655
    %v1774 = vunpack.c.l.b16 %v656
    %v1775 = vunpack.c.h.b16 %v656
    %v1776 = vunpack.c.l.b16 %v657
    %v1777 = vunpack.c.h.b16 %v657
    %v1778 = vunpack.c.l.b16 %v658
    %v1779 = vunpack.c.h.b16 %v658
    %v1780 = vunpack.c.l.b16 %v659
    %v1781 = vunpack.c.h.b16 %v659
    %v1782 = vunpack.c.l.b16 %v660
    %v1783 = vunpack.c.h.b16 %v660
    %v1784 = vunpack.c.l.b16 %v661
    %v1785 = vunpack.c.h.b16 %v661
    %v1786 = vunpack.c.l.b16 %v662
    %v1787 = vunpack.c.h.b16 %v662
    %v1788 = vunpack.c.l.b16 %v663
    %v1789 = vunpack.c.h.b16 %v663
    %v1790 = vunpack.c.l.b16 %v664
    %v1791 = vunpack.c.h.b16 %v664
    %v1792 = vunpack.c.l.b16 %v665
    %v1793 = vunpack.c.h.b16 %v665
    %v1794 = vunpack.c.l.b16 %v666
    %v1795 = vunpack.c.h.b16 %v666
    %v1796 = vunpack.c.l.b16 %v667
    %v1797 = vunpack.c.h.b16 %v667
    %v1798 = vunpack.c.l.b16 %v668
    %v1799 = vunpack.c.h.b16 %v668
    %v1800 = vunpack.c.l.b16 %v669
    %v1801 = vunpack.c.h.b16 %v669
    %v1802 = vunpack.c.l.b16 %v670
    %v1803 = vunpack.c.h.b16 %v670
    %v1804 = vunpack.c.l.b16 %v671
    %v1805 = vunpack.c.h.b16 %v671
    %v1806 = vunpack.c.l.b16 %v672
    %v1807 = vunpack.c.h.b16 %v672
    %v1808 = vunpack.c.l.b16 %v673
    %v1809 = vunpack.c.h.b16 %v673
    %v1810 = vunpack.c.l.b16 %v674
    %v1811 = vunpack.c.h.b16 %v674
    %v1812 = vunpack.c.l.b16 %v675
    %v1813 = vunpack.c.h.b16 %v675
    %v1814 = vunpack.c.l.b16 %v676
    %v1815 = vunpack.c.h.b16 %v676
    %v1816 = vunpack.c.l.b16 %v677
    %v1817 = vunpack.c.h.b16 %v677
    %v1818 = vunpack.c.l.b16 %v678
    %v1819 = vunpack.c.h.b16 %v678
    %v1820 = vunpack.c.l.b16 %v679
    %v1821 = vunpack.c.h.b16 %v679
    %v1822 = vunpack.c.l.b16 %v680
    %v1823 = vunpack.c.h.b16 %v680
    %v1824 = vunpack.c.l.b16 %v681
    %v1825 = vunpack.c.h.b16 %v681
    %v1826 = vunpack.c.l.b16 %v682
    %v1827 = vunpack.c.h.b16 %v682
    %v1828 = vunpack.c.l.b16 %v683
    %v1829 = vunpack.c.h.b16 %v683
    %v1830 = vunpack.c.l.b16 %v684
    %v1831 = vunpack.c.h.b16 %v684
    %v1832 = vunpack.c.l.b16 %v685
    %v1833 = vunpack.c.h.b16 %v685
    %v1834 = vunpack.c.l.b16 %v686
    %v1835 = vunpack.c.h.b16 %v686
    %v1836 = vunpack.c.l.b16 %v687
    %v1837 = vunpack.c.h.b16 %v687
    %v1838 = vunpack.c.l.b16 %v688
    %v1839 = vunpack.c.h.b16 %v688
    %v1840 = vunpack.c.l.b16 %v689
    %v1841 = vunpack.c.h.b16 %v689
    %v1842 = vunpack.c.l.b16 %v690
    %v1843 = vunpack.c.h.b16 %v690
    %v1844 = vunpack.c.l.b16 %v691
    %v1845 = vunpack.c.h.b16 %v691
    %v1846 = vunpack.c.l.b16 %v692
    %v1847 = vunpack.c.h.b16 %v692
    %v1848 = vunpack.c.l.b16 %v693
    %v1849 = vunpack.c.h.b16 %v693
    %v1850 = vunpack.c.l.b16 %v694
    %v1851 = vunpack.c.h.b16 %v694
    %v1852 = vunpack.c.l.b16 %v695
    %v1853 = vunpack.c.h.b16 %v695
    %v1854 = vunpack.c.l.b16 %v696
    %v1855 = vunpack.c.h.b16 %v696
    %v1856 = vunpack.c.l.b16 %v697
    %v1857 = vunpack.c.h.b16 %v697
    %v1858 = vunpack.c.l.b16 %v698
    %v1859 = vunpack.c.h.b16 %v698
    %v1860 = vunpack.c.l.b16 %v699
    %v1861 = vunpack.c.h.b16 %v699
    %v1862 = vunpack.c.l.b16 %v700
    %v1863 = vunpack.c.h.b16 %v700
    %v1864 = vunpack.c.l.b16 %v701
    %v1865 = vunpack.c.h.b16 %v701
    %v1866 = vunpack.c.l.b16 %v702
    %v1867 = vunpack.c.h.b16 %v702
    %v1868 = vunpack.c.l.b16 %v703
    %v1869 = vunpack.c.h.b16 %v703
    %v1870 = vunpack.c.l.b16 %v704
    %v1871 = vunpack.c.h.b16 %v704
    %v1872 = vunpack.c.l.b16 %v705
    %v1873 = vunpack.c.h.b16 %v705
    %v1874 = vunpack.c.l.b16 %v706
    %v1875 = vunpack.c.h.b16 %v706
    %v1876 = vunpack.c.l.b16 %v707
    %v1877 = vunpack.c.h.b16 %v707
    %v1878 = vunpack.c.l.b16 %v708
    %v1879 = vunpack.c.h.b16 %v708
    %v1880 = vunpack.c.l.b16 %v709
    %v1881 = vunpack.c.h.b16 %v709
    %v1882 = vunpack.c.l.b16 %v710
    %v1883 = vunpack.c.h.b16 %v710
    %v1884 = vunpack.c.l.b16 %v711
    %v1885 = vunpack.c.h.b16 %v711
    %v1886 = vunpack.c.l.b16 %v712
    %v1887 = vunpack.c.h.b16 %v712
    %v1888 = vunpack.c.l.b16 %v713
    %v1889 = vunpack.c.h.b16 %v713
    %v1890 = vunpack.c.l.b16 %v714
    %v1891 = vunpack.c.h.b16 %v714
    %v1892 = vunpack.c.l.b16 %v715
    %v1893 = vunpack.c.h.b16 %v715
    %v1894 = vunpack.c.l.b16 %v716
    %v1895 = vunpack.c.h.b16 %v716
    %v1896 = vunpack.c.l.b16 %v717
    %v1897 = vunpack.c.h.b16 %v717
    %v1898 = vunpack.c.l.b16 %v718
    %v1899 = vunpack.c.h.b16 %v718
    %v1900 = vunpack.c.l.b16 %v719
    %v1901 = vunpack.c.h.b16 %v719
    %v1902 = vunpack.c.l.b16 %v720
    %v1903 = vunpack.c.h.b16 %v720
    %v1904 = vunpack.c.l.b16 %v721
    %v1905 = vunpack.c.h.b16 %v721
    %v1906 = vunpack.c.l.b16 %v722
    %v1907 = vunpack.c.h.b16 %v722
    %v1908 = vunpack.c.l.b16 %v723
    %v1909 = vunpack.c.h.b16 %v723
    %v1910 = vunpack.c.l.b16 %v724
    %v1911 = vunpack.c.h.b16 %v724
    %v1912 = vunpack.c.l.b16 %v725
    %v1913 = vunpack.c.h.b16 %v725
    %v1914 = vunpack.c.l.b16 %v726
    %v1915 = vunpack.c.h.b16 %v726
    %v1916 = vunpack.c.l.b16 %v727
    %v1917 = vunpack.c.h.b16 %v727
    %v1918 = vunpack.c.l.b16 %v728
    %v1919 = vunpack.c.h.b16 %v728
    %v1920 = vunpack.c.l.b16 %v729
    %v1921 = vunpack.c.h.b16 %v729
    %v1922 = vunpack.c.l.b16 %v730
    %v1923 = vunpack.c.h.b16 %v730
    %v1924 = vunpack.c.l.b16 %v731
    %v1925 = vunpack.c.h.b16 %v731
    %v1926 = vunpack.c.l.b16 %v732
    %v1927 = vunpack.c.h.b16 %v732
    %v1928 = vunpack.c.l.b16 %v733
    %v1929 = vunpack.c.h.b16 %v733
    %v1930 = vunpack.c.l.b16 %v734
    %v1931 = vunpack.c.h.b16 %v734
    %v1932 = vunpack.c.l.b16 %v735
    %v1933 = vunpack.c.h.b16 %v735
    %v1934 = vunpack.c.l.b16 %v736
    %v1935 = vunpack.c.h.b16 %v736
    %v1936 = vunpack.c.l.b16 %v737
    %v1937 = vunpack.c.h.b16 %v737
    %v1938 = vunpack.c.l.b16 %v738
    %v1939 = vunpack.c.h.b16 %v738
    %v1940 = vunpack.c.l.b16 %v739
    %v1941 = vunpack.c.h.b16 %v739
    %v1942 = vunpack.c.l.b16 %v740
    %v1943 = vunpack.c.h.b16 %v740
    %v1944 = vunpack.c.l.b16 %v741
    %v1945 = vunpack.c.h.b16 %v741
    %v1946 = vunpack.c.l.b16 %v742
    %v1947 = vunpack.c.h.b16 %v742
    %v1948 = vunpack.c.l.b16 %v743
    %v1949 = vunpack.c.h.b16 %v743
    %v1950 = vunpack.c.l.b16 %v744
    %v1951 = vunpack.c.h.b16 %v744
    %v1952 = vunpack.c.l.b16 %v745
    %v1953 = vunpack.c.h.b16 %v745
    %v1954 = vunpack.c.l.b16 %v746
    %v1955 = vunpack.c.h.b16 %v746
    %v1956 = vunpack.c.l.b16 %v747
    %v1957 = vunpack.c.h.b16 %v747
    %v1958 = vunpack.c.l.b16 %v748
    %v1959 = vunpack.c.h.b16 %v748
    %v1960 = vunpack.c.l.b16 %v749
    %v1961 = vunpack.c.h.b16 %v749
    %v1962 = vunpack.c.l.b16 %v750
    %v1963 = vunpack.c.h.b16 %v750
    %v1964 = vunpack.c.l.b16 %v751
    %v1965 = vunpack.c.h.b16 %v751
    %v1966 = vunpack.c.l.b16 %v752
    %v1967 = vunpack.c.h.b16 %v752
    %v1968 = vunpack.c.l.b16 %v753
    %v1969 = vunpack.c.h.b16 %v753
    %v1970 = vunpack.c.l.b16 %v754
    %v1971 = vunpack.c.h.b16 %v754
    %v1972 = vunpack.c.l.b16 %v755
    %v1973 = vunpack.c.h.b16 %v755
    %v1974 = vunpack.c.l.b16 %v756
    %v1975 = vunpack.c.h.b16 %v756
    %v1976 = vunpack.c.l.b16 %v757
    %v1977 = vunpack.c.h.b16 %v757
    %v1978 = vunpack.c.l.b16 %v758
    %v1979 = vunpack.c.h.b16 %v758
    %v1980 = vunpack.c.l.b16 %v759
    %v1981 = vunpack.c.h.b16 %v759
    %v1982 = vunpack.c.l.b16 %v760
    %v1983 = vunpack.c.h.b16 %v760
    %v1984 = vunpack.c.l.b16 %v761
    %v1985 = vunpack.c.h.b16 %v761
    %v1986 = vunpack.c.l.b16 %v762
    %v1987 = vunpack.c.h.b16 %v762
    %v1988 = vunpack.c.l.b16 %v763
    %v1989 = vunpack.c.h.b16 %v763
    %v1990 = vunpack.c.l.b16 %v764
    %v1991 = vunpack.c.h.b16 %v764
    %v1992 = vunpack.c.l.b16 %v765
    %v1993 = vunpack.c.h.b16 %v765
    %v1994 = vunpack.c.l.b16 %v766
    %v1995 = vunpack.c.h.b16 %v766
    %v1996 = vunpack.c.l.b16 %v767
    %v1997 = vunpack.c.h.b16 %v767
    %v1998 = vunpack.c.l.b16 %v768
    %v1999 = vunpack.c.h.b16 %v768
    %v2000 = vunpack.c.l.b16 %v769
    %v2001 = vunpack.c.h.b16 %v769
    %v2002 = vunpack.c.l.b16 %v770
    %v2003 = vunpack.c.h.b16 %v770
    %v2004 = vunpack.c.l.b16 %v771
    %v2005 = vunpack.c.h.b16 %v771
    %v2006 = vunpack.c.l.b16 %v772
    %v2007 = vunpack.c.h.b16 %v772
    %v2008 = vunpack.c.l.b16 %v773
    %v2009 = vunpack.c.h.b16 %v773
    %v2010 = vunpack.c.l.b16 %v774
    %v2011 = vunpack.c.h.b16 %v774
    %v2012 = vunpack.c.l.b16 %v775
    %v2013 = vunpack.c.h.b16 %v775
    %v2014 = vunpack.c.l.b16 %v776
    %v2015 = vunpack.c.h.b16 %v776
    %v2016 = vunpack.c.l.b16 %v777
    %v2017 = vunpack.c.h.b16 %v777
    %v2018 = vunpack.c.l.b16 %v778
    %v2019 = vunpack.c.h.b16 %v778
    %v2020 = vunpack.c.l.b16 %v779
    %v2021 = vunpack.c.h.b16 %v779
    %v2022 = vunpack.c.l.b16 %v780
    %v2023 = vunpack.c.h.b16 %v780
    %v2024 = vunpack.c.l.b16 %v781
    %v2025 = vunpack.c.h.b16 %v781
    %v2026 = vunpack.c.l.b16 %v782
    %v2027 = vunpack.c.h.b16 %v782
    %v2028 = vunpack.c.l.b16 %v783
    %v2029 = vunpack.c.h.b16 %v783
    %v2030 = vunpack.c.l.b16 %v784
    %v2031 = vunpack.c.h.b16 %v784
    %v2032 = vunpack.c.l.b16 %v785
    %v2033 = vunpack.c.h.b16 %v785
    %v2034 = vunpack.c.l.b16 %v786
    %v2035 = vunpack.c.h.b16 %v786
    %v2036 = vunpack.c.l.b16 %v787
    %v2037 = vunpack.c.h.b16 %v787
    %v2038 = vunpack.c.l.b16 %v788
    %v2039 = vunpack.c.h.b16 %v788
    %v2040 = vunpack.c.l.b16 %v789
    %v2041 = vunpack.c.h.b16 %v789
    %v2042 = vunpack.c.l.b16 %v790
    %v2043 = vunpack.c.h.b16 %v790
    %v2044 = vunpack.c.l.b16 %v791
    %v2045 = vunpack.c.h.b16 %v791
    %v2046 = vunpack.c.l.b16 %v792
    %v2047 = vunpack.c.h.b16 %v792
    %v2048 = vunpack.c.l.b16 %v793
    %v2049 = vunpack.c.h.b16 %v793
    %v2050 = vunpack.c.l.b16 %v794
    %v2051 = vunpack.c.h.b16 %v794
    %v2052 = vunpack.c.l.b16 %v795
    %v2053 = vunpack.c.h.b16 %v795
    %v2054 = vunpack.c.l.b16 %v796
    %v2055 = vunpack.c.h.b16 %v796
    %v2056 = vunpack.c.l.b16 %v797
    %v2057 = vunpack.c.h.b16 %v797
    %v2058 = vunpack.c.l.b16 %v798
    %v2059 = vunpack.c.h.b16 %v798
    %v2060 = vunpack.c.l.b16 %v799
    %v2061 = vunpack.c.h.b16 %v799
    %v2062 = vunpack.c.l.b16 %v800
    %v2063 = vunpack.c.h.b16 %v800
    %v2064 = vunpack.c.l.b16 %v801
    %v2065 = vunpack.c.h.b16 %v801
    %v2066 = vunpack.c.l.b16 %v802
    %v2067 = vunpack.c.h.b16 %v802
    %v2068 = vunpack.c.l.b16 %v803
    %v2069 = vunpack.c.h.b16 %v803
    %v2070 = vunpack.c.l.b16 %v804
    %v2071 = vunpack.c.h.b16 %v804
    %v2072 = vunpack.c.l.b16 %v805
    %v2073 = vunpack.c.h.b16 %v805
    %v2074 = vunpack.c.l.b16 %v806
    %v2075 = vunpack.c.h.b16 %v806
    %v2076 = vunpack.c.l.b16 %v807
    %v2077 = vunpack.c.h.b16 %v807
    %v2078 = vunpack.c.l.b16 %v808
    %v2079 = vunpack.c.h.b16 %v808
    %v2080 = vunpack.c.l.b16 %v809
    %v2081 = vunpack.c.h.b16 %v809
    %v2082 = vunpack.c.l.b16 %v810
    %v2083 = vunpack.c.h.b16 %v810
    %v2084 = vunpack.c.l.b16 %v811
    %v2085 = vunpack.c.h.b16 %v811
    %v2086 = vunpack.c.l.b16 %v812
    %v2087 = vunpack.c.h.b16 %v812
    %v2088 = vunpack.c.l.b16 %v813
    %v2089 = vunpack.c.h.b16 %v813
    %v2090 = vunpack.c.l.b16 %v814
    %v2091 = vunpack.c.h.b16 %v814
    %v2092 = vunpack.c.l.b16 %v815
    %v2093 = vunpack.c.h.b16 %v815
    %v2094 = vunpack.c.l.b16 %v816
    %v2095 = vunpack.c.h.b16 %v816
    %v2096 = vunpack.c.l.b16 %v817
    %v2097 = vunpack.c.h.b16 %v817
    %v2098 = vunpack.c.l.b16 %v818
    %v2099 = vunpack.c.h.b16 %v818
    %v2100 = vunpack.c.l.b16 %v819
    %v2101 = vunpack.c.h.b16 %v819
    %v2102 = vunpack.c.l.b16 %v820
    %v2103 = vunpack.c.h.b16 %v820
    %v2104 = vunpack.c.l.b16 %v821
    %v2105 = vunpack.c.h.b16 %v821
    %v2106 = vunpack.c.l.b16 %v822
    %v2107 = vunpack.c.h.b16 %v822
    %v2108 = vunpack.c.l.b16 %v823
    %v2109 = vunpack.c.h.b16 %v823
    %v2110 = vunpack.c.l.b16 %v824
    %v2111 = vunpack.c.h.b16 %v824
    %v2112 = vunpack.c.l.b16 %v825
    %v2113 = vunpack.c.h.b16 %v825
    %v2114 = vunpack.c.l.b16 %v826
    %v2115 = vunpack.c.h.b16 %v826
    %v2116 = vunpack.c.l.b16 %v827
    %v2117 = vunpack.c.h.b16 %v827
    %v2118 = vunpack.c.l.b16 %v828
    %v2119 = vunpack.c.h.b16 %v828
    %v2120 = vunpack.c.l.b16 %v829
    %v2121 = vunpack.c.h.b16 %v829
    %v2122 = vunpack.c.l.b16 %v830
    %v2123 = vunpack.c.h.b16 %v830
    %v2124 = vunpack.c.l.b16 %v831
    %v2125 = vunpack.c.h.b16 %v831
    %v2126 = vunpack.c.l.b16 %v832
    %v2127 = vunpack.c.h.b16 %v832
    %v2128 = vunpack.c.l.b16 %v833
    %v2129 = vunpack.c.h.b16 %v833
    %v2130 = vunpack.c.l.b16 %v834
    %v2131 = vunpack.c.h.b16 %v834
    %v2132 = vunpack.c.l.b16 %v835
    %v2133 = vunpack.c.h.b16 %v835
    %v2134 = vunpack.c.l.b16 %v836
    %v2135 = vunpack.c.h.b16 %v836
    %v2136 = vunpack.c.l.b16 %v837
    %v2137 = vunpack.c.h.b16 %v837
    %v2138 = vunpack.c.l.b16 %v838
    %v2139 = vunpack.c.h.b16 %v838
    %v2140 = vunpack.c.l.b16 %v839
    %v2141 = vunpack.c.h.b16 %v839
    %v2142 = vunpack.c.l.b16 %v840
    %v2143 = vunpack.c.h.b16 %v840
    %v2144 = vunpack.c.l.b16 %v841
    %v2145 = vunpack.c.h.b16 %v841
    %v2146 = vunpack.c.l.b16 %v842
    %v2147 = vunpack.c.h.b16 %v842
    %v2148 = vunpack.c.l.b16 %v843
    %v2149 = vunpack.c.h.b16 %v843
    %v2150 = vunpack.c.l.b16 %v844
    %v2151 = vunpack.c.h.b16 %v844
    %v2152 = vunpack.c.l.b16 %v845
    %v2153 = vunpack.c.h.b16 %v845
    %v2154 = vunpack.c.l.b16 %v846
    %v2155 = vunpack.c.h.b16 %v846
    %v2156 = vunpack.c.l.b16 %v847
    %v2157 = vunpack.c.h.b16 %v847
    %v2158 = vunpack.c.l.b16 %v848
    %v2159 = vunpack.c.h.b16 %v848
    %v2160 = vunpack.c.l.b16 %v849
    %v2161 = vunpack.c.h.b16 %v849
    %v2162 = vunpack.c.l.b16 %v850
    %v2163 = vunpack.c.h.b16 %v850
    %v2164 = vunpack.c.l.b16 %v851
    %v2165 = vunpack.c.h.b16 %v851
    %v2166 = vunpack.c.l.b16 %v852
    %v2167 = vunpack.c.h.b16 %v852
    %v2168 = vunpack.c.l.b16 %v853
    %v2169 = vunpack.c.h.b16 %v853
    %v2170 = vunpack.c.l.b16 %v854
    %v2171 = vunpack.c.h.b16 %v854
    %v2172 = vunpack.c.l.b16 %v855
    %v2173 = vunpack.c.h.b16 %v855
    %v2174 = vunpack.c.l.b16 %v856
    %v2175 = vunpack.c.h.b16 %v856
    %v2176 = vunpack.c.l.b16 %v857
    %v2177 = vunpack.c.h.b16 %v857
    %v2178 = vunpack.c.l.b16 %v858
    %v2179 = vunpack.c.h.b16 %v858
    %v2180 = vunpack.c.l.b16 %v859
    %v2181 = vunpack.c.h.b16 %v859
    %v2182 = vunpack.c.l.b16 %v860
    %v2183 = vunpack.c.h.b16 %v860
    %v2184 = vunpack.c.l.b16 %v861
    %v2185 = vunpack.c.h.b16 %v861
    %v2186 = vunpack.c.l.b16 %v862
    %v2187 = vunpack.c.h.b16 %v862
    %v2188 = vunpack.c.l.b16 %v863
    %v2189 = vunpack.c.h.b16 %v863
    %v2190 = vunpack.c.l.b16 %v864
    %v2191 = vunpack.c.h.b16 %v864
    %v2192 = vunpack.c.l.b16 %v865
    %v2193 = vunpack.c.h.b16 %v865
    %v2194 = vunpack.c.l.b16 %v866
    %v2195 = vunpack.c.h.b16 %v866
    %v2196 = vunpack.c.l.b16 %v867
    %v2197 = vunpack.c.h.b16 %v867
    %v2198 = vunpack.c.l.b16 %v868
    %v2199 = vunpack.c.h.b16 %v868
    %v2200 = vunpack.c.l.b16 %v869
    %v2201 = vunpack.c.h.b16 %v869
    %v2202 = vunpack.c.l.b16 %v870
    %v2203 = vunpack.c.h.b16 %v870
    %v2204 = vunpack.c.l.b16 %v871
    %v2205 = vunpack.c.h.b16 %v871
    %v2206 = vunpack.c.l.b16 %v872
    %v2207 = vunpack.c.h.b16 %v872
    %v2208 = vunpack.c.l.b16 %v873
    %v2209 = vunpack.c.h.b16 %v873
    %v2210 = vunpack.c.l.b16 %v874
    %v2211 = vunpack.c.h.b16 %v874
    %v2212 = vunpack.c.l.b16 %v875
    %v2213 = vunpack.c.h.b16 %v875
    %v2214 = vunpack.c.l.b16 %v876
    %v2215 = vunpack.c.h.b16 %v876
    %v2216 = vunpack.c.l.b16 %v877
    %v2217 = vunpack.c.h.b16 %v877
    %v2218 = vunpack.c.l.b16 %v878
    %v2219 = vunpack.c.h.b16 %v878
    %v2220 = vunpack.c.l.b16 %v879
    %v2221 = vunpack.c.h.b16 %v879
    %v2222 = vunpack.c.l.b16 %v880
    %v2223 = vunpack.c.h.b16 %v880
    %v2224 = vunpack.c.l.b16 %v881
    %v2225 = vunpack.c.h.b16 %v881
    %v2226 = vunpack.c.l.b16 %v882
    %v2227 = vunpack.c.h.b16 %v882
    %v2228 = vunpack.c.l.b16 %v883
    %v2229 = vunpack.c.h.b16 %v883
    %v2230 = vunpack.c.l.b16 %v884
    %v2231 = vunpack.c.h.b16 %v884
    %v2232 = vunpack.c.l.b16 %v885
    %v2233 = vunpack.c.h.b16 %v885
    %v2234 = vunpack.c.l.b16 %v886
    %v2235 = vunpack.c.h.b16 %v886
    %v2236 = vunpack.c.l.b16 %v887
    %v2237 = vunpack.c.h.b16 %v887
    %v2238 = vunpack.c.l.b16 %v888
    %v2239 = vunpack.c.h.b16 %v888
    %v2240 = vunpack.c.l.b16 %v889
    %v2241 = vunpack.c.h.b16 %v889
    %v2242 = vunpack.c.l.b16 %v890
    %v2243 = vunpack.c.h.b16 %v890
    %v2244 = vunpack.c.l.b16 %v891
    %v2245 = vunpack.c.h.b16 %v891
    %v2246 = vunpack.c.l.b16 %v892
    %v2247 = vunpack.c.h.b16 %v892
    %v2248 = vunpack.c.l.b16 %v893
    %v2249 = vunpack.c.h.b16 %v893
    %v2250 = vunpack.c.l.b16 %v894
    %v2251 = vunpack.c.h.b16 %v894
    %v2252 = vunpack.c.l.b16 %v895
    %v2253 = vunpack.c.h.b16 %v895
    %v2254 = vunpack.c.l.b16 %v896
    %v2255 = vunpack.c.h.b16 %v896
    %v2256 = vunpack.c.l.b16 %v897
    %v2257 = vunpack.c.h.b16 %v897
    %v2258 = vunpack.c.l.b16 %v898
    %v2259 = vunpack.c.h.b16 %v898
    %v2260 = vunpack.c.l.b16 %v899
    %v2261 = vunpack.c.h.b16 %v899
    %v2262 = vunpack.c.l.b16 %v900
    %v2263 = vunpack.c.h.b16 %v900
    %v2264 = vunpack.c.l.b16 %v901
    %v2265 = vunpack.c.h.b16 %v901
    %v2266 = vunpack.c.l.b16 %v902
    %v2267 = vunpack.c.h.b16 %v902
    %v2268 = vunpack.c.l.b16 %v903
    %v2269 = vunpack.c.h.b16 %v903
    %v2270 = vunpack.c.l.b16 %v904
    %v2271 = vunpack.c.h.b16 %v904
    %v2272 = vunpack.c.l.b16 %v905
    %v2273 = vunpack.c.h.b16 %v905
    %v2274 = vunpack.c.l.b16 %v906
    %v2275 = vunpack.c.h.b16 %v906
    %v2276 = vunpack.c.l.b16 %v907
    %v2277 = vunpack.c.h.b16 %v907
    %v2278 = vunpack.c.l.b16 %v908
    %v2279 = vunpack.c.h.b16 %v908
    %v2280 = vunpack.c.l.b16 %v909
    %v2281 = vunpack.c.h.b16 %v909
    %v2282 = vunpack.c.l.b16 %v910
    %v2283 = vunpack.c.h.b16 %v910
    %v2284 = vunpack.c.l.b16 %v911
    %v2285 = vunpack.c.h.b16 %v911
    %v2286 = vunpack.c.l.b16 %v912
    %v2287 = vunpack.c.h.b16 %v912
    %v2288 = vunpack.c.l.b16 %v913
    %v2289 = vunpack.c.h.b16 %v913
    %v2290 = vunpack.c.l.b16 %v914
    %v2291 = vunpack.c.h.b16 %v914
    %v2292 = vunpack.c.l.b16 %v915
    %v2293 = vunpack.c.h.b16 %v915
    %v2294 = vunpack.c.l.b16 %v916
    %v2295 = vunpack.c.h.b16 %v916
    %v2296 = vunpack.c.l.b16 %v917
    %v2297 = vunpack.c.h.b16 %v917
    %v2298 = vunpack.c.l.b16 %v918
    %v2299 = vunpack.c.h.b16 %v918
    %v2300 = vunpack.c.l.b16 %v919
    %v2301 = vunpack.c.h.b16 %v919
    %v2302 = vunpack.c.l.b16 %v920
    %v2303 = vunpack.c.h.b16 %v920
    %v2304 = vunpack.c.l.b16 %v921
    %v2305 = vunpack.c.h.b16 %v921
    %v2306 = vunpack.c.l.b16 %v922
    %v2307 = vunpack.c.h.b16 %v922
    %v2308 = vunpack.c.l.b16 %v923
    %v2309 = vunpack.c.h.b16 %v923
    %v2310 = vunpack.c.l.b16 %v924
    %v2311 = vunpack.c.h.b16 %v924
    %v2312 = vunpack.c.l.b16 %v925
    %v2313 = vunpack.c.h.b16 %v925
    %v2314 = vunpack.c.l.b16 %v926
    %v2315 = vunpack.c.h.b16 %v926
    %v2316 = vunpack.c.l.b16 %v927
    %v2317 = vunpack.c.h.b16 %v927
    %v2318 = vunpack.c.l.b16 %v928
    %v2319 = vunpack.c.h.b16 %v928
    %v2320 = vunpack.c.l.b16 %v929
    %v2321 = vunpack.c.h.b16 %v929
    %v2322 = vunpack.c.l.b16 %v930
    %v2323 = vunpack.c.h.b16 %v930
    %v2324 = vunpack.c.l.b16 %v931
    %v2325 = vunpack.c.h.b16 %v931
    %v2326 = vunpack.c.l.b16 %v932
    %v2327 = vunpack.c.h.b16 %v932
    %v2328 = vunpack.c.l.b16 %v933
    %v2329 = vunpack.c.h.b16 %v933
    %v2330 = vunpack.c.l.b16 %v934
    %v2331 = vunpack.c.h.b16 %v934
    %v2332 = vunpack.c.l.b16 %v935
    %v2333 = vunpack.c.h.b16 %v935
    %v2334 = vunpack.c.l.b16 %v936
    %v2335 = vunpack.c.h.b16 %v936
    %v2336 = vunpack.c.l.b16 %v937
    %v2337 = vunpack.c.h.b16 %v937
    %v2338 = vunpack.c.l.b16 %v938
    %v2339 = vunpack.c.h.b16 %v938
    %v2340 = vunpack.c.l.b16 %v939
    %v2341 = vunpack.c.h.b16 %v939
    %v2342 = vunpack.c.l.b16 %v940
    %v2343 = vunpack.c.h.b16 %v940
    %v2344 = vunpack.c.l.b16 %v941
    %v2345 = vunpack.c.h.b16 %v941
    %v2346 = vunpack.c.l.b16 %v942
    %v2347 = vunpack.c.h.b16 %v942
    %v2348 = vunpack.c.l.b16 %v943
    %v2349 = vunpack.c.h.b16 %v943
    %v2350 = vunpack.c.l.b16 %v944
    %v2351 = vunpack.c.h.b16 %v944
    %v2352 = vunpack.c.l.b16 %v945
    %v2353 = vunpack.c.h.b16 %v945
    %v2354 = vunpack.c.l.b16 %v946
    %v2355 = vunpack.c.h.b16 %v946
    %v2356 = vunpack.c.l.b16 %v947
    %v2357 = vunpack.c.h.b16 %v947
    %v2358 = vunpack.c.l.b16 %v948
    %v2359 = vunpack.c.h.b16 %v948
    %v2360 = vunpack.c.l.b16 %v949
    %v2361 = vunpack.c.h.b16 %v949
    %v2362 = vunpack.c.l.b16 %v950
    %v2363 = vunpack.c.h.b16 %v950
    %v2364 = vunpack.c.l.b16 %v951
    %v2365 = vunpack.c.h.b16 %v951
    %v2366 = vunpack.c.l.b16 %v952
    %v2367 = vunpack.c.h.b16 %v952
    %v2368 = vunpack.c.l.b16 %v953
    %v2369 = vunpack.c.h.b16 %v953
    %v2370 = vunpack.c.l.b16 %v954
    %v2371 = vunpack.c.h.b16 %v954
    %v2372 = vunpack.c.l.b16 %v955
    %v2373 = vunpack.c.h.b16 %v955
    %v2374 = vunpack.c.l.b16 %v956
    %v2375 = vunpack.c.h.b16 %v956
    %v2376 = vunpack.c.l.b16 %v957
    %v2377 = vunpack.c.h.b16 %v957
    %v2378 = vunpack.c.l.b16 %v958
    %v2379 = vunpack.c.h.b16 %v958
    %v2380 = vunpack.c.l.b16 %v959
    %v2381 = vunpack.c.h.b16 %v959
    %v2382 = vunpack.c.l.b16 %v960
    %v2383 = vunpack.c.h.b16 %v960
    %v2384 = vunpack.c.l.b16 %v961
    %v2385 = vunpack.c.h.b16 %v961
    %v2386 = vunpack.c.l.b16 %v962
    %v2387 = vunpack.c.h.b16 %v962
    %v2388 = vunpack.c.l.b16 %v963
    %v2389 = vunpack.c.h.b16 %v963
    %v2390 = vunpack.c.l.b16 %v964
    %v2391 = vunpack.c.h.b16 %v964
    %v2392 = vunpack.c.l.b16 %v965
    %v2393 = vunpack.c.h.b16 %v965
    %v2394 = vunpack.c.l.b16 %v966
    %v2395 = vunpack.c.h.b16 %v966
    %v2396 = vunpack.c.l.b16 %v967
    %v2397 = vunpack.c.h.b16 %v967
    %v2398 = vunpack.c.l.b16 %v968
    %v2399 = vunpack.c.h.b16 %v968
    %v2400 = vunpack.c.l.b16 %v969
    %v2401 = vunpack.c.h.b16 %v969
    %v2402 = vunpack.c.l.b16 %v970
    %v2403 = vunpack.c.h.b16 %v970
    %v2404 = vunpack.c.l.b16 %v971
    %v2405 = vunpack.c.h.b16 %v971
    %v2406 = vunpack.c.l.b16 %v972
    %v2407 = vunpack.c.h.b16 %v972
    %v2408 = vunpack.c.l.b16 %v973
    %v2409 = vunpack.c.h.b16 %v973
    %v2410 = vunpack.c.l.b16 %v974
    %v2411 = vunpack.c.h.b16 %v974
    %v2412 = vunpack.c.l.b16 %v975
    %v2413 = vunpack.c.h.b16 %v975
    %v2414 = vunpack.c.l.b16 %v976
    %v2415 = vunpack.c.h.b16 %v976
    %v2416 = vunpack.c.l.b16 %v977
    %v2417 = vunpack.c.h.b16 %v977
    %v2418 = vunpack.c.l.b16 %v978
    %v2419 = vunpack.c.h.b16 %v978
    %v2420 = vunpack.c.l.b16 %v979
    %v2421 = vunpack.c.h.b16 %v979
    %v2422 = vunpack.c.l.b16 %v980
    %v2423 = vunpack.c.h.b16 %v980
    %v2424 = vunpack.c.l.b16 %v981
    %v2425 = vunpack.c.h.b16 %v981
    %v2426 = vunpack.c.l.b16 %v982
    %v2427 = vunpack.c.h.b16 %v982
    %v2428 = vunpack.c.l.b16 %v983
    %v2429 = vunpack.c.h.b16 %v983
    %v2430 = vunpack.c.l.b16 %v984
    %v2431 = vunpack.c.h.b16 %v984
    %v2432 = vunpack.c.l.b16 %v985
    %v2433 = vunpack.c.h.b16 %v985
    %v2434 = vunpack.c.l.b16 %v986
    %v2435 = vunpack.c.h.b16 %v986
    %v2436 = vunpack.c.l.b16 %v987
    %v2437 = vunpack.c.h.b16 %v987
    %v2438 = vunpack.c.l.b16 %v988
    %v2439 = vunpack.c.h.b16 %v988
    %v2440 = vunpack.c.l.b16 %v989
    %v2441 = vunpack.c.h.b16 %v989
    %v2442 = vunpack.c.l.b16 %v990
    %v2443 = vunpack.c.h.b16 %v990
    %v2444 = vunpack.c.l.b16 %v991
    %v2445 = vunpack.c.h.b16 %v991
    %v2446 = vunpack.c.l.b16 %v992
    %v2447 = vunpack.c.h.b16 %v992
    %v2448 = vunpack.c.l.b16 %v993
    %v2449 = vunpack.c.h.b16 %v993
    %v2450 = vunpack.c.l.b16 %v994
    %v2451 = vunpack.c.h.b16 %v994
    %v2452 = vunpack.c.l.b16 %v995
    %v2453 = vunpack.c.h.b16 %v995
    %v2454 = vunpack.c.l.b16 %v996
    %v2455 = vunpack.c.h.b16 %v996
    %v2456 = vunpack.c.l.b16 %v997
    %v2457 = vunpack.c.h.b16 %v997
    %v2458 = vunpack.c.l.b16 %v998
    %v2459 = vunpack.c.h.b16 %v998
    %v2460 = vunpack.c.l.b16 %v999
    %v2461 = vunpack.c.h.b16 %v999
    %v2462 = vunpack.c.l.b16 %v1000
    %v2463 = vunpack.c.h.b16 %v1000
    %v2464 = vunpack.c.l.b16 %v1001
    %v2465 = vunpack.c.h.b16 %v1001
    %v2466 = vunpack.c.l.b16 %v1002
    %v2467 = vunpack.c.h.b16 %v1002
    %v2468 = vunpack.c.l.b16 %v1003
    %v2469 = vunpack.c.h.b16 %v1003
    %v2470 = vunpack.c.l.b16 %v1004
    %v2471 = vunpack.c.h.b16 %v1004
    %v2472 = vunpack.c.l.b16 %v1005
    %v2473 = vunpack.c.h.b16 %v1005
    %v2474 = vunpack.c.l.b16 %v1006
    %v2475 = vunpack.c.h.b16 %v1006
    %v2476 = vunpack.c.l.b16 %v1007
    %v2477 = vunpack.c.h.b16 %v1007
    %v2478 = vunpack.c.l.b16 %v1008
    %v2479 = vunpack.c.h.b16 %v1008
    %v2480 = vunpack.c.l.b16 %v1009
    %v2481 = vunpack.c.h.b16 %v1009
    %v2482 = vunpack.c.l.b16 %v1010
    %v2483 = vunpack.c.h.b16 %v1010
    %v2484 = vunpack.c.l.b16 %v1011
    %v2485 = vunpack.c.h.b16 %v1011
    %v2486 = vunpack.c.l.b16 %v1012
    %v2487 = vunpack.c.h.b16 %v1012
    %v2488 = vunpack.c.l.b16 %v1013
    %v2489 = vunpack.c.h.b16 %v1013
    %v2490 = vunpack.c.l.b16 %v1014
    %v2491 = vunpack.c.h.b16 %v1014
    %v2492 = vunpack.c.l.b16 %v1015
    %v2493 = vunpack.c.h.b16 %v1015
    %v2494 = vunpack.c.l.b16 %v1016
    %v2495 = vunpack.c.h.b16 %v1016
    %v2496 = vunpack.c.l.b16 %v1017
    %v2497 = vunpack.c.h.b16 %v1017
    %v2498 = vunpack.c.l.b16 %v1018
    %v2499 = vunpack.c.h.b16 %v1018
    %v2500 = vunpack.c.l.b16 %v1019
    %v2501 = vunpack.c.h.b16 %v1019
    %v2502 = vunpack.c.l.b16 %v1020
    %v2503 = vunpack.c.h.b16 %v1020
    %v2504 = vunpack.c.l.b16 %v1021
    %v2505 = vunpack.c.h.b16 %v1021
    %v2506 = vunpack.c.l.b16 %v1022
    %v2507 = vunpack.c.h.b16 %v1022
    %v2508 = vunpack.c.l.b16 %v1023
    %v2509 = vunpack.c.h.b16 %v1023
    %v2510 = vunpack.c.l.b16 %v1024
    %v2511 = vunpack.c.h.b16 %v1024
    %v2512 = vunpack.c.l.b16 %v1025
    %v2513 = vunpack.c.h.b16 %v1025
    %v2514 = vunpack.c.l.b16 %v1026
    %v2515 = vunpack.c.h.b16 %v1026
    %v2516 = vunpack.c.l.b16 %v1027
    %v2517 = vunpack.c.h.b16 %v1027
    %v2518 = vunpack.c.l.b16 %v1028
    %v2519 = vunpack.c.h.b16 %v1028
    %v2520 = vunpack.c.l.b16 %v1029
    %v2521 = vunpack.c.h.b16 %v1029
    %v2522 = vunpack.c.l.b16 %v1030
    %v2523 = vunpack.c.h.b16 %v1030
    %v2524 = vunpack.c.l.b16 %v1031
    %v2525 = vunpack.c.h.b16 %v1031
    %v2526 = vunpack.c.l.b16 %v1032
    %v2527 = vunpack.c.h.b16 %v1032
    %v2528 = vunpack.c.l.b16 %v1033
    %v2529 = vunpack.c.h.b16 %v1033
    %v2530 = vunpack.c.l.b16 %v1034
    %v2531 = vunpack.c.h.b16 %v1034
    %v2532 = vunpack.c.l.b16 %v1035
    %v2533 = vunpack.c.h.b16 %v1035
    %v2534 = vunpack.c.l.b16 %v1036
    %v2535 = vunpack.c.h.b16 %v1036
    %v2536 = vunpack.c.l.b16 %v1037
    %v2537 = vunpack.c.h.b16 %v1037
    %v2538 = vunpack.c.l.b16 %v1038
    %v2539 = vunpack.c.h.b16 %v1038
    %v2540 = vunpack.c.l.b16 %v1039
    %v2541 = vunpack.c.h.b16 %v1039
    %v2542 = vunpack.c.l.b16 %v1040
    %v2543 = vunpack.c.h.b16 %v1040
    %v2544 = vunpack.c.l.b16 %v1041
    %v2545 = vunpack.c.h.b16 %v1041
    %v2546 = vunpack.c.l.b16 %v1042
    %v2547 = vunpack.c.h.b16 %v1042
    %v2548 = vunpack.c.l.b16 %v1043
    %v2549 = vunpack.c.h.b16 %v1043
    %v2550 = vunpack.c.l.b16 %v1044
    %v2551 = vunpack.c.h.b16 %v1044
    %v2552 = vunpack.c.l.b16 %v1045
    %v2553 = vunpack.c.h.b16 %v1045
    %v2554 = vunpack.c.l.b16 %v1046
    %v2555 = vunpack.c.h.b16 %v1046
    %v2556 = vunpack.c.l.b16 %v1047
    %v2557 = vunpack.c.h.b16 %v1047
    %v2558 = vunpack.c.l.b16 %v1048
    %v2559 = vunpack.c.h.b16 %v1048
    %v2560 = vunpack.c.l.b16 %v1049
    %v2561 = vunpack.c.h.b16 %v1049
    %v2562 = vunpack.c.l.b16 %v1050
    %v2563 = vunpack.c.h.b16 %v1050
    %v2564 = vunpack.c.l.b16 %v1051
    %v2565 = vunpack.c.h.b16 %v1051
    %v2566 = vunpack.c.l.b16 %v1052
    %v2567 = vunpack.c.h.b16 %v1052
    %v2568 = vunpack.c.l.b16 %v1053
    %v2569 = vunpack.c.h.b16 %v1053
    %v2570 = vunpack.c.l.b16 %v1054
    %v2571 = vunpack.c.h.b16 %v1054
    %v2572 = vunpack.c.l.b16 %v1055
    %v2573 = vunpack.c.h.b16 %v1055
    %v2574 = vunpack.c.l.b16 %v1056
    %v2575 = vunpack.c.h.b16 %v1056
    %v2576 = vunpack.c.l.b16 %v1057
    %v2577 = vunpack.c.h.b16 %v1057
    %v2578 = vunpack.c.l.b16 %v1058
    %v2579 = vunpack.c.h.b16 %v1058
    %v2580 = vunpack.c.l.b16 %v1059
    %v2581 = vunpack.c.h.b16 %v1059
    %v2582 = vunpack.c.l.b16 %v1060
    %v2583 = vunpack.c.h.b16 %v1060
    %v2584 = vunpack.c.l.b16 %v1061
    %v2585 = vunpack.c.h.b16 %v1061
    %v2586 = vunpack.c.l.b16 %v1062
    %v2587 = vunpack.c.h.b16 %v1062
    %v2588 = vunpack.c.l.b16 %v1063
    %v2589 = vunpack.c.h.b16 %v1063
    %v2590 = vunpack.c.l.b16 %v1064
    %v2591 = vunpack.c.h.b16 %v1064
    %v2592 = vunpack.c.l.b16 %v1065
    %v2593 = vunpack.c.h.b16 %v1065
    %v2594 = vunpack.c.l.b16 %v1066
    %v2595 = vunpack.c.h.b16 %v1066
    %v2596 = vunpack.c.l.b16 %v1067
    %v2597 = vunpack.c.h.b16 %v1067
    %v2598 = vunpack.c.l.b16 %v1068
    %v2599 = vunpack.c.h.b16 %v1068
    %v2600 = vunpack.c.l.b16 %v1069
    %v2601 = vunpack.c.h.b16 %v1069
    %v2602 = vunpack.c.l.b16 %v1070
    %v2603 = vunpack.c.h.b16 %v1070
    %v2604 = vunpack.c.l.b16 %v1071
    %v2605 = vunpack.c.h.b16 %v1071
    %v2606 = vunpack.c.l.b16 %v1072
    %v2607 = vunpack.c.h.b16 %v1072
    %v2608 = vunpack.c.l.b16 %v1073
    %v2609 = vunpack.c.h.b16 %v1073
    %v2610 = vunpack.c.l.b16 %v1074
    %v2611 = vunpack.c.h.b16 %v1074
    %v2612 = vunpack.c.l.b16 %v1075
    %v2613 = vunpack.c.h.b16 %v1075
    %v2614 = vunpack.c.l.b16 %v1076
    %v2615 = vunpack.c.h.b16 %v1076
    %v2616 = vunpack.c.l.b16 %v1077
    %v2617 = vunpack.c.h.b16 %v1077
    %v2618 = vunpack.c.l.b16 %v1078
    %v2619 = vunpack.c.h.b16 %v1078
    %v2620 = vunpack.c.l.b16 %v1079
    %v2621 = vunpack.c.h.b16 %v1079
    %v2622 = vunpack.c.l.b16 %v1080
    %v2623 = vunpack.c.h.b16 %v1080
    %v2624 = vunpack.c.l.b16 %v1081
    %v2625 = vunpack.c.h.b16 %v1081
    %v2626 = vunpack.c.l.b16 %v1082
    %v2627 = vunpack.c.h.b16 %v1082
    %v2628 = vunpack.c.l.b16 %v1083
    %v2629 = vunpack.c.h.b16 %v1083
    %v2630 = vunpack.c.l.b16 %v1084
    %v2631 = vunpack.c.h.b16 %v1084
    %v2632 = vunpack.c.l.b16 %v1085
    %v2633 = vunpack.c.h.b16 %v1085
    %v2634 = vunpack.c.l.b16 %v1086
    %v2635 = vunpack.c.h.b16 %v1086
    %v2636 = vunpack.c.l.b16 %v1087
    %v2637 = vunpack.c.h.b16 %v1087
    %v2638 = vunpack.c.l.b16 %v1088
    %v2639 = vunpack.c.h.b16 %v1088
    %v2640 = vunpack.c.l.b16 %v1089
    %v2641 = vunpack.c.h.b16 %v1089
    %v2642 = vunpack.c.l.b16 %v1090
    %v2643 = vunpack.c.h.b16 %v1090
    %v2644 = vunpack.c.l.b16 %v1091
    %v2645 = vunpack.c.h.b16 %v1091
    %v2646 = vunpack.c.l.b16 %v1092
    %v2647 = vunpack.c.h.b16 %v1092
    %v2648 = vunpack.c.l.b16 %v1093
    %v2649 = vunpack.c.h.b16 %v1093
    %v2650 = vunpack.c.l.b16 %v1094
    %v2651 = vunpack.c.h.b16 %v1094
    %v2652 = vunpack.c.l.b16 %v1095
    %v2653 = vunpack.c.h.b16 %v1095
    %v2654 = vunpack.c.l.b16 %v1096
    %v2655 = vunpack.c.h.b16 %v1096
    %v2656 = vunpack.c.l.b16 %v1097
    %v2657 = vunpack.c.h.b16 %v1097
    %v2658 = vunpack.c.l.b16 %v1098
    %v2659 = vunpack.c.h.b16 %v1098
    %v2660 = vunpack.c.l.b16 %v1099
    %v2661 = vunpack.c.h.b16 %v1099
    %v2662 = vunpack.c.l.b16 %v1100
    %v2663 = vunpack.c.h.b16 %v1100
    %v2664 = vunpack.c.l.b16 %v1101
    %v2665 = vunpack.c.h.b16 %v1101
    %v2666 = vunpack.c.l.b16 %v1102
    %v2667 = vunpack.c.h.b16 %v1102
    %v2668 = vunpack.c.l.b16 %v1103
    %v2669 = vunpack.c.h.b16 %v1103
    %v2670 = vunpack.c.l.b16 %v1104
    %v2671 = vunpack.c.h.b16 %v1104
    %v2672 = vunpack.c.l.b16 %v1105
    %v2673 = vunpack.c.h.b16 %v1105
    %v2674 = vunpack.c.l.b16 %v1106
    %v2675 = vunpack.c.h.b16 %v1106
    %v2676 = vunpack.c.l.b16 %v1107
    %v2677 = vunpack.c.h.b16 %v1107
    %v2678 = vunpack.c.l.b16 %v1108
    %v2679 = vunpack.c.h.b16 %v1108
    %v2680 = vunpack.c.l.b16 %v1109
    %v2681 = vunpack.c.h.b16 %v1109
    %v2682 = vunpack.c.l.b16 %v1110
    %v2683 = vunpack.c.h.b16 %v1110
    %v2684 = vunpack.c.l.b16 %v1111
    %v2685 = vunpack.c.h.b16 %v1111
    %v2686 = vunpack.c.l.b16 %v1112
    %v2687 = vunpack.c.h.b16 %v1112
    %v2688 = vunpack.c.l.b16 %v1113
    %v2689 = vunpack.c.h.b16 %v1113
    %v2690 = vunpack.c.l.b16 %v1114
    %v2691 = vunpack.c.h.b16 %v1114
    %v2692 = vunpack.c.l.b16 %v1115
    %v2693 = vunpack.c.h.b16 %v1115
    %v2694 = vpack.c.b16 %v1678, %v1670
    %v2695 = vpack.c.b16 %v1679, %v1671
    %v2696 = vpack.c.b16 %v1680, %v1672
    %v2697 = vpack.c.b16 %v1681, %v1673
    %v2698 = vpack.c.b16 %v1682, %v1674
    %v2699 = vpack.c.b16 %v1683, %v1675
    %v2700 = vpack.c.b16 %v1684, %v1676
    %v2701 = vpack.c.b16 %v1685, %v1677
    %v2702 = vpack.c.b16 %v1694, %v1686
    %v2703 = vpack.c.b16 %v1695, %v1687
    %v2704 = vpack.c.b16 %v1696, %v1688
    %v2705 = vpack.c.b16 %v1697, %v1689
    %v2706 = vpack.c.b16 %v1698, %v1690
    %v2707 = vpack.c.b16 %v1699, %v1691
    %v2708 = vpack.c.b16 %v1700, %v1692
    %v2709 = vpack.c.b16 %v1701, %v1693
    %v2710 = vpack.c.b16 %v1710, %v1702
    %v2711 = vpack.c.b16 %v1711, %v1703
    %v2712 = vpack.c.b16 %v1712, %v1704
    %v2713 = vpack.c.b16 %v1713, %v1705
    %v2714 = vpack.c.b16 %v1714, %v1706
    %v2715 = vpack.c.b16 %v1715, %v1707
    %v2716 = vpack.c.b16 %v1716, %v1708
    %v2717 = vpack.c.b16 %v1717, %v1709
    %v2718 = vpack.c.b16 %v1726, %v1718
    %v2719 = vpack.c.b16 %v1727, %v1719
    %v2720 = vpack.c.b16 %v1728, %v1720
    %v2721 = vpack.c.b16 %v1729, %v1721
    %v2722 = vpack.c.b16 %v1730, %v1722
    %v2723 = vpack.c.b16 %v1731, %v1723
    %v2724 = vpack.c.b16 %v1732, %v1724
    %v2725 = vpack.c.b16 %v1733, %v1725
    %v2726 = vpack.c.b16 %v1742, %v1734
    %v2727 = vpack.c.b16 %v1743, %v1735
    %v2728 = vpack.c.b16 %v1744, %v1736
    %v2729 = vpack.c.b16 %v1745, %v1737
    %v2730 = vpack.c.b16 %v1746, %v1738
    %v2731 = vpack.c.b16 %v1747, %v1739
    %v2732 = vpack.c.b16 %v1748, %v1740
    %v2733 = vpack.c.b16 %v1749, %v1741
    %v2734 = vpack.c.b16 %v1758, %v1750
    %v2735 = vpack.c.b16 %v1759, %v1751
    %v2736 = vpack.c.b16 %v1760, %v1752
    %v2737 = vpack.c.b16 %v1761, %v1753
    %v2738 = vpack.c.b16 %v1762, %v1754
    %v2739 = vpack.c.b16 %v1763, %v1755
    %v2740 = vpack.c.b16 %v1764, %v1756
    %v2741 = vpack.c.b16 %v1765, %v1757
    %v2742 = vpack.c.b16 %v1774, %v1766
    %v2743 = vpack.c.b16 %v1775, %v1767
    %v2744 = vpack.c.b16 %v1776, %v1768
    %v2745 = vpack.c.b16 %v1777, %v1769
    %v2746 = vpack.c.b16 %v1778, %v1770
    %v2747 = vpack.c.b16 %v1779, %v1771
    %v2748 = vpack.c.b16 %v1780, %v1772
    %v2749 = vpack.c.b16 %v1781, %v1773
    %v2750 = vpack.c.b16 %v1790, %v1782
    %v2751 = vpack.c.b16 %v1791, %v1783
    %v2752 = vpack.c.b16 %v1792, %v1784
    %v2753 = vpack.c.b16 %v1793, %v1785
    %v2754 = vpack.c.b16 %v1794, %v1786
    %v2755 = vpack.c.b16 %v1795, %v1787
    %v2756 = vpack.c.b16 %v1796, %v1788
    %v2757 = vpack.c.b16 %v1797, %v1789
    %v2758 = vpack.c.b16 %v1806, %v1798
    %v2759 = vpack.c.b16 %v1807, %v1799
    %v2760 = vpack.c.b16 %v1808, %v1800
    %v2761 = vpack.c.b16 %v1809, %v1801
    %v2762 = vpack.c.b16 %v1810, %v1802
    %v2763 = vpack.c.b16 %v1811, %v1803
    %v2764 = vpack.c.b16 %v1812, %v1804
    %v2765 = vpack.c.b16 %v1813, %v1805
    %v2766 = vpack.c.b16 %v1822, %v1814
    %v2767 = vpack.c.b16 %v1823, %v1815
    %v2768 = vpack.c.b16 %v1824, %v1816
    %v2769 = vpack.c.b16 %v1825, %v1817
    %v2770 = vpack.c.b16 %v1826, %v1818
    %v2771 = vpack.c.b16 %v1827, %v1819
    %v2772 = vpack.c.b16 %v1828, %v1820
    %v2773 = vpack.c.b16 %v1829, %v1821
    %v2774 = vpack.c.b16 %v1838, %v1830
    %v2775 = vpack.c.b16 %v1839, %v1831
    %v2776 = vpack.c.b16 %v1840, %v1832
    %v2777 = vpack.c.b16 %v1841, %v1833
    %v2778 = vpack.c.b16 %v1842, %v1834
    %v2779 = vpack.c.b16 %v1843, %v1835
    %v2780 = vpack.c.b16 %v1844, %v1836
    %v2781 = vpack.c.b16 %v1845, %v1837
    %v2782 = vpack.c.b16 %v1854, %v1846
    %v2783 = vpack.c.b16 %v1855, %v1847
    %v2784 = vpack.c.b16 %v1856, %v1848
    %v2785 = vpack.c.b16 %v1857, %v1849
    %v2786 = vpack.c.b16 %v1858, %v1850
    %v2787 = vpack.c.b16 %v1859, %v1851
    %v2788 = vpack.c.b16 %v1860, %v1852
    %v2789 = vpack.c.b16 %v1861, %v1853
    %v2790 = vpack.c.b16 %v1870, %v1862
    %v2791 = vpack.c.b16 %v1871, %v1863
    %v2792 = vpack.c.b16 %v1872, %v1864
    %v2793 = vpack.c.b16 %v1873, %v1865
    %v2794 = vpack.c.b16 %v1874, %v1866
    %v2795 = vpack.c.b16 %v1875, %v1867
    %v2796 = vpack.c.b16 %v1876, %v1868
    %v2797 = vpack.c.b16 %v1877, %v1869
    %v2798 = vpack.c.b16 %v1886, %v1878
    %v2799 = vpack.c.b16 %v1887, %v1879
    %v2800 = vpack.c.b16 %v1888, %v1880
    %v2801 = vpack.c.b16 %v1889, %v1881
    %v2802 = vpack.c.b16 %v1890, %v1882
    %v2803 = vpack.c.b16 %v1891, %v1883
    %v2804 = vpack.c.b16 %v1892, %v1884
    %v2805 = vpack.c.b16 %v1893, %v1885
    %v2806 = vpack.c.b16 %v1902, %v1894
    %v2807 = vpack.c.b16 %v1903, %v1895
    %v2808 = vpack.c.b16 %v1904, %v1896
    %v2809 = vpack.c.b16 %v1905, %v1897
    %v2810 = vpack.c.b16 %v1906, %v1898
    %v2811 = vpack.c.b16 %v1907, %v1899
    %v2812 = vpack.c.b16 %v1908, %v1900
    %v2813 = vpack.c.b16 %v1909, %v1901
    %v2814 = vpack.c.b16 %v1918, %v1910
    %v2815 = vpack.c.b16 %v1919, %v1911
    %v2816 = vpack.c.b16 %v1920, %v1912
    %v2817 = vpack.c.b16 %v1921, %v1913
    %v2818 = vpack.c.b16 %v1922, %v1914
    %v2819 = vpack.c.b16 %v1923, %v1915
    %v2820 = vpack.c.b16 %v1924, %v1916
    %v2821 = vpack.c.b16 %v1925, %v1917
    %v2822 = vpack.c.b16 %v1934, %v1926
    %v2823 = vpack.c.b16 %v1935, %v1927
    %v2824 = vpack.c.b16 %v1936, %v1928
    %v2825 = vpack.c.b16 %v1937, %v1929
    %v2826 = vpack.c.b16 %v1938, %v1930
    %v2827 = vpack.c.b16 %v1939, %v1931
    %v2828 = vpack.c.b16 %v1940, %v1932
    %v2829 = vpack.c.b16 %v1941, %v1933
    %v2830 = vpack.c.b16 %v1950, %v1942
    %v2831 = vpack.c.b16 %v1951, %v1943
    %v2832 = vpack.c.b16 %v1952, %v1944
    %v2833 = vpack.c.b16 %v1953, %v1945
    %v2834 = vpack.c.b16 %v1954, %v1946
    %v2835 = vpack.c.b16 %v1955, %v1947
    %v2836 = vpack.c.b16 %v1956, %v1948
    %v2837 = vpack.c.b16 %v1957, %v1949
    %v2838 = vpack.c.b16 %v1966, %v1958
    %v2839 = vpack.c.b16 %v1967, %v1959
    %v2840 = vpack.c.b16 %v1968, %v1960
    %v2841 = vpack.c.b16 %v1969, %v1961
    %v2842 = vpack.c.b16 %v1970, %v1962
    %v2843 = vpack.c.b16 %v1971, %v1963
    %v2844 = vpack.c.b16 %v1972, %v1964
    %v2845 = vpack.c.b16 %v1973, %v1965
    %v2846 = vpack.c.b16 %v1982, %v1974
    %v2847 = vpack.c.b16 %v1983, %v1975
    %v2848 = vpack.c.b16 %v1984, %v1976
    %v2849 = vpack.c.b16 %v1985, %v1977
    %v2850 = vpack.c.b16 %v1986, %v1978
    %v2851 = vpack.c.b16 %v1987, %v1979
    %v2852 = vpack.c.b16 %v1988, %v1980
    %v2853 = vpack.c.b16 %v1989, %v1981
    %v2854 = vpack.c.b16 %v1998, %v1990
    %v2855 = vpack.c.b16 %v1999, %v1991
    %v2856 = vpack.c.b16 %v2000, %v1992
    %v2857 = vpack.c.b16 %v2001, %v1993
    %v2858 = vpack.c.b16 %v2002, %v1994
    %v2859 = vpack.c.b16 %v2003, %v1995
    %v2860 = vpack.c.b16 %v2004, %v1996
    %v2861 = vpack.c.b16 %v2005, %v1997
    %v2862 = vpack.c.b16 %v2014, %v2006
    %v2863 = vpack.c.b16 %v2015, %v2007
    %v2864 = vpack.c.b16 %v2016, %v2008
    %v2865 = vpack.c.b16 %v2017, %v2009
    %v2866 = vpack.c.b16 %v2018, %v2010
    %v2867 = vpack.c.b16 %v2019, %v2011
    %v2868 = vpack.c.b16 %v2020, %v2012
    %v2869 = vpack.c.b16 %v2021, %v2013
    %v2870 = vpack.c.b16 %v2030, %v2022
    %v2871 = vpack.c.b16 %v2031, %v2023
    %v2872 = vpack.c.b16 %v2032, %v2024
    %v2873 = vpack.c.b16 %v2033, %v2025
    %v2874 = vpack.c.b16 %v2034, %v2026
    %v2875 = vpack.c.b16 %v2035, %v2027
    %v2876 = vpack.c.b16 %v2036, %v2028
    %v2877 = vpack.c.b16 %v2037, %v2029
    %v2878 = vpack.c.b16 %v2046, %v2038
    %v2879 = vpack.c.b16 %v2047, %v2039
    %v2880 = vpack.c.b16 %v2048, %v2040
    %v2881 = vpack.c.b16 %v2049, %v2041
    %v2882 = vpack.c.b16 %v2050, %v2042
    %v2883 = vpack.c.b16 %v2051, %v2043
    %v2884 = vpack.c.b16 %v2052, %v2044
    %v2885 = vpack.c.b16 %v2053, %v2045
    %v2886 = vpack.c.b16 %v2062, %v2054
    %v2887 = vpack.c.b16 %v2063, %v2055
    %v2888 = vpack.c.b16 %v2064, %v2056
    %v2889 = vpack.c.b16 %v2065, %v2057
    %v2890 = vpack.c.b16 %v2066, %v2058
    %v2891 = vpack.c.b16 %v2067, %v2059
    %v2892 = vpack.c.b16 %v2068, %v2060
    %v2893 = vpack.c.b16 %v2069, %v2061
    %v2894 = vpack.c.b16 %v2078, %v2070
    %v2895 = vpack.c.b16 %v2079, %v2071
    %v2896 = vpack.c.b16 %v2080, %v2072
    %v2897 = vpack.c.b16 %v2081, %v2073
    %v2898 = vpack.c.b16 %v2082, %v2074
    %v2899 = vpack.c.b16 %v2083, %v2075
    %v2900 = vpack.c.b16 %v2084, %v2076
    %v2901 = vpack.c.b16 %v2085, %v2077
    %v2902 = vpack.c.b16 %v2094, %v2086
    %v2903 = vpack.c.b16 %v2095, %v2087
    %v2904 = vpack.c.b16 %v2096, %v2088
    %v2905 = vpack.c.b16 %v2097, %v2089
    %v2906 = vpack.c.b16 %v2098, %v2090
    %v2907 = vpack.c.b16 %v2099, %v2091
    %v2908 = vpack.c.b16 %v2100, %v2092
    %v2909 = vpack.c.b16 %v2101, %v2093
    %v2910 = vpack.c.b16 %v2110, %v2102
    %v2911 = vpack.c.b16 %v2111, %v2103
    %v2912 = vpack.c.b16 %v2112, %v2104
    %v2913 = vpack.c.b16 %v2113, %v2105
    %v2914 = vpack.c.b16 %v2114, %v2106
    %v2915 = vpack.c.b16 %v2115, %v2107
    %v2916 = vpack.c.b16 %v2116, %v2108
    %v2917 = vpack.c.b16 %v2117, %v2109
    %v2918 = vpack.c.b16 %v2126, %v2118
    %v2919 = vpack.c.b16 %v2127, %v2119
    %v2920 = vpack.c.b16 %v2128, %v2120
    %v2921 = vpack.c.b16 %v2129, %v2121
    %v2922 = vpack.c.b16 %v2130, %v2122
    %v2923 = vpack.c.b16 %v2131, %v2123
    %v2924 = vpack.c.b16 %v2132, %v2124
    %v2925 = vpack.c.b16 %v2133, %v2125
    %v2926 = vpack.c.b16 %v2142, %v2134
    %v2927 = vpack.c.b16 %v2143, %v2135
    %v2928 = vpack.c.b16 %v2144, %v2136
    %v2929 = vpack.c.b16 %v2145, %v2137
    %v2930 = vpack.c.b16 %v2146, %v2138
    %v2931 = vpack.c.b16 %v2147, %v2139
    %v2932 = vpack.c.b16 %v2148, %v2140
    %v2933 = vpack.c.b16 %v2149, %v2141
    %v2934 = vpack.c.b16 %v2158, %v2150
    %v2935 = vpack.c.b16 %v2159, %v2151
    %v2936 = vpack.c.b16 %v2160, %v2152
    %v2937 = vpack.c.b16 %v2161, %v2153
    %v2938 = vpack.c.b16 %v2162, %v2154
    %v2939 = vpack.c.b16 %v2163, %v2155
    %v2940 = vpack.c.b16 %v2164, %v2156
    %v2941 = vpack.c.b16 %v2165, %v2157
    %v2942 = vpack.c.b16 %v2174, %v2166
    %v2943 = vpack.c.b16 %v2175, %v2167
    %v2944 = vpack.c.b16 %v2176, %v2168
    %v2945 = vpack.c.b16 %v2177, %v2169
    %v2946 = vpack.c.b16 %v2178, %v2170
    %v2947 = vpack.c.b16 %v2179, %v2171
    %v2948 = vpack.c.b16 %v2180, %v2172
    %v2949 = vpack.c.b16 %v2181, %v2173
    %v2950 = vpack.c.b16 %v2190, %v2182
    %v2951 = vpack.c.b16 %v2191, %v2183
    %v2952 = vpack.c.b16 %v2192, %v2184
    %v2953 = vpack.c.b16 %v2193, %v2185
    %v2954 = vpack.c.b16 %v2194, %v2186
    %v2955 = vpack.c.b16 %v2195, %v2187
    %v2956 = vpack.c.b16 %v2196, %v2188
    %v2957 = vpack.c.b16 %v2197, %v2189
    %v2958 = vpack.c.b16 %v2206, %v2198
    %v2959 = vpack.c.b16 %v2207, %v2199
    %v2960 = vpack.c.b16 %v2208, %v2200
    %v2961 = vpack.c.b16 %v2209, %v2201
    %v2962 = vpack.c.b16 %v2210, %v2202
    %v2963 = vpack.c.b16 %v2211, %v2203
    %v2964 = vpack.c.b16 %v2212, %v2204
    %v2965 = vpack.c.b16 %v2213, %v2205
    %v2966 = vpack.c.b16 %v2222, %v2214
    %v2967 = vpack.c.b16 %v2223, %v2215
    %v2968 = vpack.c.b16 %v2224, %v2216
    %v2969 = vpack.c.b16 %v2225, %v2217
    %v2970 = vpack.c.b16 %v2226, %v2218
    %v2971 = vpack.c.b16 %v2227, %v2219
    %v2972 = vpack.c.b16 %v2228, %v2220
    %v2973 = vpack.c.b16 %v2229, %v2221
    %v2974 = vpack.c.b16 %v2238, %v2230
    %v2975 = vpack.c.b16 %v2239, %v2231
    %v2976 = vpack.c.b16 %v2240, %v2232
    %v2977 = vpack.c.b16 %v2241, %v2233
    %v2978 = vpack.c.b16 %v2242, %v2234
    %v2979 = vpack.c.b16 %v2243, %v2235
    %v2980 = vpack.c.b16 %v2244, %v2236
    %v2981 = vpack.c.b16 %v2245, %v2237
    %v2982 = vpack.c.b16 %v2254, %v2246
    %v2983 = vpack.c.b16 %v2255, %v2247
    %v2984 = vpack.c.b16 %v2256, %v2248
    %v2985 = vpack.c.b16 %v2257, %v2249
    %v2986 = vpack.c.b16 %v2258, %v2250
    %v2987 = vpack.c.b16 %v2259, %v2251
    %v2988 = vpack.c.b16 %v2260, %v2252
    %v2989 = vpack.c.b16 %v2261, %v2253
    %v2990 = vpack.c.b16 %v2270, %v2262
    %v2991 = vpack.c.b16 %v2271, %v2263
    %v2992 = vpack.c.b16 %v2272, %v2264
    %v2993 = vpack.c.b16 %v2273, %v2265
    %v2994 = vpack.c.b16 %v2274, %v2266
    %v2995 = vpack.c.b16 %v2275, %v2267
    %v2996 = vpack.c.b16 %v2276, %v2268
    %v2997 = vpack.c.b16 %v2277, %v2269
    %v2998 = vpack.c.b16 %v2286, %v2278
    %v2999 = vpack.c.b16 %v2287, %v2279
    %v3000 = vpack.c.b16 %v2288, %v2280
    %v3001 = vpack.c.b16 %v2289, %v2281
    %v3002 = vpack.c.b16 %v2290, %v2282
    %v3003 = vpack.c.b16 %v2291, %v2283
    %v3004 = vpack.c.b16 %v2292, %v2284
    %v3005 = vpack.c.b16 %v2293, %v2285
    %v3006 = vpack.c.b16 %v2302, %v2294
    %v3007 = vpack.c.b16 %v2303, %v2295
    %v3008 = vpack.c.b16 %v2304, %v2296
    %v3009 = vpack.c.b16 %v2305, %v2297
    %v3010 = vpack.c.b16 %v2306, %v2298
    %v3011 = vpack.c.b16 %v2307, %v2299
    %v3012 = vpack.c.b16 %v2308, %v2300
    %v3013 = vpack.c.b16 %v2309, %v2301
    %v3014 = vpack.c.b16 %v2318, %v2310
    %v3015 = vpack.c.b16 %v2319, %v2311
    %v3016 = vpack.c.b16 %v2320, %v2312
    %v3017 = vpack.c.b16 %v2321, %v2313
    %v3018 = vpack.c.b16 %v2322, %v2314
    %v3019 = vpack.c.b16 %v2323, %v2315
    %v3020 = vpack.c.b16 %v2324, %v2316
    %v3021 = vpack.c.b16 %v2325, %v2317
    %v3022 = vpack.c.b16 %v2334, %v2326
    %v3023 = vpack.c.b16 %v2335, %v2327
    %v3024 = vpack.c.b16 %v2336, %v2328
    %v3025 = vpack.c.b16 %v2337, %v2329
    %v3026 = vpack.c.b16 %v2338, %v2330
    %v3027 = vpack.c.b16 %v2339, %v2331
    %v3028 = vpack.c.b16 %v2340, %v2332
    %v3029 = vpack.c.b16 %v2341, %v2333
    %v3030 = vpack.c.b16 %v2350, %v2342
    %v3031 = vpack.c.b16 %v2351, %v2343
    %v3032 = vpack.c.b16 %v2352, %v2344
    %v3033 = vpack.c.b16 %v2353, %v2345
    %v3034 = vpack.c.b16 %v2354, %v2346
    %v3035 = vpack.c.b16 %v2355, %v2347
    %v3036 = vpack.c.b16 %v2356, %v2348
    %v3037 = vpack.c.b16 %v2357, %v2349
    %v3038 = vpack.c.b16 %v2366, %v2358
    %v3039 = vpack.c.b16 %v2367, %v2359
    %v3040 = vpack.c.b16 %v2368, %v2360
    %v3041 = vpack.c.b16 %v2369, %v2361
    %v3042 = vpack.c.b16 %v2370, %v2362
    %v3043 = vpack.c.b16 %v2371, %v2363
    %v3044 = vpack.c.b16 %v2372, %v2364
    %v3045 = vpack.c.b16 %v2373, %v2365
    %v3046 = vpack.c.b16 %v2382, %v2374
    %v3047 = vpack.c.b16 %v2383, %v2375
    %v3048 = vpack.c.b16 %v2384, %v2376
    %v3049 = vpack.c.b16 %v2385, %v2377
    %v3050 = vpack.c.b16 %v2386, %v2378
    %v3051 = vpack.c.b16 %v2387, %v2379
    %v3052 = vpack.c.b16 %v2388, %v2380
    %v3053 = vpack.c.b16 %v2389, %v2381
    %v3054 = vpack.c.b16 %v2398, %v2390
    %v3055 = vpack.c.b16 %v2399, %v2391
    %v3056 = vpack.c.b16 %v2400, %v2392
    %v3057 = vpack.c.b16 %v2401, %v2393
    %v3058 = vpack.c.b16 %v2402, %v2394
    %v3059 = vpack.c.b16 %v2403, %v2395
    %v3060 = vpack.c.b16 %v2404, %v2396
    %v3061 = vpack.c.b16 %v2405, %v2397
    %v3062 = vpack.c.b16 %v2414, %v2406
    %v3063 = vpack.c.b16 %v2415, %v2407
    %v3064 = vpack.c.b16 %v2416, %v2408
    %v3065 = vpack.c.b16 %v2417, %v2409
    %v3066 = vpack.c.b16 %v2418, %v2410
    %v3067 = vpack.c.b16 %v2419, %v2411
    %v3068 = vpack.c.b16 %v2420, %v2412
    %v3069 = vpack.c.b16 %v2421, %v2413
    %v3070 = vpack.c.b16 %v2430, %v2422
    %v3071 = vpack.c.b16 %v2431, %v2423
    %v3072 = vpack.c.b16 %v2432, %v2424
    %v3073 = vpack.c.b16 %v2433, %v2425
    %v3074 = vpack.c.b16 %v2434, %v2426
    %v3075 = vpack.c.b16 %v2435, %v2427
    %v3076 = vpack.c.b16 %v2436, %v2428
    %v3077 = vpack.c.b16 %v2437, %v2429
    %v3078 = vpack.c.b16 %v2446, %v2438
    %v3079 = vpack.c.b16 %v2447, %v2439
    %v3080 = vpack.c.b16 %v2448, %v2440
    %v3081 = vpack.c.b16 %v2449, %v2441
    %v3082 = vpack.c.b16 %v2450, %v2442
    %v3083 = vpack.c.b16 %v2451, %v2443
    %v3084 = vpack.c.b16 %v2452, %v2444
    %v3085 = vpack.c.b16 %v2453, %v2445
    %v3086 = vpack.c.b16 %v2462, %v2454
    %v3087 = vpack.c.b16 %v2463, %v2455
    %v3088 = vpack.c.b16 %v2464, %v2456
    %v3089 = vpack.c.b16 %v2465, %v2457
    %v3090 = vpack.c.b16 %v2466, %v2458
    %v3091 = vpack.c.b16 %v2467, %v2459
    %v3092 = vpack.c.b16 %v2468, %v2460
    %v3093 = vpack.c.b16 %v2469, %v2461
    %v3094 = vpack.c.b16 %v2478, %v2470
    %v3095 = vpack.c.b16 %v2479, %v2471
    %v3096 = vpack.c.b16 %v2480, %v2472
    %v3097 = vpack.c.b16 %v2481, %v2473
    %v3098 = vpack.c.b16 %v2482, %v2474
    %v3099 = vpack.c.b16 %v2483, %v2475
    %v3100 = vpack.c.b16 %v2484, %v2476
    %v3101 = vpack.c.b16 %v2485, %v2477
    %v3102 = vpack.c.b16 %v2494, %v2486
    %v3103 = vpack.c.b16 %v2495, %v2487
    %v3104 = vpack.c.b16 %v2496, %v2488
    %v3105 = vpack.c.b16 %v2497, %v2489
    %v3106 = vpack.c.b16 %v2498, %v2490
    %v3107 = vpack.c.b16 %v2499, %v2491
    %v3108 = vpack.c.b16 %v2500, %v2492
    %v3109 = vpack.c.b16 %v2501, %v2493
    %v3110 = vpack.c.b16 %v2510, %v2502
    %v3111 = vpack.c.b16 %v2511, %v2503
    %v3112 = vpack.c.b16 %v2512, %v2504
    %v3113 = vpack.c.b16 %v2513, %v2505
    %v3114 = vpack.c.b16 %v2514, %v2506
    %v3115 = vpack.c.b16 %v2515, %v2507
    %v3116 = vpack.c.b16 %v2516, %v2508
    %v3117 = vpack.c.b16 %v2517, %v2509
    %v3118 = vpack.c.b16 %v2526, %v2518
    %v3119 = vpack.c.b16 %v2527, %v2519
    %v3120 = vpack.c.b16 %v2528, %v2520
    %v3121 = vpack.c.b16 %v2529, %v2521
    %v3122 = vpack.c.b16 %v2530, %v2522
    %v3123 = vpack.c.b16 %v2531, %v2523
    %v3124 = vpack.c.b16 %v2532, %v2524
    %v3125 = vpack.c.b16 %v2533, %v2525
    %v3126 = vpack.c.b16 %v2542, %v2534
    %v3127 = vpack.c.b16 %v2543, %v2535
    %v3128 = vpack.c.b16 %v2544, %v2536
    %v3129 = vpack.c.b16 %v2545, %v2537
    %v3130 = vpack.c.b16 %v2546, %v2538
    %v3131 = vpack.c.b16 %v2547, %v2539
    %v3132 = vpack.c.b16 %v2548, %v2540
    %v3133 = vpack.c.b16 %v2549, %v2541
    %v3134 = vpack.c.b16 %v2558, %v2550
    %v3135 = vpack.c.b16 %v2559, %v2551
    %v3136 = vpack.c.b16 %v2560, %v2552
    %v3137 = vpack.c.b16 %v2561, %v2553
    %v3138 = vpack.c.b16 %v2562, %v2554
    %v3139 = vpack.c.b16 %v2563, %v2555
    %v3140 = vpack.c.b16 %v2564, %v2556
    %v3141 = vpack.c.b16 %v2565, %v2557
    %v3142 = vpack.c.b16 %v2574, %v2566
    %v3143 = vpack.c.b16 %v2575, %v2567
    %v3144 = vpack.c.b16 %v2576, %v2568
    %v3145 = vpack.c.b16 %v2577, %v2569
    %v3146 = vpack.c.b16 %v2578, %v2570
    %v3147 = vpack.c.b16 %v2579, %v2571
    %v3148 = vpack.c.b16 %v2580, %v2572
    %v3149 = vpack.c.b16 %v2581, %v2573
    %v3150 = vpack.c.b16 %v2590, %v2582
    %v3151 = vpack.c.b16 %v2591, %v2583
    %v3152 = vpack.c.b16 %v2592, %v2584
    %v3153 = vpack.c.b16 %v2593, %v2585
    %v3154 = vpack.c.b16 %v2594, %v2586
    %v3155 = vpack.c.b16 %v2595, %v2587
    %v3156 = vpack.c.b16 %v2596, %v2588
    %v3157 = vpack.c.b16 %v2597, %v2589
    %v3158 = vpack.c.b16 %v2606, %v2598
    %v3159 = vpack.c.b16 %v2607, %v2599
    %v3160 = vpack.c.b16 %v2608, %v2600
    %v3161 = vpack.c.b16 %v2609, %v2601
    %v3162 = vpack.c.b16 %v2610, %v2602
    %v3163 = vpack.c.b16 %v2611, %v2603
    %v3164 = vpack.c.b16 %v2612, %v2604
    %v3165 = vpack.c.b16 %v2613, %v2605
    %v3166 = vpack.c.b16 %v2622, %v2614
    %v3167 = vpack.c.b16 %v2623, %v2615
    %v3168 = vpack.c.b16 %v2624, %v2616
    %v3169 = vpack.c.b16 %v2625, %v2617
    %v3170 = vpack.c.b16 %v2626, %v2618
    %v3171 = vpack.c.b16 %v2627, %v2619
    %v3172 = vpack.c.b16 %v2628, %v2620
    %v3173 = vpack.c.b16 %v2629, %v2621
    %v3174 = vpack.c.b16 %v2638, %v2630
    %v3175 = vpack.c.b16 %v2639, %v2631
    %v3176 = vpack.c.b16 %v2640, %v2632
    %v3177 = vpack.c.b16 %v2641, %v2633
    %v3178 = vpack.c.b16 %v2642, %v2634
    %v3179 = vpack.c.b16 %v2643, %v2635
    %v3180 = vpack.c.b16 %v2644, %v2636
    %v3181 = vpack.c.b16 %v2645, %v2637
    %v3182 = vpack.c.b16 %v2654, %v2646
    %v3183 = vpack.c.b16 %v2655, %v2647
    %v3184 = vpack.c.b16 %v2656, %v2648
    %v3185 = vpack.c.b16 %v2657, %v2649
    %v3186 = vpack.c.b16 %v2658, %v2650
    %v3187 = vpack.c.b16 %v2659, %v2651
    %v3188 = vpack.c.b16 %v2660, %v2652
    %v3189 = vpack.c.b16 %v2661, %v2653
    %v3190 = vpack.c.b16 %v2670, %v2662
    %v3191 = vpack.c.b16 %v2671, %v2663
    %v3192 = vpack.c.b16 %v2672, %v2664
    %v3193 = vpack.c.b16 %v2673, %v2665
    %v3194 = vpack.c.b16 %v2674, %v2666
    %v3195 = vpack.c.b16 %v2675, %v2667
    %v3196 = vpack.c.b16 %v2676, %v2668
    %v3197 = vpack.c.b16 %v2677, %v2669
    %v3198 = vpack.c.b16 %v2686, %v2678
    %v3199 = vpack.c.b16 %v2687, %v2679
    %v3200 = vpack.c.b16 %v2688, %v2680
    %v3201 = vpack.c.b16 %v2689, %v2681
    %v3202 = vpack.c.b16 %v2690, %v2682
    %v3203 = vpack.c.b16 %v2691, %v2683
    %v3204 = vpack.c.b16 %v2692, %v2684
    %v3205 = vpack.c.b16 %v2693, %v2685
    %3718 = vmatprep.subr.bf16.mxu0 %v2751
    %3719 = vmatpush1.bf16.msra.mxu0 %v2750
    %3720 = vmatprep.subr.bf16.mxu0 %v2743
    %3721 = vmatpush1.bf16.msra.mxu0 %v2742
    %3722 = vmatprep.subr.bf16.mxu0 %v2735
    %3723 = vmatpush1.bf16.msra.mxu0 %v2734
    %3724 = vmatprep.subr.bf16.mxu0 %v2727
    %3725 = vmatpush1.bf16.msra.mxu0 %v2726
    %3726 = vmatprep.subr.bf16.mxu0 %v2719
    %3727 = vmatpush1.bf16.msra.mxu0 %v2718
    %3728 = vmatprep.subr.bf16.mxu0 %v2711
    %3729 = vmatpush1.bf16.msra.mxu0 %v2710
    %3730 = vmatprep.subr.bf16.mxu0 %v2703
    %3731 = vmatpush1.bf16.msra.mxu0 %v2702
    %3732 = vmatprep.subr.bf16.mxu0 %v2695
    %3733 = vmatpush1.bf16.msra.mxu0 %v2694
    %3734 = vmatprep.subr.bf16.mxu0 %v2815
    %3735 = vmatpush2.bf16.msra.mxu0 %v2814
    %3736 = vmatprep.subr.bf16.mxu0 %v2807
    %3737 = vmatpush2.bf16.msra.mxu0 %v2806
    %3738 = vmatprep.subr.bf16.mxu0 %v2799
    %3739 = vmatpush2.bf16.msra.mxu0 %v2798
    %3740 = vmatprep.subr.bf16.mxu0 %v2791
    %3741 = vmatpush2.bf16.msra.mxu0 %v2790
    %3742 = vmatprep.subr.bf16.mxu0 %v2783
    %3743 = vmatpush2.bf16.msra.mxu0 %v2782
    %3744 = vmatprep.subr.bf16.mxu0 %v2775
    %3745 = vmatpush2.bf16.msra.mxu0 %v2774
    %3746 = vmatprep.subr.bf16.mxu0 %v2767
    %3747 = vmatpush2.bf16.msra.mxu0 %v2766
    %3748 = vmatprep.subr.bf16.mxu0 %v2759
    %3749 = vmatpush2.bf16.msra.mxu0 %v2758
    %3750 = vmatprep.mubr.bf16.mxu0 %v597
    %3751 = vmatmul.mubr.bf16.gmra.mxu0 %v596
    %v3752 = vpop.f32.mrf.mxu0
    %v3753 = vadd.f32 %v1121, %v3752
    %v3754 = vpop.f32.mrf.mxu0
    %v3755 = vadd.f32 %v1125, %v3754
    %v3756 = vpop.f32.mrf.mxu0
    %v3757 = vadd.f32 %v1121, %v3756
    %v3758 = vpop.f32.mrf.mxu0
    %v3759 = vadd.f32 %v1125, %v3758
    %3760 = vdwg.mxu0
    %3761 = vmatprep.subr.bf16.mxu0 %v2879
    %3762 = vmatpush1.bf16.msra.mxu0 %v2878
    %3763 = vmatprep.subr.bf16.mxu0 %v2871
    %3764 = vmatpush1.bf16.msra.mxu0 %v2870
    %3765 = vmatprep.subr.bf16.mxu0 %v2863
    %3766 = vmatpush1.bf16.msra.mxu0 %v2862
    %3767 = vmatprep.subr.bf16.mxu0 %v2855
    %3768 = vmatpush1.bf16.msra.mxu0 %v2854
    %3769 = vmatprep.subr.bf16.mxu0 %v2847
    %3770 = vmatpush1.bf16.msra.mxu0 %v2846
    %3771 = vmatprep.subr.bf16.mxu0 %v2839
    %3772 = vmatpush1.bf16.msra.mxu0 %v2838
    %3773 = vmatprep.subr.bf16.mxu0 %v2831
    %3774 = vmatpush1.bf16.msra.mxu0 %v2830
    %3775 = vmatprep.subr.bf16.mxu0 %v2823
    %3776 = vmatpush1.bf16.msra.mxu0 %v2822
    %3777 = vmatprep.subr.bf16.mxu0 %v2943
    %3778 = vmatpush2.bf16.msra.mxu0 %v2942
    %3779 = vmatprep.subr.bf16.mxu0 %v2935
    %3780 = vmatpush2.bf16.msra.mxu0 %v2934
    %3781 = vmatprep.subr.bf16.mxu0 %v2927
    %3782 = vmatpush2.bf16.msra.mxu0 %v2926
    %3783 = vmatprep.subr.bf16.mxu0 %v2919
    %3784 = vmatpush2.bf16.msra.mxu0 %v2918
    %3785 = vmatprep.subr.bf16.mxu0 %v2911
    %3786 = vmatpush2.bf16.msra.mxu0 %v2910
    %3787 = vmatprep.subr.bf16.mxu0 %v2903
    %3788 = vmatpush2.bf16.msra.mxu0 %v2902
    %3789 = vmatprep.subr.bf16.mxu0 %v2895
    %3790 = vmatpush2.bf16.msra.mxu0 %v2894
    %3791 = vmatprep.subr.bf16.mxu0 %v2887
    %3792 = vmatpush2.bf16.msra.mxu0 %v2886
    %3793 = vmatprep.mubr.bf16.mxu0 %v599
    %3794 = vmatmul.mubr.bf16.gmra.mxu0 %v598
    %v3795 = vpop.f32.mrf.mxu0
    %v3796 = vadd.f32 %v3753, %v3795
    %v3797 = vpop.f32.mrf.mxu0
    %v3798 = vadd.f32 %v3755, %v3797
    %v3799 = vpop.f32.mrf.mxu0
    %v3800 = vadd.f32 %v3757, %v3799
    %v3801 = vpop.f32.mrf.mxu0
    %v3802 = vadd.f32 %v3759, %v3801
    %3803 = vdwg.mxu0
    %3804 = vmatprep.subr.bf16.mxu0 %v3007
    %3805 = vmatpush1.bf16.msra.mxu0 %v3006
    %3806 = vmatprep.subr.bf16.mxu0 %v2999
    %3807 = vmatpush1.bf16.msra.mxu0 %v2998
    %3808 = vmatprep.subr.bf16.mxu0 %v2991
    %3809 = vmatpush1.bf16.msra.mxu0 %v2990
    %3810 = vmatprep.subr.bf16.mxu0 %v2983
    %3811 = vmatpush1.bf16.msra.mxu0 %v2982
    %3812 = vmatprep.subr.bf16.mxu0 %v2975
    %3813 = vmatpush1.bf16.msra.mxu0 %v2974
    %3814 = vmatprep.subr.bf16.mxu0 %v2967
    %3815 = vmatpush1.bf16.msra.mxu0 %v2966
    %3816 = vmatprep.subr.bf16.mxu0 %v2959
    %3817 = vmatpush1.bf16.msra.mxu0 %v2958
    %3818 = vmatprep.subr.bf16.mxu0 %v2951
    %3819 = vmatpush1.bf16.msra.mxu0 %v2950
    %3820 = vmatprep.subr.bf16.mxu0 %v3071
    %3821 = vmatpush2.bf16.msra.mxu0 %v3070
    %3822 = vmatprep.subr.bf16.mxu0 %v3063
    %3823 = vmatpush2.bf16.msra.mxu0 %v3062
    %3824 = vmatprep.subr.bf16.mxu0 %v3055
    %3825 = vmatpush2.bf16.msra.mxu0 %v3054
    %3826 = vmatprep.subr.bf16.mxu0 %v3047
    %3827 = vmatpush2.bf16.msra.mxu0 %v3046
    %3828 = vmatprep.subr.bf16.mxu0 %v3039
    %3829 = vmatpush2.bf16.msra.mxu0 %v3038
    %3830 = vmatprep.subr.bf16.mxu0 %v3031
    %3831 = vmatpush2.bf16.msra.mxu0 %v3030
    %3832 = vmatprep.subr.bf16.mxu0 %v3023
    %3833 = vmatpush2.bf16.msra.mxu0 %v3022
    %3834 = vmatprep.subr.bf16.mxu0 %v3015
    %3835 = vmatpush2.bf16.msra.mxu0 %v3014
    %3836 = vmatprep.mubr.bf16.mxu0 %v601
    %3837 = vmatmul.mubr.bf16.gmra.mxu0 %v600
    %v3838 = vpop.f32.mrf.mxu0
    %v3839 = vadd.f32 %v3796, %v3838
    %v3840 = vpop.f32.mrf.mxu0
    %v3841 = vadd.f32 %v3798, %v3840
    %v3842 = vpop.f32.mrf.mxu0
    %v3843 = vadd.f32 %v3800, %v3842
    %v3844 = vpop.f32.mrf.mxu0
    %v3845 = vadd.f32 %v3802, %v3844
    %3846 = vdwg.mxu0
    %3847 = vmatprep.subr.bf16.mxu0 %v3135
    %3848 = vmatpush1.bf16.msra.mxu0 %v3134
    %3849 = vmatprep.subr.bf16.mxu0 %v3127
    %3850 = vmatpush1.bf16.msra.mxu0 %v3126
    %3851 = vmatprep.subr.bf16.mxu0 %v3119
    %3852 = vmatpush1.bf16.msra.mxu0 %v3118
    %3853 = vmatprep.subr.bf16.mxu0 %v3111
    %3854 = vmatpush1.bf16.msra.mxu0 %v3110
    %3855 = vmatprep.subr.bf16.mxu0 %v3103
    %3856 = vmatpush1.bf16.msra.mxu0 %v3102
    %3857 = vmatprep.subr.bf16.mxu0 %v3095
    %3858 = vmatpush1.bf16.msra.mxu0 %v3094
    %3859 = vmatprep.subr.bf16.mxu0 %v3087
    %3860 = vmatpush1.bf16.msra.mxu0 %v3086
    %3861 = vmatprep.subr.bf16.mxu0 %v3079
    %3862 = vmatpush1.bf16.msra.mxu0 %v3078
    %3863 = vmatprep.subr.bf16.mxu0 %v3199
    %3864 = vmatpush2.bf16.msra.mxu0 %v3198
    %3865 = vmatprep.subr.bf16.mxu0 %v3191
    %3866 = vmatpush2.bf16.msra.mxu0 %v3190
    %3867 = vmatprep.subr.bf16.mxu0 %v3183
    %3868 = vmatpush2.bf16.msra.mxu0 %v3182
    %3869 = vmatprep.subr.bf16.mxu0 %v3175
    %3870 = vmatpush2.bf16.msra.mxu0 %v3174
    %3871 = vmatprep.subr.bf16.mxu0 %v3167
    %3872 = vmatpush2.bf16.msra.mxu0 %v3166
    %3873 = vmatprep.subr.bf16.mxu0 %v3159
    %3874 = vmatpush2.bf16.msra.mxu0 %v3158
    %3875 = vmatprep.subr.bf16.mxu0 %v3151
    %3876 = vmatpush2.bf16.msra.mxu0 %v3150
    %3877 = vmatprep.subr.bf16.mxu0 %v3143
    %3878 = vmatpush2.bf16.msra.mxu0 %v3142
    %3879 = vmatprep.mubr.bf16.mxu0 %v603
    %3880 = vmatmul.mubr.bf16.gmra.mxu0 %v602
    %v3881 = vpop.f32.mrf.mxu0
    %v3882 = vadd.f32 %v3839, %v3881
    %v3883 = vpop.f32.mrf.mxu0
    %v3884 = vadd.f32 %v3841, %v3883
    %v3885 = vpop.f32.mrf.mxu0
    %v3886 = vadd.f32 %v3843, %v3885
    %v3887 = vpop.f32.mrf.mxu0
    %v3888 = vadd.f32 %v3845, %v3887
    %3889 = vdwg.mxu0
    %3890 = vmatprep.subr.bf16.mxu0 %v2753
    %3891 = vmatpush1.bf16.msra.mxu0 %v2752
    %3892 = vmatprep.subr.bf16.mxu0 %v2745
    %3893 = vmatpush1.bf16.msra.mxu0 %v2744
    %3894 = vmatprep.subr.bf16.mxu0 %v2737
    %3895 = vmatpush1.bf16.msra.mxu0 %v2736
    %3896 = vmatprep.subr.bf16.mxu0 %v2729
    %3897 = vmatpush1.bf16.msra.mxu0 %v2728
    %3898 = vmatprep.subr.bf16.mxu0 %v2721
    %3899 = vmatpush1.bf16.msra.mxu0 %v2720
    %3900 = vmatprep.subr.bf16.mxu0 %v2713
    %3901 = vmatpush1.bf16.msra.mxu0 %v2712
    %3902 = vmatprep.subr.bf16.mxu0 %v2705
    %3903 = vmatpush1.bf16.msra.mxu0 %v2704
    %3904 = vmatprep.subr.bf16.mxu0 %v2697
    %3905 = vmatpush1.bf16.msra.mxu0 %v2696
    %3906 = vmatprep.subr.bf16.mxu0 %v2817
    %3907 = vmatpush2.bf16.msra.mxu0 %v2816
    %3908 = vmatprep.subr.bf16.mxu0 %v2809
    %3909 = vmatpush2.bf16.msra.mxu0 %v2808
    %3910 = vmatprep.subr.bf16.mxu0 %v2801
    %3911 = vmatpush2.bf16.msra.mxu0 %v2800
    %3912 = vmatprep.subr.bf16.mxu0 %v2793
    %3913 = vmatpush2.bf16.msra.mxu0 %v2792
    %3914 = vmatprep.subr.bf16.mxu0 %v2785
    %3915 = vmatpush2.bf16.msra.mxu0 %v2784
    %3916 = vmatprep.subr.bf16.mxu0 %v2777
    %3917 = vmatpush2.bf16.msra.mxu0 %v2776
    %3918 = vmatprep.subr.bf16.mxu0 %v2769
    %3919 = vmatpush2.bf16.msra.mxu0 %v2768
    %3920 = vmatprep.subr.bf16.mxu0 %v2761
    %3921 = vmatpush2.bf16.msra.mxu0 %v2760
    %3922 = vmatprep.mubr.bf16.mxu0 %v597
    %3923 = vmatmul.mubr.bf16.gmra.mxu0 %v596
    %v3924 = vpop.f32.mrf.mxu0
    %v3925 = vadd.f32 %v1129, %v3924
    %v3926 = vpop.f32.mrf.mxu0
    %v3927 = vadd.f32 %v1133, %v3926
    %v3928 = vpop.f32.mrf.mxu0
    %v3929 = vadd.f32 %v1129, %v3928
    %v3930 = vpop.f32.mrf.mxu0
    %v3931 = vadd.f32 %v1133, %v3930
    %3932 = vdwg.mxu0
    %3933 = vmatprep.subr.bf16.mxu0 %v2881
    %3934 = vmatpush1.bf16.msra.mxu0 %v2880
    %3935 = vmatprep.subr.bf16.mxu0 %v2873
    %3936 = vmatpush1.bf16.msra.mxu0 %v2872
    %3937 = vmatprep.subr.bf16.mxu0 %v2865
    %3938 = vmatpush1.bf16.msra.mxu0 %v2864
    %3939 = vmatprep.subr.bf16.mxu0 %v2857
    %3940 = vmatpush1.bf16.msra.mxu0 %v2856
    %3941 = vmatprep.subr.bf16.mxu0 %v2849
    %3942 = vmatpush1.bf16.msra.mxu0 %v2848
    %3943 = vmatprep.subr.bf16.mxu0 %v2841
    %3944 = vmatpush1.bf16.msra.mxu0 %v2840
    %3945 = vmatprep.subr.bf16.mxu0 %v2833
    %3946 = vmatpush1.bf16.msra.mxu0 %v2832
    %3947 = vmatprep.subr.bf16.mxu0 %v2825
    %3948 = vmatpush1.bf16.msra.mxu0 %v2824
    %3949 = vmatprep.subr.bf16.mxu0 %v2945
    %3950 = vmatpush2.bf16.msra.mxu0 %v2944
    %3951 = vmatprep.subr.bf16.mxu0 %v2937
    %3952 = vmatpush2.bf16.msra.mxu0 %v2936
    %3953 = vmatprep.subr.bf16.mxu0 %v2929
    %3954 = vmatpush2.bf16.msra.mxu0 %v2928
    %3955 = vmatprep.subr.bf16.mxu0 %v2921
    %3956 = vmatpush2.bf16.msra.mxu0 %v2920
    %3957 = vmatprep.subr.bf16.mxu0 %v2913
    %3958 = vmatpush2.bf16.msra.mxu0 %v2912
    %3959 = vmatprep.subr.bf16.mxu0 %v2905
    %3960 = vmatpush2.bf16.msra.mxu0 %v2904
    %3961 = vmatprep.subr.bf16.mxu0 %v2897
    %3962 = vmatpush2.bf16.msra.mxu0 %v2896
    %3963 = vmatprep.subr.bf16.mxu0 %v2889
    %3964 = vmatpush2.bf16.msra.mxu0 %v2888
    %3965 = vmatprep.mubr.bf16.mxu0 %v599
    %3966 = vmatmul.mubr.bf16.gmra.mxu0 %v598
    %v3967 = vpop.f32.mrf.mxu0
    %v3968 = vadd.f32 %v3925, %v3967
    %v3969 = vpop.f32.mrf.mxu0
    %v3970 = vadd.f32 %v3927, %v3969
    %v3971 = vpop.f32.mrf.mxu0
    %v3972 = vadd.f32 %v3929, %v3971
    %v3973 = vpop.f32.mrf.mxu0
    %v3974 = vadd.f32 %v3931, %v3973
    %3975 = vdwg.mxu0
    %3976 = vmatprep.subr.bf16.mxu0 %v3009
    %3977 = vmatpush1.bf16.msra.mxu0 %v3008
    %3978 = vmatprep.subr.bf16.mxu0 %v3001
    %3979 = vmatpush1.bf16.msra.mxu0 %v3000
    %3980 = vmatprep.subr.bf16.mxu0 %v2993
    %3981 = vmatpush1.bf16.msra.mxu0 %v2992
    %3982 = vmatprep.subr.bf16.mxu0 %v2985
    %3983 = vmatpush1.bf16.msra.mxu0 %v2984
    %3984 = vmatprep.subr.bf16.mxu0 %v2977
    %3985 = vmatpush1.bf16.msra.mxu0 %v2976
    %3986 = vmatprep.subr.bf16.mxu0 %v2969
    %3987 = vmatpush1.bf16.msra.mxu0 %v2968
    %3988 = vmatprep.subr.bf16.mxu0 %v2961
    %3989 = vmatpush1.bf16.msra.mxu0 %v2960
    %3990 = vmatprep.subr.bf16.mxu0 %v2953
    %3991 = vmatpush1.bf16.msra.mxu0 %v2952
    %3992 = vmatprep.subr.bf16.mxu0 %v3073
    %3993 = vmatpush2.bf16.msra.mxu0 %v3072
    %3994 = vmatprep.subr.bf16.mxu0 %v3065
    %3995 = vmatpush2.bf16.msra.mxu0 %v3064
    %3996 = vmatprep.subr.bf16.mxu0 %v3057
    %3997 = vmatpush2.bf16.msra.mxu0 %v3056
    %3998 = vmatprep.subr.bf16.mxu0 %v3049
    %3999 = vmatpush2.bf16.msra.mxu0 %v3048
    %4000 = vmatprep.subr.bf16.mxu0 %v3041
    %4001 = vmatpush2.bf16.msra.mxu0 %v3040
    %4002 = vmatprep.subr.bf16.mxu0 %v3033
    %4003 = vmatpush2.bf16.msra.mxu0 %v3032
    %4004 = vmatprep.subr.bf16.mxu0 %v3025
    %4005 = vmatpush2.bf16.msra.mxu0 %v3024
    %4006 = vmatprep.subr.bf16.mxu0 %v3017
    %4007 = vmatpush2.bf16.msra.mxu0 %v3016
    %4008 = vmatprep.mubr.bf16.mxu0 %v601
    %4009 = vmatmul.mubr.bf16.gmra.mxu0 %v600
    %v4010 = vpop.f32.mrf.mxu0
    %v4011 = vadd.f32 %v3968, %v4010
    %v4012 = vpop.f32.mrf.mxu0
    %v4013 = vadd.f32 %v3970, %v4012
    %v4014 = vpop.f32.mrf.mxu0
    %v4015 = vadd.f32 %v3972, %v4014
    %v4016 = vpop.f32.mrf.mxu0
    %v4017 = vadd.f32 %v3974, %v4016
    %4018 = vdwg.mxu0
    %4019 = vmatprep.subr.bf16.mxu0 %v3137
    %4020 = vmatpush1.bf16.msra.mxu0 %v3136
    %4021 = vmatprep.subr.bf16.mxu0 %v3129
    %4022 = vmatpush1.bf16.msra.mxu0 %v3128
    %4023 = vmatprep.subr.bf16.mxu0 %v3121
    %4024 = vmatpush1.bf16.msra.mxu0 %v3120
    %4025 = vmatprep.subr.bf16.mxu0 %v3113
    %4026 = vmatpush1.bf16.msra.mxu0 %v3112
    %4027 = vmatprep.subr.bf16.mxu0 %v3105
    %4028 = vmatpush1.bf16.msra.mxu0 %v3104
    %4029 = vmatprep.subr.bf16.mxu0 %v3097
    %4030 = vmatpush1.bf16.msra.mxu0 %v3096
    %4031 = vmatprep.subr.bf16.mxu0 %v3089
    %4032 = vmatpush1.bf16.msra.mxu0 %v3088
    %4033 = vmatprep.subr.bf16.mxu0 %v3081
    %4034 = vmatpush1.bf16.msra.mxu0 %v3080
    %4035 = vmatprep.subr.bf16.mxu0 %v3201
    %4036 = vmatpush2.bf16.msra.mxu0 %v3200
    %4037 = vmatprep.subr.bf16.mxu0 %v3193
    %4038 = vmatpush2.bf16.msra.mxu0 %v3192
    %4039 = vmatprep.subr.bf16.mxu0 %v3185
    %4040 = vmatpush2.bf16.msra.mxu0 %v3184
    %4041 = vmatprep.subr.bf16.mxu0 %v3177
    %4042 = vmatpush2.bf16.msra.mxu0 %v3176
    %4043 = vmatprep.subr.bf16.mxu0 %v3169
    %4044 = vmatpush2.bf16.msra.mxu0 %v3168
    %4045 = vmatprep.subr.bf16.mxu0 %v3161
    %4046 = vmatpush2.bf16.msra.mxu0 %v3160
    %4047 = vmatprep.subr.bf16.mxu0 %v3153
    %4048 = vmatpush2.bf16.msra.mxu0 %v3152
    %4049 = vmatprep.subr.bf16.mxu0 %v3145
    %4050 = vmatpush2.bf16.msra.mxu0 %v3144
    %4051 = vmatprep.mubr.bf16.mxu0 %v603
    %4052 = vmatmul.mubr.bf16.gmra.mxu0 %v602
    %v4053 = vpop.f32.mrf.mxu0
    %v4054 = vadd.f32 %v4011, %v4053
    %v4055 = vpop.f32.mrf.mxu0
    %v4056 = vadd.f32 %v4013, %v4055
    %v4057 = vpop.f32.mrf.mxu0
    %v4058 = vadd.f32 %v4015, %v4057
    %v4059 = vpop.f32.mrf.mxu0
    %v4060 = vadd.f32 %v4017, %v4059
    %4061 = vdwg.mxu0
    %4062 = vmatprep.subr.bf16.mxu0 %v2755
    %4063 = vmatpush1.bf16.msra.mxu0 %v2754
    %4064 = vmatprep.subr.bf16.mxu0 %v2747
    %4065 = vmatpush1.bf16.msra.mxu0 %v2746
    %4066 = vmatprep.subr.bf16.mxu0 %v2739
    %4067 = vmatpush1.bf16.msra.mxu0 %v2738
    %4068 = vmatprep.subr.bf16.mxu0 %v2731
    %4069 = vmatpush1.bf16.msra.mxu0 %v2730
    %4070 = vmatprep.subr.bf16.mxu0 %v2723
    %4071 = vmatpush1.bf16.msra.mxu0 %v2722
    %4072 = vmatprep.subr.bf16.mxu0 %v2715
    %4073 = vmatpush1.bf16.msra.mxu0 %v2714
    %4074 = vmatprep.subr.bf16.mxu0 %v2707
    %4075 = vmatpush1.bf16.msra.mxu0 %v2706
    %4076 = vmatprep.subr.bf16.mxu0 %v2699
    %4077 = vmatpush1.bf16.msra.mxu0 %v2698
    %4078 = vmatprep.subr.bf16.mxu0 %v2819
    %4079 = vmatpush2.bf16.msra.mxu0 %v2818
    %4080 = vmatprep.subr.bf16.mxu0 %v2811
    %4081 = vmatpush2.bf16.msra.mxu0 %v2810
    %4082 = vmatprep.subr.bf16.mxu0 %v2803
    %4083 = vmatpush2.bf16.msra.mxu0 %v2802
    %4084 = vmatprep.subr.bf16.mxu0 %v2795
    %4085 = vmatpush2.bf16.msra.mxu0 %v2794
    %4086 = vmatprep.subr.bf16.mxu0 %v2787
    %4087 = vmatpush2.bf16.msra.mxu0 %v2786
    %4088 = vmatprep.subr.bf16.mxu0 %v2779
    %4089 = vmatpush2.bf16.msra.mxu0 %v2778
    %4090 = vmatprep.subr.bf16.mxu0 %v2771
    %4091 = vmatpush2.bf16.msra.mxu0 %v2770
    %4092 = vmatprep.subr.bf16.mxu0 %v2763
    %4093 = vmatpush2.bf16.msra.mxu0 %v2762
    %4094 = vmatprep.mubr.bf16.mxu0 %v597
    %4095 = vmatmul.mubr.bf16.gmra.mxu0 %v596
    %v4096 = vpop.f32.mrf.mxu0
    %v4097 = vadd.f32 %v1137, %v4096
    %v4098 = vpop.f32.mrf.mxu0
    %v4099 = vadd.f32 %v1141, %v4098
    %v4100 = vpop.f32.mrf.mxu0
    %v4101 = vadd.f32 %v1137, %v4100
    %v4102 = vpop.f32.mrf.mxu0
    %v4103 = vadd.f32 %v1141, %v4102
    %4104 = vdwg.mxu0
    %4105 = vmatprep.subr.bf16.mxu0 %v2883
    %4106 = vmatpush1.bf16.msra.mxu0 %v2882
    %4107 = vmatprep.subr.bf16.mxu0 %v2875
    %4108 = vmatpush1.bf16.msra.mxu0 %v2874
    %4109 = vmatprep.subr.bf16.mxu0 %v2867
    %4110 = vmatpush1.bf16.msra.mxu0 %v2866
    %4111 = vmatprep.subr.bf16.mxu0 %v2859
    %4112 = vmatpush1.bf16.msra.mxu0 %v2858
    %4113 = vmatprep.subr.bf16.mxu0 %v2851
    %4114 = vmatpush1.bf16.msra.mxu0 %v2850
    %4115 = vmatprep.subr.bf16.mxu0 %v2843
    %4116 = vmatpush1.bf16.msra.mxu0 %v2842
    %4117 = vmatprep.subr.bf16.mxu0 %v2835
    %4118 = vmatpush1.bf16.msra.mxu0 %v2834
    %4119 = vmatprep.subr.bf16.mxu0 %v2827
    %4120 = vmatpush1.bf16.msra.mxu0 %v2826
    %4121 = vmatprep.subr.bf16.mxu0 %v2947
    %4122 = vmatpush2.bf16.msra.mxu0 %v2946
    %4123 = vmatprep.subr.bf16.mxu0 %v2939
    %4124 = vmatpush2.bf16.msra.mxu0 %v2938
    %4125 = vmatprep.subr.bf16.mxu0 %v2931
    %4126 = vmatpush2.bf16.msra.mxu0 %v2930
    %4127 = vmatprep.subr.bf16.mxu0 %v2923
    %4128 = vmatpush2.bf16.msra.mxu0 %v2922
    %4129 = vmatprep.subr.bf16.mxu0 %v2915
    %4130 = vmatpush2.bf16.msra.mxu0 %v2914
    %4131 = vmatprep.subr.bf16.mxu0 %v2907
    %4132 = vmatpush2.bf16.msra.mxu0 %v2906
    %4133 = vmatprep.subr.bf16.mxu0 %v2899
    %4134 = vmatpush2.bf16.msra.mxu0 %v2898
    %4135 = vmatprep.subr.bf16.mxu0 %v2891
    %4136 = vmatpush2.bf16.msra.mxu0 %v2890
    %4137 = vmatprep.mubr.bf16.mxu0 %v599
    %4138 = vmatmul.mubr.bf16.gmra.mxu0 %v598
    %v4139 = vpop.f32.mrf.mxu0
    %v4140 = vadd.f32 %v4097, %v4139
    %v4141 = vpop.f32.mrf.mxu0
    %v4142 = vadd.f32 %v4099, %v4141
    %v4143 = vpop.f32.mrf.mxu0
    %v4144 = vadd.f32 %v4101, %v4143
    %v4145 = vpop.f32.mrf.mxu0
    %v4146 = vadd.f32 %v4103, %v4145
    %4147 = vdwg.mxu0
    %4148 = vmatprep.subr.bf16.mxu0 %v3011
    %4149 = vmatpush1.bf16.msra.mxu0 %v3010
    %4150 = vmatprep.subr.bf16.mxu0 %v3003
    %4151 = vmatpush1.bf16.msra.mxu0 %v3002
    %4152 = vmatprep.subr.bf16.mxu0 %v2995
    %4153 = vmatpush1.bf16.msra.mxu0 %v2994
    %4154 = vmatprep.subr.bf16.mxu0 %v2987
    %4155 = vmatpush1.bf16.msra.mxu0 %v2986
    %4156 = vmatprep.subr.bf16.mxu0 %v2979
    %4157 = vmatpush1.bf16.msra.mxu0 %v2978
    %4158 = vmatprep.subr.bf16.mxu0 %v2971
    %4159 = vmatpush1.bf16.msra.mxu0 %v2970
    %4160 = vmatprep.subr.bf16.mxu0 %v2963
    %4161 = vmatpush1.bf16.msra.mxu0 %v2962
    %4162 = vmatprep.subr.bf16.mxu0 %v2955
    %4163 = vmatpush1.bf16.msra.mxu0 %v2954
    %4164 = vmatprep.subr.bf16.mxu0 %v3075
    %4165 = vmatpush2.bf16.msra.mxu0 %v3074
    %4166 = vmatprep.subr.bf16.mxu0 %v3067
    %4167 = vmatpush2.bf16.msra.mxu0 %v3066
    %4168 = vmatprep.subr.bf16.mxu0 %v3059
    %4169 = vmatpush2.bf16.msra.mxu0 %v3058
    %4170 = vmatprep.subr.bf16.mxu0 %v3051
    %4171 = vmatpush2.bf16.msra.mxu0 %v3050
    %4172 = vmatprep.subr.bf16.mxu0 %v3043
    %4173 = vmatpush2.bf16.msra.mxu0 %v3042
    %4174 = vmatprep.subr.bf16.mxu0 %v3035
    %4175 = vmatpush2.bf16.msra.mxu0 %v3034
    %4176 = vmatprep.subr.bf16.mxu0 %v3027
    %4177 = vmatpush2.bf16.msra.mxu0 %v3026
    %4178 = vmatprep.subr.bf16.mxu0 %v3019
    %4179 = vmatpush2.bf16.msra.mxu0 %v3018
    %4180 = vmatprep.mubr.bf16.mxu0 %v601
    %4181 = vmatmul.mubr.bf16.gmra.mxu0 %v600
    %v4182 = vpop.f32.mrf.mxu0
    %v4183 = vadd.f32 %v4140, %v4182
    %v4184 = vpop.f32.mrf.mxu0
    %v4185 = vadd.f32 %v4142, %v4184
    %v4186 = vpop.f32.mrf.mxu0
    %v4187 = vadd.f32 %v4144, %v4186
    %v4188 = vpop.f32.mrf.mxu0
    %v4189 = vadd.f32 %v4146, %v4188
    %4190 = vdwg.mxu0
    %4191 = vmatprep.subr.bf16.mxu0 %v3139
    %4192 = vmatpush1.bf16.msra.mxu0 %v3138
    %4193 = vmatprep.subr.bf16.mxu0 %v3131
    %4194 = vmatpush1.bf16.msra.mxu0 %v3130
    %4195 = vmatprep.subr.bf16.mxu0 %v3123
    %4196 = vmatpush1.bf16.msra.mxu0 %v3122
    %4197 = vmatprep.subr.bf16.mxu0 %v3115
    %4198 = vmatpush1.bf16.msra.mxu0 %v3114
    %4199 = vmatprep.subr.bf16.mxu0 %v3107
    %4200 = vmatpush1.bf16.msra.mxu0 %v3106
    %4201 = vmatprep.subr.bf16.mxu0 %v3099
    %4202 = vmatpush1.bf16.msra.mxu0 %v3098
    %4203 = vmatprep.subr.bf16.mxu0 %v3091
    %4204 = vmatpush1.bf16.msra.mxu0 %v3090
    %4205 = vmatprep.subr.bf16.mxu0 %v3083
    %4206 = vmatpush1.bf16.msra.mxu0 %v3082
    %4207 = vmatprep.subr.bf16.mxu0 %v3203
    %4208 = vmatpush2.bf16.msra.mxu0 %v3202
    %4209 = vmatprep.subr.bf16.mxu0 %v3195
    %4210 = vmatpush2.bf16.msra.mxu0 %v3194
    %4211 = vmatprep.subr.bf16.mxu0 %v3187
    %4212 = vmatpush2.bf16.msra.mxu0 %v3186
    %4213 = vmatprep.subr.bf16.mxu0 %v3179
    %4214 = vmatpush2.bf16.msra.mxu0 %v3178
    %4215 = vmatprep.subr.bf16.mxu0 %v3171
    %4216 = vmatpush2.bf16.msra.mxu0 %v3170
    %4217 = vmatprep.subr.bf16.mxu0 %v3163
    %4218 = vmatpush2.bf16.msra.mxu0 %v3162
    %4219 = vmatprep.subr.bf16.mxu0 %v3155
    %4220 = vmatpush2.bf16.msra.mxu0 %v3154
    %4221 = vmatprep.subr.bf16.mxu0 %v3147
    %4222 = vmatpush2.bf16.msra.mxu0 %v3146
    %4223 = vmatprep.mubr.bf16.mxu0 %v603
    %4224 = vmatmul.mubr.bf16.gmra.mxu0 %v602
    %v4225 = vpop.f32.mrf.mxu0
    %v4226 = vadd.f32 %v4183, %v4225
    %v4227 = vpop.f32.mrf.mxu0
    %v4228 = vadd.f32 %v4185, %v4227
    %v4229 = vpop.f32.mrf.mxu0
    %v4230 = vadd.f32 %v4187, %v4229
    %v4231 = vpop.f32.mrf.mxu0
    %v4232 = vadd.f32 %v4189, %v4231
    %4233 = vdwg.mxu0
    %4234 = vmatprep.subr.bf16.mxu0 %v2757
    %4235 = vmatpush1.bf16.msra.mxu0 %v2756
    %4236 = vmatprep.subr.bf16.mxu0 %v2749
    %4237 = vmatpush1.bf16.msra.mxu0 %v2748
    %4238 = vmatprep.subr.bf16.mxu0 %v2741
    %4239 = vmatpush1.bf16.msra.mxu0 %v2740
    %4240 = vmatprep.subr.bf16.mxu0 %v2733
    %4241 = vmatpush1.bf16.msra.mxu0 %v2732
    %4242 = vmatprep.subr.bf16.mxu0 %v2725
    %4243 = vmatpush1.bf16.msra.mxu0 %v2724
    %4244 = vmatprep.subr.bf16.mxu0 %v2717
    %4245 = vmatpush1.bf16.msra.mxu0 %v2716
    %4246 = vmatprep.subr.bf16.mxu0 %v2709
    %4247 = vmatpush1.bf16.msra.mxu0 %v2708
    %4248 = vmatprep.subr.bf16.mxu0 %v2701
    %4249 = vmatpush1.bf16.msra.mxu0 %v2700
    %4250 = vmatprep.subr.bf16.mxu0 %v2821
    %4251 = vmatpush2.bf16.msra.mxu0 %v2820
    %4252 = vmatprep.subr.bf16.mxu0 %v2813
    %4253 = vmatpush2.bf16.msra.mxu0 %v2812
    %4254 = vmatprep.subr.bf16.mxu0 %v2805
    %4255 = vmatpush2.bf16.msra.mxu0 %v2804
    %4256 = vmatprep.subr.bf16.mxu0 %v2797
    %4257 = vmatpush2.bf16.msra.mxu0 %v2796
    %4258 = vmatprep.subr.bf16.mxu0 %v2789
    %4259 = vmatpush2.bf16.msra.mxu0 %v2788
    %4260 = vmatprep.subr.bf16.mxu0 %v2781
    %4261 = vmatpush2.bf16.msra.mxu0 %v2780
    %4262 = vmatprep.subr.bf16.mxu0 %v2773
    %4263 = vmatpush2.bf16.msra.mxu0 %v2772
    %4264 = vmatprep.subr.bf16.mxu0 %v2765
    %4265 = vmatpush2.bf16.msra.mxu0 %v2764
    %4266 = vmatprep.mubr.bf16.mxu0 %v597
    %4267 = vmatmul.mubr.bf16.gmra.mxu0 %v596
    %v4268 = vpop.f32.mrf.mxu0
    %v4269 = vadd.f32 %v1145, %v4268
    %v4270 = vpop.f32.mrf.mxu0
    %v4271 = vadd.f32 %v1149, %v4270
    %v4272 = vpop.f32.mrf.mxu0
    %v4273 = vadd.f32 %v1145, %v4272
    %v4274 = vpop.f32.mrf.mxu0
    %v4275 = vadd.f32 %v1149, %v4274
    %4276 = vdwg.mxu0
    %4277 = vmatprep.subr.bf16.mxu0 %v2885
    %4278 = vmatpush1.bf16.msra.mxu0 %v2884
    %4279 = vmatprep.subr.bf16.mxu0 %v2877
    %4280 = vmatpush1.bf16.msra.mxu0 %v2876
    %4281 = vmatprep.subr.bf16.mxu0 %v2869
    %4282 = vmatpush1.bf16.msra.mxu0 %v2868
    %4283 = vmatprep.subr.bf16.mxu0 %v2861
    %4284 = vmatpush1.bf16.msra.mxu0 %v2860
    %4285 = vmatprep.subr.bf16.mxu0 %v2853
    %4286 = vmatpush1.bf16.msra.mxu0 %v2852
    %4287 = vmatprep.subr.bf16.mxu0 %v2845
    %4288 = vmatpush1.bf16.msra.mxu0 %v2844
    %4289 = vmatprep.subr.bf16.mxu0 %v2837
    %4290 = vmatpush1.bf16.msra.mxu0 %v2836
    %4291 = vmatprep.subr.bf16.mxu0 %v2829
    %4292 = vmatpush1.bf16.msra.mxu0 %v2828
    %4293 = vmatprep.subr.bf16.mxu0 %v2949
    %4294 = vmatpush2.bf16.msra.mxu0 %v2948
    %4295 = vmatprep.subr.bf16.mxu0 %v2941
    %4296 = vmatpush2.bf16.msra.mxu0 %v2940
    %4297 = vmatprep.subr.bf16.mxu0 %v2933
    %4298 = vmatpush2.bf16.msra.mxu0 %v2932
    %4299 = vmatprep.subr.bf16.mxu0 %v2925
    %4300 = vmatpush2.bf16.msra.mxu0 %v2924
    %4301 = vmatprep.subr.bf16.mxu0 %v2917
    %4302 = vmatpush2.bf16.msra.mxu0 %v2916
    %4303 = vmatprep.subr.bf16.mxu0 %v2909
    %4304 = vmatpush2.bf16.msra.mxu0 %v2908
    %4305 = vmatprep.subr.bf16.mxu0 %v2901
    %4306 = vmatpush2.bf16.msra.mxu0 %v2900
    %4307 = vmatprep.subr.bf16.mxu0 %v2893
    %4308 = vmatpush2.bf16.msra.mxu0 %v2892
    %4309 = vmatprep.mubr.bf16.mxu0 %v599
    %4310 = vmatmul.mubr.bf16.gmra.mxu0 %v598
    %v4311 = vpop.f32.mrf.mxu0
    %v4312 = vadd.f32 %v4269, %v4311
    %v4313 = vpop.f32.mrf.mxu0
    %v4314 = vadd.f32 %v4271, %v4313
    %v4315 = vpop.f32.mrf.mxu0
    %v4316 = vadd.f32 %v4273, %v4315
    %v4317 = vpop.f32.mrf.mxu0
    %v4318 = vadd.f32 %v4275, %v4317
    %4319 = vdwg.mxu0
    %4320 = vmatprep.subr.bf16.mxu0 %v3013
    %4321 = vmatpush1.bf16.msra.mxu0 %v3012
    %4322 = vmatprep.subr.bf16.mxu0 %v3005
    %4323 = vmatpush1.bf16.msra.mxu0 %v3004
    %4324 = vmatprep.subr.bf16.mxu0 %v2997
    %4325 = vmatpush1.bf16.msra.mxu0 %v2996
    %4326 = vmatprep.subr.bf16.mxu0 %v2989
    %4327 = vmatpush1.bf16.msra.mxu0 %v2988
    %4328 = vmatprep.subr.bf16.mxu0 %v2981
    %4329 = vmatpush1.bf16.msra.mxu0 %v2980
    %4330 = vmatprep.subr.bf16.mxu0 %v2973
    %4331 = vmatpush1.bf16.msra.mxu0 %v2972
    %4332 = vmatprep.subr.bf16.mxu0 %v2965
    %4333 = vmatpush1.bf16.msra.mxu0 %v2964
    %4334 = vmatprep.subr.bf16.mxu0 %v2957
    %4335 = vmatpush1.bf16.msra.mxu0 %v2956
    %4336 = vmatprep.subr.bf16.mxu0 %v3077
    %4337 = vmatpush2.bf16.msra.mxu0 %v3076
    %4338 = vmatprep.subr.bf16.mxu0 %v3069
    %4339 = vmatpush2.bf16.msra.mxu0 %v3068
    %4340 = vmatprep.subr.bf16.mxu0 %v3061
    %4341 = vmatpush2.bf16.msra.mxu0 %v3060
    %4342 = vmatprep.subr.bf16.mxu0 %v3053
    %4343 = vmatpush2.bf16.msra.mxu0 %v3052
    %4344 = vmatprep.subr.bf16.mxu0 %v3045
    %4345 = vmatpush2.bf16.msra.mxu0 %v3044
    %4346 = vmatprep.subr.bf16.mxu0 %v3037
    %4347 = vmatpush2.bf16.msra.mxu0 %v3036
    %4348 = vmatprep.subr.bf16.mxu0 %v3029
    %4349 = vmatpush2.bf16.msra.mxu0 %v3028
    %4350 = vmatprep.subr.bf16.mxu0 %v3021
    %4351 = vmatpush2.bf16.msra.mxu0 %v3020
    %4352 = vmatprep.mubr.bf16.mxu0 %v601
    %4353 = vmatmul.mubr.bf16.gmra.mxu0 %v600
    %v4354 = vpop.f32.mrf.mxu0
    %v4355 = vadd.f32 %v4312, %v4354
    %v4356 = vpop.f32.mrf.mxu0
    %v4357 = vadd.f32 %v4314, %v4356
    %v4358 = vpop.f32.mrf.mxu0
    %v4359 = vadd.f32 %v4316, %v4358
    %v4360 = vpop.f32.mrf.mxu0
    %v4361 = vadd.f32 %v4318, %v4360
    %4362 = vdwg.mxu0
    %4363 = vmatprep.subr.bf16.mxu0 %v3141
    %4364 = vmatpush1.bf16.msra.mxu0 %v3140
    %4365 = vmatprep.subr.bf16.mxu0 %v3133
    %4366 = vmatpush1.bf16.msra.mxu0 %v3132
    %4367 = vmatprep.subr.bf16.mxu0 %v3125
    %4368 = vmatpush1.bf16.msra.mxu0 %v3124
    %4369 = vmatprep.subr.bf16.mxu0 %v3117
    %4370 = vmatpush1.bf16.msra.mxu0 %v3116
    %4371 = vmatprep.subr.bf16.mxu0 %v3109
    %4372 = vmatpush1.bf16.msra.mxu0 %v3108
    %4373 = vmatprep.subr.bf16.mxu0 %v3101
    %4374 = vmatpush1.bf16.msra.mxu0 %v3100
    %4375 = vmatprep.subr.bf16.mxu0 %v3093
    %4376 = vmatpush1.bf16.msra.mxu0 %v3092
    %4377 = vmatprep.subr.bf16.mxu0 %v3085
    %4378 = vmatpush1.bf16.msra.mxu0 %v3084
    %4379 = vmatprep.subr.bf16.mxu0 %v3205
    %4380 = vmatpush2.bf16.msra.mxu0 %v3204
    %4381 = vmatprep.subr.bf16.mxu0 %v3197
    %4382 = vmatpush2.bf16.msra.mxu0 %v3196
    %4383 = vmatprep.subr.bf16.mxu0 %v3189
    %4384 = vmatpush2.bf16.msra.mxu0 %v3188
    %4385 = vmatprep.subr.bf16.mxu0 %v3181
    %4386 = vmatpush2.bf16.msra.mxu0 %v3180
    %4387 = vmatprep.subr.bf16.mxu0 %v3173
    %4388 = vmatpush2.bf16.msra.mxu0 %v3172
    %4389 = vmatprep.subr.bf16.mxu0 %v3165
    %4390 = vmatpush2.bf16.msra.mxu0 %v3164
    %4391 = vmatprep.subr.bf16.mxu0 %v3157
    %4392 = vmatpush2.bf16.msra.mxu0 %v3156
    %4393 = vmatprep.subr.bf16.mxu0 %v3149
    %4394 = vmatpush2.bf16.msra.mxu0 %v3148
    %4395 = vmatprep.mubr.bf16.mxu0 %v603
    %4396 = vmatmul.mubr.bf16.gmra.mxu0 %v602
    %v4397 = vpop.f32.mrf.mxu0
    %v4398 = vadd.f32 %v4355, %v4397
    %v4399 = vpop.f32.mrf.mxu0
    %v4400 = vadd.f32 %v4357, %v4399
    %v4401 = vpop.f32.mrf.mxu0
    %v4402 = vadd.f32 %v4359, %v4401
    %v4403 = vpop.f32.mrf.mxu0
    %v4404 = vadd.f32 %v4361, %v4403
    %4405 = vdwg.mxu0
    %v4406 = vmul.f32 %v3882, 0.01
    %v4407 = vmul.f32 %v3884, 0.01
    %v4408 = vmul.f32 %v4054, 0.01
    %v4409 = vmul.f32 %v4056, 0.01
    %v4410 = vmul.f32 %v4226, 0.01
    %v4411 = vmul.f32 %v4228, 0.01
    %v4412 = vmul.f32 %v4398, 0.01
    %v4413 = vmul.f32 %v4400, 0.01
    %v4414 = vmul.f32 %v3886, 0.01
    %v4415 = vmul.f32 %v3888, 0.01
    %v4416 = vmul.f32 %v4058, 0.01
    %v4417 = vmul.f32 %v4060, 0.01
    %v4418 = vmul.f32 %v4230, 0.01
    %v4419 = vmul.f32 %v4232, 0.01
    %v4420 = vmul.f32 %v4402, 0.01
    %v4421 = vmul.f32 %v4404, 0.01
    %v4422 = vmax.f32 %v3882, %v4406
    %v4423 = vmax.f32 %v3884, %v4407
    %v4424 = vmax.f32 %v4054, %v4408
    %v4425 = vmax.f32 %v4056, %v4409
    %v4426 = vmax.f32 %v4226, %v4410
    %v4427 = vmax.f32 %v4228, %v4411
    %v4428 = vmax.f32 %v4398, %v4412
    %v4429 = vmax.f32 %v4400, %v4413
    %v4430 = vmax.f32 %v3886, %v4414
    %v4431 = vmax.f32 %v3888, %v4415
    %v4432 = vmax.f32 %v4058, %v4416
    %v4433 = vmax.f32 %v4060, %v4417
    %v4434 = vmax.f32 %v4230, %v4418
    %v4435 = vmax.f32 %v4232, %v4419
    %v4436 = vmax.f32 %v4402, %v4420
    %v4437 = vmax.f32 %v4404, %v4421
    %v4438 = vpack.c.bf16 %v4430, %v4422
    %v4439 = vpack.c.bf16 %v4431, %v4423
    %v4440 = vpack.c.bf16 %v4432, %v4424
    %v4441 = vpack.c.bf16 %v4433, %v4425
    %v4442 = vpack.c.bf16 %v4434, %v4426
    %v4443 = vpack.c.bf16 %v4435, %v4427
    %v4444 = vpack.c.bf16 %v4436, %v4428
    %v4445 = vpack.c.bf16 %v4437, %v4429
    %v4446 = vld [vmem:[#allocation11] sm:$0xff]
    %v4447 = vld [vmem:[#allocation11 + $0x8] sm:$0xff]
    %v4448 = vld [vmem:[#allocation11 + $0x10] sm:$0xff]
    %v4449 = vld [vmem:[#allocation11 + $0x18] sm:$0xff]
    %v4450 = vld [vmem:[#allocation11 + $0x20] sm:$0xff]
    %v4451 = vld [vmem:[#allocation11 + $0x28] sm:$0xff]
    %v4452 = vld [vmem:[#allocation11 + $0x30] sm:$0xff]
    %v4453 = vld [vmem:[#allocation11 + $0x38] sm:$0xff]
    %v4454 = vld [vmem:[#allocation11 + $0x40] sm:$0xff]
    %v4455 = vld [vmem:[#allocation11 + $0x48] sm:$0xff]
    %v4456 = vld [vmem:[#allocation11 + $0x50] sm:$0xff]
    %v4457 = vld [vmem:[#allocation11 + $0x58] sm:$0xff]
    %v4458 = vld [vmem:[#allocation11 + $0x60] sm:$0xff]
    %v4459 = vld [vmem:[#allocation11 + $0x68] sm:$0xff]
    %v4460 = vld [vmem:[#allocation11 + $0x70] sm:$0xff]
    %v4461 = vld [vmem:[#allocation11 + $0x78] sm:$0xff]
    %v4462 = vld [vmem:[#allocation11 + $0x80] sm:$0xff]
    %v4463 = vld [vmem:[#allocation11 + $0x88] sm:$0xff]
    %v4464 = vld [vmem:[#allocation11 + $0x90] sm:$0xff]
    %v4465 = vld [vmem:[#allocation11 + $0x98] sm:$0xff]
    %v4466 = vld [vmem:[#allocation11 + $0xa0] sm:$0xff]
    %v4467 = vld [vmem:[#allocation11 + $0xa8] sm:$0xff]
    %v4468 = vld [vmem:[#allocation11 + $0xb0] sm:$0xff]
    %v4469 = vld [vmem:[#allocation11 + $0xb8] sm:$0xff]
    %v4470 = vld [vmem:[#allocation11 + $0xc0] sm:$0xff]
    %v4471 = vld [vmem:[#allocation11 + $0xc8] sm:$0xff]
    %v4472 = vld [vmem:[#allocation11 + $0xd0] sm:$0xff]
    %v4473 = vld [vmem:[#allocation11 + $0xd8] sm:$0xff]
    %v4474 = vld [vmem:[#allocation11 + $0xe0] sm:$0xff]
    %v4475 = vld [vmem:[#allocation11 + $0xe8] sm:$0xff]
    %v4476 = vld [vmem:[#allocation11 + $0xf0] sm:$0xff]
    %v4477 = vld [vmem:[#allocation11 + $0xf8] sm:$0xff]
    %v4478 = vld [vmem:[#allocation11 + $0x100] sm:$0xff]
    %v4479 = vld [vmem:[#allocation11 + $0x108] sm:$0xff]
    %v4480 = vld [vmem:[#allocation11 + $0x110] sm:$0xff]
    %v4481 = vld [vmem:[#allocation11 + $0x118] sm:$0xff]
    %v4482 = vld [vmem:[#allocation11 + $0x120] sm:$0xff]
    %v4483 = vld [vmem:[#allocation11 + $0x128] sm:$0xff]
    %v4484 = vld [vmem:[#allocation11 + $0x130] sm:$0xff]
    %v4485 = vld [vmem:[#allocation11 + $0x138] sm:$0xff]
    %v4486 = vld [vmem:[#allocation11 + $0x140] sm:$0xff]
    %v4487 = vld [vmem:[#allocation11 + $0x148] sm:$0xff]
    %v4488 = vld [vmem:[#allocation11 + $0x150] sm:$0xff]
    %v4489 = vld [vmem:[#allocation11 + $0x158] sm:$0xff]
    %v4490 = vld [vmem:[#allocation11 + $0x160] sm:$0xff]
    %v4491 = vld [vmem:[#allocation11 + $0x168] sm:$0xff]
    %v4492 = vld [vmem:[#allocation11 + $0x170] sm:$0xff]
    %v4493 = vld [vmem:[#allocation11 + $0x178] sm:$0xff]
    %v4494 = vld [vmem:[#allocation11 + $0x180] sm:$0xff]
    %v4495 = vld [vmem:[#allocation11 + $0x188] sm:$0xff]
    %v4496 = vld [vmem:[#allocation11 + $0x190] sm:$0xff]
    %v4497 = vld [vmem:[#allocation11 + $0x198] sm:$0xff]
    %v4498 = vld [vmem:[#allocation11 + $0x1a0] sm:$0xff]
    %v4499 = vld [vmem:[#allocation11 + $0x1a8] sm:$0xff]
    %v4500 = vld [vmem:[#allocation11 + $0x1b0] sm:$0xff]
    %v4501 = vld [vmem:[#allocation11 + $0x1b8] sm:$0xff]
    %v4502 = vld [vmem:[#allocation11 + $0x1c0] sm:$0xff]
    %v4503 = vld [vmem:[#allocation11 + $0x1c8] sm:$0xff]
    %v4504 = vld [vmem:[#allocation11 + $0x1d0] sm:$0xff]
    %v4505 = vld [vmem:[#allocation11 + $0x1d8] sm:$0xff]
    %v4506 = vld [vmem:[#allocation11 + $0x1e0] sm:$0xff]
    %v4507 = vld [vmem:[#allocation11 + $0x1e8] sm:$0xff]
    %v4508 = vld [vmem:[#allocation11 + $0x1f0] sm:$0xff]
    %v4509 = vld [vmem:[#allocation11 + $0x1f8] sm:$0xff]
    %v4510 = vld [vmem:[#allocation11 + $0x200] sm:$0xff]
    %v4511 = vld [vmem:[#allocation11 + $0x208] sm:$0xff]
    %v4512 = vld [vmem:[#allocation11 + $0x210] sm:$0xff]
    %v4513 = vld [vmem:[#allocation11 + $0x218] sm:$0xff]
    %v4514 = vld [vmem:[#allocation11 + $0x220] sm:$0xff]
    %v4515 = vld [vmem:[#allocation11 + $0x228] sm:$0xff]
    %v4516 = vld [vmem:[#allocation11 + $0x230] sm:$0xff]
    %v4517 = vld [vmem:[#allocation11 + $0x238] sm:$0xff]
    %v4518 = vld [vmem:[#allocation11 + $0x240] sm:$0xff]
    %v4519 = vld [vmem:[#allocation11 + $0x248] sm:$0xff]
    %v4520 = vld [vmem:[#allocation11 + $0x250] sm:$0xff]
    %v4521 = vld [vmem:[#allocation11 + $0x258] sm:$0xff]
    %v4522 = vld [vmem:[#allocation11 + $0x260] sm:$0xff]
    %v4523 = vld [vmem:[#allocation11 + $0x268] sm:$0xff]
    %v4524 = vld [vmem:[#allocation11 + $0x270] sm:$0xff]
    %v4525 = vld [vmem:[#allocation11 + $0x278] sm:$0xff]
    %v4526 = vld [vmem:[#allocation11 + $0x280] sm:$0xff]
    %v4527 = vld [vmem:[#allocation11 + $0x288] sm:$0xff]
    %v4528 = vld [vmem:[#allocation11 + $0x290] sm:$0xff]
    %v4529 = vld [vmem:[#allocation11 + $0x298] sm:$0xff]
    %v4530 = vld [vmem:[#allocation11 + $0x2a0] sm:$0xff]
    %v4531 = vld [vmem:[#allocation11 + $0x2a8] sm:$0xff]
    %v4532 = vld [vmem:[#allocation11 + $0x2b0] sm:$0xff]
    %v4533 = vld [vmem:[#allocation11 + $0x2b8] sm:$0xff]
    %v4534 = vld [vmem:[#allocation11 + $0x2c0] sm:$0xff]
    %v4535 = vld [vmem:[#allocation11 + $0x2c8] sm:$0xff]
    %v4536 = vld [vmem:[#allocation11 + $0x2d0] sm:$0xff]
    %v4537 = vld [vmem:[#allocation11 + $0x2d8] sm:$0xff]
    %v4538 = vld [vmem:[#allocation11 + $0x2e0] sm:$0xff]
    %v4539 = vld [vmem:[#allocation11 + $0x2e8] sm:$0xff]
    %v4540 = vld [vmem:[#allocation11 + $0x2f0] sm:$0xff]
    %v4541 = vld [vmem:[#allocation11 + $0x2f8] sm:$0xff]
    %v4542 = vld [vmem:[#allocation11 + $0x300] sm:$0xff]
    %v4543 = vld [vmem:[#allocation11 + $0x308] sm:$0xff]
    %v4544 = vld [vmem:[#allocation11 + $0x310] sm:$0xff]
    %v4545 = vld [vmem:[#allocation11 + $0x318] sm:$0xff]
    %v4546 = vld [vmem:[#allocation11 + $0x320] sm:$0xff]
    %v4547 = vld [vmem:[#allocation11 + $0x328] sm:$0xff]
    %v4548 = vld [vmem:[#allocation11 + $0x330] sm:$0xff]
    %v4549 = vld [vmem:[#allocation11 + $0x338] sm:$0xff]
    %v4550 = vld [vmem:[#allocation11 + $0x340] sm:$0xff]
    %v4551 = vld [vmem:[#allocation11 + $0x348] sm:$0xff]
    %v4552 = vld [vmem:[#allocation11 + $0x350] sm:$0xff]
    %v4553 = vld [vmem:[#allocation11 + $0x358] sm:$0xff]
    %v4554 = vld [vmem:[#allocation11 + $0x360] sm:$0xff]
    %v4555 = vld [vmem:[#allocation11 + $0x368] sm:$0xff]
    %v4556 = vld [vmem:[#allocation11 + $0x370] sm:$0xff]
    %v4557 = vld [vmem:[#allocation11 + $0x378] sm:$0xff]
    %v4558 = vld [vmem:[#allocation11 + $0x380] sm:$0xff]
    %v4559 = vld [vmem:[#allocation11 + $0x388] sm:$0xff]
    %v4560 = vld [vmem:[#allocation11 + $0x390] sm:$0xff]
    %v4561 = vld [vmem:[#allocation11 + $0x398] sm:$0xff]
    %v4562 = vld [vmem:[#allocation11 + $0x3a0] sm:$0xff]
    %v4563 = vld [vmem:[#allocation11 + $0x3a8] sm:$0xff]
    %v4564 = vld [vmem:[#allocation11 + $0x3b0] sm:$0xff]
    %v4565 = vld [vmem:[#allocation11 + $0x3b8] sm:$0xff]
    %v4566 = vld [vmem:[#allocation11 + $0x3c0] sm:$0xff]
    %v4567 = vld [vmem:[#allocation11 + $0x3c8] sm:$0xff]
    %v4568 = vld [vmem:[#allocation11 + $0x3d0] sm:$0xff]
    %v4569 = vld [vmem:[#allocation11 + $0x3d8] sm:$0xff]
    %v4570 = vld [vmem:[#allocation11 + $0x3e0] sm:$0xff]
    %v4571 = vld [vmem:[#allocation11 + $0x3e8] sm:$0xff]
    %v4572 = vld [vmem:[#allocation11 + $0x3f0] sm:$0xff]
    %v4573 = vld [vmem:[#allocation11 + $0x3f8] sm:$0xff]
    %v4574 = vld [vmem:[#allocation11 + $0x400] sm:$0xff]
    %v4575 = vld [vmem:[#allocation11 + $0x408] sm:$0xff]
    %v4576 = vld [vmem:[#allocation11 + $0x410] sm:$0xff]
    %v4577 = vld [vmem:[#allocation11 + $0x418] sm:$0xff]
    %v4578 = vld [vmem:[#allocation11 + $0x420] sm:$0xff]
    %v4579 = vld [vmem:[#allocation11 + $0x428] sm:$0xff]
    %v4580 = vld [vmem:[#allocation11 + $0x430] sm:$0xff]
    %v4581 = vld [vmem:[#allocation11 + $0x438] sm:$0xff]
    %v4582 = vld [vmem:[#allocation11 + $0x440] sm:$0xff]
    %v4583 = vld [vmem:[#allocation11 + $0x448] sm:$0xff]
    %v4584 = vld [vmem:[#allocation11 + $0x450] sm:$0xff]
    %v4585 = vld [vmem:[#allocation11 + $0x458] sm:$0xff]
    %v4586 = vld [vmem:[#allocation11 + $0x460] sm:$0xff]
    %v4587 = vld [vmem:[#allocation11 + $0x468] sm:$0xff]
    %v4588 = vld [vmem:[#allocation11 + $0x470] sm:$0xff]
    %v4589 = vld [vmem:[#allocation11 + $0x478] sm:$0xff]
    %v4590 = vld [vmem:[#allocation11 + $0x480] sm:$0xff]
    %v4591 = vld [vmem:[#allocation11 + $0x488] sm:$0xff]
    %v4592 = vld [vmem:[#allocation11 + $0x490] sm:$0xff]
    %v4593 = vld [vmem:[#allocation11 + $0x498] sm:$0xff]
    %v4594 = vld [vmem:[#allocation11 + $0x4a0] sm:$0xff]
    %v4595 = vld [vmem:[#allocation11 + $0x4a8] sm:$0xff]
    %v4596 = vld [vmem:[#allocation11 + $0x4b0] sm:$0xff]
    %v4597 = vld [vmem:[#allocation11 + $0x4b8] sm:$0xff]
    %v4598 = vld [vmem:[#allocation11 + $0x4c0] sm:$0xff]
    %v4599 = vld [vmem:[#allocation11 + $0x4c8] sm:$0xff]
    %v4600 = vld [vmem:[#allocation11 + $0x4d0] sm:$0xff]
    %v4601 = vld [vmem:[#allocation11 + $0x4d8] sm:$0xff]
    %v4602 = vld [vmem:[#allocation11 + $0x4e0] sm:$0xff]
    %v4603 = vld [vmem:[#allocation11 + $0x4e8] sm:$0xff]
    %v4604 = vld [vmem:[#allocation11 + $0x4f0] sm:$0xff]
    %v4605 = vld [vmem:[#allocation11 + $0x4f8] sm:$0xff]
    %v4606 = vld [vmem:[#allocation11 + $0x500] sm:$0xff]
    %v4607 = vld [vmem:[#allocation11 + $0x508] sm:$0xff]
    %v4608 = vld [vmem:[#allocation11 + $0x510] sm:$0xff]
    %v4609 = vld [vmem:[#allocation11 + $0x518] sm:$0xff]
    %v4610 = vld [vmem:[#allocation11 + $0x520] sm:$0xff]
    %v4611 = vld [vmem:[#allocation11 + $0x528] sm:$0xff]
    %v4612 = vld [vmem:[#allocation11 + $0x530] sm:$0xff]
    %v4613 = vld [vmem:[#allocation11 + $0x538] sm:$0xff]
    %v4614 = vld [vmem:[#allocation11 + $0x540] sm:$0xff]
    %v4615 = vld [vmem:[#allocation11 + $0x548] sm:$0xff]
    %v4616 = vld [vmem:[#allocation11 + $0x550] sm:$0xff]
    %v4617 = vld [vmem:[#allocation11 + $0x558] sm:$0xff]
    %v4618 = vld [vmem:[#allocation11 + $0x560] sm:$0xff]
    %v4619 = vld [vmem:[#allocation11 + $0x568] sm:$0xff]
    %v4620 = vld [vmem:[#allocation11 + $0x570] sm:$0xff]
    %v4621 = vld [vmem:[#allocation11 + $0x578] sm:$0xff]
    %v4622 = vld [vmem:[#allocation11 + $0x580] sm:$0xff]
    %v4623 = vld [vmem:[#allocation11 + $0x588] sm:$0xff]
    %v4624 = vld [vmem:[#allocation11 + $0x590] sm:$0xff]
    %v4625 = vld [vmem:[#allocation11 + $0x598] sm:$0xff]
    %v4626 = vld [vmem:[#allocation11 + $0x5a0] sm:$0xff]
    %v4627 = vld [vmem:[#allocation11 + $0x5a8] sm:$0xff]
    %v4628 = vld [vmem:[#allocation11 + $0x5b0] sm:$0xff]
    %v4629 = vld [vmem:[#allocation11 + $0x5b8] sm:$0xff]
    %v4630 = vld [vmem:[#allocation11 + $0x5c0] sm:$0xff]
    %v4631 = vld [vmem:[#allocation11 + $0x5c8] sm:$0xff]
    %v4632 = vld [vmem:[#allocation11 + $0x5d0] sm:$0xff]
    %v4633 = vld [vmem:[#allocation11 + $0x5d8] sm:$0xff]
    %v4634 = vld [vmem:[#allocation11 + $0x5e0] sm:$0xff]
    %v4635 = vld [vmem:[#allocation11 + $0x5e8] sm:$0xff]
    %v4636 = vld [vmem:[#allocation11 + $0x5f0] sm:$0xff]
    %v4637 = vld [vmem:[#allocation11 + $0x5f8] sm:$0xff]
    %v4638 = vld [vmem:[#allocation11 + $0x600] sm:$0xff]
    %v4639 = vld [vmem:[#allocation11 + $0x608] sm:$0xff]
    %v4640 = vld [vmem:[#allocation11 + $0x610] sm:$0xff]
    %v4641 = vld [vmem:[#allocation11 + $0x618] sm:$0xff]
    %v4642 = vld [vmem:[#allocation11 + $0x620] sm:$0xff]
    %v4643 = vld [vmem:[#allocation11 + $0x628] sm:$0xff]
    %v4644 = vld [vmem:[#allocation11 + $0x630] sm:$0xff]
    %v4645 = vld [vmem:[#allocation11 + $0x638] sm:$0xff]
    %v4646 = vld [vmem:[#allocation11 + $0x640] sm:$0xff]
    %v4647 = vld [vmem:[#allocation11 + $0x648] sm:$0xff]
    %v4648 = vld [vmem:[#allocation11 + $0x650] sm:$0xff]
    %v4649 = vld [vmem:[#allocation11 + $0x658] sm:$0xff]
    %v4650 = vld [vmem:[#allocation11 + $0x660] sm:$0xff]
    %v4651 = vld [vmem:[#allocation11 + $0x668] sm:$0xff]
    %v4652 = vld [vmem:[#allocation11 + $0x670] sm:$0xff]
    %v4653 = vld [vmem:[#allocation11 + $0x678] sm:$0xff]
    %v4654 = vld [vmem:[#allocation11 + $0x680] sm:$0xff]
    %v4655 = vld [vmem:[#allocation11 + $0x688] sm:$0xff]
    %v4656 = vld [vmem:[#allocation11 + $0x690] sm:$0xff]
    %v4657 = vld [vmem:[#allocation11 + $0x698] sm:$0xff]
    %v4658 = vld [vmem:[#allocation11 + $0x6a0] sm:$0xff]
    %v4659 = vld [vmem:[#allocation11 + $0x6a8] sm:$0xff]
    %v4660 = vld [vmem:[#allocation11 + $0x6b0] sm:$0xff]
    %v4661 = vld [vmem:[#allocation11 + $0x6b8] sm:$0xff]
    %v4662 = vld [vmem:[#allocation11 + $0x6c0] sm:$0xff]
    %v4663 = vld [vmem:[#allocation11 + $0x6c8] sm:$0xff]
    %v4664 = vld [vmem:[#allocation11 + $0x6d0] sm:$0xff]
    %v4665 = vld [vmem:[#allocation11 + $0x6d8] sm:$0xff]
    %v4666 = vld [vmem:[#allocation11 + $0x6e0] sm:$0xff]
    %v4667 = vld [vmem:[#allocation11 + $0x6e8] sm:$0xff]
    %v4668 = vld [vmem:[#allocation11 + $0x6f0] sm:$0xff]
    %v4669 = vld [vmem:[#allocation11 + $0x6f8] sm:$0xff]
    %v4670 = vld [vmem:[#allocation11 + $0x700] sm:$0xff]
    %v4671 = vld [vmem:[#allocation11 + $0x708] sm:$0xff]
    %v4672 = vld [vmem:[#allocation11 + $0x710] sm:$0xff]
    %v4673 = vld [vmem:[#allocation11 + $0x718] sm:$0xff]
    %v4674 = vld [vmem:[#allocation11 + $0x720] sm:$0xff]
    %v4675 = vld [vmem:[#allocation11 + $0x728] sm:$0xff]
    %v4676 = vld [vmem:[#allocation11 + $0x730] sm:$0xff]
    %v4677 = vld [vmem:[#allocation11 + $0x738] sm:$0xff]
    %v4678 = vld [vmem:[#allocation11 + $0x740] sm:$0xff]
    %v4679 = vld [vmem:[#allocation11 + $0x748] sm:$0xff]
    %v4680 = vld [vmem:[#allocation11 + $0x750] sm:$0xff]
    %v4681 = vld [vmem:[#allocation11 + $0x758] sm:$0xff]
    %v4682 = vld [vmem:[#allocation11 + $0x760] sm:$0xff]
    %v4683 = vld [vmem:[#allocation11 + $0x768] sm:$0xff]
    %v4684 = vld [vmem:[#allocation11 + $0x770] sm:$0xff]
    %v4685 = vld [vmem:[#allocation11 + $0x778] sm:$0xff]
    %v4686 = vld [vmem:[#allocation11 + $0x780] sm:$0xff]
    %v4687 = vld [vmem:[#allocation11 + $0x788] sm:$0xff]
    %v4688 = vld [vmem:[#allocation11 + $0x790] sm:$0xff]
    %v4689 = vld [vmem:[#allocation11 + $0x798] sm:$0xff]
    %v4690 = vld [vmem:[#allocation11 + $0x7a0] sm:$0xff]
    %v4691 = vld [vmem:[#allocation11 + $0x7a8] sm:$0xff]
    %v4692 = vld [vmem:[#allocation11 + $0x7b0] sm:$0xff]
    %v4693 = vld [vmem:[#allocation11 + $0x7b8] sm:$0xff]
    %v4694 = vld [vmem:[#allocation11 + $0x7c0] sm:$0xff]
    %v4695 = vld [vmem:[#allocation11 + $0x7c8] sm:$0xff]
    %v4696 = vld [vmem:[#allocation11 + $0x7d0] sm:$0xff]
    %v4697 = vld [vmem:[#allocation11 + $0x7d8] sm:$0xff]
    %v4698 = vld [vmem:[#allocation11 + $0x7e0] sm:$0xff]
    %v4699 = vld [vmem:[#allocation11 + $0x7e8] sm:$0xff]
    %v4700 = vld [vmem:[#allocation11 + $0x7f0] sm:$0xff]
    %v4701 = vld [vmem:[#allocation11 + $0x7f8] sm:$0xff]
    %v4702 = vld [vmem:[#allocation11 + $0x800] sm:$0xff]
    %v4703 = vld [vmem:[#allocation11 + $0x808] sm:$0xff]
    %v4704 = vld [vmem:[#allocation11 + $0x810] sm:$0xff]
    %v4705 = vld [vmem:[#allocation11 + $0x818] sm:$0xff]
    %v4706 = vld [vmem:[#allocation11 + $0x820] sm:$0xff]
    %v4707 = vld [vmem:[#allocation11 + $0x828] sm:$0xff]
    %v4708 = vld [vmem:[#allocation11 + $0x830] sm:$0xff]
    %v4709 = vld [vmem:[#allocation11 + $0x838] sm:$0xff]
    %v4710 = vld [vmem:[#allocation11 + $0x840] sm:$0xff]
    %v4711 = vld [vmem:[#allocation11 + $0x848] sm:$0xff]
    %v4712 = vld [vmem:[#allocation11 + $0x850] sm:$0xff]
    %v4713 = vld [vmem:[#allocation11 + $0x858] sm:$0xff]
    %v4714 = vld [vmem:[#allocation11 + $0x860] sm:$0xff]
    %v4715 = vld [vmem:[#allocation11 + $0x868] sm:$0xff]
    %v4716 = vld [vmem:[#allocation11 + $0x870] sm:$0xff]
    %v4717 = vld [vmem:[#allocation11 + $0x878] sm:$0xff]
    %v4718 = vld [vmem:[#allocation11 + $0x880] sm:$0xff]
    %v4719 = vld [vmem:[#allocation11 + $0x888] sm:$0xff]
    %v4720 = vld [vmem:[#allocation11 + $0x890] sm:$0xff]
    %v4721 = vld [vmem:[#allocation11 + $0x898] sm:$0xff]
    %v4722 = vld [vmem:[#allocation11 + $0x8a0] sm:$0xff]
    %v4723 = vld [vmem:[#allocation11 + $0x8a8] sm:$0xff]
    %v4724 = vld [vmem:[#allocation11 + $0x8b0] sm:$0xff]
    %v4725 = vld [vmem:[#allocation11 + $0x8b8] sm:$0xff]
    %v4726 = vld [vmem:[#allocation11 + $0x8c0] sm:$0xff]
    %v4727 = vld [vmem:[#allocation11 + $0x8c8] sm:$0xff]
    %v4728 = vld [vmem:[#allocation11 + $0x8d0] sm:$0xff]
    %v4729 = vld [vmem:[#allocation11 + $0x8d8] sm:$0xff]
    %v4730 = vld [vmem:[#allocation11 + $0x8e0] sm:$0xff]
    %v4731 = vld [vmem:[#allocation11 + $0x8e8] sm:$0xff]
    %v4732 = vld [vmem:[#allocation11 + $0x8f0] sm:$0xff]
    %v4733 = vld [vmem:[#allocation11 + $0x8f8] sm:$0xff]
    %v4734 = vld [vmem:[#allocation11 + $0x900] sm:$0xff]
    %v4735 = vld [vmem:[#allocation11 + $0x908] sm:$0xff]
    %v4736 = vld [vmem:[#allocation11 + $0x910] sm:$0xff]
    %v4737 = vld [vmem:[#allocation11 + $0x918] sm:$0xff]
    %v4738 = vld [vmem:[#allocation11 + $0x920] sm:$0xff]
    %v4739 = vld [vmem:[#allocation11 + $0x928] sm:$0xff]
    %v4740 = vld [vmem:[#allocation11 + $0x930] sm:$0xff]
    %v4741 = vld [vmem:[#allocation11 + $0x938] sm:$0xff]
    %v4742 = vld [vmem:[#allocation11 + $0x940] sm:$0xff]
    %v4743 = vld [vmem:[#allocation11 + $0x948] sm:$0xff]
    %v4744 = vld [vmem:[#allocation11 + $0x950] sm:$0xff]
    %v4745 = vld [vmem:[#allocation11 + $0x958] sm:$0xff]
    %v4746 = vld [vmem:[#allocation11 + $0x960] sm:$0xff]
    %v4747 = vld [vmem:[#allocation11 + $0x968] sm:$0xff]
    %v4748 = vld [vmem:[#allocation11 + $0x970] sm:$0xff]
    %v4749 = vld [vmem:[#allocation11 + $0x978] sm:$0xff]
    %v4750 = vld [vmem:[#allocation11 + $0x980] sm:$0xff]
    %v4751 = vld [vmem:[#allocation11 + $0x988] sm:$0xff]
    %v4752 = vld [vmem:[#allocation11 + $0x990] sm:$0xff]
    %v4753 = vld [vmem:[#allocation11 + $0x998] sm:$0xff]
    %v4754 = vld [vmem:[#allocation11 + $0x9a0] sm:$0xff]
    %v4755 = vld [vmem:[#allocation11 + $0x9a8] sm:$0xff]
    %v4756 = vld [vmem:[#allocation11 + $0x9b0] sm:$0xff]
    %v4757 = vld [vmem:[#allocation11 + $0x9b8] sm:$0xff]
    %v4758 = vld [vmem:[#allocation11 + $0x9c0] sm:$0xff]
    %v4759 = vld [vmem:[#allocation11 + $0x9c8] sm:$0xff]
    %v4760 = vld [vmem:[#allocation11 + $0x9d0] sm:$0xff]
    %v4761 = vld [vmem:[#allocation11 + $0x9d8] sm:$0xff]
    %v4762 = vld [vmem:[#allocation11 + $0x9e0] sm:$0xff]
    %v4763 = vld [vmem:[#allocation11 + $0x9e8] sm:$0xff]
    %v4764 = vld [vmem:[#allocation11 + $0x9f0] sm:$0xff]
    %v4765 = vld [vmem:[#allocation11 + $0x9f8] sm:$0xff]
    %v4766 = vld [vmem:[#allocation11 + $0xa00] sm:$0xff]
    %v4767 = vld [vmem:[#allocation11 + $0xa08] sm:$0xff]
    %v4768 = vld [vmem:[#allocation11 + $0xa10] sm:$0xff]
    %v4769 = vld [vmem:[#allocation11 + $0xa18] sm:$0xff]
    %v4770 = vld [vmem:[#allocation11 + $0xa20] sm:$0xff]
    %v4771 = vld [vmem:[#allocation11 + $0xa28] sm:$0xff]
    %v4772 = vld [vmem:[#allocation11 + $0xa30] sm:$0xff]
    %v4773 = vld [vmem:[#allocation11 + $0xa38] sm:$0xff]
    %v4774 = vld [vmem:[#allocation11 + $0xa40] sm:$0xff]
    %v4775 = vld [vmem:[#allocation11 + $0xa48] sm:$0xff]
    %v4776 = vld [vmem:[#allocation11 + $0xa50] sm:$0xff]
    %v4777 = vld [vmem:[#allocation11 + $0xa58] sm:$0xff]
    %v4778 = vld [vmem:[#allocation11 + $0xa60] sm:$0xff]
    %v4779 = vld [vmem:[#allocation11 + $0xa68] sm:$0xff]
    %v4780 = vld [vmem:[#allocation11 + $0xa70] sm:$0xff]
    %v4781 = vld [vmem:[#allocation11 + $0xa78] sm:$0xff]
    %v4782 = vld [vmem:[#allocation11 + $0xa80] sm:$0xff]
    %v4783 = vld [vmem:[#allocation11 + $0xa88] sm:$0xff]
    %v4784 = vld [vmem:[#allocation11 + $0xa90] sm:$0xff]
    %v4785 = vld [vmem:[#allocation11 + $0xa98] sm:$0xff]
    %v4786 = vld [vmem:[#allocation11 + $0xaa0] sm:$0xff]
    %v4787 = vld [vmem:[#allocation11 + $0xaa8] sm:$0xff]
    %v4788 = vld [vmem:[#allocation11 + $0xab0] sm:$0xff]
    %v4789 = vld [vmem:[#allocation11 + $0xab8] sm:$0xff]
    %v4790 = vld [vmem:[#allocation11 + $0xac0] sm:$0xff]
    %v4791 = vld [vmem:[#allocation11 + $0xac8] sm:$0xff]
    %v4792 = vld [vmem:[#allocation11 + $0xad0] sm:$0xff]
    %v4793 = vld [vmem:[#allocation11 + $0xad8] sm:$0xff]
    %v4794 = vld [vmem:[#allocation11 + $0xae0] sm:$0xff]
    %v4795 = vld [vmem:[#allocation11 + $0xae8] sm:$0xff]
    %v4796 = vld [vmem:[#allocation11 + $0xaf0] sm:$0xff]
    %v4797 = vld [vmem:[#allocation11 + $0xaf8] sm:$0xff]
    %v4798 = vld [vmem:[#allocation11 + $0xb00] sm:$0xff]
    %v4799 = vld [vmem:[#allocation11 + $0xb08] sm:$0xff]
    %v4800 = vld [vmem:[#allocation11 + $0xb10] sm:$0xff]
    %v4801 = vld [vmem:[#allocation11 + $0xb18] sm:$0xff]
    %v4802 = vld [vmem:[#allocation11 + $0xb20] sm:$0xff]
    %v4803 = vld [vmem:[#allocation11 + $0xb28] sm:$0xff]
    %v4804 = vld [vmem:[#allocation11 + $0xb30] sm:$0xff]
    %v4805 = vld [vmem:[#allocation11 + $0xb38] sm:$0xff]
    %v4806 = vld [vmem:[#allocation11 + $0xb40] sm:$0xff]
    %v4807 = vld [vmem:[#allocation11 + $0xb48] sm:$0xff]
    %v4808 = vld [vmem:[#allocation11 + $0xb50] sm:$0xff]
    %v4809 = vld [vmem:[#allocation11 + $0xb58] sm:$0xff]
    %v4810 = vld [vmem:[#allocation11 + $0xb60] sm:$0xff]
    %v4811 = vld [vmem:[#allocation11 + $0xb68] sm:$0xff]
    %v4812 = vld [vmem:[#allocation11 + $0xb70] sm:$0xff]
    %v4813 = vld [vmem:[#allocation11 + $0xb78] sm:$0xff]
    %v4814 = vld [vmem:[#allocation11 + $0xb80] sm:$0xff]
    %v4815 = vld [vmem:[#allocation11 + $0xb88] sm:$0xff]
    %v4816 = vld [vmem:[#allocation11 + $0xb90] sm:$0xff]
    %v4817 = vld [vmem:[#allocation11 + $0xb98] sm:$0xff]
    %v4818 = vld [vmem:[#allocation11 + $0xba0] sm:$0xff]
    %v4819 = vld [vmem:[#allocation11 + $0xba8] sm:$0xff]
    %v4820 = vld [vmem:[#allocation11 + $0xbb0] sm:$0xff]
    %v4821 = vld [vmem:[#allocation11 + $0xbb8] sm:$0xff]
    %v4822 = vld [vmem:[#allocation11 + $0xbc0] sm:$0xff]
    %v4823 = vld [vmem:[#allocation11 + $0xbc8] sm:$0xff]
    %v4824 = vld [vmem:[#allocation11 + $0xbd0] sm:$0xff]
    %v4825 = vld [vmem:[#allocation11 + $0xbd8] sm:$0xff]
    %v4826 = vld [vmem:[#allocation11 + $0xbe0] sm:$0xff]
    %v4827 = vld [vmem:[#allocation11 + $0xbe8] sm:$0xff]
    %v4828 = vld [vmem:[#allocation11 + $0xbf0] sm:$0xff]
    %v4829 = vld [vmem:[#allocation11 + $0xbf8] sm:$0xff]
    %v4830 = vld [vmem:[#allocation11 + $0xc00] sm:$0xff]
    %v4831 = vld [vmem:[#allocation11 + $0xc08] sm:$0xff]
    %v4832 = vld [vmem:[#allocation11 + $0xc10] sm:$0xff]
    %v4833 = vld [vmem:[#allocation11 + $0xc18] sm:$0xff]
    %v4834 = vld [vmem:[#allocation11 + $0xc20] sm:$0xff]
    %v4835 = vld [vmem:[#allocation11 + $0xc28] sm:$0xff]
    %v4836 = vld [vmem:[#allocation11 + $0xc30] sm:$0xff]
    %v4837 = vld [vmem:[#allocation11 + $0xc38] sm:$0xff]
    %v4838 = vld [vmem:[#allocation11 + $0xc40] sm:$0xff]
    %v4839 = vld [vmem:[#allocation11 + $0xc48] sm:$0xff]
    %v4840 = vld [vmem:[#allocation11 + $0xc50] sm:$0xff]
    %v4841 = vld [vmem:[#allocation11 + $0xc58] sm:$0xff]
    %v4842 = vld [vmem:[#allocation11 + $0xc60] sm:$0xff]
    %v4843 = vld [vmem:[#allocation11 + $0xc68] sm:$0xff]
    %v4844 = vld [vmem:[#allocation11 + $0xc70] sm:$0xff]
    %v4845 = vld [vmem:[#allocation11 + $0xc78] sm:$0xff]
    %v4846 = vld [vmem:[#allocation11 + $0xc80] sm:$0xff]
    %v4847 = vld [vmem:[#allocation11 + $0xc88] sm:$0xff]
    %v4848 = vld [vmem:[#allocation11 + $0xc90] sm:$0xff]
    %v4849 = vld [vmem:[#allocation11 + $0xc98] sm:$0xff]
    %v4850 = vld [vmem:[#allocation11 + $0xca0] sm:$0xff]
    %v4851 = vld [vmem:[#allocation11 + $0xca8] sm:$0xff]
    %v4852 = vld [vmem:[#allocation11 + $0xcb0] sm:$0xff]
    %v4853 = vld [vmem:[#allocation11 + $0xcb8] sm:$0xff]
    %v4854 = vld [vmem:[#allocation11 + $0xcc0] sm:$0xff]
    %v4855 = vld [vmem:[#allocation11 + $0xcc8] sm:$0xff]
    %v4856 = vld [vmem:[#allocation11 + $0xcd0] sm:$0xff]
    %v4857 = vld [vmem:[#allocation11 + $0xcd8] sm:$0xff]
    %v4858 = vld [vmem:[#allocation11 + $0xce0] sm:$0xff]
    %v4859 = vld [vmem:[#allocation11 + $0xce8] sm:$0xff]
    %v4860 = vld [vmem:[#allocation11 + $0xcf0] sm:$0xff]
    %v4861 = vld [vmem:[#allocation11 + $0xcf8] sm:$0xff]
    %v4862 = vld [vmem:[#allocation11 + $0xd00] sm:$0xff]
    %v4863 = vld [vmem:[#allocation11 + $0xd08] sm:$0xff]
    %v4864 = vld [vmem:[#allocation11 + $0xd10] sm:$0xff]
    %v4865 = vld [vmem:[#allocation11 + $0xd18] sm:$0xff]
    %v4866 = vld [vmem:[#allocation11 + $0xd20] sm:$0xff]
    %v4867 = vld [vmem:[#allocation11 + $0xd28] sm:$0xff]
    %v4868 = vld [vmem:[#allocation11 + $0xd30] sm:$0xff]
    %v4869 = vld [vmem:[#allocation11 + $0xd38] sm:$0xff]
    %v4870 = vld [vmem:[#allocation11 + $0xd40] sm:$0xff]
    %v4871 = vld [vmem:[#allocation11 + $0xd48] sm:$0xff]
    %v4872 = vld [vmem:[#allocation11 + $0xd50] sm:$0xff]
    %v4873 = vld [vmem:[#allocation11 + $0xd58] sm:$0xff]
    %v4874 = vld [vmem:[#allocation11 + $0xd60] sm:$0xff]
    %v4875 = vld [vmem:[#allocation11 + $0xd68] sm:$0xff]
    %v4876 = vld [vmem:[#allocation11 + $0xd70] sm:$0xff]
    %v4877 = vld [vmem:[#allocation11 + $0xd78] sm:$0xff]
    %v4878 = vld [vmem:[#allocation11 + $0xd80] sm:$0xff]
    %v4879 = vld [vmem:[#allocation11 + $0xd88] sm:$0xff]
    %v4880 = vld [vmem:[#allocation11 + $0xd90] sm:$0xff]
    %v4881 = vld [vmem:[#allocation11 + $0xd98] sm:$0xff]
    %v4882 = vld [vmem:[#allocation11 + $0xda0] sm:$0xff]
    %v4883 = vld [vmem:[#allocation11 + $0xda8] sm:$0xff]
    %v4884 = vld [vmem:[#allocation11 + $0xdb0] sm:$0xff]
    %v4885 = vld [vmem:[#allocation11 + $0xdb8] sm:$0xff]
    %v4886 = vld [vmem:[#allocation11 + $0xdc0] sm:$0xff]
    %v4887 = vld [vmem:[#allocation11 + $0xdc8] sm:$0xff]
    %v4888 = vld [vmem:[#allocation11 + $0xdd0] sm:$0xff]
    %v4889 = vld [vmem:[#allocation11 + $0xdd8] sm:$0xff]
    %v4890 = vld [vmem:[#allocation11 + $0xde0] sm:$0xff]
    %v4891 = vld [vmem:[#allocation11 + $0xde8] sm:$0xff]
    %v4892 = vld [vmem:[#allocation11 + $0xdf0] sm:$0xff]
    %v4893 = vld [vmem:[#allocation11 + $0xdf8] sm:$0xff]
    %v4894 = vld [vmem:[#allocation11 + $0xe00] sm:$0xff]
    %v4895 = vld [vmem:[#allocation11 + $0xe08] sm:$0xff]
    %v4896 = vld [vmem:[#allocation11 + $0xe10] sm:$0xff]
    %v4897 = vld [vmem:[#allocation11 + $0xe18] sm:$0xff]
    %v4898 = vld [vmem:[#allocation11 + $0xe20] sm:$0xff]
    %v4899 = vld [vmem:[#allocation11 + $0xe28] sm:$0xff]
    %v4900 = vld [vmem:[#allocation11 + $0xe30] sm:$0xff]
    %v4901 = vld [vmem:[#allocation11 + $0xe38] sm:$0xff]
    %v4902 = vld [vmem:[#allocation11 + $0xe40] sm:$0xff]
    %v4903 = vld [vmem:[#allocation11 + $0xe48] sm:$0xff]
    %v4904 = vld [vmem:[#allocation11 + $0xe50] sm:$0xff]
    %v4905 = vld [vmem:[#allocation11 + $0xe58] sm:$0xff]
    %v4906 = vld [vmem:[#allocation11 + $0xe60] sm:$0xff]
    %v4907 = vld [vmem:[#allocation11 + $0xe68] sm:$0xff]
    %v4908 = vld [vmem:[#allocation11 + $0xe70] sm:$0xff]
    %v4909 = vld [vmem:[#allocation11 + $0xe78] sm:$0xff]
    %v4910 = vld [vmem:[#allocation11 + $0xe80] sm:$0xff]
    %v4911 = vld [vmem:[#allocation11 + $0xe88] sm:$0xff]
    %v4912 = vld [vmem:[#allocation11 + $0xe90] sm:$0xff]
    %v4913 = vld [vmem:[#allocation11 + $0xe98] sm:$0xff]
    %v4914 = vld [vmem:[#allocation11 + $0xea0] sm:$0xff]
    %v4915 = vld [vmem:[#allocation11 + $0xea8] sm:$0xff]
    %v4916 = vld [vmem:[#allocation11 + $0xeb0] sm:$0xff]
    %v4917 = vld [vmem:[#allocation11 + $0xeb8] sm:$0xff]
    %v4918 = vld [vmem:[#allocation11 + $0xec0] sm:$0xff]
    %v4919 = vld [vmem:[#allocation11 + $0xec8] sm:$0xff]
    %v4920 = vld [vmem:[#allocation11 + $0xed0] sm:$0xff]
    %v4921 = vld [vmem:[#allocation11 + $0xed8] sm:$0xff]
    %v4922 = vld [vmem:[#allocation11 + $0xee0] sm:$0xff]
    %v4923 = vld [vmem:[#allocation11 + $0xee8] sm:$0xff]
    %v4924 = vld [vmem:[#allocation11 + $0xef0] sm:$0xff]
    %v4925 = vld [vmem:[#allocation11 + $0xef8] sm:$0xff]
    %v4926 = vld [vmem:[#allocation11 + $0xf00] sm:$0xff]
    %v4927 = vld [vmem:[#allocation11 + $0xf08] sm:$0xff]
    %v4928 = vld [vmem:[#allocation11 + $0xf10] sm:$0xff]
    %v4929 = vld [vmem:[#allocation11 + $0xf18] sm:$0xff]
    %v4930 = vld [vmem:[#allocation11 + $0xf20] sm:$0xff]
    %v4931 = vld [vmem:[#allocation11 + $0xf28] sm:$0xff]
    %v4932 = vld [vmem:[#allocation11 + $0xf30] sm:$0xff]
    %v4933 = vld [vmem:[#allocation11 + $0xf38] sm:$0xff]
    %v4934 = vld [vmem:[#allocation11 + $0xf40] sm:$0xff]
    %v4935 = vld [vmem:[#allocation11 + $0xf48] sm:$0xff]
    %v4936 = vld [vmem:[#allocation11 + $0xf50] sm:$0xff]
    %v4937 = vld [vmem:[#allocation11 + $0xf58] sm:$0xff]
    %v4938 = vld [vmem:[#allocation11 + $0xf60] sm:$0xff]
    %v4939 = vld [vmem:[#allocation11 + $0xf68] sm:$0xff]
    %v4940 = vld [vmem:[#allocation11 + $0xf70] sm:$0xff]
    %v4941 = vld [vmem:[#allocation11 + $0xf78] sm:$0xff]
    %v4942 = vld [vmem:[#allocation11 + $0xf80] sm:$0xff]
    %v4943 = vld [vmem:[#allocation11 + $0xf88] sm:$0xff]
    %v4944 = vld [vmem:[#allocation11 + $0xf90] sm:$0xff]
    %v4945 = vld [vmem:[#allocation11 + $0xf98] sm:$0xff]
    %v4946 = vld [vmem:[#allocation11 + $0xfa0] sm:$0xff]
    %v4947 = vld [vmem:[#allocation11 + $0xfa8] sm:$0xff]
    %v4948 = vld [vmem:[#allocation11 + $0xfb0] sm:$0xff]
    %v4949 = vld [vmem:[#allocation11 + $0xfb8] sm:$0xff]
    %v4950 = vld [vmem:[#allocation11 + $0xfc0] sm:$0xff]
    %v4951 = vld [vmem:[#allocation11 + $0xfc8] sm:$0xff]
    %v4952 = vld [vmem:[#allocation11 + $0xfd0] sm:$0xff]
    %v4953 = vld [vmem:[#allocation11 + $0xfd8] sm:$0xff]
    %v4954 = vld [vmem:[#allocation11 + $0xfe0] sm:$0xff]
    %v4955 = vld [vmem:[#allocation11 + $0xfe8] sm:$0xff]
    %v4956 = vld [vmem:[#allocation11 + $0xff0] sm:$0xff]
    %v4957 = vld [vmem:[#allocation11 + $0xff8] sm:$0xff]
    %v4958 = vld [vmem:[#allocation13] sm:$0xff]
    %v4960 = vlaneseq
    %v4961 = vshrl.u32 %v4960, 7
    %v4962 = vsub.s32 0, %v4961
    %v4963 = vrot.slane %v4958, %v4962
    %v4964 = vlaneseq
    %v4965 = vshrl.u32 %v4964, 7
    %v4966 = vsub.s32 1, %v4965
    %v4967 = vrot.slane %v4958, %v4966
    %v4968 = vlaneseq
    %v4969 = vshrl.u32 %v4968, 7
    %v4970 = vsub.s32 2, %v4969
    %v4971 = vrot.slane %v4958, %v4970
    %v4972 = vlaneseq
    %v4973 = vshrl.u32 %v4972, 7
    %v4974 = vsub.s32 3, %v4973
    %v4975 = vrot.slane %v4958, %v4974
    %v4976 = vlaneseq
    %v4977 = vshrl.u32 %v4976, 7
    %v4978 = vsub.s32 4, %v4977
    %v4979 = vrot.slane %v4958, %v4978
    %v4980 = vlaneseq
    %v4981 = vshrl.u32 %v4980, 7
    %v4982 = vsub.s32 5, %v4981
    %v4983 = vrot.slane %v4958, %v4982
    %v4984 = vlaneseq
    %v4985 = vshrl.u32 %v4984, 7
    %v4986 = vsub.s32 6, %v4985
    %v4987 = vrot.slane %v4958, %v4986
    %v4988 = vlaneseq
    %v4989 = vshrl.u32 %v4988, 7
    %v4990 = vsub.s32 7, %v4989
    %v4991 = vrot.slane %v4958, %v4990
    %v5512 = vunpack.c.l.b16 %v4446
    %v5513 = vunpack.c.h.b16 %v4446
    %v5514 = vunpack.c.l.b16 %v4447
    %v5515 = vunpack.c.h.b16 %v4447
    %v5516 = vunpack.c.l.b16 %v4448
    %v5517 = vunpack.c.h.b16 %v4448
    %v5518 = vunpack.c.l.b16 %v4449
    %v5519 = vunpack.c.h.b16 %v4449
    %v5520 = vunpack.c.l.b16 %v4450
    %v5521 = vunpack.c.h.b16 %v4450
    %v5522 = vunpack.c.l.b16 %v4451
    %v5523 = vunpack.c.h.b16 %v4451
    %v5524 = vunpack.c.l.b16 %v4452
    %v5525 = vunpack.c.h.b16 %v4452
    %v5526 = vunpack.c.l.b16 %v4453
    %v5527 = vunpack.c.h.b16 %v4453
    %v5528 = vunpack.c.l.b16 %v4454
    %v5529 = vunpack.c.h.b16 %v4454
    %v5530 = vunpack.c.l.b16 %v4455
    %v5531 = vunpack.c.h.b16 %v4455
    %v5532 = vunpack.c.l.b16 %v4456
    %v5533 = vunpack.c.h.b16 %v4456
    %v5534 = vunpack.c.l.b16 %v4457
    %v5535 = vunpack.c.h.b16 %v4457
    %v5536 = vunpack.c.l.b16 %v4458
    %v5537 = vunpack.c.h.b16 %v4458
    %v5538 = vunpack.c.l.b16 %v4459
    %v5539 = vunpack.c.h.b16 %v4459
    %v5540 = vunpack.c.l.b16 %v4460
    %v5541 = vunpack.c.h.b16 %v4460
    %v5542 = vunpack.c.l.b16 %v4461
    %v5543 = vunpack.c.h.b16 %v4461
    %v5544 = vunpack.c.l.b16 %v4462
    %v5545 = vunpack.c.h.b16 %v4462
    %v5546 = vunpack.c.l.b16 %v4463
    %v5547 = vunpack.c.h.b16 %v4463
    %v5548 = vunpack.c.l.b16 %v4464
    %v5549 = vunpack.c.h.b16 %v4464
    %v5550 = vunpack.c.l.b16 %v4465
    %v5551 = vunpack.c.h.b16 %v4465
    %v5552 = vunpack.c.l.b16 %v4466
    %v5553 = vunpack.c.h.b16 %v4466
    %v5554 = vunpack.c.l.b16 %v4467
    %v5555 = vunpack.c.h.b16 %v4467
    %v5556 = vunpack.c.l.b16 %v4468
    %v5557 = vunpack.c.h.b16 %v4468
    %v5558 = vunpack.c.l.b16 %v4469
    %v5559 = vunpack.c.h.b16 %v4469
    %v5560 = vunpack.c.l.b16 %v4470
    %v5561 = vunpack.c.h.b16 %v4470
    %v5562 = vunpack.c.l.b16 %v4471
    %v5563 = vunpack.c.h.b16 %v4471
    %v5564 = vunpack.c.l.b16 %v4472
    %v5565 = vunpack.c.h.b16 %v4472
    %v5566 = vunpack.c.l.b16 %v4473
    %v5567 = vunpack.c.h.b16 %v4473
    %v5568 = vunpack.c.l.b16 %v4474
    %v5569 = vunpack.c.h.b16 %v4474
    %v5570 = vunpack.c.l.b16 %v4475
    %v5571 = vunpack.c.h.b16 %v4475
    %v5572 = vunpack.c.l.b16 %v4476
    %v5573 = vunpack.c.h.b16 %v4476
    %v5574 = vunpack.c.l.b16 %v4477
    %v5575 = vunpack.c.h.b16 %v4477
    %v5576 = vunpack.c.l.b16 %v4478
    %v5577 = vunpack.c.h.b16 %v4478
    %v5578 = vunpack.c.l.b16 %v4479
    %v5579 = vunpack.c.h.b16 %v4479
    %v5580 = vunpack.c.l.b16 %v4480
    %v5581 = vunpack.c.h.b16 %v4480
    %v5582 = vunpack.c.l.b16 %v4481
    %v5583 = vunpack.c.h.b16 %v4481
    %v5584 = vunpack.c.l.b16 %v4482
    %v5585 = vunpack.c.h.b16 %v4482
    %v5586 = vunpack.c.l.b16 %v4483
    %v5587 = vunpack.c.h.b16 %v4483
    %v5588 = vunpack.c.l.b16 %v4484
    %v5589 = vunpack.c.h.b16 %v4484
    %v5590 = vunpack.c.l.b16 %v4485
    %v5591 = vunpack.c.h.b16 %v4485
    %v5592 = vunpack.c.l.b16 %v4486
    %v5593 = vunpack.c.h.b16 %v4486
    %v5594 = vunpack.c.l.b16 %v4487
    %v5595 = vunpack.c.h.b16 %v4487
    %v5596 = vunpack.c.l.b16 %v4488
    %v5597 = vunpack.c.h.b16 %v4488
    %v5598 = vunpack.c.l.b16 %v4489
    %v5599 = vunpack.c.h.b16 %v4489
    %v5600 = vunpack.c.l.b16 %v4490
    %v5601 = vunpack.c.h.b16 %v4490
    %v5602 = vunpack.c.l.b16 %v4491
    %v5603 = vunpack.c.h.b16 %v4491
    %v5604 = vunpack.c.l.b16 %v4492
    %v5605 = vunpack.c.h.b16 %v4492
    %v5606 = vunpack.c.l.b16 %v4493
    %v5607 = vunpack.c.h.b16 %v4493
    %v5608 = vunpack.c.l.b16 %v4494
    %v5609 = vunpack.c.h.b16 %v4494
    %v5610 = vunpack.c.l.b16 %v4495
    %v5611 = vunpack.c.h.b16 %v4495
    %v5612 = vunpack.c.l.b16 %v4496
    %v5613 = vunpack.c.h.b16 %v4496
    %v5614 = vunpack.c.l.b16 %v4497
    %v5615 = vunpack.c.h.b16 %v4497
    %v5616 = vunpack.c.l.b16 %v4498
    %v5617 = vunpack.c.h.b16 %v4498
    %v5618 = vunpack.c.l.b16 %v4499
    %v5619 = vunpack.c.h.b16 %v4499
    %v5620 = vunpack.c.l.b16 %v4500
    %v5621 = vunpack.c.h.b16 %v4500
    %v5622 = vunpack.c.l.b16 %v4501
    %v5623 = vunpack.c.h.b16 %v4501
    %v5624 = vunpack.c.l.b16 %v4502
    %v5625 = vunpack.c.h.b16 %v4502
    %v5626 = vunpack.c.l.b16 %v4503
    %v5627 = vunpack.c.h.b16 %v4503
    %v5628 = vunpack.c.l.b16 %v4504
    %v5629 = vunpack.c.h.b16 %v4504
    %v5630 = vunpack.c.l.b16 %v4505
    %v5631 = vunpack.c.h.b16 %v4505
    %v5632 = vunpack.c.l.b16 %v4506
    %v5633 = vunpack.c.h.b16 %v4506
    %v5634 = vunpack.c.l.b16 %v4507
    %v5635 = vunpack.c.h.b16 %v4507
    %v5636 = vunpack.c.l.b16 %v4508
    %v5637 = vunpack.c.h.b16 %v4508
    %v5638 = vunpack.c.l.b16 %v4509
    %v5639 = vunpack.c.h.b16 %v4509
    %v5640 = vunpack.c.l.b16 %v4510
    %v5641 = vunpack.c.h.b16 %v4510
    %v5642 = vunpack.c.l.b16 %v4511
    %v5643 = vunpack.c.h.b16 %v4511
    %v5644 = vunpack.c.l.b16 %v4512
    %v5645 = vunpack.c.h.b16 %v4512
    %v5646 = vunpack.c.l.b16 %v4513
    %v5647 = vunpack.c.h.b16 %v4513
    %v5648 = vunpack.c.l.b16 %v4514
    %v5649 = vunpack.c.h.b16 %v4514
    %v5650 = vunpack.c.l.b16 %v4515
    %v5651 = vunpack.c.h.b16 %v4515
    %v5652 = vunpack.c.l.b16 %v4516
    %v5653 = vunpack.c.h.b16 %v4516
    %v5654 = vunpack.c.l.b16 %v4517
    %v5655 = vunpack.c.h.b16 %v4517
    %v5656 = vunpack.c.l.b16 %v4518
    %v5657 = vunpack.c.h.b16 %v4518
    %v5658 = vunpack.c.l.b16 %v4519
    %v5659 = vunpack.c.h.b16 %v4519
    %v5660 = vunpack.c.l.b16 %v4520
    %v5661 = vunpack.c.h.b16 %v4520
    %v5662 = vunpack.c.l.b16 %v4521
    %v5663 = vunpack.c.h.b16 %v4521
    %v5664 = vunpack.c.l.b16 %v4522
    %v5665 = vunpack.c.h.b16 %v4522
    %v5666 = vunpack.c.l.b16 %v4523
    %v5667 = vunpack.c.h.b16 %v4523
    %v5668 = vunpack.c.l.b16 %v4524
    %v5669 = vunpack.c.h.b16 %v4524
    %v5670 = vunpack.c.l.b16 %v4525
    %v5671 = vunpack.c.h.b16 %v4525
    %v5672 = vunpack.c.l.b16 %v4526
    %v5673 = vunpack.c.h.b16 %v4526
    %v5674 = vunpack.c.l.b16 %v4527
    %v5675 = vunpack.c.h.b16 %v4527
    %v5676 = vunpack.c.l.b16 %v4528
    %v5677 = vunpack.c.h.b16 %v4528
    %v5678 = vunpack.c.l.b16 %v4529
    %v5679 = vunpack.c.h.b16 %v4529
    %v5680 = vunpack.c.l.b16 %v4530
    %v5681 = vunpack.c.h.b16 %v4530
    %v5682 = vunpack.c.l.b16 %v4531
    %v5683 = vunpack.c.h.b16 %v4531
    %v5684 = vunpack.c.l.b16 %v4532
    %v5685 = vunpack.c.h.b16 %v4532
    %v5686 = vunpack.c.l.b16 %v4533
    %v5687 = vunpack.c.h.b16 %v4533
    %v5688 = vunpack.c.l.b16 %v4534
    %v5689 = vunpack.c.h.b16 %v4534
    %v5690 = vunpack.c.l.b16 %v4535
    %v5691 = vunpack.c.h.b16 %v4535
    %v5692 = vunpack.c.l.b16 %v4536
    %v5693 = vunpack.c.h.b16 %v4536
    %v5694 = vunpack.c.l.b16 %v4537
    %v5695 = vunpack.c.h.b16 %v4537
    %v5696 = vunpack.c.l.b16 %v4538
    %v5697 = vunpack.c.h.b16 %v4538
    %v5698 = vunpack.c.l.b16 %v4539
    %v5699 = vunpack.c.h.b16 %v4539
    %v5700 = vunpack.c.l.b16 %v4540
    %v5701 = vunpack.c.h.b16 %v4540
    %v5702 = vunpack.c.l.b16 %v4541
    %v5703 = vunpack.c.h.b16 %v4541
    %v5704 = vunpack.c.l.b16 %v4542
    %v5705 = vunpack.c.h.b16 %v4542
    %v5706 = vunpack.c.l.b16 %v4543
    %v5707 = vunpack.c.h.b16 %v4543
    %v5708 = vunpack.c.l.b16 %v4544
    %v5709 = vunpack.c.h.b16 %v4544
    %v5710 = vunpack.c.l.b16 %v4545
    %v5711 = vunpack.c.h.b16 %v4545
    %v5712 = vunpack.c.l.b16 %v4546
    %v5713 = vunpack.c.h.b16 %v4546
    %v5714 = vunpack.c.l.b16 %v4547
    %v5715 = vunpack.c.h.b16 %v4547
    %v5716 = vunpack.c.l.b16 %v4548
    %v5717 = vunpack.c.h.b16 %v4548
    %v5718 = vunpack.c.l.b16 %v4549
    %v5719 = vunpack.c.h.b16 %v4549
    %v5720 = vunpack.c.l.b16 %v4550
    %v5721 = vunpack.c.h.b16 %v4550
    %v5722 = vunpack.c.l.b16 %v4551
    %v5723 = vunpack.c.h.b16 %v4551
    %v5724 = vunpack.c.l.b16 %v4552
    %v5725 = vunpack.c.h.b16 %v4552
    %v5726 = vunpack.c.l.b16 %v4553
    %v5727 = vunpack.c.h.b16 %v4553
    %v5728 = vunpack.c.l.b16 %v4554
    %v5729 = vunpack.c.h.b16 %v4554
    %v5730 = vunpack.c.l.b16 %v4555
    %v5731 = vunpack.c.h.b16 %v4555
    %v5732 = vunpack.c.l.b16 %v4556
    %v5733 = vunpack.c.h.b16 %v4556
    %v5734 = vunpack.c.l.b16 %v4557
    %v5735 = vunpack.c.h.b16 %v4557
    %v5736 = vunpack.c.l.b16 %v4558
    %v5737 = vunpack.c.h.b16 %v4558
    %v5738 = vunpack.c.l.b16 %v4559
    %v5739 = vunpack.c.h.b16 %v4559
    %v5740 = vunpack.c.l.b16 %v4560
    %v5741 = vunpack.c.h.b16 %v4560
    %v5742 = vunpack.c.l.b16 %v4561
    %v5743 = vunpack.c.h.b16 %v4561
    %v5744 = vunpack.c.l.b16 %v4562
    %v5745 = vunpack.c.h.b16 %v4562
    %v5746 = vunpack.c.l.b16 %v4563
    %v5747 = vunpack.c.h.b16 %v4563
    %v5748 = vunpack.c.l.b16 %v4564
    %v5749 = vunpack.c.h.b16 %v4564
    %v5750 = vunpack.c.l.b16 %v4565
    %v5751 = vunpack.c.h.b16 %v4565
    %v5752 = vunpack.c.l.b16 %v4566
    %v5753 = vunpack.c.h.b16 %v4566
    %v5754 = vunpack.c.l.b16 %v4567
    %v5755 = vunpack.c.h.b16 %v4567
    %v5756 = vunpack.c.l.b16 %v4568
    %v5757 = vunpack.c.h.b16 %v4568
    %v5758 = vunpack.c.l.b16 %v4569
    %v5759 = vunpack.c.h.b16 %v4569
    %v5760 = vunpack.c.l.b16 %v4570
    %v5761 = vunpack.c.h.b16 %v4570
    %v5762 = vunpack.c.l.b16 %v4571
    %v5763 = vunpack.c.h.b16 %v4571
    %v5764 = vunpack.c.l.b16 %v4572
    %v5765 = vunpack.c.h.b16 %v4572
    %v5766 = vunpack.c.l.b16 %v4573
    %v5767 = vunpack.c.h.b16 %v4573
    %v5768 = vunpack.c.l.b16 %v4574
    %v5769 = vunpack.c.h.b16 %v4574
    %v5770 = vunpack.c.l.b16 %v4575
    %v5771 = vunpack.c.h.b16 %v4575
    %v5772 = vunpack.c.l.b16 %v4576
    %v5773 = vunpack.c.h.b16 %v4576
    %v5774 = vunpack.c.l.b16 %v4577
    %v5775 = vunpack.c.h.b16 %v4577
    %v5776 = vunpack.c.l.b16 %v4578
    %v5777 = vunpack.c.h.b16 %v4578
    %v5778 = vunpack.c.l.b16 %v4579
    %v5779 = vunpack.c.h.b16 %v4579
    %v5780 = vunpack.c.l.b16 %v4580
    %v5781 = vunpack.c.h.b16 %v4580
    %v5782 = vunpack.c.l.b16 %v4581
    %v5783 = vunpack.c.h.b16 %v4581
    %v5784 = vunpack.c.l.b16 %v4582
    %v5785 = vunpack.c.h.b16 %v4582
    %v5786 = vunpack.c.l.b16 %v4583
    %v5787 = vunpack.c.h.b16 %v4583
    %v5788 = vunpack.c.l.b16 %v4584
    %v5789 = vunpack.c.h.b16 %v4584
    %v5790 = vunpack.c.l.b16 %v4585
    %v5791 = vunpack.c.h.b16 %v4585
    %v5792 = vunpack.c.l.b16 %v4586
    %v5793 = vunpack.c.h.b16 %v4586
    %v5794 = vunpack.c.l.b16 %v4587
    %v5795 = vunpack.c.h.b16 %v4587
    %v5796 = vunpack.c.l.b16 %v4588
    %v5797 = vunpack.c.h.b16 %v4588
    %v5798 = vunpack.c.l.b16 %v4589
    %v5799 = vunpack.c.h.b16 %v4589
    %v5800 = vunpack.c.l.b16 %v4590
    %v5801 = vunpack.c.h.b16 %v4590
    %v5802 = vunpack.c.l.b16 %v4591
    %v5803 = vunpack.c.h.b16 %v4591
    %v5804 = vunpack.c.l.b16 %v4592
    %v5805 = vunpack.c.h.b16 %v4592
    %v5806 = vunpack.c.l.b16 %v4593
    %v5807 = vunpack.c.h.b16 %v4593
    %v5808 = vunpack.c.l.b16 %v4594
    %v5809 = vunpack.c.h.b16 %v4594
    %v5810 = vunpack.c.l.b16 %v4595
    %v5811 = vunpack.c.h.b16 %v4595
    %v5812 = vunpack.c.l.b16 %v4596
    %v5813 = vunpack.c.h.b16 %v4596
    %v5814 = vunpack.c.l.b16 %v4597
    %v5815 = vunpack.c.h.b16 %v4597
    %v5816 = vunpack.c.l.b16 %v4598
    %v5817 = vunpack.c.h.b16 %v4598
    %v5818 = vunpack.c.l.b16 %v4599
    %v5819 = vunpack.c.h.b16 %v4599
    %v5820 = vunpack.c.l.b16 %v4600
    %v5821 = vunpack.c.h.b16 %v4600
    %v5822 = vunpack.c.l.b16 %v4601
    %v5823 = vunpack.c.h.b16 %v4601
    %v5824 = vunpack.c.l.b16 %v4602
    %v5825 = vunpack.c.h.b16 %v4602
    %v5826 = vunpack.c.l.b16 %v4603
    %v5827 = vunpack.c.h.b16 %v4603
    %v5828 = vunpack.c.l.b16 %v4604
    %v5829 = vunpack.c.h.b16 %v4604
    %v5830 = vunpack.c.l.b16 %v4605
    %v5831 = vunpack.c.h.b16 %v4605
    %v5832 = vunpack.c.l.b16 %v4606
    %v5833 = vunpack.c.h.b16 %v4606
    %v5834 = vunpack.c.l.b16 %v4607
    %v5835 = vunpack.c.h.b16 %v4607
    %v5836 = vunpack.c.l.b16 %v4608
    %v5837 = vunpack.c.h.b16 %v4608
    %v5838 = vunpack.c.l.b16 %v4609
    %v5839 = vunpack.c.h.b16 %v4609
    %v5840 = vunpack.c.l.b16 %v4610
    %v5841 = vunpack.c.h.b16 %v4610
    %v5842 = vunpack.c.l.b16 %v4611
    %v5843 = vunpack.c.h.b16 %v4611
    %v5844 = vunpack.c.l.b16 %v4612
    %v5845 = vunpack.c.h.b16 %v4612
    %v5846 = vunpack.c.l.b16 %v4613
    %v5847 = vunpack.c.h.b16 %v4613
    %v5848 = vunpack.c.l.b16 %v4614
    %v5849 = vunpack.c.h.b16 %v4614
    %v5850 = vunpack.c.l.b16 %v4615
    %v5851 = vunpack.c.h.b16 %v4615
    %v5852 = vunpack.c.l.b16 %v4616
    %v5853 = vunpack.c.h.b16 %v4616
    %v5854 = vunpack.c.l.b16 %v4617
    %v5855 = vunpack.c.h.b16 %v4617
    %v5856 = vunpack.c.l.b16 %v4618
    %v5857 = vunpack.c.h.b16 %v4618
    %v5858 = vunpack.c.l.b16 %v4619
    %v5859 = vunpack.c.h.b16 %v4619
    %v5860 = vunpack.c.l.b16 %v4620
    %v5861 = vunpack.c.h.b16 %v4620
    %v5862 = vunpack.c.l.b16 %v4621
    %v5863 = vunpack.c.h.b16 %v4621
    %v5864 = vunpack.c.l.b16 %v4622
    %v5865 = vunpack.c.h.b16 %v4622
    %v5866 = vunpack.c.l.b16 %v4623
    %v5867 = vunpack.c.h.b16 %v4623
    %v5868 = vunpack.c.l.b16 %v4624
    %v5869 = vunpack.c.h.b16 %v4624
    %v5870 = vunpack.c.l.b16 %v4625
    %v5871 = vunpack.c.h.b16 %v4625
    %v5872 = vunpack.c.l.b16 %v4626
    %v5873 = vunpack.c.h.b16 %v4626
    %v5874 = vunpack.c.l.b16 %v4627
    %v5875 = vunpack.c.h.b16 %v4627
    %v5876 = vunpack.c.l.b16 %v4628
    %v5877 = vunpack.c.h.b16 %v4628
    %v5878 = vunpack.c.l.b16 %v4629
    %v5879 = vunpack.c.h.b16 %v4629
    %v5880 = vunpack.c.l.b16 %v4630
    %v5881 = vunpack.c.h.b16 %v4630
    %v5882 = vunpack.c.l.b16 %v4631
    %v5883 = vunpack.c.h.b16 %v4631
    %v5884 = vunpack.c.l.b16 %v4632
    %v5885 = vunpack.c.h.b16 %v4632
    %v5886 = vunpack.c.l.b16 %v4633
    %v5887 = vunpack.c.h.b16 %v4633
    %v5888 = vunpack.c.l.b16 %v4634
    %v5889 = vunpack.c.h.b16 %v4634
    %v5890 = vunpack.c.l.b16 %v4635
    %v5891 = vunpack.c.h.b16 %v4635
    %v5892 = vunpack.c.l.b16 %v4636
    %v5893 = vunpack.c.h.b16 %v4636
    %v5894 = vunpack.c.l.b16 %v4637
    %v5895 = vunpack.c.h.b16 %v4637
    %v5896 = vunpack.c.l.b16 %v4638
    %v5897 = vunpack.c.h.b16 %v4638
    %v5898 = vunpack.c.l.b16 %v4639
    %v5899 = vunpack.c.h.b16 %v4639
    %v5900 = vunpack.c.l.b16 %v4640
    %v5901 = vunpack.c.h.b16 %v4640
    %v5902 = vunpack.c.l.b16 %v4641
    %v5903 = vunpack.c.h.b16 %v4641
    %v5904 = vunpack.c.l.b16 %v4642
    %v5905 = vunpack.c.h.b16 %v4642
    %v5906 = vunpack.c.l.b16 %v4643
    %v5907 = vunpack.c.h.b16 %v4643
    %v5908 = vunpack.c.l.b16 %v4644
    %v5909 = vunpack.c.h.b16 %v4644
    %v5910 = vunpack.c.l.b16 %v4645
    %v5911 = vunpack.c.h.b16 %v4645
    %v5912 = vunpack.c.l.b16 %v4646
    %v5913 = vunpack.c.h.b16 %v4646
    %v5914 = vunpack.c.l.b16 %v4647
    %v5915 = vunpack.c.h.b16 %v4647
    %v5916 = vunpack.c.l.b16 %v4648
    %v5917 = vunpack.c.h.b16 %v4648
    %v5918 = vunpack.c.l.b16 %v4649
    %v5919 = vunpack.c.h.b16 %v4649
    %v5920 = vunpack.c.l.b16 %v4650
    %v5921 = vunpack.c.h.b16 %v4650
    %v5922 = vunpack.c.l.b16 %v4651
    %v5923 = vunpack.c.h.b16 %v4651
    %v5924 = vunpack.c.l.b16 %v4652
    %v5925 = vunpack.c.h.b16 %v4652
    %v5926 = vunpack.c.l.b16 %v4653
    %v5927 = vunpack.c.h.b16 %v4653
    %v5928 = vunpack.c.l.b16 %v4654
    %v5929 = vunpack.c.h.b16 %v4654
    %v5930 = vunpack.c.l.b16 %v4655
    %v5931 = vunpack.c.h.b16 %v4655
    %v5932 = vunpack.c.l.b16 %v4656
    %v5933 = vunpack.c.h.b16 %v4656
    %v5934 = vunpack.c.l.b16 %v4657
    %v5935 = vunpack.c.h.b16 %v4657
    %v5936 = vunpack.c.l.b16 %v4658
    %v5937 = vunpack.c.h.b16 %v4658
    %v5938 = vunpack.c.l.b16 %v4659
    %v5939 = vunpack.c.h.b16 %v4659
    %v5940 = vunpack.c.l.b16 %v4660
    %v5941 = vunpack.c.h.b16 %v4660
    %v5942 = vunpack.c.l.b16 %v4661
    %v5943 = vunpack.c.h.b16 %v4661
    %v5944 = vunpack.c.l.b16 %v4662
    %v5945 = vunpack.c.h.b16 %v4662
    %v5946 = vunpack.c.l.b16 %v4663
    %v5947 = vunpack.c.h.b16 %v4663
    %v5948 = vunpack.c.l.b16 %v4664
    %v5949 = vunpack.c.h.b16 %v4664
    %v5950 = vunpack.c.l.b16 %v4665
    %v5951 = vunpack.c.h.b16 %v4665
    %v5952 = vunpack.c.l.b16 %v4666
    %v5953 = vunpack.c.h.b16 %v4666
    %v5954 = vunpack.c.l.b16 %v4667
    %v5955 = vunpack.c.h.b16 %v4667
    %v5956 = vunpack.c.l.b16 %v4668
    %v5957 = vunpack.c.h.b16 %v4668
    %v5958 = vunpack.c.l.b16 %v4669
    %v5959 = vunpack.c.h.b16 %v4669
    %v5960 = vunpack.c.l.b16 %v4670
    %v5961 = vunpack.c.h.b16 %v4670
    %v5962 = vunpack.c.l.b16 %v4671
    %v5963 = vunpack.c.h.b16 %v4671
    %v5964 = vunpack.c.l.b16 %v4672
    %v5965 = vunpack.c.h.b16 %v4672
    %v5966 = vunpack.c.l.b16 %v4673
    %v5967 = vunpack.c.h.b16 %v4673
    %v5968 = vunpack.c.l.b16 %v4674
    %v5969 = vunpack.c.h.b16 %v4674
    %v5970 = vunpack.c.l.b16 %v4675
    %v5971 = vunpack.c.h.b16 %v4675
    %v5972 = vunpack.c.l.b16 %v4676
    %v5973 = vunpack.c.h.b16 %v4676
    %v5974 = vunpack.c.l.b16 %v4677
    %v5975 = vunpack.c.h.b16 %v4677
    %v5976 = vunpack.c.l.b16 %v4678
    %v5977 = vunpack.c.h.b16 %v4678
    %v5978 = vunpack.c.l.b16 %v4679
    %v5979 = vunpack.c.h.b16 %v4679
    %v5980 = vunpack.c.l.b16 %v4680
    %v5981 = vunpack.c.h.b16 %v4680
    %v5982 = vunpack.c.l.b16 %v4681
    %v5983 = vunpack.c.h.b16 %v4681
    %v5984 = vunpack.c.l.b16 %v4682
    %v5985 = vunpack.c.h.b16 %v4682
    %v5986 = vunpack.c.l.b16 %v4683
    %v5987 = vunpack.c.h.b16 %v4683
    %v5988 = vunpack.c.l.b16 %v4684
    %v5989 = vunpack.c.h.b16 %v4684
    %v5990 = vunpack.c.l.b16 %v4685
    %v5991 = vunpack.c.h.b16 %v4685
    %v5992 = vunpack.c.l.b16 %v4686
    %v5993 = vunpack.c.h.b16 %v4686
    %v5994 = vunpack.c.l.b16 %v4687
    %v5995 = vunpack.c.h.b16 %v4687
    %v5996 = vunpack.c.l.b16 %v4688
    %v5997 = vunpack.c.h.b16 %v4688
    %v5998 = vunpack.c.l.b16 %v4689
    %v5999 = vunpack.c.h.b16 %v4689
    %v6000 = vunpack.c.l.b16 %v4690
    %v6001 = vunpack.c.h.b16 %v4690
    %v6002 = vunpack.c.l.b16 %v4691
    %v6003 = vunpack.c.h.b16 %v4691
    %v6004 = vunpack.c.l.b16 %v4692
    %v6005 = vunpack.c.h.b16 %v4692
    %v6006 = vunpack.c.l.b16 %v4693
    %v6007 = vunpack.c.h.b16 %v4693
    %v6008 = vunpack.c.l.b16 %v4694
    %v6009 = vunpack.c.h.b16 %v4694
    %v6010 = vunpack.c.l.b16 %v4695
    %v6011 = vunpack.c.h.b16 %v4695
    %v6012 = vunpack.c.l.b16 %v4696
    %v6013 = vunpack.c.h.b16 %v4696
    %v6014 = vunpack.c.l.b16 %v4697
    %v6015 = vunpack.c.h.b16 %v4697
    %v6016 = vunpack.c.l.b16 %v4698
    %v6017 = vunpack.c.h.b16 %v4698
    %v6018 = vunpack.c.l.b16 %v4699
    %v6019 = vunpack.c.h.b16 %v4699
    %v6020 = vunpack.c.l.b16 %v4700
    %v6021 = vunpack.c.h.b16 %v4700
    %v6022 = vunpack.c.l.b16 %v4701
    %v6023 = vunpack.c.h.b16 %v4701
    %v6024 = vunpack.c.l.b16 %v4702
    %v6025 = vunpack.c.h.b16 %v4702
    %v6026 = vunpack.c.l.b16 %v4703
    %v6027 = vunpack.c.h.b16 %v4703
    %v6028 = vunpack.c.l.b16 %v4704
    %v6029 = vunpack.c.h.b16 %v4704
    %v6030 = vunpack.c.l.b16 %v4705
    %v6031 = vunpack.c.h.b16 %v4705
    %v6032 = vunpack.c.l.b16 %v4706
    %v6033 = vunpack.c.h.b16 %v4706
    %v6034 = vunpack.c.l.b16 %v4707
    %v6035 = vunpack.c.h.b16 %v4707
    %v6036 = vunpack.c.l.b16 %v4708
    %v6037 = vunpack.c.h.b16 %v4708
    %v6038 = vunpack.c.l.b16 %v4709
    %v6039 = vunpack.c.h.b16 %v4709
    %v6040 = vunpack.c.l.b16 %v4710
    %v6041 = vunpack.c.h.b16 %v4710
    %v6042 = vunpack.c.l.b16 %v4711
    %v6043 = vunpack.c.h.b16 %v4711
    %v6044 = vunpack.c.l.b16 %v4712
    %v6045 = vunpack.c.h.b16 %v4712
    %v6046 = vunpack.c.l.b16 %v4713
    %v6047 = vunpack.c.h.b16 %v4713
    %v6048 = vunpack.c.l.b16 %v4714
    %v6049 = vunpack.c.h.b16 %v4714
    %v6050 = vunpack.c.l.b16 %v4715
    %v6051 = vunpack.c.h.b16 %v4715
    %v6052 = vunpack.c.l.b16 %v4716
    %v6053 = vunpack.c.h.b16 %v4716
    %v6054 = vunpack.c.l.b16 %v4717
    %v6055 = vunpack.c.h.b16 %v4717
    %v6056 = vunpack.c.l.b16 %v4718
    %v6057 = vunpack.c.h.b16 %v4718
    %v6058 = vunpack.c.l.b16 %v4719
    %v6059 = vunpack.c.h.b16 %v4719
    %v6060 = vunpack.c.l.b16 %v4720
    %v6061 = vunpack.c.h.b16 %v4720
    %v6062 = vunpack.c.l.b16 %v4721
    %v6063 = vunpack.c.h.b16 %v4721
    %v6064 = vunpack.c.l.b16 %v4722
    %v6065 = vunpack.c.h.b16 %v4722
    %v6066 = vunpack.c.l.b16 %v4723
    %v6067 = vunpack.c.h.b16 %v4723
    %v6068 = vunpack.c.l.b16 %v4724
    %v6069 = vunpack.c.h.b16 %v4724
    %v6070 = vunpack.c.l.b16 %v4725
    %v6071 = vunpack.c.h.b16 %v4725
    %v6072 = vunpack.c.l.b16 %v4726
    %v6073 = vunpack.c.h.b16 %v4726
    %v6074 = vunpack.c.l.b16 %v4727
    %v6075 = vunpack.c.h.b16 %v4727
    %v6076 = vunpack.c.l.b16 %v4728
    %v6077 = vunpack.c.h.b16 %v4728
    %v6078 = vunpack.c.l.b16 %v4729
    %v6079 = vunpack.c.h.b16 %v4729
    %v6080 = vunpack.c.l.b16 %v4730
    %v6081 = vunpack.c.h.b16 %v4730
    %v6082 = vunpack.c.l.b16 %v4731
    %v6083 = vunpack.c.h.b16 %v4731
    %v6084 = vunpack.c.l.b16 %v4732
    %v6085 = vunpack.c.h.b16 %v4732
    %v6086 = vunpack.c.l.b16 %v4733
    %v6087 = vunpack.c.h.b16 %v4733
    %v6088 = vunpack.c.l.b16 %v4734
    %v6089 = vunpack.c.h.b16 %v4734
    %v6090 = vunpack.c.l.b16 %v4735
    %v6091 = vunpack.c.h.b16 %v4735
    %v6092 = vunpack.c.l.b16 %v4736
    %v6093 = vunpack.c.h.b16 %v4736
    %v6094 = vunpack.c.l.b16 %v4737
    %v6095 = vunpack.c.h.b16 %v4737
    %v6096 = vunpack.c.l.b16 %v4738
    %v6097 = vunpack.c.h.b16 %v4738
    %v6098 = vunpack.c.l.b16 %v4739
    %v6099 = vunpack.c.h.b16 %v4739
    %v6100 = vunpack.c.l.b16 %v4740
    %v6101 = vunpack.c.h.b16 %v4740
    %v6102 = vunpack.c.l.b16 %v4741
    %v6103 = vunpack.c.h.b16 %v4741
    %v6104 = vunpack.c.l.b16 %v4742
    %v6105 = vunpack.c.h.b16 %v4742
    %v6106 = vunpack.c.l.b16 %v4743
    %v6107 = vunpack.c.h.b16 %v4743
    %v6108 = vunpack.c.l.b16 %v4744
    %v6109 = vunpack.c.h.b16 %v4744
    %v6110 = vunpack.c.l.b16 %v4745
    %v6111 = vunpack.c.h.b16 %v4745
    %v6112 = vunpack.c.l.b16 %v4746
    %v6113 = vunpack.c.h.b16 %v4746
    %v6114 = vunpack.c.l.b16 %v4747
    %v6115 = vunpack.c.h.b16 %v4747
    %v6116 = vunpack.c.l.b16 %v4748
    %v6117 = vunpack.c.h.b16 %v4748
    %v6118 = vunpack.c.l.b16 %v4749
    %v6119 = vunpack.c.h.b16 %v4749
    %v6120 = vunpack.c.l.b16 %v4750
    %v6121 = vunpack.c.h.b16 %v4750
    %v6122 = vunpack.c.l.b16 %v4751
    %v6123 = vunpack.c.h.b16 %v4751
    %v6124 = vunpack.c.l.b16 %v4752
    %v6125 = vunpack.c.h.b16 %v4752
    %v6126 = vunpack.c.l.b16 %v4753
    %v6127 = vunpack.c.h.b16 %v4753
    %v6128 = vunpack.c.l.b16 %v4754
    %v6129 = vunpack.c.h.b16 %v4754
    %v6130 = vunpack.c.l.b16 %v4755
    %v6131 = vunpack.c.h.b16 %v4755
    %v6132 = vunpack.c.l.b16 %v4756
    %v6133 = vunpack.c.h.b16 %v4756
    %v6134 = vunpack.c.l.b16 %v4757
    %v6135 = vunpack.c.h.b16 %v4757
    %v6136 = vunpack.c.l.b16 %v4758
    %v6137 = vunpack.c.h.b16 %v4758
    %v6138 = vunpack.c.l.b16 %v4759
    %v6139 = vunpack.c.h.b16 %v4759
    %v6140 = vunpack.c.l.b16 %v4760
    %v6141 = vunpack.c.h.b16 %v4760
    %v6142 = vunpack.c.l.b16 %v4761
    %v6143 = vunpack.c.h.b16 %v4761
    %v6144 = vunpack.c.l.b16 %v4762
    %v6145 = vunpack.c.h.b16 %v4762
    %v6146 = vunpack.c.l.b16 %v4763
    %v6147 = vunpack.c.h.b16 %v4763
    %v6148 = vunpack.c.l.b16 %v4764
    %v6149 = vunpack.c.h.b16 %v4764
    %v6150 = vunpack.c.l.b16 %v4765
    %v6151 = vunpack.c.h.b16 %v4765
    %v6152 = vunpack.c.l.b16 %v4766
    %v6153 = vunpack.c.h.b16 %v4766
    %v6154 = vunpack.c.l.b16 %v4767
    %v6155 = vunpack.c.h.b16 %v4767
    %v6156 = vunpack.c.l.b16 %v4768
    %v6157 = vunpack.c.h.b16 %v4768
    %v6158 = vunpack.c.l.b16 %v4769
    %v6159 = vunpack.c.h.b16 %v4769
    %v6160 = vunpack.c.l.b16 %v4770
    %v6161 = vunpack.c.h.b16 %v4770
    %v6162 = vunpack.c.l.b16 %v4771
    %v6163 = vunpack.c.h.b16 %v4771
    %v6164 = vunpack.c.l.b16 %v4772
    %v6165 = vunpack.c.h.b16 %v4772
    %v6166 = vunpack.c.l.b16 %v4773
    %v6167 = vunpack.c.h.b16 %v4773
    %v6168 = vunpack.c.l.b16 %v4774
    %v6169 = vunpack.c.h.b16 %v4774
    %v6170 = vunpack.c.l.b16 %v4775
    %v6171 = vunpack.c.h.b16 %v4775
    %v6172 = vunpack.c.l.b16 %v4776
    %v6173 = vunpack.c.h.b16 %v4776
    %v6174 = vunpack.c.l.b16 %v4777
    %v6175 = vunpack.c.h.b16 %v4777
    %v6176 = vunpack.c.l.b16 %v4778
    %v6177 = vunpack.c.h.b16 %v4778
    %v6178 = vunpack.c.l.b16 %v4779
    %v6179 = vunpack.c.h.b16 %v4779
    %v6180 = vunpack.c.l.b16 %v4780
    %v6181 = vunpack.c.h.b16 %v4780
    %v6182 = vunpack.c.l.b16 %v4781
    %v6183 = vunpack.c.h.b16 %v4781
    %v6184 = vunpack.c.l.b16 %v4782
    %v6185 = vunpack.c.h.b16 %v4782
    %v6186 = vunpack.c.l.b16 %v4783
    %v6187 = vunpack.c.h.b16 %v4783
    %v6188 = vunpack.c.l.b16 %v4784
    %v6189 = vunpack.c.h.b16 %v4784
    %v6190 = vunpack.c.l.b16 %v4785
    %v6191 = vunpack.c.h.b16 %v4785
    %v6192 = vunpack.c.l.b16 %v4786
    %v6193 = vunpack.c.h.b16 %v4786
    %v6194 = vunpack.c.l.b16 %v4787
    %v6195 = vunpack.c.h.b16 %v4787
    %v6196 = vunpack.c.l.b16 %v4788
    %v6197 = vunpack.c.h.b16 %v4788
    %v6198 = vunpack.c.l.b16 %v4789
    %v6199 = vunpack.c.h.b16 %v4789
    %v6200 = vunpack.c.l.b16 %v4790
    %v6201 = vunpack.c.h.b16 %v4790
    %v6202 = vunpack.c.l.b16 %v4791
    %v6203 = vunpack.c.h.b16 %v4791
    %v6204 = vunpack.c.l.b16 %v4792
    %v6205 = vunpack.c.h.b16 %v4792
    %v6206 = vunpack.c.l.b16 %v4793
    %v6207 = vunpack.c.h.b16 %v4793
    %v6208 = vunpack.c.l.b16 %v4794
    %v6209 = vunpack.c.h.b16 %v4794
    %v6210 = vunpack.c.l.b16 %v4795
    %v6211 = vunpack.c.h.b16 %v4795
    %v6212 = vunpack.c.l.b16 %v4796
    %v6213 = vunpack.c.h.b16 %v4796
    %v6214 = vunpack.c.l.b16 %v4797
    %v6215 = vunpack.c.h.b16 %v4797
    %v6216 = vunpack.c.l.b16 %v4798
    %v6217 = vunpack.c.h.b16 %v4798
    %v6218 = vunpack.c.l.b16 %v4799
    %v6219 = vunpack.c.h.b16 %v4799
    %v6220 = vunpack.c.l.b16 %v4800
    %v6221 = vunpack.c.h.b16 %v4800
    %v6222 = vunpack.c.l.b16 %v4801
    %v6223 = vunpack.c.h.b16 %v4801
    %v6224 = vunpack.c.l.b16 %v4802
    %v6225 = vunpack.c.h.b16 %v4802
    %v6226 = vunpack.c.l.b16 %v4803
    %v6227 = vunpack.c.h.b16 %v4803
    %v6228 = vunpack.c.l.b16 %v4804
    %v6229 = vunpack.c.h.b16 %v4804
    %v6230 = vunpack.c.l.b16 %v4805
    %v6231 = vunpack.c.h.b16 %v4805
    %v6232 = vunpack.c.l.b16 %v4806
    %v6233 = vunpack.c.h.b16 %v4806
    %v6234 = vunpack.c.l.b16 %v4807
    %v6235 = vunpack.c.h.b16 %v4807
    %v6236 = vunpack.c.l.b16 %v4808
    %v6237 = vunpack.c.h.b16 %v4808
    %v6238 = vunpack.c.l.b16 %v4809
    %v6239 = vunpack.c.h.b16 %v4809
    %v6240 = vunpack.c.l.b16 %v4810
    %v6241 = vunpack.c.h.b16 %v4810
    %v6242 = vunpack.c.l.b16 %v4811
    %v6243 = vunpack.c.h.b16 %v4811
    %v6244 = vunpack.c.l.b16 %v4812
    %v6245 = vunpack.c.h.b16 %v4812
    %v6246 = vunpack.c.l.b16 %v4813
    %v6247 = vunpack.c.h.b16 %v4813
    %v6248 = vunpack.c.l.b16 %v4814
    %v6249 = vunpack.c.h.b16 %v4814
    %v6250 = vunpack.c.l.b16 %v4815
    %v6251 = vunpack.c.h.b16 %v4815
    %v6252 = vunpack.c.l.b16 %v4816
    %v6253 = vunpack.c.h.b16 %v4816
    %v6254 = vunpack.c.l.b16 %v4817
    %v6255 = vunpack.c.h.b16 %v4817
    %v6256 = vunpack.c.l.b16 %v4818
    %v6257 = vunpack.c.h.b16 %v4818
    %v6258 = vunpack.c.l.b16 %v4819
    %v6259 = vunpack.c.h.b16 %v4819
    %v6260 = vunpack.c.l.b16 %v4820
    %v6261 = vunpack.c.h.b16 %v4820
    %v6262 = vunpack.c.l.b16 %v4821
    %v6263 = vunpack.c.h.b16 %v4821
    %v6264 = vunpack.c.l.b16 %v4822
    %v6265 = vunpack.c.h.b16 %v4822
    %v6266 = vunpack.c.l.b16 %v4823
    %v6267 = vunpack.c.h.b16 %v4823
    %v6268 = vunpack.c.l.b16 %v4824
    %v6269 = vunpack.c.h.b16 %v4824
    %v6270 = vunpack.c.l.b16 %v4825
    %v6271 = vunpack.c.h.b16 %v4825
    %v6272 = vunpack.c.l.b16 %v4826
    %v6273 = vunpack.c.h.b16 %v4826
    %v6274 = vunpack.c.l.b16 %v4827
    %v6275 = vunpack.c.h.b16 %v4827
    %v6276 = vunpack.c.l.b16 %v4828
    %v6277 = vunpack.c.h.b16 %v4828
    %v6278 = vunpack.c.l.b16 %v4829
    %v6279 = vunpack.c.h.b16 %v4829
    %v6280 = vunpack.c.l.b16 %v4830
    %v6281 = vunpack.c.h.b16 %v4830
    %v6282 = vunpack.c.l.b16 %v4831
    %v6283 = vunpack.c.h.b16 %v4831
    %v6284 = vunpack.c.l.b16 %v4832
    %v6285 = vunpack.c.h.b16 %v4832
    %v6286 = vunpack.c.l.b16 %v4833
    %v6287 = vunpack.c.h.b16 %v4833
    %v6288 = vunpack.c.l.b16 %v4834
    %v6289 = vunpack.c.h.b16 %v4834
    %v6290 = vunpack.c.l.b16 %v4835
    %v6291 = vunpack.c.h.b16 %v4835
    %v6292 = vunpack.c.l.b16 %v4836
    %v6293 = vunpack.c.h.b16 %v4836
    %v6294 = vunpack.c.l.b16 %v4837
    %v6295 = vunpack.c.h.b16 %v4837
    %v6296 = vunpack.c.l.b16 %v4838
    %v6297 = vunpack.c.h.b16 %v4838
    %v6298 = vunpack.c.l.b16 %v4839
    %v6299 = vunpack.c.h.b16 %v4839
    %v6300 = vunpack.c.l.b16 %v4840
    %v6301 = vunpack.c.h.b16 %v4840
    %v6302 = vunpack.c.l.b16 %v4841
    %v6303 = vunpack.c.h.b16 %v4841
    %v6304 = vunpack.c.l.b16 %v4842
    %v6305 = vunpack.c.h.b16 %v4842
    %v6306 = vunpack.c.l.b16 %v4843
    %v6307 = vunpack.c.h.b16 %v4843
    %v6308 = vunpack.c.l.b16 %v4844
    %v6309 = vunpack.c.h.b16 %v4844
    %v6310 = vunpack.c.l.b16 %v4845
    %v6311 = vunpack.c.h.b16 %v4845
    %v6312 = vunpack.c.l.b16 %v4846
    %v6313 = vunpack.c.h.b16 %v4846
    %v6314 = vunpack.c.l.b16 %v4847
    %v6315 = vunpack.c.h.b16 %v4847
    %v6316 = vunpack.c.l.b16 %v4848
    %v6317 = vunpack.c.h.b16 %v4848
    %v6318 = vunpack.c.l.b16 %v4849
    %v6319 = vunpack.c.h.b16 %v4849
    %v6320 = vunpack.c.l.b16 %v4850
    %v6321 = vunpack.c.h.b16 %v4850
    %v6322 = vunpack.c.l.b16 %v4851
    %v6323 = vunpack.c.h.b16 %v4851
    %v6324 = vunpack.c.l.b16 %v4852
    %v6325 = vunpack.c.h.b16 %v4852
    %v6326 = vunpack.c.l.b16 %v4853
    %v6327 = vunpack.c.h.b16 %v4853
    %v6328 = vunpack.c.l.b16 %v4854
    %v6329 = vunpack.c.h.b16 %v4854
    %v6330 = vunpack.c.l.b16 %v4855
    %v6331 = vunpack.c.h.b16 %v4855
    %v6332 = vunpack.c.l.b16 %v4856
    %v6333 = vunpack.c.h.b16 %v4856
    %v6334 = vunpack.c.l.b16 %v4857
    %v6335 = vunpack.c.h.b16 %v4857
    %v6336 = vunpack.c.l.b16 %v4858
    %v6337 = vunpack.c.h.b16 %v4858
    %v6338 = vunpack.c.l.b16 %v4859
    %v6339 = vunpack.c.h.b16 %v4859
    %v6340 = vunpack.c.l.b16 %v4860
    %v6341 = vunpack.c.h.b16 %v4860
    %v6342 = vunpack.c.l.b16 %v4861
    %v6343 = vunpack.c.h.b16 %v4861
    %v6344 = vunpack.c.l.b16 %v4862
    %v6345 = vunpack.c.h.b16 %v4862
    %v6346 = vunpack.c.l.b16 %v4863
    %v6347 = vunpack.c.h.b16 %v4863
    %v6348 = vunpack.c.l.b16 %v4864
    %v6349 = vunpack.c.h.b16 %v4864
    %v6350 = vunpack.c.l.b16 %v4865
    %v6351 = vunpack.c.h.b16 %v4865
    %v6352 = vunpack.c.l.b16 %v4866
    %v6353 = vunpack.c.h.b16 %v4866
    %v6354 = vunpack.c.l.b16 %v4867
    %v6355 = vunpack.c.h.b16 %v4867
    %v6356 = vunpack.c.l.b16 %v4868
    %v6357 = vunpack.c.h.b16 %v4868
    %v6358 = vunpack.c.l.b16 %v4869
    %v6359 = vunpack.c.h.b16 %v4869
    %v6360 = vunpack.c.l.b16 %v4870
    %v6361 = vunpack.c.h.b16 %v4870
    %v6362 = vunpack.c.l.b16 %v4871
    %v6363 = vunpack.c.h.b16 %v4871
    %v6364 = vunpack.c.l.b16 %v4872
    %v6365 = vunpack.c.h.b16 %v4872
    %v6366 = vunpack.c.l.b16 %v4873
    %v6367 = vunpack.c.h.b16 %v4873
    %v6368 = vunpack.c.l.b16 %v4874
    %v6369 = vunpack.c.h.b16 %v4874
    %v6370 = vunpack.c.l.b16 %v4875
    %v6371 = vunpack.c.h.b16 %v4875
    %v6372 = vunpack.c.l.b16 %v4876
    %v6373 = vunpack.c.h.b16 %v4876
    %v6374 = vunpack.c.l.b16 %v4877
    %v6375 = vunpack.c.h.b16 %v4877
    %v6376 = vunpack.c.l.b16 %v4878
    %v6377 = vunpack.c.h.b16 %v4878
    %v6378 = vunpack.c.l.b16 %v4879
    %v6379 = vunpack.c.h.b16 %v4879
    %v6380 = vunpack.c.l.b16 %v4880
    %v6381 = vunpack.c.h.b16 %v4880
    %v6382 = vunpack.c.l.b16 %v4881
    %v6383 = vunpack.c.h.b16 %v4881
    %v6384 = vunpack.c.l.b16 %v4882
    %v6385 = vunpack.c.h.b16 %v4882
    %v6386 = vunpack.c.l.b16 %v4883
    %v6387 = vunpack.c.h.b16 %v4883
    %v6388 = vunpack.c.l.b16 %v4884
    %v6389 = vunpack.c.h.b16 %v4884
    %v6390 = vunpack.c.l.b16 %v4885
    %v6391 = vunpack.c.h.b16 %v4885
    %v6392 = vunpack.c.l.b16 %v4886
    %v6393 = vunpack.c.h.b16 %v4886
    %v6394 = vunpack.c.l.b16 %v4887
    %v6395 = vunpack.c.h.b16 %v4887
    %v6396 = vunpack.c.l.b16 %v4888
    %v6397 = vunpack.c.h.b16 %v4888
    %v6398 = vunpack.c.l.b16 %v4889
    %v6399 = vunpack.c.h.b16 %v4889
    %v6400 = vunpack.c.l.b16 %v4890
    %v6401 = vunpack.c.h.b16 %v4890
    %v6402 = vunpack.c.l.b16 %v4891
    %v6403 = vunpack.c.h.b16 %v4891
    %v6404 = vunpack.c.l.b16 %v4892
    %v6405 = vunpack.c.h.b16 %v4892
    %v6406 = vunpack.c.l.b16 %v4893
    %v6407 = vunpack.c.h.b16 %v4893
    %v6408 = vunpack.c.l.b16 %v4894
    %v6409 = vunpack.c.h.b16 %v4894
    %v6410 = vunpack.c.l.b16 %v4895
    %v6411 = vunpack.c.h.b16 %v4895
    %v6412 = vunpack.c.l.b16 %v4896
    %v6413 = vunpack.c.h.b16 %v4896
    %v6414 = vunpack.c.l.b16 %v4897
    %v6415 = vunpack.c.h.b16 %v4897
    %v6416 = vunpack.c.l.b16 %v4898
    %v6417 = vunpack.c.h.b16 %v4898
    %v6418 = vunpack.c.l.b16 %v4899
    %v6419 = vunpack.c.h.b16 %v4899
    %v6420 = vunpack.c.l.b16 %v4900
    %v6421 = vunpack.c.h.b16 %v4900
    %v6422 = vunpack.c.l.b16 %v4901
    %v6423 = vunpack.c.h.b16 %v4901
    %v6424 = vunpack.c.l.b16 %v4902
    %v6425 = vunpack.c.h.b16 %v4902
    %v6426 = vunpack.c.l.b16 %v4903
    %v6427 = vunpack.c.h.b16 %v4903
    %v6428 = vunpack.c.l.b16 %v4904
    %v6429 = vunpack.c.h.b16 %v4904
    %v6430 = vunpack.c.l.b16 %v4905
    %v6431 = vunpack.c.h.b16 %v4905
    %v6432 = vunpack.c.l.b16 %v4906
    %v6433 = vunpack.c.h.b16 %v4906
    %v6434 = vunpack.c.l.b16 %v4907
    %v6435 = vunpack.c.h.b16 %v4907
    %v6436 = vunpack.c.l.b16 %v4908
    %v6437 = vunpack.c.h.b16 %v4908
    %v6438 = vunpack.c.l.b16 %v4909
    %v6439 = vunpack.c.h.b16 %v4909
    %v6440 = vunpack.c.l.b16 %v4910
    %v6441 = vunpack.c.h.b16 %v4910
    %v6442 = vunpack.c.l.b16 %v4911
    %v6443 = vunpack.c.h.b16 %v4911
    %v6444 = vunpack.c.l.b16 %v4912
    %v6445 = vunpack.c.h.b16 %v4912
    %v6446 = vunpack.c.l.b16 %v4913
    %v6447 = vunpack.c.h.b16 %v4913
    %v6448 = vunpack.c.l.b16 %v4914
    %v6449 = vunpack.c.h.b16 %v4914
    %v6450 = vunpack.c.l.b16 %v4915
    %v6451 = vunpack.c.h.b16 %v4915
    %v6452 = vunpack.c.l.b16 %v4916
    %v6453 = vunpack.c.h.b16 %v4916
    %v6454 = vunpack.c.l.b16 %v4917
    %v6455 = vunpack.c.h.b16 %v4917
    %v6456 = vunpack.c.l.b16 %v4918
    %v6457 = vunpack.c.h.b16 %v4918
    %v6458 = vunpack.c.l.b16 %v4919
    %v6459 = vunpack.c.h.b16 %v4919
    %v6460 = vunpack.c.l.b16 %v4920
    %v6461 = vunpack.c.h.b16 %v4920
    %v6462 = vunpack.c.l.b16 %v4921
    %v6463 = vunpack.c.h.b16 %v4921
    %v6464 = vunpack.c.l.b16 %v4922
    %v6465 = vunpack.c.h.b16 %v4922
    %v6466 = vunpack.c.l.b16 %v4923
    %v6467 = vunpack.c.h.b16 %v4923
    %v6468 = vunpack.c.l.b16 %v4924
    %v6469 = vunpack.c.h.b16 %v4924
    %v6470 = vunpack.c.l.b16 %v4925
    %v6471 = vunpack.c.h.b16 %v4925
    %v6472 = vunpack.c.l.b16 %v4926
    %v6473 = vunpack.c.h.b16 %v4926
    %v6474 = vunpack.c.l.b16 %v4927
    %v6475 = vunpack.c.h.b16 %v4927
    %v6476 = vunpack.c.l.b16 %v4928
    %v6477 = vunpack.c.h.b16 %v4928
    %v6478 = vunpack.c.l.b16 %v4929
    %v6479 = vunpack.c.h.b16 %v4929
    %v6480 = vunpack.c.l.b16 %v4930
    %v6481 = vunpack.c.h.b16 %v4930
    %v6482 = vunpack.c.l.b16 %v4931
    %v6483 = vunpack.c.h.b16 %v4931
    %v6484 = vunpack.c.l.b16 %v4932
    %v6485 = vunpack.c.h.b16 %v4932
    %v6486 = vunpack.c.l.b16 %v4933
    %v6487 = vunpack.c.h.b16 %v4933
    %v6488 = vunpack.c.l.b16 %v4934
    %v6489 = vunpack.c.h.b16 %v4934
    %v6490 = vunpack.c.l.b16 %v4935
    %v6491 = vunpack.c.h.b16 %v4935
    %v6492 = vunpack.c.l.b16 %v4936
    %v6493 = vunpack.c.h.b16 %v4936
    %v6494 = vunpack.c.l.b16 %v4937
    %v6495 = vunpack.c.h.b16 %v4937
    %v6496 = vunpack.c.l.b16 %v4938
    %v6497 = vunpack.c.h.b16 %v4938
    %v6498 = vunpack.c.l.b16 %v4939
    %v6499 = vunpack.c.h.b16 %v4939
    %v6500 = vunpack.c.l.b16 %v4940
    %v6501 = vunpack.c.h.b16 %v4940
    %v6502 = vunpack.c.l.b16 %v4941
    %v6503 = vunpack.c.h.b16 %v4941
    %v6504 = vunpack.c.l.b16 %v4942
    %v6505 = vunpack.c.h.b16 %v4942
    %v6506 = vunpack.c.l.b16 %v4943
    %v6507 = vunpack.c.h.b16 %v4943
    %v6508 = vunpack.c.l.b16 %v4944
    %v6509 = vunpack.c.h.b16 %v4944
    %v6510 = vunpack.c.l.b16 %v4945
    %v6511 = vunpack.c.h.b16 %v4945
    %v6512 = vunpack.c.l.b16 %v4946
    %v6513 = vunpack.c.h.b16 %v4946
    %v6514 = vunpack.c.l.b16 %v4947
    %v6515 = vunpack.c.h.b16 %v4947
    %v6516 = vunpack.c.l.b16 %v4948
    %v6517 = vunpack.c.h.b16 %v4948
    %v6518 = vunpack.c.l.b16 %v4949
    %v6519 = vunpack.c.h.b16 %v4949
    %v6520 = vunpack.c.l.b16 %v4950
    %v6521 = vunpack.c.h.b16 %v4950
    %v6522 = vunpack.c.l.b16 %v4951
    %v6523 = vunpack.c.h.b16 %v4951
    %v6524 = vunpack.c.l.b16 %v4952
    %v6525 = vunpack.c.h.b16 %v4952
    %v6526 = vunpack.c.l.b16 %v4953
    %v6527 = vunpack.c.h.b16 %v4953
    %v6528 = vunpack.c.l.b16 %v4954
    %v6529 = vunpack.c.h.b16 %v4954
    %v6530 = vunpack.c.l.b16 %v4955
    %v6531 = vunpack.c.h.b16 %v4955
    %v6532 = vunpack.c.l.b16 %v4956
    %v6533 = vunpack.c.h.b16 %v4956
    %v6534 = vunpack.c.l.b16 %v4957
    %v6535 = vunpack.c.h.b16 %v4957
    %v6536 = vpack.c.b16 %v5520, %v5512
    %v6537 = vpack.c.b16 %v5521, %v5513
    %v6538 = vpack.c.b16 %v5522, %v5514
    %v6539 = vpack.c.b16 %v5523, %v5515
    %v6540 = vpack.c.b16 %v5524, %v5516
    %v6541 = vpack.c.b16 %v5525, %v5517
    %v6542 = vpack.c.b16 %v5526, %v5518
    %v6543 = vpack.c.b16 %v5527, %v5519
    %v6544 = vpack.c.b16 %v5536, %v5528
    %v6545 = vpack.c.b16 %v5537, %v5529
    %v6546 = vpack.c.b16 %v5538, %v5530
    %v6547 = vpack.c.b16 %v5539, %v5531
    %v6548 = vpack.c.b16 %v5540, %v5532
    %v6549 = vpack.c.b16 %v5541, %v5533
    %v6550 = vpack.c.b16 %v5542, %v5534
    %v6551 = vpack.c.b16 %v5543, %v5535
    %v6552 = vpack.c.b16 %v5552, %v5544
    %v6553 = vpack.c.b16 %v5553, %v5545
    %v6554 = vpack.c.b16 %v5554, %v5546
    %v6555 = vpack.c.b16 %v5555, %v5547
    %v6556 = vpack.c.b16 %v5556, %v5548
    %v6557 = vpack.c.b16 %v5557, %v5549
    %v6558 = vpack.c.b16 %v5558, %v5550
    %v6559 = vpack.c.b16 %v5559, %v5551
    %v6560 = vpack.c.b16 %v5568, %v5560
    %v6561 = vpack.c.b16 %v5569, %v5561
    %v6562 = vpack.c.b16 %v5570, %v5562
    %v6563 = vpack.c.b16 %v5571, %v5563
    %v6564 = vpack.c.b16 %v5572, %v5564
    %v6565 = vpack.c.b16 %v5573, %v5565
    %v6566 = vpack.c.b16 %v5574, %v5566
    %v6567 = vpack.c.b16 %v5575, %v5567
    %v6568 = vpack.c.b16 %v5584, %v5576
    %v6569 = vpack.c.b16 %v5585, %v5577
    %v6570 = vpack.c.b16 %v5586, %v5578
    %v6571 = vpack.c.b16 %v5587, %v5579
    %v6572 = vpack.c.b16 %v5588, %v5580
    %v6573 = vpack.c.b16 %v5589, %v5581
    %v6574 = vpack.c.b16 %v5590, %v5582
    %v6575 = vpack.c.b16 %v5591, %v5583
    %v6576 = vpack.c.b16 %v5600, %v5592
    %v6577 = vpack.c.b16 %v5601, %v5593
    %v6578 = vpack.c.b16 %v5602, %v5594
    %v6579 = vpack.c.b16 %v5603, %v5595
    %v6580 = vpack.c.b16 %v5604, %v5596
    %v6581 = vpack.c.b16 %v5605, %v5597
    %v6582 = vpack.c.b16 %v5606, %v5598
    %v6583 = vpack.c.b16 %v5607, %v5599
    %v6584 = vpack.c.b16 %v5616, %v5608
    %v6585 = vpack.c.b16 %v5617, %v5609
    %v6586 = vpack.c.b16 %v5618, %v5610
    %v6587 = vpack.c.b16 %v5619, %v5611
    %v6588 = vpack.c.b16 %v5620, %v5612
    %v6589 = vpack.c.b16 %v5621, %v5613
    %v6590 = vpack.c.b16 %v5622, %v5614
    %v6591 = vpack.c.b16 %v5623, %v5615
    %v6592 = vpack.c.b16 %v5632, %v5624
    %v6593 = vpack.c.b16 %v5633, %v5625
    %v6594 = vpack.c.b16 %v5634, %v5626
    %v6595 = vpack.c.b16 %v5635, %v5627
    %v6596 = vpack.c.b16 %v5636, %v5628
    %v6597 = vpack.c.b16 %v5637, %v5629
    %v6598 = vpack.c.b16 %v5638, %v5630
    %v6599 = vpack.c.b16 %v5639, %v5631
    %v6600 = vpack.c.b16 %v5648, %v5640
    %v6601 = vpack.c.b16 %v5649, %v5641
    %v6602 = vpack.c.b16 %v5650, %v5642
    %v6603 = vpack.c.b16 %v5651, %v5643
    %v6604 = vpack.c.b16 %v5652, %v5644
    %v6605 = vpack.c.b16 %v5653, %v5645
    %v6606 = vpack.c.b16 %v5654, %v5646
    %v6607 = vpack.c.b16 %v5655, %v5647
    %v6608 = vpack.c.b16 %v5664, %v5656
    %v6609 = vpack.c.b16 %v5665, %v5657
    %v6610 = vpack.c.b16 %v5666, %v5658
    %v6611 = vpack.c.b16 %v5667, %v5659
    %v6612 = vpack.c.b16 %v5668, %v5660
    %v6613 = vpack.c.b16 %v5669, %v5661
    %v6614 = vpack.c.b16 %v5670, %v5662
    %v6615 = vpack.c.b16 %v5671, %v5663
    %v6616 = vpack.c.b16 %v5680, %v5672
    %v6617 = vpack.c.b16 %v5681, %v5673
    %v6618 = vpack.c.b16 %v5682, %v5674
    %v6619 = vpack.c.b16 %v5683, %v5675
    %v6620 = vpack.c.b16 %v5684, %v5676
    %v6621 = vpack.c.b16 %v5685, %v5677
    %v6622 = vpack.c.b16 %v5686, %v5678
    %v6623 = vpack.c.b16 %v5687, %v5679
    %v6624 = vpack.c.b16 %v5696, %v5688
    %v6625 = vpack.c.b16 %v5697, %v5689
    %v6626 = vpack.c.b16 %v5698, %v5690
    %v6627 = vpack.c.b16 %v5699, %v5691
    %v6628 = vpack.c.b16 %v5700, %v5692
    %v6629 = vpack.c.b16 %v5701, %v5693
    %v6630 = vpack.c.b16 %v5702, %v5694
    %v6631 = vpack.c.b16 %v5703, %v5695
    %v6632 = vpack.c.b16 %v5712, %v5704
    %v6633 = vpack.c.b16 %v5713, %v5705
    %v6634 = vpack.c.b16 %v5714, %v5706
    %v6635 = vpack.c.b16 %v5715, %v5707
    %v6636 = vpack.c.b16 %v5716, %v5708
    %v6637 = vpack.c.b16 %v5717, %v5709
    %v6638 = vpack.c.b16 %v5718, %v5710
    %v6639 = vpack.c.b16 %v5719, %v5711
    %v6640 = vpack.c.b16 %v5728, %v5720
    %v6641 = vpack.c.b16 %v5729, %v5721
    %v6642 = vpack.c.b16 %v5730, %v5722
    %v6643 = vpack.c.b16 %v5731, %v5723
    %v6644 = vpack.c.b16 %v5732, %v5724
    %v6645 = vpack.c.b16 %v5733, %v5725
    %v6646 = vpack.c.b16 %v5734, %v5726
    %v6647 = vpack.c.b16 %v5735, %v5727
    %v6648 = vpack.c.b16 %v5744, %v5736
    %v6649 = vpack.c.b16 %v5745, %v5737
    %v6650 = vpack.c.b16 %v5746, %v5738
    %v6651 = vpack.c.b16 %v5747, %v5739
    %v6652 = vpack.c.b16 %v5748, %v5740
    %v6653 = vpack.c.b16 %v5749, %v5741
    %v6654 = vpack.c.b16 %v5750, %v5742
    %v6655 = vpack.c.b16 %v5751, %v5743
    %v6656 = vpack.c.b16 %v5760, %v5752
    %v6657 = vpack.c.b16 %v5761, %v5753
    %v6658 = vpack.c.b16 %v5762, %v5754
    %v6659 = vpack.c.b16 %v5763, %v5755
    %v6660 = vpack.c.b16 %v5764, %v5756
    %v6661 = vpack.c.b16 %v5765, %v5757
    %v6662 = vpack.c.b16 %v5766, %v5758
    %v6663 = vpack.c.b16 %v5767, %v5759
    %v6664 = vpack.c.b16 %v5776, %v5768
    %v6665 = vpack.c.b16 %v5777, %v5769
    %v6666 = vpack.c.b16 %v5778, %v5770
    %v6667 = vpack.c.b16 %v5779, %v5771
    %v6668 = vpack.c.b16 %v5780, %v5772
    %v6669 = vpack.c.b16 %v5781, %v5773
    %v6670 = vpack.c.b16 %v5782, %v5774
    %v6671 = vpack.c.b16 %v5783, %v5775
    %v6672 = vpack.c.b16 %v5792, %v5784
    %v6673 = vpack.c.b16 %v5793, %v5785
    %v6674 = vpack.c.b16 %v5794, %v5786
    %v6675 = vpack.c.b16 %v5795, %v5787
    %v6676 = vpack.c.b16 %v5796, %v5788
    %v6677 = vpack.c.b16 %v5797, %v5789
    %v6678 = vpack.c.b16 %v5798, %v5790
    %v6679 = vpack.c.b16 %v5799, %v5791
    %v6680 = vpack.c.b16 %v5808, %v5800
    %v6681 = vpack.c.b16 %v5809, %v5801
    %v6682 = vpack.c.b16 %v5810, %v5802
    %v6683 = vpack.c.b16 %v5811, %v5803
    %v6684 = vpack.c.b16 %v5812, %v5804
    %v6685 = vpack.c.b16 %v5813, %v5805
    %v6686 = vpack.c.b16 %v5814, %v5806
    %v6687 = vpack.c.b16 %v5815, %v5807
    %v6688 = vpack.c.b16 %v5824, %v5816
    %v6689 = vpack.c.b16 %v5825, %v5817
    %v6690 = vpack.c.b16 %v5826, %v5818
    %v6691 = vpack.c.b16 %v5827, %v5819
    %v6692 = vpack.c.b16 %v5828, %v5820
    %v6693 = vpack.c.b16 %v5829, %v5821
    %v6694 = vpack.c.b16 %v5830, %v5822
    %v6695 = vpack.c.b16 %v5831, %v5823
    %v6696 = vpack.c.b16 %v5840, %v5832
    %v6697 = vpack.c.b16 %v5841, %v5833
    %v6698 = vpack.c.b16 %v5842, %v5834
    %v6699 = vpack.c.b16 %v5843, %v5835
    %v6700 = vpack.c.b16 %v5844, %v5836
    %v6701 = vpack.c.b16 %v5845, %v5837
    %v6702 = vpack.c.b16 %v5846, %v5838
    %v6703 = vpack.c.b16 %v5847, %v5839
    %v6704 = vpack.c.b16 %v5856, %v5848
    %v6705 = vpack.c.b16 %v5857, %v5849
    %v6706 = vpack.c.b16 %v5858, %v5850
    %v6707 = vpack.c.b16 %v5859, %v5851
    %v6708 = vpack.c.b16 %v5860, %v5852
    %v6709 = vpack.c.b16 %v5861, %v5853
    %v6710 = vpack.c.b16 %v5862, %v5854
    %v6711 = vpack.c.b16 %v5863, %v5855
    %v6712 = vpack.c.b16 %v5872, %v5864
    %v6713 = vpack.c.b16 %v5873, %v5865
    %v6714 = vpack.c.b16 %v5874, %v5866
    %v6715 = vpack.c.b16 %v5875, %v5867
    %v6716 = vpack.c.b16 %v5876, %v5868
    %v6717 = vpack.c.b16 %v5877, %v5869
    %v6718 = vpack.c.b16 %v5878, %v5870
    %v6719 = vpack.c.b16 %v5879, %v5871
    %v6720 = vpack.c.b16 %v5888, %v5880
    %v6721 = vpack.c.b16 %v5889, %v5881
    %v6722 = vpack.c.b16 %v5890, %v5882
    %v6723 = vpack.c.b16 %v5891, %v5883
    %v6724 = vpack.c.b16 %v5892, %v5884
    %v6725 = vpack.c.b16 %v5893, %v5885
    %v6726 = vpack.c.b16 %v5894, %v5886
    %v6727 = vpack.c.b16 %v5895, %v5887
    %v6728 = vpack.c.b16 %v5904, %v5896
    %v6729 = vpack.c.b16 %v5905, %v5897
    %v6730 = vpack.c.b16 %v5906, %v5898
    %v6731 = vpack.c.b16 %v5907, %v5899
    %v6732 = vpack.c.b16 %v5908, %v5900
    %v6733 = vpack.c.b16 %v5909, %v5901
    %v6734 = vpack.c.b16 %v5910, %v5902
    %v6735 = vpack.c.b16 %v5911, %v5903
    %v6736 = vpack.c.b16 %v5920, %v5912
    %v6737 = vpack.c.b16 %v5921, %v5913
    %v6738 = vpack.c.b16 %v5922, %v5914
    %v6739 = vpack.c.b16 %v5923, %v5915
    %v6740 = vpack.c.b16 %v5924, %v5916
    %v6741 = vpack.c.b16 %v5925, %v5917
    %v6742 = vpack.c.b16 %v5926, %v5918
    %v6743 = vpack.c.b16 %v5927, %v5919
    %v6744 = vpack.c.b16 %v5936, %v5928
    %v6745 = vpack.c.b16 %v5937, %v5929
    %v6746 = vpack.c.b16 %v5938, %v5930
    %v6747 = vpack.c.b16 %v5939, %v5931
    %v6748 = vpack.c.b16 %v5940, %v5932
    %v6749 = vpack.c.b16 %v5941, %v5933
    %v6750 = vpack.c.b16 %v5942, %v5934
    %v6751 = vpack.c.b16 %v5943, %v5935
    %v6752 = vpack.c.b16 %v5952, %v5944
    %v6753 = vpack.c.b16 %v5953, %v5945
    %v6754 = vpack.c.b16 %v5954, %v5946
    %v6755 = vpack.c.b16 %v5955, %v5947
    %v6756 = vpack.c.b16 %v5956, %v5948
    %v6757 = vpack.c.b16 %v5957, %v5949
    %v6758 = vpack.c.b16 %v5958, %v5950
    %v6759 = vpack.c.b16 %v5959, %v5951
    %v6760 = vpack.c.b16 %v5968, %v5960
    %v6761 = vpack.c.b16 %v5969, %v5961
    %v6762 = vpack.c.b16 %v5970, %v5962
    %v6763 = vpack.c.b16 %v5971, %v5963
    %v6764 = vpack.c.b16 %v5972, %v5964
    %v6765 = vpack.c.b16 %v5973, %v5965
    %v6766 = vpack.c.b16 %v5974, %v5966
    %v6767 = vpack.c.b16 %v5975, %v5967
    %v6768 = vpack.c.b16 %v5984, %v5976
    %v6769 = vpack.c.b16 %v5985, %v5977
    %v6770 = vpack.c.b16 %v5986, %v5978
    %v6771 = vpack.c.b16 %v5987, %v5979
    %v6772 = vpack.c.b16 %v5988, %v5980
    %v6773 = vpack.c.b16 %v5989, %v5981
    %v6774 = vpack.c.b16 %v5990, %v5982
    %v6775 = vpack.c.b16 %v5991, %v5983
    %v6776 = vpack.c.b16 %v6000, %v5992
    %v6777 = vpack.c.b16 %v6001, %v5993
    %v6778 = vpack.c.b16 %v6002, %v5994
    %v6779 = vpack.c.b16 %v6003, %v5995
    %v6780 = vpack.c.b16 %v6004, %v5996
    %v6781 = vpack.c.b16 %v6005, %v5997
    %v6782 = vpack.c.b16 %v6006, %v5998
    %v6783 = vpack.c.b16 %v6007, %v5999
    %v6784 = vpack.c.b16 %v6016, %v6008
    %v6785 = vpack.c.b16 %v6017, %v6009
    %v6786 = vpack.c.b16 %v6018, %v6010
    %v6787 = vpack.c.b16 %v6019, %v6011
    %v6788 = vpack.c.b16 %v6020, %v6012
    %v6789 = vpack.c.b16 %v6021, %v6013
    %v6790 = vpack.c.b16 %v6022, %v6014
    %v6791 = vpack.c.b16 %v6023, %v6015
    %v6792 = vpack.c.b16 %v6032, %v6024
    %v6793 = vpack.c.b16 %v6033, %v6025
    %v6794 = vpack.c.b16 %v6034, %v6026
    %v6795 = vpack.c.b16 %v6035, %v6027
    %v6796 = vpack.c.b16 %v6036, %v6028
    %v6797 = vpack.c.b16 %v6037, %v6029
    %v6798 = vpack.c.b16 %v6038, %v6030
    %v6799 = vpack.c.b16 %v6039, %v6031
    %v6800 = vpack.c.b16 %v6048, %v6040
    %v6801 = vpack.c.b16 %v6049, %v6041
    %v6802 = vpack.c.b16 %v6050, %v6042
    %v6803 = vpack.c.b16 %v6051, %v6043
    %v6804 = vpack.c.b16 %v6052, %v6044
    %v6805 = vpack.c.b16 %v6053, %v6045
    %v6806 = vpack.c.b16 %v6054, %v6046
    %v6807 = vpack.c.b16 %v6055, %v6047
    %v6808 = vpack.c.b16 %v6064, %v6056
    %v6809 = vpack.c.b16 %v6065, %v6057
    %v6810 = vpack.c.b16 %v6066, %v6058
    %v6811 = vpack.c.b16 %v6067, %v6059
    %v6812 = vpack.c.b16 %v6068, %v6060
    %v6813 = vpack.c.b16 %v6069, %v6061
    %v6814 = vpack.c.b16 %v6070, %v6062
    %v6815 = vpack.c.b16 %v6071, %v6063
    %v6816 = vpack.c.b16 %v6080, %v6072
    %v6817 = vpack.c.b16 %v6081, %v6073
    %v6818 = vpack.c.b16 %v6082, %v6074
    %v6819 = vpack.c.b16 %v6083, %v6075
    %v6820 = vpack.c.b16 %v6084, %v6076
    %v6821 = vpack.c.b16 %v6085, %v6077
    %v6822 = vpack.c.b16 %v6086, %v6078
    %v6823 = vpack.c.b16 %v6087, %v6079
    %v6824 = vpack.c.b16 %v6096, %v6088
    %v6825 = vpack.c.b16 %v6097, %v6089
    %v6826 = vpack.c.b16 %v6098, %v6090
    %v6827 = vpack.c.b16 %v6099, %v6091
    %v6828 = vpack.c.b16 %v6100, %v6092
    %v6829 = vpack.c.b16 %v6101, %v6093
    %v6830 = vpack.c.b16 %v6102, %v6094
    %v6831 = vpack.c.b16 %v6103, %v6095
    %v6832 = vpack.c.b16 %v6112, %v6104
    %v6833 = vpack.c.b16 %v6113, %v6105
    %v6834 = vpack.c.b16 %v6114, %v6106
    %v6835 = vpack.c.b16 %v6115, %v6107
    %v6836 = vpack.c.b16 %v6116, %v6108
    %v6837 = vpack.c.b16 %v6117, %v6109
    %v6838 = vpack.c.b16 %v6118, %v6110
    %v6839 = vpack.c.b16 %v6119, %v6111
    %v6840 = vpack.c.b16 %v6128, %v6120
    %v6841 = vpack.c.b16 %v6129, %v6121
    %v6842 = vpack.c.b16 %v6130, %v6122
    %v6843 = vpack.c.b16 %v6131, %v6123
    %v6844 = vpack.c.b16 %v6132, %v6124
    %v6845 = vpack.c.b16 %v6133, %v6125
    %v6846 = vpack.c.b16 %v6134, %v6126
    %v6847 = vpack.c.b16 %v6135, %v6127
    %v6848 = vpack.c.b16 %v6144, %v6136
    %v6849 = vpack.c.b16 %v6145, %v6137
    %v6850 = vpack.c.b16 %v6146, %v6138
    %v6851 = vpack.c.b16 %v6147, %v6139
    %v6852 = vpack.c.b16 %v6148, %v6140
    %v6853 = vpack.c.b16 %v6149, %v6141
    %v6854 = vpack.c.b16 %v6150, %v6142
    %v6855 = vpack.c.b16 %v6151, %v6143
    %v6856 = vpack.c.b16 %v6160, %v6152
    %v6857 = vpack.c.b16 %v6161, %v6153
    %v6858 = vpack.c.b16 %v6162, %v6154
    %v6859 = vpack.c.b16 %v6163, %v6155
    %v6860 = vpack.c.b16 %v6164, %v6156
    %v6861 = vpack.c.b16 %v6165, %v6157
    %v6862 = vpack.c.b16 %v6166, %v6158
    %v6863 = vpack.c.b16 %v6167, %v6159
    %v6864 = vpack.c.b16 %v6176, %v6168
    %v6865 = vpack.c.b16 %v6177, %v6169
    %v6866 = vpack.c.b16 %v6178, %v6170
    %v6867 = vpack.c.b16 %v6179, %v6171
    %v6868 = vpack.c.b16 %v6180, %v6172
    %v6869 = vpack.c.b16 %v6181, %v6173
    %v6870 = vpack.c.b16 %v6182, %v6174
    %v6871 = vpack.c.b16 %v6183, %v6175
    %v6872 = vpack.c.b16 %v6192, %v6184
    %v6873 = vpack.c.b16 %v6193, %v6185
    %v6874 = vpack.c.b16 %v6194, %v6186
    %v6875 = vpack.c.b16 %v6195, %v6187
    %v6876 = vpack.c.b16 %v6196, %v6188
    %v6877 = vpack.c.b16 %v6197, %v6189
    %v6878 = vpack.c.b16 %v6198, %v6190
    %v6879 = vpack.c.b16 %v6199, %v6191
    %v6880 = vpack.c.b16 %v6208, %v6200
    %v6881 = vpack.c.b16 %v6209, %v6201
    %v6882 = vpack.c.b16 %v6210, %v6202
    %v6883 = vpack.c.b16 %v6211, %v6203
    %v6884 = vpack.c.b16 %v6212, %v6204
    %v6885 = vpack.c.b16 %v6213, %v6205
    %v6886 = vpack.c.b16 %v6214, %v6206
    %v6887 = vpack.c.b16 %v6215, %v6207
    %v6888 = vpack.c.b16 %v6224, %v6216
    %v6889 = vpack.c.b16 %v6225, %v6217
    %v6890 = vpack.c.b16 %v6226, %v6218
    %v6891 = vpack.c.b16 %v6227, %v6219
    %v6892 = vpack.c.b16 %v6228, %v6220
    %v6893 = vpack.c.b16 %v6229, %v6221
    %v6894 = vpack.c.b16 %v6230, %v6222
    %v6895 = vpack.c.b16 %v6231, %v6223
    %v6896 = vpack.c.b16 %v6240, %v6232
    %v6897 = vpack.c.b16 %v6241, %v6233
    %v6898 = vpack.c.b16 %v6242, %v6234
    %v6899 = vpack.c.b16 %v6243, %v6235
    %v6900 = vpack.c.b16 %v6244, %v6236
    %v6901 = vpack.c.b16 %v6245, %v6237
    %v6902 = vpack.c.b16 %v6246, %v6238
    %v6903 = vpack.c.b16 %v6247, %v6239
    %v6904 = vpack.c.b16 %v6256, %v6248
    %v6905 = vpack.c.b16 %v6257, %v6249
    %v6906 = vpack.c.b16 %v6258, %v6250
    %v6907 = vpack.c.b16 %v6259, %v6251
    %v6908 = vpack.c.b16 %v6260, %v6252
    %v6909 = vpack.c.b16 %v6261, %v6253
    %v6910 = vpack.c.b16 %v6262, %v6254
    %v6911 = vpack.c.b16 %v6263, %v6255
    %v6912 = vpack.c.b16 %v6272, %v6264
    %v6913 = vpack.c.b16 %v6273, %v6265
    %v6914 = vpack.c.b16 %v6274, %v6266
    %v6915 = vpack.c.b16 %v6275, %v6267
    %v6916 = vpack.c.b16 %v6276, %v6268
    %v6917 = vpack.c.b16 %v6277, %v6269
    %v6918 = vpack.c.b16 %v6278, %v6270
    %v6919 = vpack.c.b16 %v6279, %v6271
    %v6920 = vpack.c.b16 %v6288, %v6280
    %v6921 = vpack.c.b16 %v6289, %v6281
    %v6922 = vpack.c.b16 %v6290, %v6282
    %v6923 = vpack.c.b16 %v6291, %v6283
    %v6924 = vpack.c.b16 %v6292, %v6284
    %v6925 = vpack.c.b16 %v6293, %v6285
    %v6926 = vpack.c.b16 %v6294, %v6286
    %v6927 = vpack.c.b16 %v6295, %v6287
    %v6928 = vpack.c.b16 %v6304, %v6296
    %v6929 = vpack.c.b16 %v6305, %v6297
    %v6930 = vpack.c.b16 %v6306, %v6298
    %v6931 = vpack.c.b16 %v6307, %v6299
    %v6932 = vpack.c.b16 %v6308, %v6300
    %v6933 = vpack.c.b16 %v6309, %v6301
    %v6934 = vpack.c.b16 %v6310, %v6302
    %v6935 = vpack.c.b16 %v6311, %v6303
    %v6936 = vpack.c.b16 %v6320, %v6312
    %v6937 = vpack.c.b16 %v6321, %v6313
    %v6938 = vpack.c.b16 %v6322, %v6314
    %v6939 = vpack.c.b16 %v6323, %v6315
    %v6940 = vpack.c.b16 %v6324, %v6316
    %v6941 = vpack.c.b16 %v6325, %v6317
    %v6942 = vpack.c.b16 %v6326, %v6318
    %v6943 = vpack.c.b16 %v6327, %v6319
    %v6944 = vpack.c.b16 %v6336, %v6328
    %v6945 = vpack.c.b16 %v6337, %v6329
    %v6946 = vpack.c.b16 %v6338, %v6330
    %v6947 = vpack.c.b16 %v6339, %v6331
    %v6948 = vpack.c.b16 %v6340, %v6332
    %v6949 = vpack.c.b16 %v6341, %v6333
    %v6950 = vpack.c.b16 %v6342, %v6334
    %v6951 = vpack.c.b16 %v6343, %v6335
    %v6952 = vpack.c.b16 %v6352, %v6344
    %v6953 = vpack.c.b16 %v6353, %v6345
    %v6954 = vpack.c.b16 %v6354, %v6346
    %v6955 = vpack.c.b16 %v6355, %v6347
    %v6956 = vpack.c.b16 %v6356, %v6348
    %v6957 = vpack.c.b16 %v6357, %v6349
    %v6958 = vpack.c.b16 %v6358, %v6350
    %v6959 = vpack.c.b16 %v6359, %v6351
    %v6960 = vpack.c.b16 %v6368, %v6360
    %v6961 = vpack.c.b16 %v6369, %v6361
    %v6962 = vpack.c.b16 %v6370, %v6362
    %v6963 = vpack.c.b16 %v6371, %v6363
    %v6964 = vpack.c.b16 %v6372, %v6364
    %v6965 = vpack.c.b16 %v6373, %v6365
    %v6966 = vpack.c.b16 %v6374, %v6366
    %v6967 = vpack.c.b16 %v6375, %v6367
    %v6968 = vpack.c.b16 %v6384, %v6376
    %v6969 = vpack.c.b16 %v6385, %v6377
    %v6970 = vpack.c.b16 %v6386, %v6378
    %v6971 = vpack.c.b16 %v6387, %v6379
    %v6972 = vpack.c.b16 %v6388, %v6380
    %v6973 = vpack.c.b16 %v6389, %v6381
    %v6974 = vpack.c.b16 %v6390, %v6382
    %v6975 = vpack.c.b16 %v6391, %v6383
    %v6976 = vpack.c.b16 %v6400, %v6392
    %v6977 = vpack.c.b16 %v6401, %v6393
    %v6978 = vpack.c.b16 %v6402, %v6394
    %v6979 = vpack.c.b16 %v6403, %v6395
    %v6980 = vpack.c.b16 %v6404, %v6396
    %v6981 = vpack.c.b16 %v6405, %v6397
    %v6982 = vpack.c.b16 %v6406, %v6398
    %v6983 = vpack.c.b16 %v6407, %v6399
    %v6984 = vpack.c.b16 %v6416, %v6408
    %v6985 = vpack.c.b16 %v6417, %v6409
    %v6986 = vpack.c.b16 %v6418, %v6410
    %v6987 = vpack.c.b16 %v6419, %v6411
    %v6988 = vpack.c.b16 %v6420, %v6412
    %v6989 = vpack.c.b16 %v6421, %v6413
    %v6990 = vpack.c.b16 %v6422, %v6414
    %v6991 = vpack.c.b16 %v6423, %v6415
    %v6992 = vpack.c.b16 %v6432, %v6424
    %v6993 = vpack.c.b16 %v6433, %v6425
    %v6994 = vpack.c.b16 %v6434, %v6426
    %v6995 = vpack.c.b16 %v6435, %v6427
    %v6996 = vpack.c.b16 %v6436, %v6428
    %v6997 = vpack.c.b16 %v6437, %v6429
    %v6998 = vpack.c.b16 %v6438, %v6430
    %v6999 = vpack.c.b16 %v6439, %v6431
    %v7000 = vpack.c.b16 %v6448, %v6440
    %v7001 = vpack.c.b16 %v6449, %v6441
    %v7002 = vpack.c.b16 %v6450, %v6442
    %v7003 = vpack.c.b16 %v6451, %v6443
    %v7004 = vpack.c.b16 %v6452, %v6444
    %v7005 = vpack.c.b16 %v6453, %v6445
    %v7006 = vpack.c.b16 %v6454, %v6446
    %v7007 = vpack.c.b16 %v6455, %v6447
    %v7008 = vpack.c.b16 %v6464, %v6456
    %v7009 = vpack.c.b16 %v6465, %v6457
    %v7010 = vpack.c.b16 %v6466, %v6458
    %v7011 = vpack.c.b16 %v6467, %v6459
    %v7012 = vpack.c.b16 %v6468, %v6460
    %v7013 = vpack.c.b16 %v6469, %v6461
    %v7014 = vpack.c.b16 %v6470, %v6462
    %v7015 = vpack.c.b16 %v6471, %v6463
    %v7016 = vpack.c.b16 %v6480, %v6472
    %v7017 = vpack.c.b16 %v6481, %v6473
    %v7018 = vpack.c.b16 %v6482, %v6474
    %v7019 = vpack.c.b16 %v6483, %v6475
    %v7020 = vpack.c.b16 %v6484, %v6476
    %v7021 = vpack.c.b16 %v6485, %v6477
    %v7022 = vpack.c.b16 %v6486, %v6478
    %v7023 = vpack.c.b16 %v6487, %v6479
    %v7024 = vpack.c.b16 %v6496, %v6488
    %v7025 = vpack.c.b16 %v6497, %v6489
    %v7026 = vpack.c.b16 %v6498, %v6490
    %v7027 = vpack.c.b16 %v6499, %v6491
    %v7028 = vpack.c.b16 %v6500, %v6492
    %v7029 = vpack.c.b16 %v6501, %v6493
    %v7030 = vpack.c.b16 %v6502, %v6494
    %v7031 = vpack.c.b16 %v6503, %v6495
    %v7032 = vpack.c.b16 %v6512, %v6504
    %v7033 = vpack.c.b16 %v6513, %v6505
    %v7034 = vpack.c.b16 %v6514, %v6506
    %v7035 = vpack.c.b16 %v6515, %v6507
    %v7036 = vpack.c.b16 %v6516, %v6508
    %v7037 = vpack.c.b16 %v6517, %v6509
    %v7038 = vpack.c.b16 %v6518, %v6510
    %v7039 = vpack.c.b16 %v6519, %v6511
    %v7040 = vpack.c.b16 %v6528, %v6520
    %v7041 = vpack.c.b16 %v6529, %v6521
    %v7042 = vpack.c.b16 %v6530, %v6522
    %v7043 = vpack.c.b16 %v6531, %v6523
    %v7044 = vpack.c.b16 %v6532, %v6524
    %v7045 = vpack.c.b16 %v6533, %v6525
    %v7046 = vpack.c.b16 %v6534, %v6526
    %v7047 = vpack.c.b16 %v6535, %v6527
    %7560 = vmatprep.subr.bf16.mxu0 %v6593
    %7561 = vmatpush1.bf16.msra.mxu0 %v6592
    %7562 = vmatprep.subr.bf16.mxu0 %v6585
    %7563 = vmatpush1.bf16.msra.mxu0 %v6584
    %7564 = vmatprep.subr.bf16.mxu0 %v6577
    %7565 = vmatpush1.bf16.msra.mxu0 %v6576
    %7566 = vmatprep.subr.bf16.mxu0 %v6569
    %7567 = vmatpush1.bf16.msra.mxu0 %v6568
    %7568 = vmatprep.subr.bf16.mxu0 %v6561
    %7569 = vmatpush1.bf16.msra.mxu0 %v6560
    %7570 = vmatprep.subr.bf16.mxu0 %v6553
    %7571 = vmatpush1.bf16.msra.mxu0 %v6552
    %7572 = vmatprep.subr.bf16.mxu0 %v6545
    %7573 = vmatpush1.bf16.msra.mxu0 %v6544
    %7574 = vmatprep.subr.bf16.mxu0 %v6537
    %7575 = vmatpush1.bf16.msra.mxu0 %v6536
    %7576 = vmatprep.subr.bf16.mxu0 %v6657
    %7577 = vmatpush2.bf16.msra.mxu0 %v6656
    %7578 = vmatprep.subr.bf16.mxu0 %v6649
    %7579 = vmatpush2.bf16.msra.mxu0 %v6648
    %7580 = vmatprep.subr.bf16.mxu0 %v6641
    %7581 = vmatpush2.bf16.msra.mxu0 %v6640
    %7582 = vmatprep.subr.bf16.mxu0 %v6633
    %7583 = vmatpush2.bf16.msra.mxu0 %v6632
    %7584 = vmatprep.subr.bf16.mxu0 %v6625
    %7585 = vmatpush2.bf16.msra.mxu0 %v6624
    %7586 = vmatprep.subr.bf16.mxu0 %v6617
    %7587 = vmatpush2.bf16.msra.mxu0 %v6616
    %7588 = vmatprep.subr.bf16.mxu0 %v6609
    %7589 = vmatpush2.bf16.msra.mxu0 %v6608
    %7590 = vmatprep.subr.bf16.mxu0 %v6601
    %7591 = vmatpush2.bf16.msra.mxu0 %v6600
    %7592 = vmatprep.mubr.bf16.mxu0 %v4439
    %7593 = vmatmul.mubr.bf16.gmra.mxu0 %v4438
    %v7594 = vpop.f32.mrf.mxu0
    %v7595 = vadd.f32 %v4963, %v7594
    %v7596 = vpop.f32.mrf.mxu0
    %v7597 = vadd.f32 %v4967, %v7596
    %v7598 = vpop.f32.mrf.mxu0
    %v7599 = vadd.f32 %v4963, %v7598
    %v7600 = vpop.f32.mrf.mxu0
    %v7601 = vadd.f32 %v4967, %v7600
    %7602 = vdwg.mxu0
    %7603 = vmatprep.subr.bf16.mxu0 %v6721
    %7604 = vmatpush1.bf16.msra.mxu0 %v6720
    %7605 = vmatprep.subr.bf16.mxu0 %v6713
    %7606 = vmatpush1.bf16.msra.mxu0 %v6712
    %7607 = vmatprep.subr.bf16.mxu0 %v6705
    %7608 = vmatpush1.bf16.msra.mxu0 %v6704
    %7609 = vmatprep.subr.bf16.mxu0 %v6697
    %7610 = vmatpush1.bf16.msra.mxu0 %v6696
    %7611 = vmatprep.subr.bf16.mxu0 %v6689
    %7612 = vmatpush1.bf16.msra.mxu0 %v6688
    %7613 = vmatprep.subr.bf16.mxu0 %v6681
    %7614 = vmatpush1.bf16.msra.mxu0 %v6680
    %7615 = vmatprep.subr.bf16.mxu0 %v6673
    %7616 = vmatpush1.bf16.msra.mxu0 %v6672
    %7617 = vmatprep.subr.bf16.mxu0 %v6665
    %7618 = vmatpush1.bf16.msra.mxu0 %v6664
    %7619 = vmatprep.subr.bf16.mxu0 %v6785
    %7620 = vmatpush2.bf16.msra.mxu0 %v6784
    %7621 = vmatprep.subr.bf16.mxu0 %v6777
    %7622 = vmatpush2.bf16.msra.mxu0 %v6776
    %7623 = vmatprep.subr.bf16.mxu0 %v6769
    %7624 = vmatpush2.bf16.msra.mxu0 %v6768
    %7625 = vmatprep.subr.bf16.mxu0 %v6761
    %7626 = vmatpush2.bf16.msra.mxu0 %v6760
    %7627 = vmatprep.subr.bf16.mxu0 %v6753
    %7628 = vmatpush2.bf16.msra.mxu0 %v6752
    %7629 = vmatprep.subr.bf16.mxu0 %v6745
    %7630 = vmatpush2.bf16.msra.mxu0 %v6744
    %7631 = vmatprep.subr.bf16.mxu0 %v6737
    %7632 = vmatpush2.bf16.msra.mxu0 %v6736
    %7633 = vmatprep.subr.bf16.mxu0 %v6729
    %7634 = vmatpush2.bf16.msra.mxu0 %v6728
    %7635 = vmatprep.mubr.bf16.mxu0 %v4441
    %7636 = vmatmul.mubr.bf16.gmra.mxu0 %v4440
    %v7637 = vpop.f32.mrf.mxu0
    %v7638 = vadd.f32 %v7595, %v7637
    %v7639 = vpop.f32.mrf.mxu0
    %v7640 = vadd.f32 %v7597, %v7639
    %v7641 = vpop.f32.mrf.mxu0
    %v7642 = vadd.f32 %v7599, %v7641
    %v7643 = vpop.f32.mrf.mxu0
    %v7644 = vadd.f32 %v7601, %v7643
    %7645 = vdwg.mxu0
    %7646 = vmatprep.subr.bf16.mxu0 %v6849
    %7647 = vmatpush1.bf16.msra.mxu0 %v6848
    %7648 = vmatprep.subr.bf16.mxu0 %v6841
    %7649 = vmatpush1.bf16.msra.mxu0 %v6840
    %7650 = vmatprep.subr.bf16.mxu0 %v6833
    %7651 = vmatpush1.bf16.msra.mxu0 %v6832
    %7652 = vmatprep.subr.bf16.mxu0 %v6825
    %7653 = vmatpush1.bf16.msra.mxu0 %v6824
    %7654 = vmatprep.subr.bf16.mxu0 %v6817
    %7655 = vmatpush1.bf16.msra.mxu0 %v6816
    %7656 = vmatprep.subr.bf16.mxu0 %v6809
    %7657 = vmatpush1.bf16.msra.mxu0 %v6808
    %7658 = vmatprep.subr.bf16.mxu0 %v6801
    %7659 = vmatpush1.bf16.msra.mxu0 %v6800
    %7660 = vmatprep.subr.bf16.mxu0 %v6793
    %7661 = vmatpush1.bf16.msra.mxu0 %v6792
    %7662 = vmatprep.subr.bf16.mxu0 %v6913
    %7663 = vmatpush2.bf16.msra.mxu0 %v6912
    %7664 = vmatprep.subr.bf16.mxu0 %v6905
    %7665 = vmatpush2.bf16.msra.mxu0 %v6904
    %7666 = vmatprep.subr.bf16.mxu0 %v6897
    %7667 = vmatpush2.bf16.msra.mxu0 %v6896
    %7668 = vmatprep.subr.bf16.mxu0 %v6889
    %7669 = vmatpush2.bf16.msra.mxu0 %v6888
    %7670 = vmatprep.subr.bf16.mxu0 %v6881
    %7671 = vmatpush2.bf16.msra.mxu0 %v6880
    %7672 = vmatprep.subr.bf16.mxu0 %v6873
    %7673 = vmatpush2.bf16.msra.mxu0 %v6872
    %7674 = vmatprep.subr.bf16.mxu0 %v6865
    %7675 = vmatpush2.bf16.msra.mxu0 %v6864
    %7676 = vmatprep.subr.bf16.mxu0 %v6857
    %7677 = vmatpush2.bf16.msra.mxu0 %v6856
    %7678 = vmatprep.mubr.bf16.mxu0 %v4443
    %7679 = vmatmul.mubr.bf16.gmra.mxu0 %v4442
    %v7680 = vpop.f32.mrf.mxu0
    %v7681 = vadd.f32 %v7638, %v7680
    %v7682 = vpop.f32.mrf.mxu0
    %v7683 = vadd.f32 %v7640, %v7682
    %v7684 = vpop.f32.mrf.mxu0
    %v7685 = vadd.f32 %v7642, %v7684
    %v7686 = vpop.f32.mrf.mxu0
    %v7687 = vadd.f32 %v7644, %v7686
    %7688 = vdwg.mxu0
    %7689 = vmatprep.subr.bf16.mxu0 %v6977
    %7690 = vmatpush1.bf16.msra.mxu0 %v6976
    %7691 = vmatprep.subr.bf16.mxu0 %v6969
    %7692 = vmatpush1.bf16.msra.mxu0 %v6968
    %7693 = vmatprep.subr.bf16.mxu0 %v6961
    %7694 = vmatpush1.bf16.msra.mxu0 %v6960
    %7695 = vmatprep.subr.bf16.mxu0 %v6953
    %7696 = vmatpush1.bf16.msra.mxu0 %v6952
    %7697 = vmatprep.subr.bf16.mxu0 %v6945
    %7698 = vmatpush1.bf16.msra.mxu0 %v6944
    %7699 = vmatprep.subr.bf16.mxu0 %v6937
    %7700 = vmatpush1.bf16.msra.mxu0 %v6936
    %7701 = vmatprep.subr.bf16.mxu0 %v6929
    %7702 = vmatpush1.bf16.msra.mxu0 %v6928
    %7703 = vmatprep.subr.bf16.mxu0 %v6921
    %7704 = vmatpush1.bf16.msra.mxu0 %v6920
    %7705 = vmatprep.subr.bf16.mxu0 %v7041
    %7706 = vmatpush2.bf16.msra.mxu0 %v7040
    %7707 = vmatprep.subr.bf16.mxu0 %v7033
    %7708 = vmatpush2.bf16.msra.mxu0 %v7032
    %7709 = vmatprep.subr.bf16.mxu0 %v7025
    %7710 = vmatpush2.bf16.msra.mxu0 %v7024
    %7711 = vmatprep.subr.bf16.mxu0 %v7017
    %7712 = vmatpush2.bf16.msra.mxu0 %v7016
    %7713 = vmatprep.subr.bf16.mxu0 %v7009
    %7714 = vmatpush2.bf16.msra.mxu0 %v7008
    %7715 = vmatprep.subr.bf16.mxu0 %v7001
    %7716 = vmatpush2.bf16.msra.mxu0 %v7000
    %7717 = vmatprep.subr.bf16.mxu0 %v6993
    %7718 = vmatpush2.bf16.msra.mxu0 %v6992
    %7719 = vmatprep.subr.bf16.mxu0 %v6985
    %7720 = vmatpush2.bf16.msra.mxu0 %v6984
    %7721 = vmatprep.mubr.bf16.mxu0 %v4445
    %7722 = vmatmul.mubr.bf16.gmra.mxu0 %v4444
    %v7723 = vpop.f32.mrf.mxu0
    %v7724 = vadd.f32 %v7681, %v7723
    %v7725 = vpop.f32.mrf.mxu0
    %v7726 = vadd.f32 %v7683, %v7725
    %v7727 = vpop.f32.mrf.mxu0
    %v7728 = vadd.f32 %v7685, %v7727
    %v7729 = vpop.f32.mrf.mxu0
    %v7730 = vadd.f32 %v7687, %v7729
    %7731 = vdwg.mxu0
    %7732 = vmatprep.subr.bf16.mxu0 %v6595
    %7733 = vmatpush1.bf16.msra.mxu0 %v6594
    %7734 = vmatprep.subr.bf16.mxu0 %v6587
    %7735 = vmatpush1.bf16.msra.mxu0 %v6586
    %7736 = vmatprep.subr.bf16.mxu0 %v6579
    %7737 = vmatpush1.bf16.msra.mxu0 %v6578
    %7738 = vmatprep.subr.bf16.mxu0 %v6571
    %7739 = vmatpush1.bf16.msra.mxu0 %v6570
    %7740 = vmatprep.subr.bf16.mxu0 %v6563
    %7741 = vmatpush1.bf16.msra.mxu0 %v6562
    %7742 = vmatprep.subr.bf16.mxu0 %v6555
    %7743 = vmatpush1.bf16.msra.mxu0 %v6554
    %7744 = vmatprep.subr.bf16.mxu0 %v6547
    %7745 = vmatpush1.bf16.msra.mxu0 %v6546
    %7746 = vmatprep.subr.bf16.mxu0 %v6539
    %7747 = vmatpush1.bf16.msra.mxu0 %v6538
    %7748 = vmatprep.subr.bf16.mxu0 %v6659
    %7749 = vmatpush2.bf16.msra.mxu0 %v6658
    %7750 = vmatprep.subr.bf16.mxu0 %v6651
    %7751 = vmatpush2.bf16.msra.mxu0 %v6650
    %7752 = vmatprep.subr.bf16.mxu0 %v6643
    %7753 = vmatpush2.bf16.msra.mxu0 %v6642
    %7754 = vmatprep.subr.bf16.mxu0 %v6635
    %7755 = vmatpush2.bf16.msra.mxu0 %v6634
    %7756 = vmatprep.subr.bf16.mxu0 %v6627
    %7757 = vmatpush2.bf16.msra.mxu0 %v6626
    %7758 = vmatprep.subr.bf16.mxu0 %v6619
    %7759 = vmatpush2.bf16.msra.mxu0 %v6618
    %7760 = vmatprep.subr.bf16.mxu0 %v6611
    %7761 = vmatpush2.bf16.msra.mxu0 %v6610
    %7762 = vmatprep.subr.bf16.mxu0 %v6603
    %7763 = vmatpush2.bf16.msra.mxu0 %v6602
    %7764 = vmatprep.mubr.bf16.mxu0 %v4439
    %7765 = vmatmul.mubr.bf16.gmra.mxu0 %v4438
    %v7766 = vpop.f32.mrf.mxu0
    %v7767 = vadd.f32 %v4971, %v7766
    %v7768 = vpop.f32.mrf.mxu0
    %v7769 = vadd.f32 %v4975, %v7768
    %v7770 = vpop.f32.mrf.mxu0
    %v7771 = vadd.f32 %v4971, %v7770
    %v7772 = vpop.f32.mrf.mxu0
    %v7773 = vadd.f32 %v4975, %v7772
    %7774 = vdwg.mxu0
    %7775 = vmatprep.subr.bf16.mxu0 %v6723
    %7776 = vmatpush1.bf16.msra.mxu0 %v6722
    %7777 = vmatprep.subr.bf16.mxu0 %v6715
    %7778 = vmatpush1.bf16.msra.mxu0 %v6714
    %7779 = vmatprep.subr.bf16.mxu0 %v6707
    %7780 = vmatpush1.bf16.msra.mxu0 %v6706
    %7781 = vmatprep.subr.bf16.mxu0 %v6699
    %7782 = vmatpush1.bf16.msra.mxu0 %v6698
    %7783 = vmatprep.subr.bf16.mxu0 %v6691
    %7784 = vmatpush1.bf16.msra.mxu0 %v6690
    %7785 = vmatprep.subr.bf16.mxu0 %v6683
    %7786 = vmatpush1.bf16.msra.mxu0 %v6682
    %7787 = vmatprep.subr.bf16.mxu0 %v6675
    %7788 = vmatpush1.bf16.msra.mxu0 %v6674
    %7789 = vmatprep.subr.bf16.mxu0 %v6667
    %7790 = vmatpush1.bf16.msra.mxu0 %v6666
    %7791 = vmatprep.subr.bf16.mxu0 %v6787
    %7792 = vmatpush2.bf16.msra.mxu0 %v6786
    %7793 = vmatprep.subr.bf16.mxu0 %v6779
    %7794 = vmatpush2.bf16.msra.mxu0 %v6778
    %7795 = vmatprep.subr.bf16.mxu0 %v6771
    %7796 = vmatpush2.bf16.msra.mxu0 %v6770
    %7797 = vmatprep.subr.bf16.mxu0 %v6763
    %7798 = vmatpush2.bf16.msra.mxu0 %v6762
    %7799 = vmatprep.subr.bf16.mxu0 %v6755
    %7800 = vmatpush2.bf16.msra.mxu0 %v6754
    %7801 = vmatprep.subr.bf16.mxu0 %v6747
    %7802 = vmatpush2.bf16.msra.mxu0 %v6746
    %7803 = vmatprep.subr.bf16.mxu0 %v6739
    %7804 = vmatpush2.bf16.msra.mxu0 %v6738
    %7805 = vmatprep.subr.bf16.mxu0 %v6731
    %7806 = vmatpush2.bf16.msra.mxu0 %v6730
    %7807 = vmatprep.mubr.bf16.mxu0 %v4441
    %7808 = vmatmul.mubr.bf16.gmra.mxu0 %v4440
    %v7809 = vpop.f32.mrf.mxu0
    %v7810 = vadd.f32 %v7767, %v7809
    %v7811 = vpop.f32.mrf.mxu0
    %v7812 = vadd.f32 %v7769, %v7811
    %v7813 = vpop.f32.mrf.mxu0
    %v7814 = vadd.f32 %v7771, %v7813
    %v7815 = vpop.f32.mrf.mxu0
    %v7816 = vadd.f32 %v7773, %v7815
    %7817 = vdwg.mxu0
    %7818 = vmatprep.subr.bf16.mxu0 %v6851
    %7819 = vmatpush1.bf16.msra.mxu0 %v6850
    %7820 = vmatprep.subr.bf16.mxu0 %v6843
    %7821 = vmatpush1.bf16.msra.mxu0 %v6842
    %7822 = vmatprep.subr.bf16.mxu0 %v6835
    %7823 = vmatpush1.bf16.msra.mxu0 %v6834
    %7824 = vmatprep.subr.bf16.mxu0 %v6827
    %7825 = vmatpush1.bf16.msra.mxu0 %v6826
    %7826 = vmatprep.subr.bf16.mxu0 %v6819
    %7827 = vmatpush1.bf16.msra.mxu0 %v6818
    %7828 = vmatprep.subr.bf16.mxu0 %v6811
    %7829 = vmatpush1.bf16.msra.mxu0 %v6810
    %7830 = vmatprep.subr.bf16.mxu0 %v6803
    %7831 = vmatpush1.bf16.msra.mxu0 %v6802
    %7832 = vmatprep.subr.bf16.mxu0 %v6795
    %7833 = vmatpush1.bf16.msra.mxu0 %v6794
    %7834 = vmatprep.subr.bf16.mxu0 %v6915
    %7835 = vmatpush2.bf16.msra.mxu0 %v6914
    %7836 = vmatprep.subr.bf16.mxu0 %v6907
    %7837 = vmatpush2.bf16.msra.mxu0 %v6906
    %7838 = vmatprep.subr.bf16.mxu0 %v6899
    %7839 = vmatpush2.bf16.msra.mxu0 %v6898
    %7840 = vmatprep.subr.bf16.mxu0 %v6891
    %7841 = vmatpush2.bf16.msra.mxu0 %v6890
    %7842 = vmatprep.subr.bf16.mxu0 %v6883
    %7843 = vmatpush2.bf16.msra.mxu0 %v6882
    %7844 = vmatprep.subr.bf16.mxu0 %v6875
    %7845 = vmatpush2.bf16.msra.mxu0 %v6874
    %7846 = vmatprep.subr.bf16.mxu0 %v6867
    %7847 = vmatpush2.bf16.msra.mxu0 %v6866
    %7848 = vmatprep.subr.bf16.mxu0 %v6859
    %7849 = vmatpush2.bf16.msra.mxu0 %v6858
    %7850 = vmatprep.mubr.bf16.mxu0 %v4443
    %7851 = vmatmul.mubr.bf16.gmra.mxu0 %v4442
    %v7852 = vpop.f32.mrf.mxu0
    %v7853 = vadd.f32 %v7810, %v7852
    %v7854 = vpop.f32.mrf.mxu0
    %v7855 = vadd.f32 %v7812, %v7854
    %v7856 = vpop.f32.mrf.mxu0
    %v7857 = vadd.f32 %v7814, %v7856
    %v7858 = vpop.f32.mrf.mxu0
    %v7859 = vadd.f32 %v7816, %v7858
    %7860 = vdwg.mxu0
    %7861 = vmatprep.subr.bf16.mxu0 %v6979
    %7862 = vmatpush1.bf16.msra.mxu0 %v6978
    %7863 = vmatprep.subr.bf16.mxu0 %v6971
    %7864 = vmatpush1.bf16.msra.mxu0 %v6970
    %7865 = vmatprep.subr.bf16.mxu0 %v6963
    %7866 = vmatpush1.bf16.msra.mxu0 %v6962
    %7867 = vmatprep.subr.bf16.mxu0 %v6955
    %7868 = vmatpush1.bf16.msra.mxu0 %v6954
    %7869 = vmatprep.subr.bf16.mxu0 %v6947
    %7870 = vmatpush1.bf16.msra.mxu0 %v6946
    %7871 = vmatprep.subr.bf16.mxu0 %v6939
    %7872 = vmatpush1.bf16.msra.mxu0 %v6938
    %7873 = vmatprep.subr.bf16.mxu0 %v6931
    %7874 = vmatpush1.bf16.msra.mxu0 %v6930
    %7875 = vmatprep.subr.bf16.mxu0 %v6923
    %7876 = vmatpush1.bf16.msra.mxu0 %v6922
    %7877 = vmatprep.subr.bf16.mxu0 %v7043
    %7878 = vmatpush2.bf16.msra.mxu0 %v7042
    %7879 = vmatprep.subr.bf16.mxu0 %v7035
    %7880 = vmatpush2.bf16.msra.mxu0 %v7034
    %7881 = vmatprep.subr.bf16.mxu0 %v7027
    %7882 = vmatpush2.bf16.msra.mxu0 %v7026
    %7883 = vmatprep.subr.bf16.mxu0 %v7019
    %7884 = vmatpush2.bf16.msra.mxu0 %v7018
    %7885 = vmatprep.subr.bf16.mxu0 %v7011
    %7886 = vmatpush2.bf16.msra.mxu0 %v7010
    %7887 = vmatprep.subr.bf16.mxu0 %v7003
    %7888 = vmatpush2.bf16.msra.mxu0 %v7002
    %7889 = vmatprep.subr.bf16.mxu0 %v6995
    %7890 = vmatpush2.bf16.msra.mxu0 %v6994
    %7891 = vmatprep.subr.bf16.mxu0 %v6987
    %7892 = vmatpush2.bf16.msra.mxu0 %v6986
    %7893 = vmatprep.mubr.bf16.mxu0 %v4445
    %7894 = vmatmul.mubr.bf16.gmra.mxu0 %v4444
    %v7895 = vpop.f32.mrf.mxu0
    %v7896 = vadd.f32 %v7853, %v7895
    %v7897 = vpop.f32.mrf.mxu0
    %v7898 = vadd.f32 %v7855, %v7897
    %v7899 = vpop.f32.mrf.mxu0
    %v7900 = vadd.f32 %v7857, %v7899
    %v7901 = vpop.f32.mrf.mxu0
    %v7902 = vadd.f32 %v7859, %v7901
    %7903 = vdwg.mxu0
    %7904 = vmatprep.subr.bf16.mxu0 %v6597
    %7905 = vmatpush1.bf16.msra.mxu0 %v6596
    %7906 = vmatprep.subr.bf16.mxu0 %v6589
    %7907 = vmatpush1.bf16.msra.mxu0 %v6588
    %7908 = vmatprep.subr.bf16.mxu0 %v6581
    %7909 = vmatpush1.bf16.msra.mxu0 %v6580
    %7910 = vmatprep.subr.bf16.mxu0 %v6573
    %7911 = vmatpush1.bf16.msra.mxu0 %v6572
    %7912 = vmatprep.subr.bf16.mxu0 %v6565
    %7913 = vmatpush1.bf16.msra.mxu0 %v6564
    %7914 = vmatprep.subr.bf16.mxu0 %v6557
    %7915 = vmatpush1.bf16.msra.mxu0 %v6556
    %7916 = vmatprep.subr.bf16.mxu0 %v6549
    %7917 = vmatpush1.bf16.msra.mxu0 %v6548
    %7918 = vmatprep.subr.bf16.mxu0 %v6541
    %7919 = vmatpush1.bf16.msra.mxu0 %v6540
    %7920 = vmatprep.subr.bf16.mxu0 %v6661
    %7921 = vmatpush2.bf16.msra.mxu0 %v6660
    %7922 = vmatprep.subr.bf16.mxu0 %v6653
    %7923 = vmatpush2.bf16.msra.mxu0 %v6652
    %7924 = vmatprep.subr.bf16.mxu0 %v6645
    %7925 = vmatpush2.bf16.msra.mxu0 %v6644
    %7926 = vmatprep.subr.bf16.mxu0 %v6637
    %7927 = vmatpush2.bf16.msra.mxu0 %v6636
    %7928 = vmatprep.subr.bf16.mxu0 %v6629
    %7929 = vmatpush2.bf16.msra.mxu0 %v6628
    %7930 = vmatprep.subr.bf16.mxu0 %v6621
    %7931 = vmatpush2.bf16.msra.mxu0 %v6620
    %7932 = vmatprep.subr.bf16.mxu0 %v6613
    %7933 = vmatpush2.bf16.msra.mxu0 %v6612
    %7934 = vmatprep.subr.bf16.mxu0 %v6605
    %7935 = vmatpush2.bf16.msra.mxu0 %v6604
    %7936 = vmatprep.mubr.bf16.mxu0 %v4439
    %7937 = vmatmul.mubr.bf16.gmra.mxu0 %v4438
    %v7938 = vpop.f32.mrf.mxu0
    %v7939 = vadd.f32 %v4979, %v7938
    %v7940 = vpop.f32.mrf.mxu0
    %v7941 = vadd.f32 %v4983, %v7940
    %v7942 = vpop.f32.mrf.mxu0
    %v7943 = vadd.f32 %v4979, %v7942
    %v7944 = vpop.f32.mrf.mxu0
    %v7945 = vadd.f32 %v4983, %v7944
    %7946 = vdwg.mxu0
    %7947 = vmatprep.subr.bf16.mxu0 %v6725
    %7948 = vmatpush1.bf16.msra.mxu0 %v6724
    %7949 = vmatprep.subr.bf16.mxu0 %v6717
    %7950 = vmatpush1.bf16.msra.mxu0 %v6716
    %7951 = vmatprep.subr.bf16.mxu0 %v6709
    %7952 = vmatpush1.bf16.msra.mxu0 %v6708
    %7953 = vmatprep.subr.bf16.mxu0 %v6701
    %7954 = vmatpush1.bf16.msra.mxu0 %v6700
    %7955 = vmatprep.subr.bf16.mxu0 %v6693
    %7956 = vmatpush1.bf16.msra.mxu0 %v6692
    %7957 = vmatprep.subr.bf16.mxu0 %v6685
    %7958 = vmatpush1.bf16.msra.mxu0 %v6684
    %7959 = vmatprep.subr.bf16.mxu0 %v6677
    %7960 = vmatpush1.bf16.msra.mxu0 %v6676
    %7961 = vmatprep.subr.bf16.mxu0 %v6669
    %7962 = vmatpush1.bf16.msra.mxu0 %v6668
    %7963 = vmatprep.subr.bf16.mxu0 %v6789
    %7964 = vmatpush2.bf16.msra.mxu0 %v6788
    %7965 = vmatprep.subr.bf16.mxu0 %v6781
    %7966 = vmatpush2.bf16.msra.mxu0 %v6780
    %7967 = vmatprep.subr.bf16.mxu0 %v6773
    %7968 = vmatpush2.bf16.msra.mxu0 %v6772
    %7969 = vmatprep.subr.bf16.mxu0 %v6765
    %7970 = vmatpush2.bf16.msra.mxu0 %v6764
    %7971 = vmatprep.subr.bf16.mxu0 %v6757
    %7972 = vmatpush2.bf16.msra.mxu0 %v6756
    %7973 = vmatprep.subr.bf16.mxu0 %v6749
    %7974 = vmatpush2.bf16.msra.mxu0 %v6748
    %7975 = vmatprep.subr.bf16.mxu0 %v6741
    %7976 = vmatpush2.bf16.msra.mxu0 %v6740
    %7977 = vmatprep.subr.bf16.mxu0 %v6733
    %7978 = vmatpush2.bf16.msra.mxu0 %v6732
    %7979 = vmatprep.mubr.bf16.mxu0 %v4441
    %7980 = vmatmul.mubr.bf16.gmra.mxu0 %v4440
    %v7981 = vpop.f32.mrf.mxu0
    %v7982 = vadd.f32 %v7939, %v7981
    %v7983 = vpop.f32.mrf.mxu0
    %v7984 = vadd.f32 %v7941, %v7983
    %v7985 = vpop.f32.mrf.mxu0
    %v7986 = vadd.f32 %v7943, %v7985
    %v7987 = vpop.f32.mrf.mxu0
    %v7988 = vadd.f32 %v7945, %v7987
    %7989 = vdwg.mxu0
    %7990 = vmatprep.subr.bf16.mxu0 %v6853
    %7991 = vmatpush1.bf16.msra.mxu0 %v6852
    %7992 = vmatprep.subr.bf16.mxu0 %v6845
    %7993 = vmatpush1.bf16.msra.mxu0 %v6844
    %7994 = vmatprep.subr.bf16.mxu0 %v6837
    %7995 = vmatpush1.bf16.msra.mxu0 %v6836
    %7996 = vmatprep.subr.bf16.mxu0 %v6829
    %7997 = vmatpush1.bf16.msra.mxu0 %v6828
    %7998 = vmatprep.subr.bf16.mxu0 %v6821
    %7999 = vmatpush1.bf16.msra.mxu0 %v6820
    %8000 = vmatprep.subr.bf16.mxu0 %v6813
    %8001 = vmatpush1.bf16.msra.mxu0 %v6812
    %8002 = vmatprep.subr.bf16.mxu0 %v6805
    %8003 = vmatpush1.bf16.msra.mxu0 %v6804
    %8004 = vmatprep.subr.bf16.mxu0 %v6797
    %8005 = vmatpush1.bf16.msra.mxu0 %v6796
    %8006 = vmatprep.subr.bf16.mxu0 %v6917
    %8007 = vmatpush2.bf16.msra.mxu0 %v6916
    %8008 = vmatprep.subr.bf16.mxu0 %v6909
    %8009 = vmatpush2.bf16.msra.mxu0 %v6908
    %8010 = vmatprep.subr.bf16.mxu0 %v6901
    %8011 = vmatpush2.bf16.msra.mxu0 %v6900
    %8012 = vmatprep.subr.bf16.mxu0 %v6893
    %8013 = vmatpush2.bf16.msra.mxu0 %v6892
    %8014 = vmatprep.subr.bf16.mxu0 %v6885
    %8015 = vmatpush2.bf16.msra.mxu0 %v6884
    %8016 = vmatprep.subr.bf16.mxu0 %v6877
    %8017 = vmatpush2.bf16.msra.mxu0 %v6876
    %8018 = vmatprep.subr.bf16.mxu0 %v6869
    %8019 = vmatpush2.bf16.msra.mxu0 %v6868
    %8020 = vmatprep.subr.bf16.mxu0 %v6861
    %8021 = vmatpush2.bf16.msra.mxu0 %v6860
    %8022 = vmatprep.mubr.bf16.mxu0 %v4443
    %8023 = vmatmul.mubr.bf16.gmra.mxu0 %v4442
    %v8024 = vpop.f32.mrf.mxu0
    %v8025 = vadd.f32 %v7982, %v8024
    %v8026 = vpop.f32.mrf.mxu0
    %v8027 = vadd.f32 %v7984, %v8026
    %v8028 = vpop.f32.mrf.mxu0
    %v8029 = vadd.f32 %v7986, %v8028
    %v8030 = vpop.f32.mrf.mxu0
    %v8031 = vadd.f32 %v7988, %v8030
    %8032 = vdwg.mxu0
    %8033 = vmatprep.subr.bf16.mxu0 %v6981
    %8034 = vmatpush1.bf16.msra.mxu0 %v6980
    %8035 = vmatprep.subr.bf16.mxu0 %v6973
    %8036 = vmatpush1.bf16.msra.mxu0 %v6972
    %8037 = vmatprep.subr.bf16.mxu0 %v6965
    %8038 = vmatpush1.bf16.msra.mxu0 %v6964
    %8039 = vmatprep.subr.bf16.mxu0 %v6957
    %8040 = vmatpush1.bf16.msra.mxu0 %v6956
    %8041 = vmatprep.subr.bf16.mxu0 %v6949
    %8042 = vmatpush1.bf16.msra.mxu0 %v6948
    %8043 = vmatprep.subr.bf16.mxu0 %v6941
    %8044 = vmatpush1.bf16.msra.mxu0 %v6940
    %8045 = vmatprep.subr.bf16.mxu0 %v6933
    %8046 = vmatpush1.bf16.msra.mxu0 %v6932
    %8047 = vmatprep.subr.bf16.mxu0 %v6925
    %8048 = vmatpush1.bf16.msra.mxu0 %v6924
    %8049 = vmatprep.subr.bf16.mxu0 %v7045
    %8050 = vmatpush2.bf16.msra.mxu0 %v7044
    %8051 = vmatprep.subr.bf16.mxu0 %v7037
    %8052 = vmatpush2.bf16.msra.mxu0 %v7036
    %8053 = vmatprep.subr.bf16.mxu0 %v7029
    %8054 = vmatpush2.bf16.msra.mxu0 %v7028
    %8055 = vmatprep.subr.bf16.mxu0 %v7021
    %8056 = vmatpush2.bf16.msra.mxu0 %v7020
    %8057 = vmatprep.subr.bf16.mxu0 %v7013
    %8058 = vmatpush2.bf16.msra.mxu0 %v7012
    %8059 = vmatprep.subr.bf16.mxu0 %v7005
    %8060 = vmatpush2.bf16.msra.mxu0 %v7004
    %8061 = vmatprep.subr.bf16.mxu0 %v6997
    %8062 = vmatpush2.bf16.msra.mxu0 %v6996
    %8063 = vmatprep.subr.bf16.mxu0 %v6989
    %8064 = vmatpush2.bf16.msra.mxu0 %v6988
    %8065 = vmatprep.mubr.bf16.mxu0 %v4445
    %8066 = vmatmul.mubr.bf16.gmra.mxu0 %v4444
    %v8067 = vpop.f32.mrf.mxu0
    %v8068 = vadd.f32 %v8025, %v8067
    %v8069 = vpop.f32.mrf.mxu0
    %v8070 = vadd.f32 %v8027, %v8069
    %v8071 = vpop.f32.mrf.mxu0
    %v8072 = vadd.f32 %v8029, %v8071
    %v8073 = vpop.f32.mrf.mxu0
    %v8074 = vadd.f32 %v8031, %v8073
    %8075 = vdwg.mxu0
    %8076 = vmatprep.subr.bf16.mxu0 %v6599
    %8077 = vmatpush1.bf16.msra.mxu0 %v6598
    %8078 = vmatprep.subr.bf16.mxu0 %v6591
    %8079 = vmatpush1.bf16.msra.mxu0 %v6590
    %8080 = vmatprep.subr.bf16.mxu0 %v6583
    %8081 = vmatpush1.bf16.msra.mxu0 %v6582
    %8082 = vmatprep.subr.bf16.mxu0 %v6575
    %8083 = vmatpush1.bf16.msra.mxu0 %v6574
    %8084 = vmatprep.subr.bf16.mxu0 %v6567
    %8085 = vmatpush1.bf16.msra.mxu0 %v6566
    %8086 = vmatprep.subr.bf16.mxu0 %v6559
    %8087 = vmatpush1.bf16.msra.mxu0 %v6558
    %8088 = vmatprep.subr.bf16.mxu0 %v6551
    %8089 = vmatpush1.bf16.msra.mxu0 %v6550
    %8090 = vmatprep.subr.bf16.mxu0 %v6543
    %8091 = vmatpush1.bf16.msra.mxu0 %v6542
    %8092 = vmatprep.subr.bf16.mxu0 %v6663
    %8093 = vmatpush2.bf16.msra.mxu0 %v6662
    %8094 = vmatprep.subr.bf16.mxu0 %v6655
    %8095 = vmatpush2.bf16.msra.mxu0 %v6654
    %8096 = vmatprep.subr.bf16.mxu0 %v6647
    %8097 = vmatpush2.bf16.msra.mxu0 %v6646
    %8098 = vmatprep.subr.bf16.mxu0 %v6639
    %8099 = vmatpush2.bf16.msra.mxu0 %v6638
    %8100 = vmatprep.subr.bf16.mxu0 %v6631
    %8101 = vmatpush2.bf16.msra.mxu0 %v6630
    %8102 = vmatprep.subr.bf16.mxu0 %v6623
    %8103 = vmatpush2.bf16.msra.mxu0 %v6622
    %8104 = vmatprep.subr.bf16.mxu0 %v6615
    %8105 = vmatpush2.bf16.msra.mxu0 %v6614
    %8106 = vmatprep.subr.bf16.mxu0 %v6607
    %8107 = vmatpush2.bf16.msra.mxu0 %v6606
    %8108 = vmatprep.mubr.bf16.mxu0 %v4439
    %8109 = vmatmul.mubr.bf16.gmra.mxu0 %v4438
    %v8110 = vpop.f32.mrf.mxu0
    %v8111 = vadd.f32 %v4987, %v8110
    %v8112 = vpop.f32.mrf.mxu0
    %v8113 = vadd.f32 %v4991, %v8112
    %v8114 = vpop.f32.mrf.mxu0
    %v8115 = vadd.f32 %v4987, %v8114
    %v8116 = vpop.f32.mrf.mxu0
    %v8117 = vadd.f32 %v4991, %v8116
    %8118 = vdwg.mxu0
    %8119 = vmatprep.subr.bf16.mxu0 %v6727
    %8120 = vmatpush1.bf16.msra.mxu0 %v6726
    %8121 = vmatprep.subr.bf16.mxu0 %v6719
    %8122 = vmatpush1.bf16.msra.mxu0 %v6718
    %8123 = vmatprep.subr.bf16.mxu0 %v6711
    %8124 = vmatpush1.bf16.msra.mxu0 %v6710
    %8125 = vmatprep.subr.bf16.mxu0 %v6703
    %8126 = vmatpush1.bf16.msra.mxu0 %v6702
    %8127 = vmatprep.subr.bf16.mxu0 %v6695
    %8128 = vmatpush1.bf16.msra.mxu0 %v6694
    %8129 = vmatprep.subr.bf16.mxu0 %v6687
    %8130 = vmatpush1.bf16.msra.mxu0 %v6686
    %8131 = vmatprep.subr.bf16.mxu0 %v6679
    %8132 = vmatpush1.bf16.msra.mxu0 %v6678
    %8133 = vmatprep.subr.bf16.mxu0 %v6671
    %8134 = vmatpush1.bf16.msra.mxu0 %v6670
    %8135 = vmatprep.subr.bf16.mxu0 %v6791
    %8136 = vmatpush2.bf16.msra.mxu0 %v6790
    %8137 = vmatprep.subr.bf16.mxu0 %v6783
    %8138 = vmatpush2.bf16.msra.mxu0 %v6782
    %8139 = vmatprep.subr.bf16.mxu0 %v6775
    %8140 = vmatpush2.bf16.msra.mxu0 %v6774
    %8141 = vmatprep.subr.bf16.mxu0 %v6767
    %8142 = vmatpush2.bf16.msra.mxu0 %v6766
    %8143 = vmatprep.subr.bf16.mxu0 %v6759
    %8144 = vmatpush2.bf16.msra.mxu0 %v6758
    %8145 = vmatprep.subr.bf16.mxu0 %v6751
    %8146 = vmatpush2.bf16.msra.mxu0 %v6750
    %8147 = vmatprep.subr.bf16.mxu0 %v6743
    %8148 = vmatpush2.bf16.msra.mxu0 %v6742
    %8149 = vmatprep.subr.bf16.mxu0 %v6735
    %8150 = vmatpush2.bf16.msra.mxu0 %v6734
    %8151 = vmatprep.mubr.bf16.mxu0 %v4441
    %8152 = vmatmul.mubr.bf16.gmra.mxu0 %v4440
    %v8153 = vpop.f32.mrf.mxu0
    %v8154 = vadd.f32 %v8111, %v8153
    %v8155 = vpop.f32.mrf.mxu0
    %v8156 = vadd.f32 %v8113, %v8155
    %v8157 = vpop.f32.mrf.mxu0
    %v8158 = vadd.f32 %v8115, %v8157
    %v8159 = vpop.f32.mrf.mxu0
    %v8160 = vadd.f32 %v8117, %v8159
    %8161 = vdwg.mxu0
    %8162 = vmatprep.subr.bf16.mxu0 %v6855
    %8163 = vmatpush1.bf16.msra.mxu0 %v6854
    %8164 = vmatprep.subr.bf16.mxu0 %v6847
    %8165 = vmatpush1.bf16.msra.mxu0 %v6846
    %8166 = vmatprep.subr.bf16.mxu0 %v6839
    %8167 = vmatpush1.bf16.msra.mxu0 %v6838
    %8168 = vmatprep.subr.bf16.mxu0 %v6831
    %8169 = vmatpush1.bf16.msra.mxu0 %v6830
    %8170 = vmatprep.subr.bf16.mxu0 %v6823
    %8171 = vmatpush1.bf16.msra.mxu0 %v6822
    %8172 = vmatprep.subr.bf16.mxu0 %v6815
    %8173 = vmatpush1.bf16.msra.mxu0 %v6814
    %8174 = vmatprep.subr.bf16.mxu0 %v6807
    %8175 = vmatpush1.bf16.msra.mxu0 %v6806
    %8176 = vmatprep.subr.bf16.mxu0 %v6799
    %8177 = vmatpush1.bf16.msra.mxu0 %v6798
    %8178 = vmatprep.subr.bf16.mxu0 %v6919
    %8179 = vmatpush2.bf16.msra.mxu0 %v6918
    %8180 = vmatprep.subr.bf16.mxu0 %v6911
    %8181 = vmatpush2.bf16.msra.mxu0 %v6910
    %8182 = vmatprep.subr.bf16.mxu0 %v6903
    %8183 = vmatpush2.bf16.msra.mxu0 %v6902
    %8184 = vmatprep.subr.bf16.mxu0 %v6895
    %8185 = vmatpush2.bf16.msra.mxu0 %v6894
    %8186 = vmatprep.subr.bf16.mxu0 %v6887
    %8187 = vmatpush2.bf16.msra.mxu0 %v6886
    %8188 = vmatprep.subr.bf16.mxu0 %v6879
    %8189 = vmatpush2.bf16.msra.mxu0 %v6878
    %8190 = vmatprep.subr.bf16.mxu0 %v6871
    %8191 = vmatpush2.bf16.msra.mxu0 %v6870
    %8192 = vmatprep.subr.bf16.mxu0 %v6863
    %8193 = vmatpush2.bf16.msra.mxu0 %v6862
    %8194 = vmatprep.mubr.bf16.mxu0 %v4443
    %8195 = vmatmul.mubr.bf16.gmra.mxu0 %v4442
    %v8196 = vpop.f32.mrf.mxu0
    %v8197 = vadd.f32 %v8154, %v8196
    %v8198 = vpop.f32.mrf.mxu0
    %v8199 = vadd.f32 %v8156, %v8198
    %v8200 = vpop.f32.mrf.mxu0
    %v8201 = vadd.f32 %v8158, %v8200
    %v8202 = vpop.f32.mrf.mxu0
    %v8203 = vadd.f32 %v8160, %v8202
    %8204 = vdwg.mxu0
    %8205 = vmatprep.subr.bf16.mxu0 %v6983
    %8206 = vmatpush1.bf16.msra.mxu0 %v6982
    %8207 = vmatprep.subr.bf16.mxu0 %v6975
    %8208 = vmatpush1.bf16.msra.mxu0 %v6974
    %8209 = vmatprep.subr.bf16.mxu0 %v6967
    %8210 = vmatpush1.bf16.msra.mxu0 %v6966
    %8211 = vmatprep.subr.bf16.mxu0 %v6959
    %8212 = vmatpush1.bf16.msra.mxu0 %v6958
    %8213 = vmatprep.subr.bf16.mxu0 %v6951
    %8214 = vmatpush1.bf16.msra.mxu0 %v6950
    %8215 = vmatprep.subr.bf16.mxu0 %v6943
    %8216 = vmatpush1.bf16.msra.mxu0 %v6942
    %8217 = vmatprep.subr.bf16.mxu0 %v6935
    %8218 = vmatpush1.bf16.msra.mxu0 %v6934
    %8219 = vmatprep.subr.bf16.mxu0 %v6927
    %8220 = vmatpush1.bf16.msra.mxu0 %v6926
    %8221 = vmatprep.subr.bf16.mxu0 %v7047
    %8222 = vmatpush2.bf16.msra.mxu0 %v7046
    %8223 = vmatprep.subr.bf16.mxu0 %v7039
    %8224 = vmatpush2.bf16.msra.mxu0 %v7038
    %8225 = vmatprep.subr.bf16.mxu0 %v7031
    %8226 = vmatpush2.bf16.msra.mxu0 %v7030
    %8227 = vmatprep.subr.bf16.mxu0 %v7023
    %8228 = vmatpush2.bf16.msra.mxu0 %v7022
    %8229 = vmatprep.subr.bf16.mxu0 %v7015
    %8230 = vmatpush2.bf16.msra.mxu0 %v7014
    %8231 = vmatprep.subr.bf16.mxu0 %v7007
    %8232 = vmatpush2.bf16.msra.mxu0 %v7006
    %8233 = vmatprep.subr.bf16.mxu0 %v6999
    %8234 = vmatpush2.bf16.msra.mxu0 %v6998
    %8235 = vmatprep.subr.bf16.mxu0 %v6991
    %8236 = vmatpush2.bf16.msra.mxu0 %v6990
    %8237 = vmatprep.mubr.bf16.mxu0 %v4445
    %8238 = vmatmul.mubr.bf16.gmra.mxu0 %v4444
    %v8239 = vpop.f32.mrf.mxu0
    %v8240 = vadd.f32 %v8197, %v8239
    %v8241 = vpop.f32.mrf.mxu0
    %v8242 = vadd.f32 %v8199, %v8241
    %v8243 = vpop.f32.mrf.mxu0
    %v8244 = vadd.f32 %v8201, %v8243
    %v8245 = vpop.f32.mrf.mxu0
    %v8246 = vadd.f32 %v8203, %v8245
    %8247 = vdwg.mxu0
    %v8248 = vmul.f32 %v7724, 0.01
    %v8249 = vmul.f32 %v7726, 0.01
    %v8250 = vmul.f32 %v7896, 0.01
    %v8251 = vmul.f32 %v7898, 0.01
    %v8252 = vmul.f32 %v8068, 0.01
    %v8253 = vmul.f32 %v8070, 0.01
    %v8254 = vmul.f32 %v8240, 0.01
    %v8255 = vmul.f32 %v8242, 0.01
    %v8256 = vmul.f32 %v7728, 0.01
    %v8257 = vmul.f32 %v7730, 0.01
    %v8258 = vmul.f32 %v7900, 0.01
    %v8259 = vmul.f32 %v7902, 0.01
    %v8260 = vmul.f32 %v8072, 0.01
    %v8261 = vmul.f32 %v8074, 0.01
    %v8262 = vmul.f32 %v8244, 0.01
    %v8263 = vmul.f32 %v8246, 0.01
    %v8264 = vmax.f32 %v7724, %v8248
    %v8265 = vmax.f32 %v7726, %v8249
    %v8266 = vmax.f32 %v7896, %v8250
    %v8267 = vmax.f32 %v7898, %v8251
    %v8268 = vmax.f32 %v8068, %v8252
    %v8269 = vmax.f32 %v8070, %v8253
    %v8270 = vmax.f32 %v8240, %v8254
    %v8271 = vmax.f32 %v8242, %v8255
    %v8272 = vmax.f32 %v7728, %v8256
    %v8273 = vmax.f32 %v7730, %v8257
    %v8274 = vmax.f32 %v7900, %v8258
    %v8275 = vmax.f32 %v7902, %v8259
    %v8276 = vmax.f32 %v8072, %v8260
    %v8277 = vmax.f32 %v8074, %v8261
    %v8278 = vmax.f32 %v8244, %v8262
    %v8279 = vmax.f32 %v8246, %v8263
    %v8280 = vadd.f32 %v8264, %v8265
    %v8281 = vadd.f32 %v8280, %v8266
    %v8282 = vadd.f32 %v8281, %v8267
    %v8283 = vadd.f32 %v8282, %v8268
    %v8284 = vadd.f32 %v8283, %v8269
    %v8285 = vadd.f32 %v8284, %v8270
    %v8286 = vadd.f32 %v8285, %v8271
    %8287 = vadd.xlane.f32.xlu0 %v8286
    %v8288 = vpop.xlane.xlu0 %8287
    %v8289 = vadd.f32 %v8272, %v8273
    %v8290 = vadd.f32 %v8289, %v8274
    %v8291 = vadd.f32 %v8290, %v8275
    %v8292 = vadd.f32 %v8291, %v8276
    %v8293 = vadd.f32 %v8292, %v8277
    %v8294 = vadd.f32 %v8293, %v8278
    %v8295 = vadd.f32 %v8294, %v8279
    %8296 = vadd.xlane.f32.xlu0 %v8295
    %v8297 = vpop.xlane.xlu0 %8296
    %v8298 = vmul.f32 %v8288, %v515
    %v8299 = vmul.f32 %v8297, %v515
    %v8300 = vmul.f32 %v8264, %v8264
    %v8301 = vmul.f32 %v8265, %v8265
    %v8302 = vmul.f32 %v8266, %v8266
    %v8303 = vmul.f32 %v8267, %v8267
    %v8304 = vmul.f32 %v8268, %v8268
    %v8305 = vmul.f32 %v8269, %v8269
    %v8306 = vmul.f32 %v8270, %v8270
    %v8307 = vmul.f32 %v8271, %v8271
    %v8308 = vmul.f32 %v8272, %v8272
    %v8309 = vmul.f32 %v8273, %v8273
    %v8310 = vmul.f32 %v8274, %v8274
    %v8311 = vmul.f32 %v8275, %v8275
    %v8312 = vmul.f32 %v8276, %v8276
    %v8313 = vmul.f32 %v8277, %v8277
    %v8314 = vmul.f32 %v8278, %v8278
    %v8315 = vmul.f32 %v8279, %v8279
    %v8316 = vadd.f32 %v8300, %v8301
    %v8317 = vadd.f32 %v8316, %v8302
    %v8318 = vadd.f32 %v8317, %v8303
    %v8319 = vadd.f32 %v8318, %v8304
    %v8320 = vadd.f32 %v8319, %v8305
    %v8321 = vadd.f32 %v8320, %v8306
    %v8322 = vadd.f32 %v8321, %v8307
    %8323 = vadd.xlane.f32.xlu0 %v8322
    %v8324 = vpop.xlane.xlu0 %8323
    %v8325 = vadd.f32 %v8308, %v8309
    %v8326 = vadd.f32 %v8325, %v8310
    %v8327 = vadd.f32 %v8326, %v8311
    %v8328 = vadd.f32 %v8327, %v8312
    %v8329 = vadd.f32 %v8328, %v8313
    %v8330 = vadd.f32 %v8329, %v8314
    %v8331 = vadd.f32 %v8330, %v8315
    %8332 = vadd.xlane.f32.xlu0 %v8331
    %v8333 = vpop.xlane.xlu0 %8332
    %v8334 = vmul.f32 %v8324, %v515
    %v8335 = vmul.f32 %v8333, %v515
    %v8336 = vmul.f32 %v8298, %v8298
    %v8337 = vmul.f32 %v8299, %v8299
    %v8338 = vsub.f32 %v8334, %v8336
    %v8339 = vsub.f32 %v8335, %v8337
    %v8340 = vmax.f32 %v8338, 0.0
    %v8341 = vmax.f32 %v8339, 0.0
    %v8342 = vsub.f32 %v8264, %v8298
    %v8343 = vsub.f32 %v8265, %v8298
    %v8344 = vsub.f32 %v8266, %v8298
    %v8345 = vsub.f32 %v8267, %v8298
    %v8346 = vsub.f32 %v8268, %v8298
    %v8347 = vsub.f32 %v8269, %v8298
    %v8348 = vsub.f32 %v8270, %v8298
    %v8349 = vsub.f32 %v8271, %v8298
    %v8350 = vsub.f32 %v8272, %v8299
    %v8351 = vsub.f32 %v8273, %v8299
    %v8352 = vsub.f32 %v8274, %v8299
    %v8353 = vsub.f32 %v8275, %v8299
    %v8354 = vsub.f32 %v8276, %v8299
    %v8355 = vsub.f32 %v8277, %v8299
    %v8356 = vsub.f32 %v8278, %v8299
    %v8357 = vsub.f32 %v8279, %v8299
    %v8358 = vadd.f32 %v8340, 1e-05
    %v8359 = vadd.f32 %v8341, 1e-05
    %v8360 = vrsqrt.pop %v8358
    %v8361 = vrsqrt.pop %v8359
    %v8362 = vmul.f32 %v8342, %v8360
    %v8363 = vmul.f32 %v8343, %v8360
    %v8364 = vmul.f32 %v8344, %v8360
    %v8365 = vmul.f32 %v8345, %v8360
    %v8366 = vmul.f32 %v8346, %v8360
    %v8367 = vmul.f32 %v8347, %v8360
    %v8368 = vmul.f32 %v8348, %v8360
    %v8369 = vmul.f32 %v8349, %v8360
    %v8370 = vmul.f32 %v8350, %v8361
    %v8371 = vmul.f32 %v8351, %v8361
    %v8372 = vmul.f32 %v8352, %v8361
    %v8373 = vmul.f32 %v8353, %v8361
    %v8374 = vmul.f32 %v8354, %v8361
    %v8375 = vmul.f32 %v8355, %v8361
    %v8376 = vmul.f32 %v8356, %v8361
    %v8377 = vmul.f32 %v8357, %v8361
    %v8378 = vpack.c.bf16 %v8370, %v8362
    %v8379 = vpack.c.bf16 %v8371, %v8363
    %v8380 = vpack.c.bf16 %v8372, %v8364
    %v8381 = vpack.c.bf16 %v8373, %v8365
    %v8382 = vpack.c.bf16 %v8374, %v8366
    %v8383 = vpack.c.bf16 %v8375, %v8367
    %v8384 = vpack.c.bf16 %v8376, %v8368
    %v8385 = vpack.c.bf16 %v8377, %v8369
    %v8386 = vld [vmem:[#allocation14] sm:$0xf]
    %v8387 = vld [vmem:[#allocation14 + $0x4] sm:$0xf]
    %v8388 = vld [vmem:[#allocation14 + $0x8] sm:$0xf]
    %v8389 = vld [vmem:[#allocation14 + $0xc] sm:$0xf]
    %v8390 = vld [vmem:[#allocation14 + $0x10] sm:$0xf]
    %v8391 = vld [vmem:[#allocation14 + $0x14] sm:$0xf]
    %v8392 = vld [vmem:[#allocation14 + $0x18] sm:$0xf]
    %v8393 = vld [vmem:[#allocation14 + $0x1c] sm:$0xf]
    %v8394 = vld [vmem:[#allocation14 + $0x20] sm:$0xf]
    %v8395 = vld [vmem:[#allocation14 + $0x24] sm:$0xf]
    %v8396 = vld [vmem:[#allocation14 + $0x28] sm:$0xf]
    %v8397 = vld [vmem:[#allocation14 + $0x2c] sm:$0xf]
    %v8398 = vld [vmem:[#allocation14 + $0x30] sm:$0xf]
    %v8399 = vld [vmem:[#allocation14 + $0x34] sm:$0xf]
    %v8400 = vld [vmem:[#allocation14 + $0x38] sm:$0xf]
    %v8401 = vld [vmem:[#allocation14 + $0x3c] sm:$0xf]
    %v8402 = vld [vmem:[#allocation14 + $0x40] sm:$0xf]
    %v8403 = vld [vmem:[#allocation14 + $0x44] sm:$0xf]
    %v8404 = vld [vmem:[#allocation14 + $0x48] sm:$0xf]
    %v8405 = vld [vmem:[#allocation14 + $0x4c] sm:$0xf]
    %v8406 = vld [vmem:[#allocation14 + $0x50] sm:$0xf]
    %v8407 = vld [vmem:[#allocation14 + $0x54] sm:$0xf]
    %v8408 = vld [vmem:[#allocation14 + $0x58] sm:$0xf]
    %v8409 = vld [vmem:[#allocation14 + $0x5c] sm:$0xf]
    %v8410 = vld [vmem:[#allocation14 + $0x60] sm:$0xf]
    %v8411 = vld [vmem:[#allocation14 + $0x64] sm:$0xf]
    %v8412 = vld [vmem:[#allocation14 + $0x68] sm:$0xf]
    %v8413 = vld [vmem:[#allocation14 + $0x6c] sm:$0xf]
    %v8414 = vld [vmem:[#allocation14 + $0x70] sm:$0xf]
    %v8415 = vld [vmem:[#allocation14 + $0x74] sm:$0xf]
    %v8416 = vld [vmem:[#allocation14 + $0x78] sm:$0xf]
    %v8417 = vld [vmem:[#allocation14 + $0x7c] sm:$0xf]
    %v8418 = vld [vmem:[#allocation14 + $0x80] sm:$0xf]
    %v8419 = vld [vmem:[#allocation14 + $0x84] sm:$0xf]
    %v8420 = vld [vmem:[#allocation14 + $0x88] sm:$0xf]
    %v8421 = vld [vmem:[#allocation14 + $0x8c] sm:$0xf]
    %v8422 = vld [vmem:[#allocation14 + $0x90] sm:$0xf]
    %v8423 = vld [vmem:[#allocation14 + $0x94] sm:$0xf]
    %v8424 = vld [vmem:[#allocation14 + $0x98] sm:$0xf]
    %v8425 = vld [vmem:[#allocation14 + $0x9c] sm:$0xf]
    %v8426 = vld [vmem:[#allocation14 + $0xa0] sm:$0xf]
    %v8427 = vld [vmem:[#allocation14 + $0xa4] sm:$0xf]
    %v8428 = vld [vmem:[#allocation14 + $0xa8] sm:$0xf]
    %v8429 = vld [vmem:[#allocation14 + $0xac] sm:$0xf]
    %v8430 = vld [vmem:[#allocation14 + $0xb0] sm:$0xf]
    %v8431 = vld [vmem:[#allocation14 + $0xb4] sm:$0xf]
    %v8432 = vld [vmem:[#allocation14 + $0xb8] sm:$0xf]
    %v8433 = vld [vmem:[#allocation14 + $0xbc] sm:$0xf]
    %v8434 = vld [vmem:[#allocation14 + $0xc0] sm:$0xf]
    %v8435 = vld [vmem:[#allocation14 + $0xc4] sm:$0xf]
    %v8436 = vld [vmem:[#allocation14 + $0xc8] sm:$0xf]
    %v8437 = vld [vmem:[#allocation14 + $0xcc] sm:$0xf]
    %v8438 = vld [vmem:[#allocation14 + $0xd0] sm:$0xf]
    %v8439 = vld [vmem:[#allocation14 + $0xd4] sm:$0xf]
    %v8440 = vld [vmem:[#allocation14 + $0xd8] sm:$0xf]
    %v8441 = vld [vmem:[#allocation14 + $0xdc] sm:$0xf]
    %v8442 = vld [vmem:[#allocation14 + $0xe0] sm:$0xf]
    %v8443 = vld [vmem:[#allocation14 + $0xe4] sm:$0xf]
    %v8444 = vld [vmem:[#allocation14 + $0xe8] sm:$0xf]
    %v8445 = vld [vmem:[#allocation14 + $0xec] sm:$0xf]
    %v8446 = vld [vmem:[#allocation14 + $0xf0] sm:$0xf]
    %v8447 = vld [vmem:[#allocation14 + $0xf4] sm:$0xf]
    %v8448 = vld [vmem:[#allocation14 + $0xf8] sm:$0xf]
    %v8449 = vld [vmem:[#allocation14 + $0xfc] sm:$0xf]
    %v8450 = vld [vmem:[#allocation14 + $0x100] sm:$0xf]
    %v8451 = vld [vmem:[#allocation14 + $0x104] sm:$0xf]
    %v8452 = vld [vmem:[#allocation14 + $0x108] sm:$0xf]
    %v8453 = vld [vmem:[#allocation14 + $0x10c] sm:$0xf]
    %v8454 = vld [vmem:[#allocation14 + $0x110] sm:$0xf]
    %v8455 = vld [vmem:[#allocation14 + $0x114] sm:$0xf]
    %v8456 = vld [vmem:[#allocation14 + $0x118] sm:$0xf]
    %v8457 = vld [vmem:[#allocation14 + $0x11c] sm:$0xf]
    %v8458 = vld [vmem:[#allocation14 + $0x120] sm:$0xf]
    %v8459 = vld [vmem:[#allocation14 + $0x124] sm:$0xf]
    %v8460 = vld [vmem:[#allocation14 + $0x128] sm:$0xf]
    %v8461 = vld [vmem:[#allocation14 + $0x12c] sm:$0xf]
    %v8462 = vld [vmem:[#allocation14 + $0x130] sm:$0xf]
    %v8463 = vld [vmem:[#allocation14 + $0x134] sm:$0xf]
    %v8464 = vld [vmem:[#allocation14 + $0x138] sm:$0xf]
    %v8465 = vld [vmem:[#allocation14 + $0x13c] sm:$0xf]
    %v8466 = vld [vmem:[#allocation14 + $0x140] sm:$0xf]
    %v8467 = vld [vmem:[#allocation14 + $0x144] sm:$0xf]
    %v8468 = vld [vmem:[#allocation14 + $0x148] sm:$0xf]
    %v8469 = vld [vmem:[#allocation14 + $0x14c] sm:$0xf]
    %v8470 = vld [vmem:[#allocation14 + $0x150] sm:$0xf]
    %v8471 = vld [vmem:[#allocation14 + $0x154] sm:$0xf]
    %v8472 = vld [vmem:[#allocation14 + $0x158] sm:$0xf]
    %v8473 = vld [vmem:[#allocation14 + $0x15c] sm:$0xf]
    %v8474 = vld [vmem:[#allocation14 + $0x160] sm:$0xf]
    %v8475 = vld [vmem:[#allocation14 + $0x164] sm:$0xf]
    %v8476 = vld [vmem:[#allocation14 + $0x168] sm:$0xf]
    %v8477 = vld [vmem:[#allocation14 + $0x16c] sm:$0xf]
    %v8478 = vld [vmem:[#allocation14 + $0x170] sm:$0xf]
    %v8479 = vld [vmem:[#allocation14 + $0x174] sm:$0xf]
    %v8480 = vld [vmem:[#allocation14 + $0x178] sm:$0xf]
    %v8481 = vld [vmem:[#allocation14 + $0x17c] sm:$0xf]
    %v8482 = vld [vmem:[#allocation14 + $0x180] sm:$0xf]
    %v8483 = vld [vmem:[#allocation14 + $0x184] sm:$0xf]
    %v8484 = vld [vmem:[#allocation14 + $0x188] sm:$0xf]
    %v8485 = vld [vmem:[#allocation14 + $0x18c] sm:$0xf]
    %v8486 = vld [vmem:[#allocation14 + $0x190] sm:$0xf]
    %v8487 = vld [vmem:[#allocation14 + $0x194] sm:$0xf]
    %v8488 = vld [vmem:[#allocation14 + $0x198] sm:$0xf]
    %v8489 = vld [vmem:[#allocation14 + $0x19c] sm:$0xf]
    %v8490 = vld [vmem:[#allocation14 + $0x1a0] sm:$0xf]
    %v8491 = vld [vmem:[#allocation14 + $0x1a4] sm:$0xf]
    %v8492 = vld [vmem:[#allocation14 + $0x1a8] sm:$0xf]
    %v8493 = vld [vmem:[#allocation14 + $0x1ac] sm:$0xf]
    %v8494 = vld [vmem:[#allocation14 + $0x1b0] sm:$0xf]
    %v8495 = vld [vmem:[#allocation14 + $0x1b4] sm:$0xf]
    %v8496 = vld [vmem:[#allocation14 + $0x1b8] sm:$0xf]
    %v8497 = vld [vmem:[#allocation14 + $0x1bc] sm:$0xf]
    %v8498 = vld [vmem:[#allocation14 + $0x1c0] sm:$0xf]
    %v8499 = vld [vmem:[#allocation14 + $0x1c4] sm:$0xf]
    %v8500 = vld [vmem:[#allocation14 + $0x1c8] sm:$0xf]
    %v8501 = vld [vmem:[#allocation14 + $0x1cc] sm:$0xf]
    %v8502 = vld [vmem:[#allocation14 + $0x1d0] sm:$0xf]
    %v8503 = vld [vmem:[#allocation14 + $0x1d4] sm:$0xf]
    %v8504 = vld [vmem:[#allocation14 + $0x1d8] sm:$0xf]
    %v8505 = vld [vmem:[#allocation14 + $0x1dc] sm:$0xf]
    %v8506 = vld [vmem:[#allocation14 + $0x1e0] sm:$0xf]
    %v8507 = vld [vmem:[#allocation14 + $0x1e4] sm:$0xf]
    %v8508 = vld [vmem:[#allocation14 + $0x1e8] sm:$0xf]
    %v8509 = vld [vmem:[#allocation14 + $0x1ec] sm:$0xf]
    %v8510 = vld [vmem:[#allocation14 + $0x1f0] sm:$0xf]
    %v8511 = vld [vmem:[#allocation14 + $0x1f4] sm:$0xf]
    %v8512 = vld [vmem:[#allocation14 + $0x1f8] sm:$0xf]
    %v8513 = vld [vmem:[#allocation14 + $0x1fc] sm:$0xf]
    %v8514 = vld [vmem:[#allocation16] sm:$0x1]
    %v8516 = vlaneseq
    %v8517 = vshrl.u32 %v8516, 7
    %v8518 = vsub.s32 0, %v8517
    %v8519 = vrot.slane %v8514, %v8518
    %v8649 = vunpack.c.l.b16 %v8386
    %v8650 = vunpack.c.l.b16 %v8387
    %v8651 = vunpack.c.l.b16 %v8388
    %v8652 = vunpack.c.l.b16 %v8389
    %v8653 = vunpack.c.l.b16 %v8390
    %v8654 = vunpack.c.l.b16 %v8391
    %v8655 = vunpack.c.l.b16 %v8392
    %v8656 = vunpack.c.l.b16 %v8393
    %v8657 = vunpack.c.l.b16 %v8394
    %v8658 = vunpack.c.l.b16 %v8395
    %v8659 = vunpack.c.l.b16 %v8396
    %v8660 = vunpack.c.l.b16 %v8397
    %v8661 = vunpack.c.l.b16 %v8398
    %v8662 = vunpack.c.l.b16 %v8399
    %v8663 = vunpack.c.l.b16 %v8400
    %v8664 = vunpack.c.l.b16 %v8401
    %v8665 = vunpack.c.l.b16 %v8402
    %v8666 = vunpack.c.l.b16 %v8403
    %v8667 = vunpack.c.l.b16 %v8404
    %v8668 = vunpack.c.l.b16 %v8405
    %v8669 = vunpack.c.l.b16 %v8406
    %v8670 = vunpack.c.l.b16 %v8407
    %v8671 = vunpack.c.l.b16 %v8408
    %v8672 = vunpack.c.l.b16 %v8409
    %v8673 = vunpack.c.l.b16 %v8410
    %v8674 = vunpack.c.l.b16 %v8411
    %v8675 = vunpack.c.l.b16 %v8412
    %v8676 = vunpack.c.l.b16 %v8413
    %v8677 = vunpack.c.l.b16 %v8414
    %v8678 = vunpack.c.l.b16 %v8415
    %v8679 = vunpack.c.l.b16 %v8416
    %v8680 = vunpack.c.l.b16 %v8417
    %v8681 = vunpack.c.l.b16 %v8418
    %v8682 = vunpack.c.l.b16 %v8419
    %v8683 = vunpack.c.l.b16 %v8420
    %v8684 = vunpack.c.l.b16 %v8421
    %v8685 = vunpack.c.l.b16 %v8422
    %v8686 = vunpack.c.l.b16 %v8423
    %v8687 = vunpack.c.l.b16 %v8424
    %v8688 = vunpack.c.l.b16 %v8425
    %v8689 = vunpack.c.l.b16 %v8426
    %v8690 = vunpack.c.l.b16 %v8427
    %v8691 = vunpack.c.l.b16 %v8428
    %v8692 = vunpack.c.l.b16 %v8429
    %v8693 = vunpack.c.l.b16 %v8430
    %v8694 = vunpack.c.l.b16 %v8431
    %v8695 = vunpack.c.l.b16 %v8432
    %v8696 = vunpack.c.l.b16 %v8433
    %v8697 = vunpack.c.l.b16 %v8434
    %v8698 = vunpack.c.l.b16 %v8435
    %v8699 = vunpack.c.l.b16 %v8436
    %v8700 = vunpack.c.l.b16 %v8437
    %v8701 = vunpack.c.l.b16 %v8438
    %v8702 = vunpack.c.l.b16 %v8439
    %v8703 = vunpack.c.l.b16 %v8440
    %v8704 = vunpack.c.l.b16 %v8441
    %v8705 = vunpack.c.l.b16 %v8442
    %v8706 = vunpack.c.l.b16 %v8443
    %v8707 = vunpack.c.l.b16 %v8444
    %v8708 = vunpack.c.l.b16 %v8445
    %v8709 = vunpack.c.l.b16 %v8446
    %v8710 = vunpack.c.l.b16 %v8447
    %v8711 = vunpack.c.l.b16 %v8448
    %v8712 = vunpack.c.l.b16 %v8449
    %v8713 = vunpack.c.l.b16 %v8450
    %v8714 = vunpack.c.l.b16 %v8451
    %v8715 = vunpack.c.l.b16 %v8452
    %v8716 = vunpack.c.l.b16 %v8453
    %v8717 = vunpack.c.l.b16 %v8454
    %v8718 = vunpack.c.l.b16 %v8455
    %v8719 = vunpack.c.l.b16 %v8456
    %v8720 = vunpack.c.l.b16 %v8457
    %v8721 = vunpack.c.l.b16 %v8458
    %v8722 = vunpack.c.l.b16 %v8459
    %v8723 = vunpack.c.l.b16 %v8460
    %v8724 = vunpack.c.l.b16 %v8461
    %v8725 = vunpack.c.l.b16 %v8462
    %v8726 = vunpack.c.l.b16 %v8463
    %v8727 = vunpack.c.l.b16 %v8464
    %v8728 = vunpack.c.l.b16 %v8465
    %v8729 = vunpack.c.l.b16 %v8466
    %v8730 = vunpack.c.l.b16 %v8467
    %v8731 = vunpack.c.l.b16 %v8468
    %v8732 = vunpack.c.l.b16 %v8469
    %v8733 = vunpack.c.l.b16 %v8470
    %v8734 = vunpack.c.l.b16 %v8471
    %v8735 = vunpack.c.l.b16 %v8472
    %v8736 = vunpack.c.l.b16 %v8473
    %v8737 = vunpack.c.l.b16 %v8474
    %v8738 = vunpack.c.l.b16 %v8475
    %v8739 = vunpack.c.l.b16 %v8476
    %v8740 = vunpack.c.l.b16 %v8477
    %v8741 = vunpack.c.l.b16 %v8478
    %v8742 = vunpack.c.l.b16 %v8479
    %v8743 = vunpack.c.l.b16 %v8480
    %v8744 = vunpack.c.l.b16 %v8481
    %v8745 = vunpack.c.l.b16 %v8482
    %v8746 = vunpack.c.l.b16 %v8483
    %v8747 = vunpack.c.l.b16 %v8484
    %v8748 = vunpack.c.l.b16 %v8485
    %v8749 = vunpack.c.l.b16 %v8486
    %v8750 = vunpack.c.l.b16 %v8487
    %v8751 = vunpack.c.l.b16 %v8488
    %v8752 = vunpack.c.l.b16 %v8489
    %v8753 = vunpack.c.l.b16 %v8490
    %v8754 = vunpack.c.l.b16 %v8491
    %v8755 = vunpack.c.l.b16 %v8492
    %v8756 = vunpack.c.l.b16 %v8493
    %v8757 = vunpack.c.l.b16 %v8494
    %v8758 = vunpack.c.l.b16 %v8495
    %v8759 = vunpack.c.l.b16 %v8496
    %v8760 = vunpack.c.l.b16 %v8497
    %v8761 = vunpack.c.l.b16 %v8498
    %v8762 = vunpack.c.l.b16 %v8499
    %v8763 = vunpack.c.l.b16 %v8500
    %v8764 = vunpack.c.l.b16 %v8501
    %v8765 = vunpack.c.l.b16 %v8502
    %v8766 = vunpack.c.l.b16 %v8503
    %v8767 = vunpack.c.l.b16 %v8504
    %v8768 = vunpack.c.l.b16 %v8505
    %v8769 = vunpack.c.l.b16 %v8506
    %v8770 = vunpack.c.l.b16 %v8507
    %v8771 = vunpack.c.l.b16 %v8508
    %v8772 = vunpack.c.l.b16 %v8509
    %v8773 = vunpack.c.l.b16 %v8510
    %v8774 = vunpack.c.l.b16 %v8511
    %v8775 = vunpack.c.l.b16 %v8512
    %v8776 = vunpack.c.l.b16 %v8513
    %v8777 = vpack.c.b16 %v8650, %v8649
    %v8778 = vpack.c.b16 %v8652, %v8651
    %v8779 = vpack.c.b16 %v8654, %v8653
    %v8780 = vpack.c.b16 %v8656, %v8655
    %v8781 = vpack.c.b16 %v8658, %v8657
    %v8782 = vpack.c.b16 %v8660, %v8659
    %v8783 = vpack.c.b16 %v8662, %v8661
    %v8784 = vpack.c.b16 %v8664, %v8663
    %v8785 = vpack.c.b16 %v8666, %v8665
    %v8786 = vpack.c.b16 %v8668, %v8667
    %v8787 = vpack.c.b16 %v8670, %v8669
    %v8788 = vpack.c.b16 %v8672, %v8671
    %v8789 = vpack.c.b16 %v8674, %v8673
    %v8790 = vpack.c.b16 %v8676, %v8675
    %v8791 = vpack.c.b16 %v8678, %v8677
    %v8792 = vpack.c.b16 %v8680, %v8679
    %v8793 = vpack.c.b16 %v8682, %v8681
    %v8794 = vpack.c.b16 %v8684, %v8683
    %v8795 = vpack.c.b16 %v8686, %v8685
    %v8796 = vpack.c.b16 %v8688, %v8687
    %v8797 = vpack.c.b16 %v8690, %v8689
    %v8798 = vpack.c.b16 %v8692, %v8691
    %v8799 = vpack.c.b16 %v8694, %v8693
    %v8800 = vpack.c.b16 %v8696, %v8695
    %v8801 = vpack.c.b16 %v8698, %v8697
    %v8802 = vpack.c.b16 %v8700, %v8699
    %v8803 = vpack.c.b16 %v8702, %v8701
    %v8804 = vpack.c.b16 %v8704, %v8703
    %v8805 = vpack.c.b16 %v8706, %v8705
    %v8806 = vpack.c.b16 %v8708, %v8707
    %v8807 = vpack.c.b16 %v8710, %v8709
    %v8808 = vpack.c.b16 %v8712, %v8711
    %v8809 = vpack.c.b16 %v8714, %v8713
    %v8810 = vpack.c.b16 %v8716, %v8715
    %v8811 = vpack.c.b16 %v8718, %v8717
    %v8812 = vpack.c.b16 %v8720, %v8719
    %v8813 = vpack.c.b16 %v8722, %v8721
    %v8814 = vpack.c.b16 %v8724, %v8723
    %v8815 = vpack.c.b16 %v8726, %v8725
    %v8816 = vpack.c.b16 %v8728, %v8727
    %v8817 = vpack.c.b16 %v8730, %v8729
    %v8818 = vpack.c.b16 %v8732, %v8731
    %v8819 = vpack.c.b16 %v8734, %v8733
    %v8820 = vpack.c.b16 %v8736, %v8735
    %v8821 = vpack.c.b16 %v8738, %v8737
    %v8822 = vpack.c.b16 %v8740, %v8739
    %v8823 = vpack.c.b16 %v8742, %v8741
    %v8824 = vpack.c.b16 %v8744, %v8743
    %v8825 = vpack.c.b16 %v8746, %v8745
    %v8826 = vpack.c.b16 %v8748, %v8747
    %v8827 = vpack.c.b16 %v8750, %v8749
    %v8828 = vpack.c.b16 %v8752, %v8751
    %v8829 = vpack.c.b16 %v8754, %v8753
    %v8830 = vpack.c.b16 %v8756, %v8755
    %v8831 = vpack.c.b16 %v8758, %v8757
    %v8832 = vpack.c.b16 %v8760, %v8759
    %v8833 = vpack.c.b16 %v8762, %v8761
    %v8834 = vpack.c.b16 %v8764, %v8763
    %v8835 = vpack.c.b16 %v8766, %v8765
    %v8836 = vpack.c.b16 %v8768, %v8767
    %v8837 = vpack.c.b16 %v8770, %v8769
    %v8838 = vpack.c.b16 %v8772, %v8771
    %v8839 = vpack.c.b16 %v8774, %v8773
    %v8840 = vpack.c.b16 %v8776, %v8775
    %8905 = vmatprep.subr.bf16.mxu0 0
    %8906 = vmatpush1.bf16.msra.mxu0 %v8784
    %8907 = vmatprep.subr.bf16.mxu0 0
    %8908 = vmatpush1.bf16.msra.mxu0 %v8783
    %8909 = vmatprep.subr.bf16.mxu0 0
    %8910 = vmatpush1.bf16.msra.mxu0 %v8782
    %8911 = vmatprep.subr.bf16.mxu0 0
    %8912 = vmatpush1.bf16.msra.mxu0 %v8781
    %8913 = vmatprep.subr.bf16.mxu0 0
    %8914 = vmatpush1.bf16.msra.mxu0 %v8780
    %8915 = vmatprep.subr.bf16.mxu0 0
    %8916 = vmatpush1.bf16.msra.mxu0 %v8779
    %8917 = vmatprep.subr.bf16.mxu0 0
    %8918 = vmatpush1.bf16.msra.mxu0 %v8778
    %8919 = vmatprep.subr.bf16.mxu0 0
    %8920 = vmatpush1.bf16.msra.mxu0 %v8777
    %8921 = vmatprep.subr.bf16.mxu0 0
    %8922 = vmatpush2.bf16.msra.mxu0 %v8792
    %8923 = vmatprep.subr.bf16.mxu0 0
    %8924 = vmatpush2.bf16.msra.mxu0 %v8791
    %8925 = vmatprep.subr.bf16.mxu0 0
    %8926 = vmatpush2.bf16.msra.mxu0 %v8790
    %8927 = vmatprep.subr.bf16.mxu0 0
    %8928 = vmatpush2.bf16.msra.mxu0 %v8789
    %8929 = vmatprep.subr.bf16.mxu0 0
    %8930 = vmatpush2.bf16.msra.mxu0 %v8788
    %8931 = vmatprep.subr.bf16.mxu0 0
    %8932 = vmatpush2.bf16.msra.mxu0 %v8787
    %8933 = vmatprep.subr.bf16.mxu0 0
    %8934 = vmatpush2.bf16.msra.mxu0 %v8786
    %8935 = vmatprep.subr.bf16.mxu0 0
    %8936 = vmatpush2.bf16.msra.mxu0 %v8785
    %8937 = vmatprep.mubr.bf16.mxu0 %v8379
    %8938 = vmatmul.mubr.bf16.gmra.mxu0 %v8378
    %v8939 = vpop.f32.mrf.mxu0
    %v8940 = vadd.f32 %v8519, %v8939
    %v8941 = vpop.f32.mrf.mxu0
    %v8942 = vpop.f32.mrf.mxu0
    %v8943 = vadd.f32 %v8519, %v8942
    %v8944 = vpop.f32.mrf.mxu0
    %8945 = vdwg.mxu0
    %8946 = vmatprep.subr.bf16.mxu0 0
    %8947 = vmatpush1.bf16.msra.mxu0 %v8800
    %8948 = vmatprep.subr.bf16.mxu0 0
    %8949 = vmatpush1.bf16.msra.mxu0 %v8799
    %8950 = vmatprep.subr.bf16.mxu0 0
    %8951 = vmatpush1.bf16.msra.mxu0 %v8798
    %8952 = vmatprep.subr.bf16.mxu0 0
    %8953 = vmatpush1.bf16.msra.mxu0 %v8797
    %8954 = vmatprep.subr.bf16.mxu0 0
    %8955 = vmatpush1.bf16.msra.mxu0 %v8796
    %8956 = vmatprep.subr.bf16.mxu0 0
    %8957 = vmatpush1.bf16.msra.mxu0 %v8795
    %8958 = vmatprep.subr.bf16.mxu0 0
    %8959 = vmatpush1.bf16.msra.mxu0 %v8794
    %8960 = vmatprep.subr.bf16.mxu0 0
    %8961 = vmatpush1.bf16.msra.mxu0 %v8793
    %8962 = vmatprep.subr.bf16.mxu0 0
    %8963 = vmatpush2.bf16.msra.mxu0 %v8808
    %8964 = vmatprep.subr.bf16.mxu0 0
    %8965 = vmatpush2.bf16.msra.mxu0 %v8807
    %8966 = vmatprep.subr.bf16.mxu0 0
    %8967 = vmatpush2.bf16.msra.mxu0 %v8806
    %8968 = vmatprep.subr.bf16.mxu0 0
    %8969 = vmatpush2.bf16.msra.mxu0 %v8805
    %8970 = vmatprep.subr.bf16.mxu0 0
    %8971 = vmatpush2.bf16.msra.mxu0 %v8804
    %8972 = vmatprep.subr.bf16.mxu0 0
    %8973 = vmatpush2.bf16.msra.mxu0 %v8803
    %8974 = vmatprep.subr.bf16.mxu0 0
    %8975 = vmatpush2.bf16.msra.mxu0 %v8802
    %8976 = vmatprep.subr.bf16.mxu0 0
    %8977 = vmatpush2.bf16.msra.mxu0 %v8801
    %8978 = vmatprep.mubr.bf16.mxu0 %v8381
    %8979 = vmatmul.mubr.bf16.gmra.mxu0 %v8380
    %v8980 = vpop.f32.mrf.mxu0
    %v8981 = vadd.f32 %v8940, %v8980
    %v8982 = vpop.f32.mrf.mxu0
    %v8983 = vpop.f32.mrf.mxu0
    %v8984 = vadd.f32 %v8943, %v8983
    %v8985 = vpop.f32.mrf.mxu0
    %8986 = vdwg.mxu0
    %8987 = vmatprep.subr.bf16.mxu0 0
    %8988 = vmatpush1.bf16.msra.mxu0 %v8816
    %8989 = vmatprep.subr.bf16.mxu0 0
    %8990 = vmatpush1.bf16.msra.mxu0 %v8815
    %8991 = vmatprep.subr.bf16.mxu0 0
    %8992 = vmatpush1.bf16.msra.mxu0 %v8814
    %8993 = vmatprep.subr.bf16.mxu0 0
    %8994 = vmatpush1.bf16.msra.mxu0 %v8813
    %8995 = vmatprep.subr.bf16.mxu0 0
    %8996 = vmatpush1.bf16.msra.mxu0 %v8812
    %8997 = vmatprep.subr.bf16.mxu0 0
    %8998 = vmatpush1.bf16.msra.mxu0 %v8811
    %8999 = vmatprep.subr.bf16.mxu0 0
    %9000 = vmatpush1.bf16.msra.mxu0 %v8810
    %9001 = vmatprep.subr.bf16.mxu0 0
    %9002 = vmatpush1.bf16.msra.mxu0 %v8809
    %9003 = vmatprep.subr.bf16.mxu0 0
    %9004 = vmatpush2.bf16.msra.mxu0 %v8824
    %9005 = vmatprep.subr.bf16.mxu0 0
    %9006 = vmatpush2.bf16.msra.mxu0 %v8823
    %9007 = vmatprep.subr.bf16.mxu0 0
    %9008 = vmatpush2.bf16.msra.mxu0 %v8822
    %9009 = vmatprep.subr.bf16.mxu0 0
    %9010 = vmatpush2.bf16.msra.mxu0 %v8821
    %9011 = vmatprep.subr.bf16.mxu0 0
    %9012 = vmatpush2.bf16.msra.mxu0 %v8820
    %9013 = vmatprep.subr.bf16.mxu0 0
    %9014 = vmatpush2.bf16.msra.mxu0 %v8819
    %9015 = vmatprep.subr.bf16.mxu0 0
    %9016 = vmatpush2.bf16.msra.mxu0 %v8818
    %9017 = vmatprep.subr.bf16.mxu0 0
    %9018 = vmatpush2.bf16.msra.mxu0 %v8817
    %9019 = vmatprep.mubr.bf16.mxu0 %v8383
    %9020 = vmatmul.mubr.bf16.gmra.mxu0 %v8382
    %v9021 = vpop.f32.mrf.mxu0
    %v9022 = vadd.f32 %v8981, %v9021
    %v9023 = vpop.f32.mrf.mxu0
    %v9024 = vpop.f32.mrf.mxu0
    %v9025 = vadd.f32 %v8984, %v9024
    %v9026 = vpop.f32.mrf.mxu0
    %9027 = vdwg.mxu0
    %9028 = vmatprep.subr.bf16.mxu0 0
    %9029 = vmatpush1.bf16.msra.mxu0 %v8832
    %9030 = vmatprep.subr.bf16.mxu0 0
    %9031 = vmatpush1.bf16.msra.mxu0 %v8831
    %9032 = vmatprep.subr.bf16.mxu0 0
    %9033 = vmatpush1.bf16.msra.mxu0 %v8830
    %9034 = vmatprep.subr.bf16.mxu0 0
    %9035 = vmatpush1.bf16.msra.mxu0 %v8829
    %9036 = vmatprep.subr.bf16.mxu0 0
    %9037 = vmatpush1.bf16.msra.mxu0 %v8828
    %9038 = vmatprep.subr.bf16.mxu0 0
    %9039 = vmatpush1.bf16.msra.mxu0 %v8827
    %9040 = vmatprep.subr.bf16.mxu0 0
    %9041 = vmatpush1.bf16.msra.mxu0 %v8826
    %9042 = vmatprep.subr.bf16.mxu0 0
    %9043 = vmatpush1.bf16.msra.mxu0 %v8825
    %9044 = vmatprep.subr.bf16.mxu0 0
    %9045 = vmatpush2.bf16.msra.mxu0 %v8840
    %9046 = vmatprep.subr.bf16.mxu0 0
    %9047 = vmatpush2.bf16.msra.mxu0 %v8839
    %9048 = vmatprep.subr.bf16.mxu0 0
    %9049 = vmatpush2.bf16.msra.mxu0 %v8838
    %9050 = vmatprep.subr.bf16.mxu0 0
    %9051 = vmatpush2.bf16.msra.mxu0 %v8837
    %9052 = vmatprep.subr.bf16.mxu0 0
    %9053 = vmatpush2.bf16.msra.mxu0 %v8836
    %9054 = vmatprep.subr.bf16.mxu0 0
    %9055 = vmatpush2.bf16.msra.mxu0 %v8835
    %9056 = vmatprep.subr.bf16.mxu0 0
    %9057 = vmatpush2.bf16.msra.mxu0 %v8834
    %9058 = vmatprep.subr.bf16.mxu0 0
    %9059 = vmatpush2.bf16.msra.mxu0 %v8833
    %9060 = vmatprep.mubr.bf16.mxu0 %v8385
    %9061 = vmatmul.mubr.bf16.gmra.mxu0 %v8384
    %v9062 = vpop.f32.mrf.mxu0
    %v9063 = vadd.f32 %v9022, %v9062
    %v9064 = vpop.f32.mrf.mxu0
    %v9065 = vpop.f32.mrf.mxu0
    %v9066 = vadd.f32 %v9025, %v9065
    %v9067 = vpop.f32.mrf.mxu0
    %9068 = vdwg.mxu0
    %9069 = vst [vmem:[#allocation17] sm:$0xff] %v9063
    %9070 = vst [vmem:[#allocation17 + $0x8] sm:$0xff] %v9066
    // Predicated region
    $region74: #{tpu_custom_call.1} parent=1 // pred_check
      _
    $region75: #{tpu_custom_call.1} parent=1 // pred_check_branch
      %9072 = sbr.rel (0) target = $region77
    $region76: #{tpu_custom_call.1} parent=1 // pred_region
      %s9074 = ssub.s32 256, 256
      %9075 = vsyncadd [#allocation4], %s9074
      %s9076 = sshll.u32 [#allocation17], 4
      %s9077 = int_to_ptr.vmem [resolvable:$true] %s9076
      %9082 = dma.vmem_to_hbm [thread:$0]  %s9077, 256, %s9, [#allocation4], 128, 128, 8
    $region77: #{tpu_custom_call.1} parent=1 // pred_fallthru
      _
    // Predicated region
    $region78: #{tpu_custom_call.1} parent=1 // pred_check
      _
    $region79: #{tpu_custom_call.1} parent=1 // pred_check_branch
      %9084 = sbr.rel (0) target = $region81
    $region80: #{tpu_custom_call.1} parent=1 // pred_region
      %9085 = dma.done [#allocation4], 256
    $region81: #{tpu_custom_call.1} parent=1 // pred_fallthru
      _
    %9086 = vsyncpa [#allocation3], 1
    %9087 = vsyncpa [#allocation6], 1
    %9088 = vsyncpa [#allocation9], 1
    %9089 = vsyncpa [#allocation12], 1
    %9090 = vsyncpa [#allocation15], 1
    %9091 = vsyncpa [#allocation4], 1

</llo_original>
